<compile_context>
chip_gen: v7x
topology: tpu7x:2x2x1
jax: 0.10.0
libtpu: 0.0.40
codegen_flags: <defaults>
</compile_context>

<pallas_src>
import functools

import numpy as np
import jax
import jax.numpy as jnp
from jax.experimental import pallas as pl
from jax.experimental.pallas import tpu as pltpu

EPS = 1e-5
KS = 3                        # conv kernel size
STRIDES = (2, 2, 1, 1, 1)
DILATIONS = (1, 1, 2, 3, 2)


def _out_dim(n, stride, dil):
    return (n - dil * (KS - 1) - 1) // stride + 1


# ----------------------- host-side parameter prep ---------------------------

def prepare_params(P, channels_in, H, W, N):
    """One-time preprocessing of the module parameters into the structured
    GEMM operands consumed by the fused kernel (pure weight transform, numpy).
    `N` only sizes the block-diagonal lane-batched column-selection matrices."""
    arrays = []
    cfg = []
    Hi, Wi, Cin = H, W, channels_in
    flops = 0
    for i in range(5):
        s, d = STRIDES[i], DILATIONS[i]
        w = np.asarray(P[f"conv{i+1}_w"], np.float32)       # (Cout, Cin, 3, 3)
        bias = np.asarray(P[f"conv{i+1}_b"], np.float32)
        gamma = np.asarray(P[f"bn{i+1}_g"], np.float32)
        beta = np.asarray(P[f"bn{i+1}_b"], np.float32)
        Cout = w.shape[0]
        assert w.shape[1] == Cin
        Ho, Wo = _out_dim(Hi, s, d), _out_dim(Wi, s, d)

        # Block-diagonal 0/1 column selection over the lane-batched slab
        # (stride / dilation along W, all N images at once):
        #   cw[kw][n*Wi + s*wo + d*kw, n*Wo + wo] = 1
        cw = np.zeros((KS, N * Wi, N * Wo), np.float32)
        wo = np.arange(Wo)
        for kw in range(KS):
            for n in range(N):
                cw[kw, n * Wi + s * wo + d * kw, n * Wo + wo] = 1.0

        # Row selection + conv-weight scatter; the 3 kw blocks are fused along
        # the contraction axis so the kernel does ONE big-K GEMM per stage:
        #   L[kw][o*Ho+ho, c*Hi+hi] = sum_kh [hi == s*ho + d*kh] * w[o,c,kh,kw]
        L = np.zeros((KS, Cout, Ho, Cin, Hi), np.float32)
        for kw in range(KS):
            for kh in range(KS):
                for ho in range(Ho):
                    L[kw, :, ho, :, s * ho + d * kh] += w[:, :, kh, kw]
        L = L.reshape(KS, Cout * Ho, Cin * Hi)
        lcat = np.concatenate(list(L), axis=1)                # (Cout*Ho, 3*Cin*Hi)

        brows = np.repeat(bias, Ho)[:, None]                  # (Cout*Ho, 1)
        red = np.kron(np.eye(Cout, dtype=np.float32),
                      np.ones((1, Ho), np.float32))           # (Cout, Cout*Ho)
        exp = np.kron(np.eye(Cout, dtype=np.float32),
                      np.ones((Ho, 1), np.float32))           # (Cout*Ho, Cout)
        # Fused (sum, sum_sq) / (scale, shift) forms, stacked along the
        # 8-aligned sublane axis so a single GEMM handles both halves.
        red2 = np.kron(np.eye(2, dtype=np.float32), red)      # (2*Cout, 2*Cout*Ho)
        exp2 = np.kron(np.eye(2, dtype=np.float32), exp)      # (2*Cout*Ho, 2*Cout)

        arrays += [jnp.asarray(cw, jnp.bfloat16),             # exact 0/1
                   jnp.asarray(lcat, jnp.bfloat16),           # bf16 MXU weights
                   jnp.asarray(brows, jnp.float32),
                   jnp.asarray(red2, jnp.float32),
                   jnp.asarray(exp2, jnp.float32),
                   jnp.asarray(gamma.reshape(-1, 1), jnp.float32),
                   jnp.asarray(beta.reshape(-1, 1), jnp.float32)]

        flops += 2 * KS * (Cin * Hi) * (N * Wi) * (N * Wo)        # selections
        flops += 2 * (Cout * Ho) * (KS * Cin * Hi) * (N * Wo)     # fused conv
        flops += 8 * (Cout * Ho) * (N * Wo)                       # bias/relu/bn
        cfg.append((Ho, Wo))
        Hi, Wi, Cin = Ho, Wo, Cout

    # ---------------- FC head (flatten + fc1 + relu + 3 linears) ------------
    Ho5, Wo5 = cfg[-1]
    Cout5 = Cin
    feat = Cout5 * Ho5 * Wo5
    assert feat == P["fc1_w"].shape[1], (feat, P["fc1_w"].shape)

    # Matmul-based flatten ("vec" trick), batched over images:
    #   m = e5 @ Y5 replicates each slab row Wo5 times;  (m * d5n) @ seg
    #   segment-sums the per-image lane blocks -> xfc (feat, N) in the exact
    #   x5.view(-1, 408) order.
    e5 = np.kron(np.eye(Cout5 * Ho5, dtype=np.float32),
                 np.ones((Wo5, 1), np.float32))                   # (408, 24)
    d5n = np.tile(np.eye(Wo5, dtype=np.float32), (Cout5 * Ho5, N))  # (408, N*Wo5)
    seg = np.kron(np.eye(N, dtype=np.float32),
                  np.ones((Wo5, 1), np.float32))                  # (N*Wo5, N)

    w1 = np.asarray(P["fc1_w"], np.float32)                       # (64, 408)
    b1 = np.asarray(P["fc1_b"], np.float32)[:, None]              # (64, 1)
    wh = np.concatenate([np.asarray(P["fc_char1_w"], np.float32),
                         np.asarray(P["fc_char2_w"], np.float32),
                         np.asarray(P["fc_stage_w"], np.float32)], axis=0)
    bh = np.concatenate([np.asarray(P["fc_char1_b"], np.float32),
                         np.asarray(P["fc_char2_b"], np.float32),
                         np.asarray(P["fc_stage_b"], np.float32)],
                        axis=0)[:, None]

    arrays += [jnp.asarray(e5, jnp.bfloat16),
               jnp.asarray(d5n, jnp.float32),
               jnp.asarray(seg, jnp.float32),
               jnp.asarray(w1, jnp.bfloat16),
               jnp.asarray(b1, jnp.float32),
               jnp.asarray(wh, jnp.bfloat16),
               jnp.asarray(bh, jnp.float32)]

    flops += 2 * (feat * (Cout5 * Ho5) * N * Wo5 + feat * N * Wo5 * N
                  + w1.shape[0] * feat * N + wh.shape[0] * w1.shape[0] * N)
    bytes_accessed = int(N * channels_in * H * W * 4
                         + sum(int(a.size) * a.dtype.itemsize for a in arrays)
                         + wh.shape[0] * N * 4)

    static = (tuple(cfg),
              int(P["fc_char1_w"].shape[0]),   # num_chars
              int(P["fc_stage_w"].shape[0]),   # num_stages
              int(channels_in), int(H), int(W), int(N),
              int(flops), int(bytes_accessed))
    return {"arrays": tuple(arrays), "static": static}


# ------------------------------ fused kernel --------------------------------

def _make_kernel(N, cfg):
    def kernel(*refs):
        x_ref = refs[0]
        out_ref = refs[-1]
        pos = 1

        # Lane-batched input slab (Cin*H, N*W); the per-image lane concat is
        # 128-aligned (W == 128) and therefore free.  MXU operands in bf16.
        x = jnp.concatenate([x_ref[n] for n in range(N)], axis=1)
        x = x.astype(jnp.bfloat16)

        for si in range(5):
            (cw_ref, lcat_ref, brows_ref, red2_ref, exp2_ref,
             gamma_ref, beta_ref) = refs[pos:pos + 7]
            pos += 7
            Ho, Wo = cfg[si]
            cout_ho = brows_ref.shape[0]
            cout = gamma_ref.shape[0]
            inv_count = 1.0 / float(N * Ho * Wo)

            # ---- Conv: 3 column-selection GEMMs (all images at once) + ONE
            # fused big-K GEMM (the 3 kw taps folded into K), then bias+ReLU.
            ts = [jnp.dot(x, cw_ref[kw], preferred_element_type=jnp.float32)
                  for kw in range(KS)]
            tcat = jnp.concatenate(ts, axis=0)                # (3*Cin*Hi, N*Wo)
            y = jnp.dot(lcat_ref[...], tcat.astype(jnp.bfloat16),
                        preferred_element_type=jnp.float32)   # (Cout*Ho, N*Wo)
            y = jnp.maximum(y + brows_ref[...], 0.0)          # f32

            # ---- BatchNorm (training-mode batch stats), all math in f32.
            # One lane-reduce + one GEMM -> per-channel (sum, sum_sq).
            rs = jnp.sum(jnp.concatenate([y, y * y], axis=0),
                         axis=1, keepdims=True)               # (2*Cout*Ho, 1)
            ch = jnp.dot(red2_ref[...], rs,
                         preferred_element_type=jnp.float32)  # (2*Cout, 1)
            mean = ch[:cout] * inv_count
            var = jnp.maximum(ch[cout:] * inv_count - mean * mean, 0.0)
            scale = gamma_ref[...] * jax.lax.rsqrt(var + EPS)
            shift = beta_ref[...] - mean * scale
            ss = jnp.dot(exp2_ref[...],
                         jnp.concatenate([scale, shift], axis=0),
                         preferred_element_type=jnp.float32)  # (2*Cout*Ho, 1)
            # Next stage consumes bf16 operands; store the slab as bf16.
            x = (y * ss[:cout_ho] + ss[cout_ho:]).astype(jnp.bfloat16)

        # ---- FC head, batched over the N images (matmul-based flatten).
        (e5_ref, d5n_ref, seg_ref, w1_ref, b1_ref,
         wh_ref, bh_ref) = refs[pos:pos + 7]
        m = jnp.dot(e5_ref[...], x, preferred_element_type=jnp.float32)
        xfc = jnp.dot(m * d5n_ref[...], seg_ref[...],
                      preferred_element_type=jnp.float32)     # (408, N)
        h = jnp.dot(w1_ref[...], xfc.astype(jnp.bfloat16),
                    preferred_element_type=jnp.float32) + b1_ref[...]
        h = jnp.maximum(h, 0.0)                               # (64, N)
        logits = jnp.dot(wh_ref[...], h.astype(jnp.bfloat16),
                         preferred_element_type=jnp.float32) + bh_ref[...]
        out_ref[...] = logits                                 # (num_out, N)

    return kernel


def _zero_map(nd):
    return lambda i: (0,) * nd


@functools.partial(jax.jit, static_argnums=(2,))
def _forward(x, arrays, static):
    (cfg, num_chars, num_stages, channels_in, H, W, n_prep,
     flops, bytes_accessed) = static
    N, C, Hx, Wx = x.shape
    assert (N, C, Hx, Wx) == (n_prep, channels_in, H, W), (x.shape, static)
    num_out = 2 * num_chars + num_stages

    inputs = (x.reshape(N, C * Hx, Wx),) + tuple(arrays)

    # NOTE(v7x): grid=(1,) keeps the whole forward on one TensorCore; at this
    # batch size (N=2) the second v7x core is intentionally left idle.
    out = pl.pallas_call(
        _make_kernel(N, cfg),
        out_shape=jax.ShapeDtypeStruct((num_out, N), jnp.float32),
        grid=(1,),
        in_specs=[pl.BlockSpec(a.shape, _zero_map(a.ndim)) for a in inputs],
        out_specs=pl.BlockSpec((num_out, N), _zero_map(2)),
        compiler_params=pltpu.CompilerParams(
            dimension_semantics=("arbitrary",)),
        cost_estimate=pl.CostEstimate(flops=flops, transcendentals=64,
                                      bytes_accessed=bytes_accessed),
    )(*inputs)

    logits = out.T                                            # (N, num_out)
    return (logits[:, :num_chars],
            logits[:, num_chars:2 * num_chars],
            logits[:, 2 * num_chars:])


def character_stage_net(x, prepped):
    return _forward(x, prepped["arrays"], prepped["static"])


# ------------------------------ params / ref ---------------------------------

def init_params(key, channels_in, num_chars, num_stages, nf=8):
    keys = jax.random.split(key, 32)
    it = iter(keys)
    n = lambda shape, s=0.1: s * jax.random.normal(next(it), shape, jnp.float32)
    P = {}
    cins = [channels_in, nf, nf, nf, nf]
    for i in range(5):
        P[f"conv{i+1}_w"] = n((nf, cins[i], 3, 3))
        P[f"conv{i+1}_b"] = n((nf,))
        P[f"bn{i+1}_g"] = 1.0 + n((nf,))
        P[f"bn{i+1}_b"] = n((nf,))
    P["fc1_w"] = n((64, 408));             P["fc1_b"] = n((64,))
    P["fc_char1_w"] = n((num_chars, 64));  P["fc_char1_b"] = n((num_chars,))
    P["fc_char2_w"] = n((num_chars, 64));  P["fc_char2_b"] = n((num_chars,))
    P["fc_stage_w"] = n((num_stages, 64)); P["fc_stage_b"] = n((num_stages,))
    return P


def reference_forward(x, P, gemm_dtype=jnp.float32):
    """Pure-XLA reference.  `gemm_dtype` sets the operand precision of the
    conv / linear contractions (accumulation stays f32); bfloat16 mirrors the
    kernel's bf16 MXU operands, float32 is the strict reference."""
    c = lambda a: a.astype(gemm_dtype)

    def conv_bn(x, w, b, g, be, stride, dil):
        y = jax.lax.conv_general_dilated(
            c(x), c(w), window_strides=(stride, stride), padding="VALID",
            rhs_dilation=(dil, dil),
            dimension_numbers=("NCHW", "OIHW", "NCHW"),
            preferred_element_type=jnp.float32)
        y = jnp.maximum(y + b[None, :, None, None], 0.0)
        mean = jnp.mean(y, axis=(0, 2, 3), keepdims=True)
        var = jnp.mean((y - mean) ** 2, axis=(0, 2, 3), keepdims=True)
        return (y - mean) / jnp.sqrt(var + EPS) * g[None, :, None, None] \
            + be[None, :, None, None]

    x1 = conv_bn(x,  P["conv1_w"], P["conv1_b"], P["bn1_g"], P["bn1_b"], 2, 1)
    x2 = conv_bn(x1, P["conv2_w"], P["conv2_b"], P["bn2_g"], P["bn2_b"], 2, 1)
    x3 = conv_bn(x2, P["conv3_w"], P["conv3_b"], P["bn3_g"], P["bn3_b"], 1, 2)
    x4 = conv_bn(x3, P["conv4_w"], P["conv4_b"], P["bn4_g"], P["bn4_b"], 1, 3)
    x5 = conv_bn(x4, P["conv5_w"], P["conv5_b"], P["bn5_g"], P["bn5_b"], 1, 2)
    xf = x5.reshape(x5.shape[0], -1)
    h = jnp.maximum(
        jnp.dot(c(xf), c(P["fc1_w"]).T, preferred_element_type=jnp.float32)
        + P["fc1_b"], 0.0)

    def head(wk, bk):
        return jnp.dot(c(h), c(P[wk]).T,
                       preferred_element_type=jnp.float32) + P[bk]

    return (head("fc_char1_w", "fc_char1_b"),
            head("fc_char2_w", "fc_char2_b"),
            head("fc_stage_w", "fc_stage_b"))


# --------------------------------- main --------------------------------------

if __name__ == "__main__":
    key = jax.random.PRNGKey(0)
    kx, kp = jax.random.split(key)

    channels_in, num_chars, num_stages = 3, 26, 10
    # fc1 expects 408 = 8 filters * 3 * 17 features, which the conv stack
    # produces from a (72, 128) input image.
    N, H, W = 2, 72, 128
    x = jax.random.normal(kx, (N, channels_in, H, W), jnp.float32)
    params = init_params(kp, channels_in, num_chars, num_stages, nf=8)

    # One-time host-side weight preprocessing, then the single fused forward.
    prepped = prepare_params(params, channels_in, H, W, N)
    outs = character_stage_net(x, prepped)
    outs = jax.block_until_ready(outs)

    # Tight structural check: XLA reference at the same bf16 operand precision
    # (f32 accumulation, f32 BatchNorm) as the kernel's MXU GEMMs.
    ref_bf16 = reference_forward(x, params, jnp.bfloat16)
    for o, r in zip(outs, ref_bf16):
        assert o.shape == r.shape, (o.shape, r.shape)
        assert jnp.allclose(o, r, atol=2e-2, rtol=2e-2), \
            float(jnp.max(jnp.abs(o - r)))

    # Loose sanity check vs the strict-f32 reference: the only expected
    # deviation is bf16 operand rounding accumulated across 5 conv+BN stages.
    ref_f32 = reference_forward(x, params, jnp.float32)
    for o, r in zip(outs, ref_f32):
        assert jnp.allclose(o, r, atol=3e-1, rtol=1e-1), \
            float(jnp.max(jnp.abs(o - r)))

    print("KERNEL_OK")
</pallas_src>

<mosaic_0001>
module attributes {stable_mosaic.version = 11 : i64} {
  func.func @kernel(%arg0: i32, %arg1: memref<2x216x128xf32, #tpu.memory_space<vmem>>, %arg2: memref<3x256x126xbf16, #tpu.memory_space<vmem>>, %arg3: memref<280x648xbf16, #tpu.memory_space<vmem>>, %arg4: memref<280x1xf32, #tpu.memory_space<vmem>>, %arg5: memref<16x560xf32, #tpu.memory_space<vmem>>, %arg6: memref<560x16xf32, #tpu.memory_space<vmem>>, %arg7: memref<8x1xf32, #tpu.memory_space<vmem>>, %arg8: memref<8x1xf32, #tpu.memory_space<vmem>>, %arg9: memref<3x126x62xbf16, #tpu.memory_space<vmem>>, %arg10: memref<136x840xbf16, #tpu.memory_space<vmem>>, %arg11: memref<136x1xf32, #tpu.memory_space<vmem>>, %arg12: memref<16x272xf32, #tpu.memory_space<vmem>>, %arg13: memref<272x16xf32, #tpu.memory_space<vmem>>, %arg14: memref<8x1xf32, #tpu.memory_space<vmem>>, %arg15: memref<8x1xf32, #tpu.memory_space<vmem>>, %arg16: memref<3x62x54xbf16, #tpu.memory_space<vmem>>, %arg17: memref<104x408xbf16, #tpu.memory_space<vmem>>, %arg18: memref<104x1xf32, #tpu.memory_space<vmem>>, %arg19: memref<16x208xf32, #tpu.memory_space<vmem>>, %arg20: memref<208x16xf32, #tpu.memory_space<vmem>>, %arg21: memref<8x1xf32, #tpu.memory_space<vmem>>, %arg22: memref<8x1xf32, #tpu.memory_space<vmem>>, %arg23: memref<3x54x42xbf16, #tpu.memory_space<vmem>>, %arg24: memref<56x312xbf16, #tpu.memory_space<vmem>>, %arg25: memref<56x1xf32, #tpu.memory_space<vmem>>, %arg26: memref<16x112xf32, #tpu.memory_space<vmem>>, %arg27: memref<112x16xf32, #tpu.memory_space<vmem>>, %arg28: memref<8x1xf32, #tpu.memory_space<vmem>>, %arg29: memref<8x1xf32, #tpu.memory_space<vmem>>, %arg30: memref<3x42x34xbf16, #tpu.memory_space<vmem>>, %arg31: memref<24x168xbf16, #tpu.memory_space<vmem>>, %arg32: memref<24x1xf32, #tpu.memory_space<vmem>>, %arg33: memref<16x48xf32, #tpu.memory_space<vmem>>, %arg34: memref<48x16xf32, #tpu.memory_space<vmem>>, %arg35: memref<8x1xf32, #tpu.memory_space<vmem>>, %arg36: memref<8x1xf32, #tpu.memory_space<vmem>>, %arg37: memref<408x24xbf16, #tpu.memory_space<vmem>>, %arg38: memref<408x34xf32, #tpu.memory_space<vmem>>, %arg39: memref<34x2xf32, #tpu.memory_space<vmem>>, %arg40: memref<64x408xbf16, #tpu.memory_space<vmem>>, %arg41: memref<64x1xf32, #tpu.memory_space<vmem>>, %arg42: memref<62x64xbf16, #tpu.memory_space<vmem>>, %arg43: memref<62x1xf32, #tpu.memory_space<vmem>>, %arg44: memref<62x2xf32, #tpu.memory_space<vmem>>) attributes {dimension_semantics = [#tpu.dimension_semantics<arbitrary>], iteration_bounds = array<i64: 1>, scalar_prefetch = 0 : i64, scratch_operands = 0 : i64, tpu.core_type = #tpu.core_type<tc>, window_params = [{pipeline_mode = #tpu.pipeline_mode<synchronous>, transform_indices = @transform_0, window_bounds = array<i64: 2, 216, 128>}, {pipeline_mode = #tpu.pipeline_mode<synchronous>, transform_indices = @transform_1, window_bounds = array<i64: 3, 256, 126>}, {pipeline_mode = #tpu.pipeline_mode<synchronous>, transform_indices = @transform_2, window_bounds = array<i64: 280, 648>}, {pipeline_mode = #tpu.pipeline_mode<synchronous>, transform_indices = @transform_3, window_bounds = array<i64: 280, 1>}, {pipeline_mode = #tpu.pipeline_mode<synchronous>, transform_indices = @transform_4, window_bounds = array<i64: 16, 560>}, {pipeline_mode = #tpu.pipeline_mode<synchronous>, transform_indices = @transform_5, window_bounds = array<i64: 560, 16>}, {pipeline_mode = #tpu.pipeline_mode<synchronous>, transform_indices = @transform_6, window_bounds = array<i64: 8, 1>}, {pipeline_mode = #tpu.pipeline_mode<synchronous>, transform_indices = @transform_7, window_bounds = array<i64: 8, 1>}, {pipeline_mode = #tpu.pipeline_mode<synchronous>, transform_indices = @transform_8, window_bounds = array<i64: 3, 126, 62>}, {pipeline_mode = #tpu.pipeline_mode<synchronous>, transform_indices = @transform_9, window_bounds = array<i64: 136, 840>}, {pipeline_mode = #tpu.pipeline_mode<synchronous>, transform_indices = @transform_10, window_bounds = array<i64: 136, 1>}, {pipeline_mode = #tpu.pipeline_mode<synchronous>, transform_indices = @transform_11, window_bounds = array<i64: 16, 272>}, {pipeline_mode = #tpu.pipeline_mode<synchronous>, transform_indices = @transform_12, window_bounds = array<i64: 272, 16>}, {pipeline_mode = #tpu.pipeline_mode<synchronous>, transform_indices = @transform_13, window_bounds = array<i64: 8, 1>}, {pipeline_mode = #tpu.pipeline_mode<synchronous>, transform_indices = @transform_14, window_bounds = array<i64: 8, 1>}, {pipeline_mode = #tpu.pipeline_mode<synchronous>, transform_indices = @transform_15, window_bounds = array<i64: 3, 62, 54>}, {pipeline_mode = #tpu.pipeline_mode<synchronous>, transform_indices = @transform_16, window_bounds = array<i64: 104, 408>}, {pipeline_mode = #tpu.pipeline_mode<synchronous>, transform_indices = @transform_17, window_bounds = array<i64: 104, 1>}, {pipeline_mode = #tpu.pipeline_mode<synchronous>, transform_indices = @transform_18, window_bounds = array<i64: 16, 208>}, {pipeline_mode = #tpu.pipeline_mode<synchronous>, transform_indices = @transform_19, window_bounds = array<i64: 208, 16>}, {pipeline_mode = #tpu.pipeline_mode<synchronous>, transform_indices = @transform_20, window_bounds = array<i64: 8, 1>}, {pipeline_mode = #tpu.pipeline_mode<synchronous>, transform_indices = @transform_21, window_bounds = array<i64: 8, 1>}, {pipeline_mode = #tpu.pipeline_mode<synchronous>, transform_indices = @transform_22, window_bounds = array<i64: 3, 54, 42>}, {pipeline_mode = #tpu.pipeline_mode<synchronous>, transform_indices = @transform_23, window_bounds = array<i64: 56, 312>}, {pipeline_mode = #tpu.pipeline_mode<synchronous>, transform_indices = @transform_24, window_bounds = array<i64: 56, 1>}, {pipeline_mode = #tpu.pipeline_mode<synchronous>, transform_indices = @transform_25, window_bounds = array<i64: 16, 112>}, {pipeline_mode = #tpu.pipeline_mode<synchronous>, transform_indices = @transform_26, window_bounds = array<i64: 112, 16>}, {pipeline_mode = #tpu.pipeline_mode<synchronous>, transform_indices = @transform_27, window_bounds = array<i64: 8, 1>}, {pipeline_mode = #tpu.pipeline_mode<synchronous>, transform_indices = @transform_28, window_bounds = array<i64: 8, 1>}, {pipeline_mode = #tpu.pipeline_mode<synchronous>, transform_indices = @transform_29, window_bounds = array<i64: 3, 42, 34>}, {pipeline_mode = #tpu.pipeline_mode<synchronous>, transform_indices = @transform_30, window_bounds = array<i64: 24, 168>}, {pipeline_mode = #tpu.pipeline_mode<synchronous>, transform_indices = @transform_31, window_bounds = array<i64: 24, 1>}, {pipeline_mode = #tpu.pipeline_mode<synchronous>, transform_indices = @transform_32, window_bounds = array<i64: 16, 48>}, {pipeline_mode = #tpu.pipeline_mode<synchronous>, transform_indices = @transform_33, window_bounds = array<i64: 48, 16>}, {pipeline_mode = #tpu.pipeline_mode<synchronous>, transform_indices = @transform_34, window_bounds = array<i64: 8, 1>}, {pipeline_mode = #tpu.pipeline_mode<synchronous>, transform_indices = @transform_35, window_bounds = array<i64: 8, 1>}, {pipeline_mode = #tpu.pipeline_mode<synchronous>, transform_indices = @transform_36, window_bounds = array<i64: 408, 24>}, {pipeline_mode = #tpu.pipeline_mode<synchronous>, transform_indices = @transform_37, window_bounds = array<i64: 408, 34>}, {pipeline_mode = #tpu.pipeline_mode<synchronous>, transform_indices = @transform_38, window_bounds = array<i64: 34, 2>}, {pipeline_mode = #tpu.pipeline_mode<synchronous>, transform_indices = @transform_39, window_bounds = array<i64: 64, 408>}, {pipeline_mode = #tpu.pipeline_mode<synchronous>, transform_indices = @transform_40, window_bounds = array<i64: 64, 1>}, {pipeline_mode = #tpu.pipeline_mode<synchronous>, transform_indices = @transform_41, window_bounds = array<i64: 62, 64>}, {pipeline_mode = #tpu.pipeline_mode<synchronous>, transform_indices = @transform_42, window_bounds = array<i64: 62, 1>}, {pipeline_mode = #tpu.pipeline_mode<synchronous>, transform_indices = @transform_43, window_bounds = array<i64: 62, 2>}]} {
    %c0 = arith.constant 0 : index
    %c0_0 = arith.constant 0 : index
    %c0_1 = arith.constant 0 : index
    %0 = vector.load %arg1[%c0, %c0_0, %c0_1] : memref<2x216x128xf32, #tpu.memory_space<vmem>>, vector<1x216x128xf32>
    %1 = vector.shape_cast %0 : vector<1x216x128xf32> to vector<216x128xf32>
    %c1 = arith.constant 1 : index
    %c0_2 = arith.constant 0 : index
    %c0_3 = arith.constant 0 : index
    %2 = vector.load %arg1[%c1, %c0_2, %c0_3] : memref<2x216x128xf32, #tpu.memory_space<vmem>>, vector<1x216x128xf32>
    %3 = vector.shape_cast %2 : vector<1x216x128xf32> to vector<216x128xf32>
    %4 = tpu.concatenate %1, %3 in 1 : vector<216x128xf32>, vector<216x128xf32> -> vector<216x256xf32>
    %5 = arith.truncf %4 : vector<216x256xf32> to vector<216x256xbf16>
    %c0_4 = arith.constant 0 : index
    %c0_5 = arith.constant 0 : index
    %c0_6 = arith.constant 0 : index
    %6 = vector.load %arg2[%c0_4, %c0_5, %c0_6] : memref<3x256x126xbf16, #tpu.memory_space<vmem>>, vector<1x256x126xbf16>
    %7 = vector.shape_cast %6 : vector<1x256x126xbf16> to vector<256x126xbf16>
    %cst = arith.constant dense<0.000000e+00> : vector<216x126xf32>
    %8 = tpu.matmul %5, %7, %cst {dimension_numbers = #tpu.dot_dimension_numbers<[1], [0], [0], [1], [0, 0, 1, 1], [], []>} : vector<216x256xbf16>, vector<256x126xbf16>, vector<216x126xf32> -> vector<216x126xf32>
    %c1_7 = arith.constant 1 : index
    %c0_8 = arith.constant 0 : index
    %c0_9 = arith.constant 0 : index
    %9 = vector.load %arg2[%c1_7, %c0_8, %c0_9] : memref<3x256x126xbf16, #tpu.memory_space<vmem>>, vector<1x256x126xbf16>
    %10 = vector.shape_cast %9 : vector<1x256x126xbf16> to vector<256x126xbf16>
    %cst_10 = arith.constant dense<0.000000e+00> : vector<216x126xf32>
    %11 = tpu.matmul %5, %10, %cst_10 {dimension_numbers = #tpu.dot_dimension_numbers<[1], [0], [0], [1], [0, 0, 1, 1], [], []>} : vector<216x256xbf16>, vector<256x126xbf16>, vector<216x126xf32> -> vector<216x126xf32>
    %c2 = arith.constant 2 : index
    %c0_11 = arith.constant 0 : index
    %c0_12 = arith.constant 0 : index
    %12 = vector.load %arg2[%c2, %c0_11, %c0_12] : memref<3x256x126xbf16, #tpu.memory_space<vmem>>, vector<1x256x126xbf16>
    %13 = vector.shape_cast %12 : vector<1x256x126xbf16> to vector<256x126xbf16>
    %cst_13 = arith.constant dense<0.000000e+00> : vector<216x126xf32>
    %14 = tpu.matmul %5, %13, %cst_13 {dimension_numbers = #tpu.dot_dimension_numbers<[1], [0], [0], [1], [0, 0, 1, 1], [], []>} : vector<216x256xbf16>, vector<256x126xbf16>, vector<216x126xf32> -> vector<216x126xf32>
    %15 = tpu.concatenate %8, %11, %14 in 0 : vector<216x126xf32>, vector<216x126xf32>, vector<216x126xf32> -> vector<648x126xf32>
    %c0_14 = arith.constant 0 : index
    %c0_15 = arith.constant 0 : index
    %16 = vector.load %arg3[%c0_14, %c0_15] : memref<280x648xbf16, #tpu.memory_space<vmem>>, vector<280x648xbf16>
    %17 = arith.truncf %15 : vector<648x126xf32> to vector<648x126xbf16>
    %cst_16 = arith.constant dense<0.000000e+00> : vector<280x126xf32>
    %18 = tpu.matmul %16, %17, %cst_16 {dimension_numbers = #tpu.dot_dimension_numbers<[1], [0], [0], [1], [0, 0, 1, 1], [], []>} : vector<280x648xbf16>, vector<648x126xbf16>, vector<280x126xf32> -> vector<280x126xf32>
    %c0_17 = arith.constant 0 : index
    %c0_18 = arith.constant 0 : index
    %19 = vector.load %arg4[%c0_17, %c0_18] : memref<280x1xf32, #tpu.memory_space<vmem>>, vector<280x1xf32>
    %20 = vector.broadcast %19 : vector<280x1xf32> to vector<280x126xf32>
    %21 = arith.addf %18, %20 : vector<280x126xf32>
    %cst_19 = arith.constant 0.000000e+00 : f32
    %22 = vector.broadcast %cst_19 : f32 to vector<280x126xf32>
    %23 = arith.maximumf %21, %22 : vector<280x126xf32>
    %24 = arith.mulf %23, %23 : vector<280x126xf32>
    %25 = tpu.concatenate %23, %24 in 0 : vector<280x126xf32>, vector<280x126xf32> -> vector<560x126xf32>
    %cst_20 = arith.constant dense<0.000000e+00> : vector<560xf32>
    %26 = vector.multi_reduction <add>, %25, %cst_20 [1] : vector<560x126xf32> to vector<560xf32>
    %27 = vector.shape_cast %26 : vector<560xf32> to vector<560x1xf32>
    %c0_21 = arith.constant 0 : index
    %c0_22 = arith.constant 0 : index
    %28 = vector.load %arg5[%c0_21, %c0_22] : memref<16x560xf32, #tpu.memory_space<vmem>>, vector<16x560xf32>
    %cst_23 = arith.constant dense<0.000000e+00> : vector<16x1xf32>
    %29 = tpu.matmul %28, %27, %cst_23 {dimension_numbers = #tpu.dot_dimension_numbers<[1], [0], [0], [1], [0, 0, 1, 1], [], []>} : vector<16x560xf32>, vector<560x1xf32>, vector<16x1xf32> -> vector<16x1xf32>
    %30 = vector.extract_strided_slice %29 {offsets = [0, 0], sizes = [8, 1], strides = [1, 1]} : vector<16x1xf32> to vector<8x1xf32>
    %cst_24 = arith.constant 2.26757373E-4 : f32
    %31 = vector.broadcast %cst_24 : f32 to vector<8x1xf32>
    %32 = arith.mulf %30, %31 : vector<8x1xf32>
    %33 = vector.extract_strided_slice %29 {offsets = [8, 0], sizes = [8, 1], strides = [1, 1]} : vector<16x1xf32> to vector<8x1xf32>
    %cst_25 = arith.constant 2.26757373E-4 : f32
    %34 = vector.broadcast %cst_25 : f32 to vector<8x1xf32>
    %35 = arith.mulf %33, %34 : vector<8x1xf32>
    %36 = arith.mulf %32, %32 : vector<8x1xf32>
    %37 = arith.subf %35, %36 : vector<8x1xf32>
    %cst_26 = arith.constant 0.000000e+00 : f32
    %38 = vector.broadcast %cst_26 : f32 to vector<8x1xf32>
    %39 = arith.maximumf %37, %38 : vector<8x1xf32>
    %c0_27 = arith.constant 0 : index
    %c0_28 = arith.constant 0 : index
    %40 = vector.load %arg7[%c0_27, %c0_28] : memref<8x1xf32, #tpu.memory_space<vmem>>, vector<8x1xf32>
    %cst_29 = arith.constant 9.99999974E-6 : f32
    %41 = vector.broadcast %cst_29 : f32 to vector<8x1xf32>
    %42 = arith.addf %39, %41 : vector<8x1xf32>
    %43 = math.rsqrt %42 : vector<8x1xf32>
    %44 = arith.mulf %40, %43 : vector<8x1xf32>
    %c0_30 = arith.constant 0 : index
    %c0_31 = arith.constant 0 : index
    %45 = vector.load %arg8[%c0_30, %c0_31] : memref<8x1xf32, #tpu.memory_space<vmem>>, vector<8x1xf32>
    %46 = arith.mulf %32, %44 : vector<8x1xf32>
    %47 = arith.subf %45, %46 : vector<8x1xf32>
    %c0_32 = arith.constant 0 : index
    %c0_33 = arith.constant 0 : index
    %48 = vector.load %arg6[%c0_32, %c0_33] : memref<560x16xf32, #tpu.memory_space<vmem>>, vector<560x16xf32>
    %49 = tpu.concatenate %44, %47 in 0 : vector<8x1xf32>, vector<8x1xf32> -> vector<16x1xf32>
    %cst_34 = arith.constant dense<0.000000e+00> : vector<560x1xf32>
    %50 = tpu.matmul %48, %49, %cst_34 {dimension_numbers = #tpu.dot_dimension_numbers<[1], [0], [0], [1], [0, 0, 1, 1], [], []>} : vector<560x16xf32>, vector<16x1xf32>, vector<560x1xf32> -> vector<560x1xf32>
    %51 = vector.extract_strided_slice %50 {offsets = [0, 0], sizes = [280, 1], strides = [1, 1]} : vector<560x1xf32> to vector<280x1xf32>
    %52 = vector.broadcast %51 : vector<280x1xf32> to vector<280x126xf32>
    %53 = arith.mulf %23, %52 : vector<280x126xf32>
    %54 = vector.extract_strided_slice %50 {offsets = [280, 0], sizes = [280, 1], strides = [1, 1]} : vector<560x1xf32> to vector<280x1xf32>
    %55 = vector.broadcast %54 : vector<280x1xf32> to vector<280x126xf32>
    %56 = arith.addf %53, %55 : vector<280x126xf32>
    %57 = arith.truncf %56 : vector<280x126xf32> to vector<280x126xbf16>
    %c0_35 = arith.constant 0 : index
    %c0_36 = arith.constant 0 : index
    %c0_37 = arith.constant 0 : index
    %58 = vector.load %arg9[%c0_35, %c0_36, %c0_37] : memref<3x126x62xbf16, #tpu.memory_space<vmem>>, vector<1x126x62xbf16>
    %59 = vector.shape_cast %58 : vector<1x126x62xbf16> to vector<126x62xbf16>
    %cst_38 = arith.constant dense<0.000000e+00> : vector<280x62xf32>
    %60 = tpu.matmul %57, %59, %cst_38 {dimension_numbers = #tpu.dot_dimension_numbers<[1], [0], [0], [1], [0, 0, 1, 1], [], []>} : vector<280x126xbf16>, vector<126x62xbf16>, vector<280x62xf32> -> vector<280x62xf32>
    %c1_39 = arith.constant 1 : index
    %c0_40 = arith.constant 0 : index
    %c0_41 = arith.constant 0 : index
    %61 = vector.load %arg9[%c1_39, %c0_40, %c0_41] : memref<3x126x62xbf16, #tpu.memory_space<vmem>>, vector<1x126x62xbf16>
    %62 = vector.shape_cast %61 : vector<1x126x62xbf16> to vector<126x62xbf16>
    %cst_42 = arith.constant dense<0.000000e+00> : vector<280x62xf32>
    %63 = tpu.matmul %57, %62, %cst_42 {dimension_numbers = #tpu.dot_dimension_numbers<[1], [0], [0], [1], [0, 0, 1, 1], [], []>} : vector<280x126xbf16>, vector<126x62xbf16>, vector<280x62xf32> -> vector<280x62xf32>
    %c2_43 = arith.constant 2 : index
    %c0_44 = arith.constant 0 : index
    %c0_45 = arith.constant 0 : index
    %64 = vector.load %arg9[%c2_43, %c0_44, %c0_45] : memref<3x126x62xbf16, #tpu.memory_space<vmem>>, vector<1x126x62xbf16>
    %65 = vector.shape_cast %64 : vector<1x126x62xbf16> to vector<126x62xbf16>
    %cst_46 = arith.constant dense<0.000000e+00> : vector<280x62xf32>
    %66 = tpu.matmul %57, %65, %cst_46 {dimension_numbers = #tpu.dot_dimension_numbers<[1], [0], [0], [1], [0, 0, 1, 1], [], []>} : vector<280x126xbf16>, vector<126x62xbf16>, vector<280x62xf32> -> vector<280x62xf32>
    %67 = tpu.concatenate %60, %63, %66 in 0 : vector<280x62xf32>, vector<280x62xf32>, vector<280x62xf32> -> vector<840x62xf32>
    %c0_47 = arith.constant 0 : index
    %c0_48 = arith.constant 0 : index
    %68 = vector.load %arg10[%c0_47, %c0_48] : memref<136x840xbf16, #tpu.memory_space<vmem>>, vector<136x840xbf16>
    %69 = arith.truncf %67 : vector<840x62xf32> to vector<840x62xbf16>
    %cst_49 = arith.constant dense<0.000000e+00> : vector<136x62xf32>
    %70 = tpu.matmul %68, %69, %cst_49 {dimension_numbers = #tpu.dot_dimension_numbers<[1], [0], [0], [1], [0, 0, 1, 1], [], []>} : vector<136x840xbf16>, vector<840x62xbf16>, vector<136x62xf32> -> vector<136x62xf32>
    %c0_50 = arith.constant 0 : index
    %c0_51 = arith.constant 0 : index
    %71 = vector.load %arg11[%c0_50, %c0_51] : memref<136x1xf32, #tpu.memory_space<vmem>>, vector<136x1xf32>
    %72 = vector.broadcast %71 : vector<136x1xf32> to vector<136x62xf32>
    %73 = arith.addf %70, %72 : vector<136x62xf32>
    %cst_52 = arith.constant 0.000000e+00 : f32
    %74 = vector.broadcast %cst_52 : f32 to vector<136x62xf32>
    %75 = arith.maximumf %73, %74 : vector<136x62xf32>
    %76 = arith.mulf %75, %75 : vector<136x62xf32>
    %77 = tpu.concatenate %75, %76 in 0 : vector<136x62xf32>, vector<136x62xf32> -> vector<272x62xf32>
    %cst_53 = arith.constant dense<0.000000e+00> : vector<272xf32>
    %78 = vector.multi_reduction <add>, %77, %cst_53 [1] : vector<272x62xf32> to vector<272xf32>
    %79 = vector.shape_cast %78 : vector<272xf32> to vector<272x1xf32>
    %c0_54 = arith.constant 0 : index
    %c0_55 = arith.constant 0 : index
    %80 = vector.load %arg12[%c0_54, %c0_55] : memref<16x272xf32, #tpu.memory_space<vmem>>, vector<16x272xf32>
    %cst_56 = arith.constant dense<0.000000e+00> : vector<16x1xf32>
    %81 = tpu.matmul %80, %79, %cst_56 {dimension_numbers = #tpu.dot_dimension_numbers<[1], [0], [0], [1], [0, 0, 1, 1], [], []>} : vector<16x272xf32>, vector<272x1xf32>, vector<16x1xf32> -> vector<16x1xf32>
    %82 = vector.extract_strided_slice %81 {offsets = [0, 0], sizes = [8, 1], strides = [1, 1]} : vector<16x1xf32> to vector<8x1xf32>
    %cst_57 = arith.constant 9.48766595E-4 : f32
    %83 = vector.broadcast %cst_57 : f32 to vector<8x1xf32>
    %84 = arith.mulf %82, %83 : vector<8x1xf32>
    %85 = vector.extract_strided_slice %81 {offsets = [8, 0], sizes = [8, 1], strides = [1, 1]} : vector<16x1xf32> to vector<8x1xf32>
    %cst_58 = arith.constant 9.48766595E-4 : f32
    %86 = vector.broadcast %cst_58 : f32 to vector<8x1xf32>
    %87 = arith.mulf %85, %86 : vector<8x1xf32>
    %88 = arith.mulf %84, %84 : vector<8x1xf32>
    %89 = arith.subf %87, %88 : vector<8x1xf32>
    %cst_59 = arith.constant 0.000000e+00 : f32
    %90 = vector.broadcast %cst_59 : f32 to vector<8x1xf32>
    %91 = arith.maximumf %89, %90 : vector<8x1xf32>
    %c0_60 = arith.constant 0 : index
    %c0_61 = arith.constant 0 : index
    %92 = vector.load %arg14[%c0_60, %c0_61] : memref<8x1xf32, #tpu.memory_space<vmem>>, vector<8x1xf32>
    %cst_62 = arith.constant 9.99999974E-6 : f32
    %93 = vector.broadcast %cst_62 : f32 to vector<8x1xf32>
    %94 = arith.addf %91, %93 : vector<8x1xf32>
    %95 = math.rsqrt %94 : vector<8x1xf32>
    %96 = arith.mulf %92, %95 : vector<8x1xf32>
    %c0_63 = arith.constant 0 : index
    %c0_64 = arith.constant 0 : index
    %97 = vector.load %arg15[%c0_63, %c0_64] : memref<8x1xf32, #tpu.memory_space<vmem>>, vector<8x1xf32>
    %98 = arith.mulf %84, %96 : vector<8x1xf32>
    %99 = arith.subf %97, %98 : vector<8x1xf32>
    %c0_65 = arith.constant 0 : index
    %c0_66 = arith.constant 0 : index
    %100 = vector.load %arg13[%c0_65, %c0_66] : memref<272x16xf32, #tpu.memory_space<vmem>>, vector<272x16xf32>
    %101 = tpu.concatenate %96, %99 in 0 : vector<8x1xf32>, vector<8x1xf32> -> vector<16x1xf32>
    %cst_67 = arith.constant dense<0.000000e+00> : vector<272x1xf32>
    %102 = tpu.matmul %100, %101, %cst_67 {dimension_numbers = #tpu.dot_dimension_numbers<[1], [0], [0], [1], [0, 0, 1, 1], [], []>} : vector<272x16xf32>, vector<16x1xf32>, vector<272x1xf32> -> vector<272x1xf32>
    %103 = vector.extract_strided_slice %102 {offsets = [0, 0], sizes = [136, 1], strides = [1, 1]} : vector<272x1xf32> to vector<136x1xf32>
    %104 = vector.broadcast %103 : vector<136x1xf32> to vector<136x62xf32>
    %105 = arith.mulf %75, %104 : vector<136x62xf32>
    %106 = vector.extract_strided_slice %102 {offsets = [136, 0], sizes = [136, 1], strides = [1, 1]} : vector<272x1xf32> to vector<136x1xf32>
    %107 = vector.broadcast %106 : vector<136x1xf32> to vector<136x62xf32>
    %108 = arith.addf %105, %107 : vector<136x62xf32>
    %109 = arith.truncf %108 : vector<136x62xf32> to vector<136x62xbf16>
    %c0_68 = arith.constant 0 : index
    %c0_69 = arith.constant 0 : index
    %c0_70 = arith.constant 0 : index
    %110 = vector.load %arg16[%c0_68, %c0_69, %c0_70] : memref<3x62x54xbf16, #tpu.memory_space<vmem>>, vector<1x62x54xbf16>
    %111 = vector.shape_cast %110 : vector<1x62x54xbf16> to vector<62x54xbf16>
    %cst_71 = arith.constant dense<0.000000e+00> : vector<136x54xf32>
    %112 = tpu.matmul %109, %111, %cst_71 {dimension_numbers = #tpu.dot_dimension_numbers<[1], [0], [0], [1], [0, 0, 1, 1], [], []>} : vector<136x62xbf16>, vector<62x54xbf16>, vector<136x54xf32> -> vector<136x54xf32>
    %c1_72 = arith.constant 1 : index
    %c0_73 = arith.constant 0 : index
    %c0_74 = arith.constant 0 : index
    %113 = vector.load %arg16[%c1_72, %c0_73, %c0_74] : memref<3x62x54xbf16, #tpu.memory_space<vmem>>, vector<1x62x54xbf16>
    %114 = vector.shape_cast %113 : vector<1x62x54xbf16> to vector<62x54xbf16>
    %cst_75 = arith.constant dense<0.000000e+00> : vector<136x54xf32>
    %115 = tpu.matmul %109, %114, %cst_75 {dimension_numbers = #tpu.dot_dimension_numbers<[1], [0], [0], [1], [0, 0, 1, 1], [], []>} : vector<136x62xbf16>, vector<62x54xbf16>, vector<136x54xf32> -> vector<136x54xf32>
    %c2_76 = arith.constant 2 : index
    %c0_77 = arith.constant 0 : index
    %c0_78 = arith.constant 0 : index
    %116 = vector.load %arg16[%c2_76, %c0_77, %c0_78] : memref<3x62x54xbf16, #tpu.memory_space<vmem>>, vector<1x62x54xbf16>
    %117 = vector.shape_cast %116 : vector<1x62x54xbf16> to vector<62x54xbf16>
    %cst_79 = arith.constant dense<0.000000e+00> : vector<136x54xf32>
    %118 = tpu.matmul %109, %117, %cst_79 {dimension_numbers = #tpu.dot_dimension_numbers<[1], [0], [0], [1], [0, 0, 1, 1], [], []>} : vector<136x62xbf16>, vector<62x54xbf16>, vector<136x54xf32> -> vector<136x54xf32>
    %119 = tpu.concatenate %112, %115, %118 in 0 : vector<136x54xf32>, vector<136x54xf32>, vector<136x54xf32> -> vector<408x54xf32>
    %c0_80 = arith.constant 0 : index
    %c0_81 = arith.constant 0 : index
    %120 = vector.load %arg17[%c0_80, %c0_81] : memref<104x408xbf16, #tpu.memory_space<vmem>>, vector<104x408xbf16>
    %121 = arith.truncf %119 : vector<408x54xf32> to vector<408x54xbf16>
    %cst_82 = arith.constant dense<0.000000e+00> : vector<104x54xf32>
    %122 = tpu.matmul %120, %121, %cst_82 {dimension_numbers = #tpu.dot_dimension_numbers<[1], [0], [0], [1], [0, 0, 1, 1], [], []>} : vector<104x408xbf16>, vector<408x54xbf16>, vector<104x54xf32> -> vector<104x54xf32>
    %c0_83 = arith.constant 0 : index
    %c0_84 = arith.constant 0 : index
    %123 = vector.load %arg18[%c0_83, %c0_84] : memref<104x1xf32, #tpu.memory_space<vmem>>, vector<104x1xf32>
    %124 = vector.broadcast %123 : vector<104x1xf32> to vector<104x54xf32>
    %125 = arith.addf %122, %124 : vector<104x54xf32>
    %cst_85 = arith.constant 0.000000e+00 : f32
    %126 = vector.broadcast %cst_85 : f32 to vector<104x54xf32>
    %127 = arith.maximumf %125, %126 : vector<104x54xf32>
    %128 = arith.mulf %127, %127 : vector<104x54xf32>
    %129 = tpu.concatenate %127, %128 in 0 : vector<104x54xf32>, vector<104x54xf32> -> vector<208x54xf32>
    %cst_86 = arith.constant dense<0.000000e+00> : vector<208xf32>
    %130 = vector.multi_reduction <add>, %129, %cst_86 [1] : vector<208x54xf32> to vector<208xf32>
    %131 = vector.shape_cast %130 : vector<208xf32> to vector<208x1xf32>
    %c0_87 = arith.constant 0 : index
    %c0_88 = arith.constant 0 : index
    %132 = vector.load %arg19[%c0_87, %c0_88] : memref<16x208xf32, #tpu.memory_space<vmem>>, vector<16x208xf32>
    %cst_89 = arith.constant dense<0.000000e+00> : vector<16x1xf32>
    %133 = tpu.matmul %132, %131, %cst_89 {dimension_numbers = #tpu.dot_dimension_numbers<[1], [0], [0], [1], [0, 0, 1, 1], [], []>} : vector<16x208xf32>, vector<208x1xf32>, vector<16x1xf32> -> vector<16x1xf32>
    %134 = vector.extract_strided_slice %133 {offsets = [0, 0], sizes = [8, 1], strides = [1, 1]} : vector<16x1xf32> to vector<8x1xf32>
    %cst_90 = arith.constant 0.00142450142 : f32
    %135 = vector.broadcast %cst_90 : f32 to vector<8x1xf32>
    %136 = arith.mulf %134, %135 : vector<8x1xf32>
    %137 = vector.extract_strided_slice %133 {offsets = [8, 0], sizes = [8, 1], strides = [1, 1]} : vector<16x1xf32> to vector<8x1xf32>
    %cst_91 = arith.constant 0.00142450142 : f32
    %138 = vector.broadcast %cst_91 : f32 to vector<8x1xf32>
    %139 = arith.mulf %137, %138 : vector<8x1xf32>
    %140 = arith.mulf %136, %136 : vector<8x1xf32>
    %141 = arith.subf %139, %140 : vector<8x1xf32>
    %cst_92 = arith.constant 0.000000e+00 : f32
    %142 = vector.broadcast %cst_92 : f32 to vector<8x1xf32>
    %143 = arith.maximumf %141, %142 : vector<8x1xf32>
    %c0_93 = arith.constant 0 : index
    %c0_94 = arith.constant 0 : index
    %144 = vector.load %arg21[%c0_93, %c0_94] : memref<8x1xf32, #tpu.memory_space<vmem>>, vector<8x1xf32>
    %cst_95 = arith.constant 9.99999974E-6 : f32
    %145 = vector.broadcast %cst_95 : f32 to vector<8x1xf32>
    %146 = arith.addf %143, %145 : vector<8x1xf32>
    %147 = math.rsqrt %146 : vector<8x1xf32>
    %148 = arith.mulf %144, %147 : vector<8x1xf32>
    %c0_96 = arith.constant 0 : index
    %c0_97 = arith.constant 0 : index
    %149 = vector.load %arg22[%c0_96, %c0_97] : memref<8x1xf32, #tpu.memory_space<vmem>>, vector<8x1xf32>
    %150 = arith.mulf %136, %148 : vector<8x1xf32>
    %151 = arith.subf %149, %150 : vector<8x1xf32>
    %c0_98 = arith.constant 0 : index
    %c0_99 = arith.constant 0 : index
    %152 = vector.load %arg20[%c0_98, %c0_99] : memref<208x16xf32, #tpu.memory_space<vmem>>, vector<208x16xf32>
    %153 = tpu.concatenate %148, %151 in 0 : vector<8x1xf32>, vector<8x1xf32> -> vector<16x1xf32>
    %cst_100 = arith.constant dense<0.000000e+00> : vector<208x1xf32>
    %154 = tpu.matmul %152, %153, %cst_100 {dimension_numbers = #tpu.dot_dimension_numbers<[1], [0], [0], [1], [0, 0, 1, 1], [], []>} : vector<208x16xf32>, vector<16x1xf32>, vector<208x1xf32> -> vector<208x1xf32>
    %155 = vector.extract_strided_slice %154 {offsets = [0, 0], sizes = [104, 1], strides = [1, 1]} : vector<208x1xf32> to vector<104x1xf32>
    %156 = vector.broadcast %155 : vector<104x1xf32> to vector<104x54xf32>
    %157 = arith.mulf %127, %156 : vector<104x54xf32>
    %158 = vector.extract_strided_slice %154 {offsets = [104, 0], sizes = [104, 1], strides = [1, 1]} : vector<208x1xf32> to vector<104x1xf32>
    %159 = vector.broadcast %158 : vector<104x1xf32> to vector<104x54xf32>
    %160 = arith.addf %157, %159 : vector<104x54xf32>
    %161 = arith.truncf %160 : vector<104x54xf32> to vector<104x54xbf16>
    %c0_101 = arith.constant 0 : index
    %c0_102 = arith.constant 0 : index
    %c0_103 = arith.constant 0 : index
    %162 = vector.load %arg23[%c0_101, %c0_102, %c0_103] : memref<3x54x42xbf16, #tpu.memory_space<vmem>>, vector<1x54x42xbf16>
    %163 = vector.shape_cast %162 : vector<1x54x42xbf16> to vector<54x42xbf16>
    %cst_104 = arith.constant dense<0.000000e+00> : vector<104x42xf32>
    %164 = tpu.matmul %161, %163, %cst_104 {dimension_numbers = #tpu.dot_dimension_numbers<[1], [0], [0], [1], [0, 0, 1, 1], [], []>} : vector<104x54xbf16>, vector<54x42xbf16>, vector<104x42xf32> -> vector<104x42xf32>
    %c1_105 = arith.constant 1 : index
    %c0_106 = arith.constant 0 : index
    %c0_107 = arith.constant 0 : index
    %165 = vector.load %arg23[%c1_105, %c0_106, %c0_107] : memref<3x54x42xbf16, #tpu.memory_space<vmem>>, vector<1x54x42xbf16>
    %166 = vector.shape_cast %165 : vector<1x54x42xbf16> to vector<54x42xbf16>
    %cst_108 = arith.constant dense<0.000000e+00> : vector<104x42xf32>
    %167 = tpu.matmul %161, %166, %cst_108 {dimension_numbers = #tpu.dot_dimension_numbers<[1], [0], [0], [1], [0, 0, 1, 1], [], []>} : vector<104x54xbf16>, vector<54x42xbf16>, vector<104x42xf32> -> vector<104x42xf32>
    %c2_109 = arith.constant 2 : index
    %c0_110 = arith.constant 0 : index
    %c0_111 = arith.constant 0 : index
    %168 = vector.load %arg23[%c2_109, %c0_110, %c0_111] : memref<3x54x42xbf16, #tpu.memory_space<vmem>>, vector<1x54x42xbf16>
    %169 = vector.shape_cast %168 : vector<1x54x42xbf16> to vector<54x42xbf16>
    %cst_112 = arith.constant dense<0.000000e+00> : vector<104x42xf32>
    %170 = tpu.matmul %161, %169, %cst_112 {dimension_numbers = #tpu.dot_dimension_numbers<[1], [0], [0], [1], [0, 0, 1, 1], [], []>} : vector<104x54xbf16>, vector<54x42xbf16>, vector<104x42xf32> -> vector<104x42xf32>
    %171 = tpu.concatenate %164, %167, %170 in 0 : vector<104x42xf32>, vector<104x42xf32>, vector<104x42xf32> -> vector<312x42xf32>
    %c0_113 = arith.constant 0 : index
    %c0_114 = arith.constant 0 : index
    %172 = vector.load %arg24[%c0_113, %c0_114] : memref<56x312xbf16, #tpu.memory_space<vmem>>, vector<56x312xbf16>
    %173 = arith.truncf %171 : vector<312x42xf32> to vector<312x42xbf16>
    %cst_115 = arith.constant dense<0.000000e+00> : vector<56x42xf32>
    %174 = tpu.matmul %172, %173, %cst_115 {dimension_numbers = #tpu.dot_dimension_numbers<[1], [0], [0], [1], [0, 0, 1, 1], [], []>} : vector<56x312xbf16>, vector<312x42xbf16>, vector<56x42xf32> -> vector<56x42xf32>
    %c0_116 = arith.constant 0 : index
    %c0_117 = arith.constant 0 : index
    %175 = vector.load %arg25[%c0_116, %c0_117] : memref<56x1xf32, #tpu.memory_space<vmem>>, vector<56x1xf32>
    %176 = vector.broadcast %175 : vector<56x1xf32> to vector<56x42xf32>
    %177 = arith.addf %174, %176 : vector<56x42xf32>
    %cst_118 = arith.constant 0.000000e+00 : f32
    %178 = vector.broadcast %cst_118 : f32 to vector<56x42xf32>
    %179 = arith.maximumf %177, %178 : vector<56x42xf32>
    %180 = arith.mulf %179, %179 : vector<56x42xf32>
    %181 = tpu.concatenate %179, %180 in 0 : vector<56x42xf32>, vector<56x42xf32> -> vector<112x42xf32>
    %cst_119 = arith.constant dense<0.000000e+00> : vector<112xf32>
    %182 = vector.multi_reduction <add>, %181, %cst_119 [1] : vector<112x42xf32> to vector<112xf32>
    %183 = vector.shape_cast %182 : vector<112xf32> to vector<112x1xf32>
    %c0_120 = arith.constant 0 : index
    %c0_121 = arith.constant 0 : index
    %184 = vector.load %arg26[%c0_120, %c0_121] : memref<16x112xf32, #tpu.memory_space<vmem>>, vector<16x112xf32>
    %cst_122 = arith.constant dense<0.000000e+00> : vector<16x1xf32>
    %185 = tpu.matmul %184, %183, %cst_122 {dimension_numbers = #tpu.dot_dimension_numbers<[1], [0], [0], [1], [0, 0, 1, 1], [], []>} : vector<16x112xf32>, vector<112x1xf32>, vector<16x1xf32> -> vector<16x1xf32>
    %186 = vector.extract_strided_slice %185 {offsets = [0, 0], sizes = [8, 1], strides = [1, 1]} : vector<16x1xf32> to vector<8x1xf32>
    %cst_123 = arith.constant 0.00340136047 : f32
    %187 = vector.broadcast %cst_123 : f32 to vector<8x1xf32>
    %188 = arith.mulf %186, %187 : vector<8x1xf32>
    %189 = vector.extract_strided_slice %185 {offsets = [8, 0], sizes = [8, 1], strides = [1, 1]} : vector<16x1xf32> to vector<8x1xf32>
    %cst_124 = arith.constant 0.00340136047 : f32
    %190 = vector.broadcast %cst_124 : f32 to vector<8x1xf32>
    %191 = arith.mulf %189, %190 : vector<8x1xf32>
    %192 = arith.mulf %188, %188 : vector<8x1xf32>
    %193 = arith.subf %191, %192 : vector<8x1xf32>
    %cst_125 = arith.constant 0.000000e+00 : f32
    %194 = vector.broadcast %cst_125 : f32 to vector<8x1xf32>
    %195 = arith.maximumf %193, %194 : vector<8x1xf32>
    %c0_126 = arith.constant 0 : index
    %c0_127 = arith.constant 0 : index
    %196 = vector.load %arg28[%c0_126, %c0_127] : memref<8x1xf32, #tpu.memory_space<vmem>>, vector<8x1xf32>
    %cst_128 = arith.constant 9.99999974E-6 : f32
    %197 = vector.broadcast %cst_128 : f32 to vector<8x1xf32>
    %198 = arith.addf %195, %197 : vector<8x1xf32>
    %199 = math.rsqrt %198 : vector<8x1xf32>
    %200 = arith.mulf %196, %199 : vector<8x1xf32>
    %c0_129 = arith.constant 0 : index
    %c0_130 = arith.constant 0 : index
    %201 = vector.load %arg29[%c0_129, %c0_130] : memref<8x1xf32, #tpu.memory_space<vmem>>, vector<8x1xf32>
    %202 = arith.mulf %188, %200 : vector<8x1xf32>
    %203 = arith.subf %201, %202 : vector<8x1xf32>
    %c0_131 = arith.constant 0 : index
    %c0_132 = arith.constant 0 : index
    %204 = vector.load %arg27[%c0_131, %c0_132] : memref<112x16xf32, #tpu.memory_space<vmem>>, vector<112x16xf32>
    %205 = tpu.concatenate %200, %203 in 0 : vector<8x1xf32>, vector<8x1xf32> -> vector<16x1xf32>
    %cst_133 = arith.constant dense<0.000000e+00> : vector<112x1xf32>
    %206 = tpu.matmul %204, %205, %cst_133 {dimension_numbers = #tpu.dot_dimension_numbers<[1], [0], [0], [1], [0, 0, 1, 1], [], []>} : vector<112x16xf32>, vector<16x1xf32>, vector<112x1xf32> -> vector<112x1xf32>
    %207 = vector.extract_strided_slice %206 {offsets = [0, 0], sizes = [56, 1], strides = [1, 1]} : vector<112x1xf32> to vector<56x1xf32>
    %208 = vector.broadcast %207 : vector<56x1xf32> to vector<56x42xf32>
    %209 = arith.mulf %179, %208 : vector<56x42xf32>
    %210 = vector.extract_strided_slice %206 {offsets = [56, 0], sizes = [56, 1], strides = [1, 1]} : vector<112x1xf32> to vector<56x1xf32>
    %211 = vector.broadcast %210 : vector<56x1xf32> to vector<56x42xf32>
    %212 = arith.addf %209, %211 : vector<56x42xf32>
    %213 = arith.truncf %212 : vector<56x42xf32> to vector<56x42xbf16>
    %c0_134 = arith.constant 0 : index
    %c0_135 = arith.constant 0 : index
    %c0_136 = arith.constant 0 : index
    %214 = vector.load %arg30[%c0_134, %c0_135, %c0_136] : memref<3x42x34xbf16, #tpu.memory_space<vmem>>, vector<1x42x34xbf16>
    %215 = vector.shape_cast %214 : vector<1x42x34xbf16> to vector<42x34xbf16>
    %cst_137 = arith.constant dense<0.000000e+00> : vector<56x34xf32>
    %216 = tpu.matmul %213, %215, %cst_137 {dimension_numbers = #tpu.dot_dimension_numbers<[1], [0], [0], [1], [0, 0, 1, 1], [], []>} : vector<56x42xbf16>, vector<42x34xbf16>, vector<56x34xf32> -> vector<56x34xf32>
    %c1_138 = arith.constant 1 : index
    %c0_139 = arith.constant 0 : index
    %c0_140 = arith.constant 0 : index
    %217 = vector.load %arg30[%c1_138, %c0_139, %c0_140] : memref<3x42x34xbf16, #tpu.memory_space<vmem>>, vector<1x42x34xbf16>
    %218 = vector.shape_cast %217 : vector<1x42x34xbf16> to vector<42x34xbf16>
    %cst_141 = arith.constant dense<0.000000e+00> : vector<56x34xf32>
    %219 = tpu.matmul %213, %218, %cst_141 {dimension_numbers = #tpu.dot_dimension_numbers<[1], [0], [0], [1], [0, 0, 1, 1], [], []>} : vector<56x42xbf16>, vector<42x34xbf16>, vector<56x34xf32> -> vector<56x34xf32>
    %c2_142 = arith.constant 2 : index
    %c0_143 = arith.constant 0 : index
    %c0_144 = arith.constant 0 : index
    %220 = vector.load %arg30[%c2_142, %c0_143, %c0_144] : memref<3x42x34xbf16, #tpu.memory_space<vmem>>, vector<1x42x34xbf16>
    %221 = vector.shape_cast %220 : vector<1x42x34xbf16> to vector<42x34xbf16>
    %cst_145 = arith.constant dense<0.000000e+00> : vector<56x34xf32>
    %222 = tpu.matmul %213, %221, %cst_145 {dimension_numbers = #tpu.dot_dimension_numbers<[1], [0], [0], [1], [0, 0, 1, 1], [], []>} : vector<56x42xbf16>, vector<42x34xbf16>, vector<56x34xf32> -> vector<56x34xf32>
    %223 = tpu.concatenate %216, %219, %222 in 0 : vector<56x34xf32>, vector<56x34xf32>, vector<56x34xf32> -> vector<168x34xf32>
    %c0_146 = arith.constant 0 : index
    %c0_147 = arith.constant 0 : index
    %224 = vector.load %arg31[%c0_146, %c0_147] : memref<24x168xbf16, #tpu.memory_space<vmem>>, vector<24x168xbf16>
    %225 = arith.truncf %223 : vector<168x34xf32> to vector<168x34xbf16>
    %cst_148 = arith.constant dense<0.000000e+00> : vector<24x34xf32>
    %226 = tpu.matmul %224, %225, %cst_148 {dimension_numbers = #tpu.dot_dimension_numbers<[1], [0], [0], [1], [0, 0, 1, 1], [], []>} : vector<24x168xbf16>, vector<168x34xbf16>, vector<24x34xf32> -> vector<24x34xf32>
    %c0_149 = arith.constant 0 : index
    %c0_150 = arith.constant 0 : index
    %227 = vector.load %arg32[%c0_149, %c0_150] : memref<24x1xf32, #tpu.memory_space<vmem>>, vector<24x1xf32>
    %228 = vector.broadcast %227 : vector<24x1xf32> to vector<24x34xf32>
    %229 = arith.addf %226, %228 : vector<24x34xf32>
    %cst_151 = arith.constant 0.000000e+00 : f32
    %230 = vector.broadcast %cst_151 : f32 to vector<24x34xf32>
    %231 = arith.maximumf %229, %230 : vector<24x34xf32>
    %232 = arith.mulf %231, %231 : vector<24x34xf32>
    %233 = tpu.concatenate %231, %232 in 0 : vector<24x34xf32>, vector<24x34xf32> -> vector<48x34xf32>
    %cst_152 = arith.constant dense<0.000000e+00> : vector<48xf32>
    %234 = vector.multi_reduction <add>, %233, %cst_152 [1] : vector<48x34xf32> to vector<48xf32>
    %235 = vector.shape_cast %234 : vector<48xf32> to vector<48x1xf32>
    %c0_153 = arith.constant 0 : index
    %c0_154 = arith.constant 0 : index
    %236 = vector.load %arg33[%c0_153, %c0_154] : memref<16x48xf32, #tpu.memory_space<vmem>>, vector<16x48xf32>
    %cst_155 = arith.constant dense<0.000000e+00> : vector<16x1xf32>
    %237 = tpu.matmul %236, %235, %cst_155 {dimension_numbers = #tpu.dot_dimension_numbers<[1], [0], [0], [1], [0, 0, 1, 1], [], []>} : vector<16x48xf32>, vector<48x1xf32>, vector<16x1xf32> -> vector<16x1xf32>
    %238 = vector.extract_strided_slice %237 {offsets = [0, 0], sizes = [8, 1], strides = [1, 1]} : vector<16x1xf32> to vector<8x1xf32>
    %cst_156 = arith.constant 0.00980392192 : f32
    %239 = vector.broadcast %cst_156 : f32 to vector<8x1xf32>
    %240 = arith.mulf %238, %239 : vector<8x1xf32>
    %241 = vector.extract_strided_slice %237 {offsets = [8, 0], sizes = [8, 1], strides = [1, 1]} : vector<16x1xf32> to vector<8x1xf32>
    %cst_157 = arith.constant 0.00980392192 : f32
    %242 = vector.broadcast %cst_157 : f32 to vector<8x1xf32>
    %243 = arith.mulf %241, %242 : vector<8x1xf32>
    %244 = arith.mulf %240, %240 : vector<8x1xf32>
    %245 = arith.subf %243, %244 : vector<8x1xf32>
    %cst_158 = arith.constant 0.000000e+00 : f32
    %246 = vector.broadcast %cst_158 : f32 to vector<8x1xf32>
    %247 = arith.maximumf %245, %246 : vector<8x1xf32>
    %c0_159 = arith.constant 0 : index
    %c0_160 = arith.constant 0 : index
    %248 = vector.load %arg35[%c0_159, %c0_160] : memref<8x1xf32, #tpu.memory_space<vmem>>, vector<8x1xf32>
    %cst_161 = arith.constant 9.99999974E-6 : f32
    %249 = vector.broadcast %cst_161 : f32 to vector<8x1xf32>
    %250 = arith.addf %247, %249 : vector<8x1xf32>
    %251 = math.rsqrt %250 : vector<8x1xf32>
    %252 = arith.mulf %248, %251 : vector<8x1xf32>
    %c0_162 = arith.constant 0 : index
    %c0_163 = arith.constant 0 : index
    %253 = vector.load %arg36[%c0_162, %c0_163] : memref<8x1xf32, #tpu.memory_space<vmem>>, vector<8x1xf32>
    %254 = arith.mulf %240, %252 : vector<8x1xf32>
    %255 = arith.subf %253, %254 : vector<8x1xf32>
    %c0_164 = arith.constant 0 : index
    %c0_165 = arith.constant 0 : index
    %256 = vector.load %arg34[%c0_164, %c0_165] : memref<48x16xf32, #tpu.memory_space<vmem>>, vector<48x16xf32>
    %257 = tpu.concatenate %252, %255 in 0 : vector<8x1xf32>, vector<8x1xf32> -> vector<16x1xf32>
    %cst_166 = arith.constant dense<0.000000e+00> : vector<48x1xf32>
    %258 = tpu.matmul %256, %257, %cst_166 {dimension_numbers = #tpu.dot_dimension_numbers<[1], [0], [0], [1], [0, 0, 1, 1], [], []>} : vector<48x16xf32>, vector<16x1xf32>, vector<48x1xf32> -> vector<48x1xf32>
    %259 = vector.extract_strided_slice %258 {offsets = [0, 0], sizes = [24, 1], strides = [1, 1]} : vector<48x1xf32> to vector<24x1xf32>
    %260 = vector.broadcast %259 : vector<24x1xf32> to vector<24x34xf32>
    %261 = arith.mulf %231, %260 : vector<24x34xf32>
    %262 = vector.extract_strided_slice %258 {offsets = [24, 0], sizes = [24, 1], strides = [1, 1]} : vector<48x1xf32> to vector<24x1xf32>
    %263 = vector.broadcast %262 : vector<24x1xf32> to vector<24x34xf32>
    %264 = arith.addf %261, %263 : vector<24x34xf32>
    %265 = arith.truncf %264 : vector<24x34xf32> to vector<24x34xbf16>
    %c0_167 = arith.constant 0 : index
    %c0_168 = arith.constant 0 : index
    %266 = vector.load %arg37[%c0_167, %c0_168] : memref<408x24xbf16, #tpu.memory_space<vmem>>, vector<408x24xbf16>
    %cst_169 = arith.constant dense<0.000000e+00> : vector<408x34xf32>
    %267 = tpu.matmul %266, %265, %cst_169 {dimension_numbers = #tpu.dot_dimension_numbers<[1], [0], [0], [1], [0, 0, 1, 1], [], []>} : vector<408x24xbf16>, vector<24x34xbf16>, vector<408x34xf32> -> vector<408x34xf32>
    %c0_170 = arith.constant 0 : index
    %c0_171 = arith.constant 0 : index
    %268 = vector.load %arg38[%c0_170, %c0_171] : memref<408x34xf32, #tpu.memory_space<vmem>>, vector<408x34xf32>
    %269 = arith.mulf %267, %268 : vector<408x34xf32>
    %c0_172 = arith.constant 0 : index
    %c0_173 = arith.constant 0 : index
    %270 = vector.load %arg39[%c0_172, %c0_173] : memref<34x2xf32, #tpu.memory_space<vmem>>, vector<34x2xf32>
    %cst_174 = arith.constant dense<0.000000e+00> : vector<408x2xf32>
    %271 = tpu.matmul %269, %270, %cst_174 {dimension_numbers = #tpu.dot_dimension_numbers<[1], [0], [0], [1], [0, 0, 1, 1], [], []>} : vector<408x34xf32>, vector<34x2xf32>, vector<408x2xf32> -> vector<408x2xf32>
    %c0_175 = arith.constant 0 : index
    %c0_176 = arith.constant 0 : index
    %272 = vector.load %arg40[%c0_175, %c0_176] : memref<64x408xbf16, #tpu.memory_space<vmem>>, vector<64x408xbf16>
    %273 = arith.truncf %271 : vector<408x2xf32> to vector<408x2xbf16>
    %cst_177 = arith.constant dense<0.000000e+00> : vector<64x2xf32>
    %274 = tpu.matmul %272, %273, %cst_177 {dimension_numbers = #tpu.dot_dimension_numbers<[1], [0], [0], [1], [0, 0, 1, 1], [], []>} : vector<64x408xbf16>, vector<408x2xbf16>, vector<64x2xf32> -> vector<64x2xf32>
    %c0_178 = arith.constant 0 : index
    %c0_179 = arith.constant 0 : index
    %275 = vector.load %arg41[%c0_178, %c0_179] : memref<64x1xf32, #tpu.memory_space<vmem>>, vector<64x1xf32>
    %276 = vector.broadcast %275 : vector<64x1xf32> to vector<64x2xf32>
    %277 = arith.addf %274, %276 : vector<64x2xf32>
    %cst_180 = arith.constant 0.000000e+00 : f32
    %278 = vector.broadcast %cst_180 : f32 to vector<64x2xf32>
    %279 = arith.maximumf %277, %278 : vector<64x2xf32>
    %c0_181 = arith.constant 0 : index
    %c0_182 = arith.constant 0 : index
    %280 = vector.load %arg42[%c0_181, %c0_182] : memref<62x64xbf16, #tpu.memory_space<vmem>>, vector<62x64xbf16>
    %281 = arith.truncf %279 : vector<64x2xf32> to vector<64x2xbf16>
    %cst_183 = arith.constant dense<0.000000e+00> : vector<62x2xf32>
    %282 = tpu.matmul %280, %281, %cst_183 {dimension_numbers = #tpu.dot_dimension_numbers<[1], [0], [0], [1], [0, 0, 1, 1], [], []>} : vector<62x64xbf16>, vector<64x2xbf16>, vector<62x2xf32> -> vector<62x2xf32>
    %c0_184 = arith.constant 0 : index
    %c0_185 = arith.constant 0 : index
    %283 = vector.load %arg43[%c0_184, %c0_185] : memref<62x1xf32, #tpu.memory_space<vmem>>, vector<62x1xf32>
    %284 = vector.broadcast %283 : vector<62x1xf32> to vector<62x2xf32>
    %285 = arith.addf %282, %284 : vector<62x2xf32>
    %c0_186 = arith.constant 0 : index
    %c0_187 = arith.constant 0 : index
    %286 = vector.load %arg44[%c0_186, %c0_187] : memref<62x2xf32, #tpu.memory_space<vmem>>, vector<62x2xf32>
    tpu.vector_store %arg44[%c0_186, %c0_187], %285 {strides = array<i32>} : memref<62x2xf32, #tpu.memory_space<vmem>>, vector<62x2xf32>,
    return
  }
  func.func @transform_0(%arg0: i32) -> (i32, i32, i32) {
    %c0_i32 = arith.constant 0 : i32
    %c0_i32_0 = arith.constant 0 : i32
    %c0_i32_1 = arith.constant 0 : i32
    %c0_i32_2 = arith.constant 0 : i32
    return %c0_i32, %c0_i32_0, %c0_i32_1 : i32, i32, i32
  }
  func.func @transform_1(%arg0: i32) -> (i32, i32, i32) {
    %c0_i32 = arith.constant 0 : i32
    %c0_i32_0 = arith.constant 0 : i32
    %c0_i32_1 = arith.constant 0 : i32
    %c0_i32_2 = arith.constant 0 : i32
    return %c0_i32, %c0_i32_0, %c0_i32_1 : i32, i32, i32
  }
  func.func @transform_2(%arg0: i32) -> (i32, i32) {
    %c0_i32 = arith.constant 0 : i32
    %c0_i32_0 = arith.constant 0 : i32
    %c0_i32_1 = arith.constant 0 : i32
    return %c0_i32, %c0_i32_0 : i32, i32
  }
  func.func @transform_3(%arg0: i32) -> (i32, i32) {
    %c0_i32 = arith.constant 0 : i32
    %c0_i32_0 = arith.constant 0 : i32
    %c0_i32_1 = arith.constant 0 : i32
    return %c0_i32, %c0_i32_0 : i32, i32
  }
  func.func @transform_4(%arg0: i32) -> (i32, i32) {
    %c0_i32 = arith.constant 0 : i32
    %c0_i32_0 = arith.constant 0 : i32
    %c0_i32_1 = arith.constant 0 : i32
    return %c0_i32, %c0_i32_0 : i32, i32
  }
  func.func @transform_5(%arg0: i32) -> (i32, i32) {
    %c0_i32 = arith.constant 0 : i32
    %c0_i32_0 = arith.constant 0 : i32
    %c0_i32_1 = arith.constant 0 : i32
    return %c0_i32, %c0_i32_0 : i32, i32
  }
  func.func @transform_6(%arg0: i32) -> (i32, i32) {
    %c0_i32 = arith.constant 0 : i32
    %c0_i32_0 = arith.constant 0 : i32
    %c0_i32_1 = arith.constant 0 : i32
    return %c0_i32, %c0_i32_0 : i32, i32
  }
  func.func @transform_7(%arg0: i32) -> (i32, i32) {
    %c0_i32 = arith.constant 0 : i32
    %c0_i32_0 = arith.constant 0 : i32
    %c0_i32_1 = arith.constant 0 : i32
    return %c0_i32, %c0_i32_0 : i32, i32
  }
  func.func @transform_8(%arg0: i32) -> (i32, i32, i32) {
    %c0_i32 = arith.constant 0 : i32
    %c0_i32_0 = arith.constant 0 : i32
    %c0_i32_1 = arith.constant 0 : i32
    %c0_i32_2 = arith.constant 0 : i32
    return %c0_i32, %c0_i32_0, %c0_i32_1 : i32, i32, i32
  }
  func.func @transform_9(%arg0: i32) -> (i32, i32) {
    %c0_i32 = arith.constant 0 : i32
    %c0_i32_0 = arith.constant 0 : i32
    %c0_i32_1 = arith.constant 0 : i32
    return %c0_i32, %c0_i32_0 : i32, i32
  }
  func.func @transform_10(%arg0: i32) -> (i32, i32) {
    %c0_i32 = arith.constant 0 : i32
    %c0_i32_0 = arith.constant 0 : i32
    %c0_i32_1 = arith.constant 0 : i32
    return %c0_i32, %c0_i32_0 : i32, i32
  }
  func.func @transform_11(%arg0: i32) -> (i32, i32) {
    %c0_i32 = arith.constant 0 : i32
    %c0_i32_0 = arith.constant 0 : i32
    %c0_i32_1 = arith.constant 0 : i32
    return %c0_i32, %c0_i32_0 : i32, i32
  }
  func.func @transform_12(%arg0: i32) -> (i32, i32) {
    %c0_i32 = arith.constant 0 : i32
    %c0_i32_0 = arith.constant 0 : i32
    %c0_i32_1 = arith.constant 0 : i32
    return %c0_i32, %c0_i32_0 : i32, i32
  }
  func.func @transform_13(%arg0: i32) -> (i32, i32) {
    %c0_i32 = arith.constant 0 : i32
    %c0_i32_0 = arith.constant 0 : i32
    %c0_i32_1 = arith.constant 0 : i32
    return %c0_i32, %c0_i32_0 : i32, i32
  }
  func.func @transform_14(%arg0: i32) -> (i32, i32) {
    %c0_i32 = arith.constant 0 : i32
    %c0_i32_0 = arith.constant 0 : i32
    %c0_i32_1 = arith.constant 0 : i32
    return %c0_i32, %c0_i32_0 : i32, i32
  }
  func.func @transform_15(%arg0: i32) -> (i32, i32, i32) {
    %c0_i32 = arith.constant 0 : i32
    %c0_i32_0 = arith.constant 0 : i32
    %c0_i32_1 = arith.constant 0 : i32
    %c0_i32_2 = arith.constant 0 : i32
    return %c0_i32, %c0_i32_0, %c0_i32_1 : i32, i32, i32
  }
  func.func @transform_16(%arg0: i32) -> (i32, i32) {
    %c0_i32 = arith.constant 0 : i32
    %c0_i32_0 = arith.constant 0 : i32
    %c0_i32_1 = arith.constant 0 : i32
    return %c0_i32, %c0_i32_0 : i32, i32
  }
  func.func @transform_17(%arg0: i32) -> (i32, i32) {
    %c0_i32 = arith.constant 0 : i32
    %c0_i32_0 = arith.constant 0 : i32
    %c0_i32_1 = arith.constant 0 : i32
    return %c0_i32, %c0_i32_0 : i32, i32
  }
  func.func @transform_18(%arg0: i32) -> (i32, i32) {
    %c0_i32 = arith.constant 0 : i32
    %c0_i32_0 = arith.constant 0 : i32
    %c0_i32_1 = arith.constant 0 : i32
    return %c0_i32, %c0_i32_0 : i32, i32
  }
  func.func @transform_19(%arg0: i32) -> (i32, i32) {
    %c0_i32 = arith.constant 0 : i32
    %c0_i32_0 = arith.constant 0 : i32
    %c0_i32_1 = arith.constant 0 : i32
    return %c0_i32, %c0_i32_0 : i32, i32
  }
  func.func @transform_20(%arg0: i32) -> (i32, i32) {
    %c0_i32 = arith.constant 0 : i32
    %c0_i32_0 = arith.constant 0 : i32
    %c0_i32_1 = arith.constant 0 : i32
    return %c0_i32, %c0_i32_0 : i32, i32
  }
  func.func @transform_21(%arg0: i32) -> (i32, i32) {
    %c0_i32 = arith.constant 0 : i32
    %c0_i32_0 = arith.constant 0 : i32
    %c0_i32_1 = arith.constant 0 : i32
    return %c0_i32, %c0_i32_0 : i32, i32
  }
  func.func @transform_22(%arg0: i32) -> (i32, i32, i32) {
    %c0_i32 = arith.constant 0 : i32
    %c0_i32_0 = arith.constant 0 : i32
    %c0_i32_1 = arith.constant 0 : i32
    %c0_i32_2 = arith.constant 0 : i32
    return %c0_i32, %c0_i32_0, %c0_i32_1 : i32, i32, i32
  }
  func.func @transform_23(%arg0: i32) -> (i32, i32) {
    %c0_i32 = arith.constant 0 : i32
    %c0_i32_0 = arith.constant 0 : i32
    %c0_i32_1 = arith.constant 0 : i32
    return %c0_i32, %c0_i32_0 : i32, i32
  }
  func.func @transform_24(%arg0: i32) -> (i32, i32) {
    %c0_i32 = arith.constant 0 : i32
    %c0_i32_0 = arith.constant 0 : i32
    %c0_i32_1 = arith.constant 0 : i32
    return %c0_i32, %c0_i32_0 : i32, i32
  }
  func.func @transform_25(%arg0: i32) -> (i32, i32) {
    %c0_i32 = arith.constant 0 : i32
    %c0_i32_0 = arith.constant 0 : i32
    %c0_i32_1 = arith.constant 0 : i32
    return %c0_i32, %c0_i32_0 : i32, i32
  }
  func.func @transform_26(%arg0: i32) -> (i32, i32) {
    %c0_i32 = arith.constant 0 : i32
    %c0_i32_0 = arith.constant 0 : i32
    %c0_i32_1 = arith.constant 0 : i32
    return %c0_i32, %c0_i32_0 : i32, i32
  }
  func.func @transform_27(%arg0: i32) -> (i32, i32) {
    %c0_i32 = arith.constant 0 : i32
    %c0_i32_0 = arith.constant 0 : i32
    %c0_i32_1 = arith.constant 0 : i32
    return %c0_i32, %c0_i32_0 : i32, i32
  }
  func.func @transform_28(%arg0: i32) -> (i32, i32) {
    %c0_i32 = arith.constant 0 : i32
    %c0_i32_0 = arith.constant 0 : i32
    %c0_i32_1 = arith.constant 0 : i32
    return %c0_i32, %c0_i32_0 : i32, i32
  }
  func.func @transform_29(%arg0: i32) -> (i32, i32, i32) {
    %c0_i32 = arith.constant 0 : i32
    %c0_i32_0 = arith.constant 0 : i32
    %c0_i32_1 = arith.constant 0 : i32
    %c0_i32_2 = arith.constant 0 : i32
    return %c0_i32, %c0_i32_0, %c0_i32_1 : i32, i32, i32
  }
  func.func @transform_30(%arg0: i32) -> (i32, i32) {
    %c0_i32 = arith.constant 0 : i32
    %c0_i32_0 = arith.constant 0 : i32
    %c0_i32_1 = arith.constant 0 : i32
    return %c0_i32, %c0_i32_0 : i32, i32
  }
  func.func @transform_31(%arg0: i32) -> (i32, i32) {
    %c0_i32 = arith.constant 0 : i32
    %c0_i32_0 = arith.constant 0 : i32
    %c0_i32_1 = arith.constant 0 : i32
    return %c0_i32, %c0_i32_0 : i32, i32
  }
  func.func @transform_32(%arg0: i32) -> (i32, i32) {
    %c0_i32 = arith.constant 0 : i32
    %c0_i32_0 = arith.constant 0 : i32
    %c0_i32_1 = arith.constant 0 : i32
    return %c0_i32, %c0_i32_0 : i32, i32
  }
  func.func @transform_33(%arg0: i32) -> (i32, i32) {
    %c0_i32 = arith.constant 0 : i32
    %c0_i32_0 = arith.constant 0 : i32
    %c0_i32_1 = arith.constant 0 : i32
    return %c0_i32, %c0_i32_0 : i32, i32
  }
  func.func @transform_34(%arg0: i32) -> (i32, i32) {
    %c0_i32 = arith.constant 0 : i32
    %c0_i32_0 = arith.constant 0 : i32
    %c0_i32_1 = arith.constant 0 : i32
    return %c0_i32, %c0_i32_0 : i32, i32
  }
  func.func @transform_35(%arg0: i32) -> (i32, i32) {
    %c0_i32 = arith.constant 0 : i32
    %c0_i32_0 = arith.constant 0 : i32
    %c0_i32_1 = arith.constant 0 : i32
    return %c0_i32, %c0_i32_0 : i32, i32
  }
  func.func @transform_36(%arg0: i32) -> (i32, i32) {
    %c0_i32 = arith.constant 0 : i32
    %c0_i32_0 = arith.constant 0 : i32
    %c0_i32_1 = arith.constant 0 : i32
    return %c0_i32, %c0_i32_0 : i32, i32
  }
  func.func @transform_37(%arg0: i32) -> (i32, i32) {
    %c0_i32 = arith.constant 0 : i32
    %c0_i32_0 = arith.constant 0 : i32
    %c0_i32_1 = arith.constant 0 : i32
    return %c0_i32, %c0_i32_0 : i32, i32
  }
  func.func @transform_38(%arg0: i32) -> (i32, i32) {
    %c0_i32 = arith.constant 0 : i32
    %c0_i32_0 = arith.constant 0 : i32
    %c0_i32_1 = arith.constant 0 : i32
    return %c0_i32, %c0_i32_0 : i32, i32
  }
  func.func @transform_39(%arg0: i32) -> (i32, i32) {
    %c0_i32 = arith.constant 0 : i32
    %c0_i32_0 = arith.constant 0 : i32
    %c0_i32_1 = arith.constant 0 : i32
    return %c0_i32, %c0_i32_0 : i32, i32
  }
  func.func @transform_40(%arg0: i32) -> (i32, i32) {
    %c0_i32 = arith.constant 0 : i32
    %c0_i32_0 = arith.constant 0 : i32
    %c0_i32_1 = arith.constant 0 : i32
    return %c0_i32, %c0_i32_0 : i32, i32
  }
  func.func @transform_41(%arg0: i32) -> (i32, i32) {
    %c0_i32 = arith.constant 0 : i32
    %c0_i32_0 = arith.constant 0 : i32
    %c0_i32_1 = arith.constant 0 : i32
    return %c0_i32, %c0_i32_0 : i32, i32
  }
  func.func @transform_42(%arg0: i32) -> (i32, i32) {
    %c0_i32 = arith.constant 0 : i32
    %c0_i32_0 = arith.constant 0 : i32
    %c0_i32_1 = arith.constant 0 : i32
    return %c0_i32, %c0_i32_0 : i32, i32
  }
  func.func @transform_43(%arg0: i32) -> (i32, i32) {
    %c0_i32 = arith.constant 0 : i32
    %c0_i32_0 = arith.constant 0 : i32
    %c0_i32_1 = arith.constant 0 : i32
    return %c0_i32, %c0_i32_0 : i32, i32
  }
}

</mosaic_0001>

<llo_original>
// kernel: _forward.1
$region0: #{_forward.1}
  #allocation0 [shape = 'u32[]', space=smem, size = 0x4, offset = 0x4, fixed_abs, tag = 'smem constant byte address 0x4 - core index']
  #allocation1 [shape = 'u32[144,128]{1,0:T(1,128)}', space=vmem, size = 0x12000, scoped, tag = 'internal scratch']
  %s0 = inlined_call_operand.smem [shape: u32[44], index: -1, kind: input, shape index: {}]
  %s1 = sld [smem:[%s0]]
  %s2 = scalar_lea.smem %s0, 1
  %s3 = sld [smem:[%s2]]
  %s4 = scalar_lea.smem %s0, 2
  %s5 = sld [smem:[%s4]]
  %s6 = scalar_lea.smem %s0, 3
  %s7 = sld [smem:[%s6]]
  %s8 = scalar_lea.smem %s0, 4
  %s9 = sld [smem:[%s8]]
  %s10 = scalar_lea.smem %s0, 5
  %s11 = sld [smem:[%s10]]
  %s12 = scalar_lea.smem %s0, 6
  %s13 = sld [smem:[%s12]]
  %s14 = scalar_lea.smem %s0, 7
  %s15 = sld [smem:[%s14]]
  %s16 = scalar_lea.smem %s0, 8
  %s17 = sld [smem:[%s16]]
  %s18 = scalar_lea.smem %s0, 9
  %s19 = sld [smem:[%s18]]
  %s20 = scalar_lea.smem %s0, 10
  %s21 = sld [smem:[%s20]]
  %s22 = scalar_lea.smem %s0, 11
  %s23 = sld [smem:[%s22]]
  %s24 = scalar_lea.smem %s0, 12
  %s25 = sld [smem:[%s24]]
  %s26 = scalar_lea.smem %s0, 13
  %s27 = sld [smem:[%s26]]
  %s28 = scalar_lea.smem %s0, 14
  %s29 = sld [smem:[%s28]]
  %s30 = scalar_lea.smem %s0, 15
  %s31 = sld [smem:[%s30]]
  %s32 = scalar_lea.smem %s0, 16
  %s33 = sld [smem:[%s32]]
  %s34 = scalar_lea.smem %s0, 17
  %s35 = sld [smem:[%s34]]
  %s36 = scalar_lea.smem %s0, 18
  %s37 = sld [smem:[%s36]]
  %s38 = scalar_lea.smem %s0, 19
  %s39 = sld [smem:[%s38]]
  %s40 = scalar_lea.smem %s0, 20
  %s41 = sld [smem:[%s40]]
  %s42 = scalar_lea.smem %s0, 21
  %s43 = sld [smem:[%s42]]
  %s44 = scalar_lea.smem %s0, 22
  %s45 = sld [smem:[%s44]]
  %s46 = scalar_lea.smem %s0, 23
  %s47 = sld [smem:[%s46]]
  %s48 = scalar_lea.smem %s0, 24
  %s49 = sld [smem:[%s48]]
  %s50 = scalar_lea.smem %s0, 25
  %s51 = sld [smem:[%s50]]
  %s52 = scalar_lea.smem %s0, 26
  %s53 = sld [smem:[%s52]]
  %s54 = scalar_lea.smem %s0, 27
  %s55 = sld [smem:[%s54]]
  %s56 = scalar_lea.smem %s0, 28
  %s57 = sld [smem:[%s56]]
  %s58 = scalar_lea.smem %s0, 29
  %s59 = sld [smem:[%s58]]
  %s60 = scalar_lea.smem %s0, 30
  %s61 = sld [smem:[%s60]]
  %s62 = scalar_lea.smem %s0, 31
  %s63 = sld [smem:[%s62]]
  %s64 = scalar_lea.smem %s0, 32
  %s65 = sld [smem:[%s64]]
  %s66 = scalar_lea.smem %s0, 33
  %s67 = sld [smem:[%s66]]
  %s68 = scalar_lea.smem %s0, 34
  %s69 = sld [smem:[%s68]]
  %s70 = scalar_lea.smem %s0, 35
  %s71 = sld [smem:[%s70]]
  %s72 = scalar_lea.smem %s0, 36
  %s73 = sld [smem:[%s72]]
  %s74 = scalar_lea.smem %s0, 37
  %s75 = sld [smem:[%s74]]
  %s76 = scalar_lea.smem %s0, 38
  %s77 = sld [smem:[%s76]]
  %s78 = scalar_lea.smem %s0, 39
  %s79 = sld [smem:[%s78]]
  %s80 = scalar_lea.smem %s0, 40
  %s81 = sld [smem:[%s80]]
  %s82 = scalar_lea.smem %s0, 41
  %s83 = sld [smem:[%s82]]
  %s84 = scalar_lea.smem %s0, 42
  %s85 = sld [smem:[%s84]]
  %s86 = scalar_lea.smem %s0, 43
  %s87 = sld [smem:[%s86]]
  %s88 = sld [smem:[#allocation0]]
  $region182: #{_forward.1} parent=0
    _
  %s90 = ssub.s32 1, %s88
  %s91 = scalar_select 0, %s90, %s88
  // Predicated region
  $region2: #{_forward.1} parent=0 // pred_check
    _
  $region3: #{_forward.1} parent=0 // pred_check_branch
    %93 = sbr.rel (0) target = $region5
  $region4: #{_forward.1} parent=0 // pred_region
    _
  $region5: #{_forward.1} parent=0 // pred_fallthru
    _
  // Predicated region
  $region6: #{_forward.1} parent=0 // pred_check
    _
  $region7: #{_forward.1} parent=0 // pred_check_branch
    %95 = sbr.rel (0) target = $region9
  $region8: #{_forward.1} parent=0 // pred_region
    _
  $region9: #{_forward.1} parent=0 // pred_fallthru
    _
  // Predicated region
  $region10: #{_forward.1} parent=0 // pred_check
    _
  $region11: #{_forward.1} parent=0 // pred_check_branch
    %97 = sbr.rel (0) target = $region13
  $region12: #{_forward.1} parent=0 // pred_region
    _
  $region13: #{_forward.1} parent=0 // pred_fallthru
    _
  // Predicated region
  $region14: #{_forward.1} parent=0 // pred_check
    _
  $region15: #{_forward.1} parent=0 // pred_check_branch
    %99 = sbr.rel (0) target = $region17
  $region16: #{_forward.1} parent=0 // pred_region
    _
  $region17: #{_forward.1} parent=0 // pred_fallthru
    _
  // Predicated region
  $region18: #{_forward.1} parent=0 // pred_check
    _
  $region19: #{_forward.1} parent=0 // pred_check_branch
    %101 = sbr.rel (0) target = $region21
  $region20: #{_forward.1} parent=0 // pred_region
    _
  $region21: #{_forward.1} parent=0 // pred_fallthru
    _
  // Predicated region
  $region22: #{_forward.1} parent=0 // pred_check
    _
  $region23: #{_forward.1} parent=0 // pred_check_branch
    %103 = sbr.rel (0) target = $region25
  $region24: #{_forward.1} parent=0 // pred_region
    _
  $region25: #{_forward.1} parent=0 // pred_fallthru
    _
  // Predicated region
  $region26: #{_forward.1} parent=0 // pred_check
    _
  $region27: #{_forward.1} parent=0 // pred_check_branch
    %105 = sbr.rel (0) target = $region29
  $region28: #{_forward.1} parent=0 // pred_region
    _
  $region29: #{_forward.1} parent=0 // pred_fallthru
    _
  // Predicated region
  $region30: #{_forward.1} parent=0 // pred_check
    _
  $region31: #{_forward.1} parent=0 // pred_check_branch
    %107 = sbr.rel (0) target = $region33
  $region32: #{_forward.1} parent=0 // pred_region
    _
  $region33: #{_forward.1} parent=0 // pred_fallthru
    _
  // Predicated region
  $region34: #{_forward.1} parent=0 // pred_check
    _
  $region35: #{_forward.1} parent=0 // pred_check_branch
    %109 = sbr.rel (0) target = $region37
  $region36: #{_forward.1} parent=0 // pred_region
    _
  $region37: #{_forward.1} parent=0 // pred_fallthru
    _
  // Predicated region
  $region38: #{_forward.1} parent=0 // pred_check
    _
  $region39: #{_forward.1} parent=0 // pred_check_branch
    %111 = sbr.rel (0) target = $region41
  $region40: #{_forward.1} parent=0 // pred_region
    _
  $region41: #{_forward.1} parent=0 // pred_fallthru
    _
  // Predicated region
  $region42: #{_forward.1} parent=0 // pred_check
    _
  $region43: #{_forward.1} parent=0 // pred_check_branch
    %113 = sbr.rel (0) target = $region45
  $region44: #{_forward.1} parent=0 // pred_region
    _
  $region45: #{_forward.1} parent=0 // pred_fallthru
    _
  // Predicated region
  $region46: #{_forward.1} parent=0 // pred_check
    _
  $region47: #{_forward.1} parent=0 // pred_check_branch
    %115 = sbr.rel (0) target = $region49
  $region48: #{_forward.1} parent=0 // pred_region
    _
  $region49: #{_forward.1} parent=0 // pred_fallthru
    _
  // Predicated region
  $region50: #{_forward.1} parent=0 // pred_check
    _
  $region51: #{_forward.1} parent=0 // pred_check_branch
    %117 = sbr.rel (0) target = $region53
  $region52: #{_forward.1} parent=0 // pred_region
    _
  $region53: #{_forward.1} parent=0 // pred_fallthru
    _
  // Predicated region
  $region54: #{_forward.1} parent=0 // pred_check
    _
  $region55: #{_forward.1} parent=0 // pred_check_branch
    %119 = sbr.rel (0) target = $region57
  $region56: #{_forward.1} parent=0 // pred_region
    _
  $region57: #{_forward.1} parent=0 // pred_fallthru
    _
  // Predicated region
  $region58: #{_forward.1} parent=0 // pred_check
    _
  $region59: #{_forward.1} parent=0 // pred_check_branch
    %121 = sbr.rel (0) target = $region61
  $region60: #{_forward.1} parent=0 // pred_region
    _
  $region61: #{_forward.1} parent=0 // pred_fallthru
    _
  // Predicated region
  $region62: #{_forward.1} parent=0 // pred_check
    _
  $region63: #{_forward.1} parent=0 // pred_check_branch
    %123 = sbr.rel (0) target = $region65
  $region64: #{_forward.1} parent=0 // pred_region
    _
  $region65: #{_forward.1} parent=0 // pred_fallthru
    _
  // Predicated region
  $region66: #{_forward.1} parent=0 // pred_check
    _
  $region67: #{_forward.1} parent=0 // pred_check_branch
    %125 = sbr.rel (0) target = $region69
  $region68: #{_forward.1} parent=0 // pred_region
    _
  $region69: #{_forward.1} parent=0 // pred_fallthru
    _
  // Predicated region
  $region70: #{_forward.1} parent=0 // pred_check
    _
  $region71: #{_forward.1} parent=0 // pred_check_branch
    %127 = sbr.rel (0) target = $region73
  $region72: #{_forward.1} parent=0 // pred_region
    _
  $region73: #{_forward.1} parent=0 // pred_fallthru
    _
  // Predicated region
  $region74: #{_forward.1} parent=0 // pred_check
    _
  $region75: #{_forward.1} parent=0 // pred_check_branch
    %129 = sbr.rel (0) target = $region77
  $region76: #{_forward.1} parent=0 // pred_region
    _
  $region77: #{_forward.1} parent=0 // pred_fallthru
    _
  // Predicated region
  $region78: #{_forward.1} parent=0 // pred_check
    _
  $region79: #{_forward.1} parent=0 // pred_check_branch
    %131 = sbr.rel (0) target = $region81
  $region80: #{_forward.1} parent=0 // pred_region
    _
  $region81: #{_forward.1} parent=0 // pred_fallthru
    _
  // Predicated region
  $region82: #{_forward.1} parent=0 // pred_check
    _
  $region83: #{_forward.1} parent=0 // pred_check_branch
    %133 = sbr.rel (0) target = $region85
  $region84: #{_forward.1} parent=0 // pred_region
    _
  $region85: #{_forward.1} parent=0 // pred_fallthru
    _
  // Predicated region
  $region86: #{_forward.1} parent=0 // pred_check
    _
  $region87: #{_forward.1} parent=0 // pred_check_branch
    %135 = sbr.rel (0) target = $region89
  $region88: #{_forward.1} parent=0 // pred_region
    _
  $region89: #{_forward.1} parent=0 // pred_fallthru
    _
  // Predicated region
  $region90: #{_forward.1} parent=0 // pred_check
    _
  $region91: #{_forward.1} parent=0 // pred_check_branch
    %137 = sbr.rel (0) target = $region93
  $region92: #{_forward.1} parent=0 // pred_region
    _
  $region93: #{_forward.1} parent=0 // pred_fallthru
    _
  // Predicated region
  $region94: #{_forward.1} parent=0 // pred_check
    _
  $region95: #{_forward.1} parent=0 // pred_check_branch
    %139 = sbr.rel (0) target = $region97
  $region96: #{_forward.1} parent=0 // pred_region
    _
  $region97: #{_forward.1} parent=0 // pred_fallthru
    _
  // Predicated region
  $region98: #{_forward.1} parent=0 // pred_check
    _
  $region99: #{_forward.1} parent=0 // pred_check_branch
    %141 = sbr.rel (0) target = $region101
  $region100: #{_forward.1} parent=0 // pred_region
    _
  $region101: #{_forward.1} parent=0 // pred_fallthru
    _
  // Predicated region
  $region102: #{_forward.1} parent=0 // pred_check
    _
  $region103: #{_forward.1} parent=0 // pred_check_branch
    %143 = sbr.rel (0) target = $region105
  $region104: #{_forward.1} parent=0 // pred_region
    _
  $region105: #{_forward.1} parent=0 // pred_fallthru
    _
  // Predicated region
  $region106: #{_forward.1} parent=0 // pred_check
    _
  $region107: #{_forward.1} parent=0 // pred_check_branch
    %145 = sbr.rel (0) target = $region109
  $region108: #{_forward.1} parent=0 // pred_region
    _
  $region109: #{_forward.1} parent=0 // pred_fallthru
    _
  // Predicated region
  $region110: #{_forward.1} parent=0 // pred_check
    _
  $region111: #{_forward.1} parent=0 // pred_check_branch
    %147 = sbr.rel (0) target = $region113
  $region112: #{_forward.1} parent=0 // pred_region
    _
  $region113: #{_forward.1} parent=0 // pred_fallthru
    _
  // Predicated region
  $region114: #{_forward.1} parent=0 // pred_check
    _
  $region115: #{_forward.1} parent=0 // pred_check_branch
    %149 = sbr.rel (0) target = $region117
  $region116: #{_forward.1} parent=0 // pred_region
    _
  $region117: #{_forward.1} parent=0 // pred_fallthru
    _
  // Predicated region
  $region118: #{_forward.1} parent=0 // pred_check
    _
  $region119: #{_forward.1} parent=0 // pred_check_branch
    %151 = sbr.rel (0) target = $region121
  $region120: #{_forward.1} parent=0 // pred_region
    _
  $region121: #{_forward.1} parent=0 // pred_fallthru
    _
  // Predicated region
  $region122: #{_forward.1} parent=0 // pred_check
    _
  $region123: #{_forward.1} parent=0 // pred_check_branch
    %153 = sbr.rel (0) target = $region125
  $region124: #{_forward.1} parent=0 // pred_region
    _
  $region125: #{_forward.1} parent=0 // pred_fallthru
    _
  // Predicated region
  $region126: #{_forward.1} parent=0 // pred_check
    _
  $region127: #{_forward.1} parent=0 // pred_check_branch
    %155 = sbr.rel (0) target = $region129
  $region128: #{_forward.1} parent=0 // pred_region
    _
  $region129: #{_forward.1} parent=0 // pred_fallthru
    _
  // Predicated region
  $region130: #{_forward.1} parent=0 // pred_check
    _
  $region131: #{_forward.1} parent=0 // pred_check_branch
    %157 = sbr.rel (0) target = $region133
  $region132: #{_forward.1} parent=0 // pred_region
    _
  $region133: #{_forward.1} parent=0 // pred_fallthru
    _
  // Predicated region
  $region134: #{_forward.1} parent=0 // pred_check
    _
  $region135: #{_forward.1} parent=0 // pred_check_branch
    %159 = sbr.rel (0) target = $region137
  $region136: #{_forward.1} parent=0 // pred_region
    _
  $region137: #{_forward.1} parent=0 // pred_fallthru
    _
  // Predicated region
  $region138: #{_forward.1} parent=0 // pred_check
    _
  $region139: #{_forward.1} parent=0 // pred_check_branch
    %161 = sbr.rel (0) target = $region141
  $region140: #{_forward.1} parent=0 // pred_region
    _
  $region141: #{_forward.1} parent=0 // pred_fallthru
    _
  // Predicated region
  $region142: #{_forward.1} parent=0 // pred_check
    _
  $region143: #{_forward.1} parent=0 // pred_check_branch
    %163 = sbr.rel (0) target = $region145
  $region144: #{_forward.1} parent=0 // pred_region
    _
  $region145: #{_forward.1} parent=0 // pred_fallthru
    _
  // Predicated region
  $region146: #{_forward.1} parent=0 // pred_check
    _
  $region147: #{_forward.1} parent=0 // pred_check_branch
    %165 = sbr.rel (0) target = $region149
  $region148: #{_forward.1} parent=0 // pred_region
    _
  $region149: #{_forward.1} parent=0 // pred_fallthru
    _
  // Predicated region
  $region150: #{_forward.1} parent=0 // pred_check
    _
  $region151: #{_forward.1} parent=0 // pred_check_branch
    %167 = sbr.rel (0) target = $region153
  $region152: #{_forward.1} parent=0 // pred_region
    _
  $region153: #{_forward.1} parent=0 // pred_fallthru
    _
  // Predicated region
  $region154: #{_forward.1} parent=0 // pred_check
    _
  $region155: #{_forward.1} parent=0 // pred_check_branch
    %169 = sbr.rel (0) target = $region157
  $region156: #{_forward.1} parent=0 // pred_region
    _
  $region157: #{_forward.1} parent=0 // pred_fallthru
    _
  // Predicated region
  $region158: #{_forward.1} parent=0 // pred_check
    _
  $region159: #{_forward.1} parent=0 // pred_check_branch
    %171 = sbr.rel (0) target = $region161
  $region160: #{_forward.1} parent=0 // pred_region
    _
  $region161: #{_forward.1} parent=0 // pred_fallthru
    _
  // Predicated region
  $region162: #{_forward.1} parent=0 // pred_check
    _
  $region163: #{_forward.1} parent=0 // pred_check_branch
    %173 = sbr.rel (0) target = $region165
  $region164: #{_forward.1} parent=0 // pred_region
    _
  $region165: #{_forward.1} parent=0 // pred_fallthru
    _
  // Predicated region
  $region166: #{_forward.1} parent=0 // pred_check
    _
  $region167: #{_forward.1} parent=0 // pred_check_branch
    %175 = sbr.rel (0) target = $region169
  $region168: #{_forward.1} parent=0 // pred_region
    _
  $region169: #{_forward.1} parent=0 // pred_fallthru
    _
  // Predicated region
  $region170: #{_forward.1} parent=0 // pred_check
    _
  $region171: #{_forward.1} parent=0 // pred_check_branch
    %177 = sbr.rel (0) target = $region173
  $region172: #{_forward.1} parent=0 // pred_region
    _
  $region173: #{_forward.1} parent=0 // pred_fallthru
    _
  %v179 = vld [vmem:[%s1] sm:$0xff]
  %v180 = vld [vmem:[%s1 + $0x8] sm:$0xff]
  %v181 = vld [vmem:[%s1 + $0x10] sm:$0xff]
  %v182 = vld [vmem:[%s1 + $0x18] sm:$0xff]
  %v183 = vld [vmem:[%s1 + $0x20] sm:$0xff]
  %v184 = vld [vmem:[%s1 + $0x28] sm:$0xff]
  %v185 = vld [vmem:[%s1 + $0x30] sm:$0xff]
  %v186 = vld [vmem:[%s1 + $0x38] sm:$0xff]
  %v187 = vld [vmem:[%s1 + $0x40] sm:$0xff]
  %v188 = vld [vmem:[%s1 + $0x48] sm:$0xff]
  %v189 = vld [vmem:[%s1 + $0x50] sm:$0xff]
  %v190 = vld [vmem:[%s1 + $0x58] sm:$0xff]
  %v191 = vld [vmem:[%s1 + $0x60] sm:$0xff]
  %v192 = vld [vmem:[%s1 + $0x68] sm:$0xff]
  %v193 = vld [vmem:[%s1 + $0x70] sm:$0xff]
  %v194 = vld [vmem:[%s1 + $0x78] sm:$0xff]
  %v195 = vld [vmem:[%s1 + $0x80] sm:$0xff]
  %v196 = vld [vmem:[%s1 + $0x88] sm:$0xff]
  %v197 = vld [vmem:[%s1 + $0x90] sm:$0xff]
  %v198 = vld [vmem:[%s1 + $0x98] sm:$0xff]
  %v199 = vld [vmem:[%s1 + $0xa0] sm:$0xff]
  %v200 = vld [vmem:[%s1 + $0xa8] sm:$0xff]
  %v201 = vld [vmem:[%s1 + $0xb0] sm:$0xff]
  %v202 = vld [vmem:[%s1 + $0xb8] sm:$0xff]
  %v203 = vld [vmem:[%s1 + $0xc0] sm:$0xff]
  %v204 = vld [vmem:[%s1 + $0xc8] sm:$0xff]
  %v205 = vld [vmem:[%s1 + $0xd0] sm:$0xff]
  %s206 = scalar_lea.vmem %s1, 216
  %v207 = vld [vmem:[%s206] sm:$0xff]
  %v208 = vld [vmem:[%s206 + $0x8] sm:$0xff]
  %v209 = vld [vmem:[%s206 + $0x10] sm:$0xff]
  %v210 = vld [vmem:[%s206 + $0x18] sm:$0xff]
  %v211 = vld [vmem:[%s206 + $0x20] sm:$0xff]
  %v212 = vld [vmem:[%s206 + $0x28] sm:$0xff]
  %v213 = vld [vmem:[%s206 + $0x30] sm:$0xff]
  %v214 = vld [vmem:[%s206 + $0x38] sm:$0xff]
  %v215 = vld [vmem:[%s206 + $0x40] sm:$0xff]
  %v216 = vld [vmem:[%s206 + $0x48] sm:$0xff]
  %v217 = vld [vmem:[%s206 + $0x50] sm:$0xff]
  %v218 = vld [vmem:[%s206 + $0x58] sm:$0xff]
  %v219 = vld [vmem:[%s206 + $0x60] sm:$0xff]
  %v220 = vld [vmem:[%s206 + $0x68] sm:$0xff]
  %v221 = vld [vmem:[%s206 + $0x70] sm:$0xff]
  %v222 = vld [vmem:[%s206 + $0x78] sm:$0xff]
  %v223 = vld [vmem:[%s206 + $0x80] sm:$0xff]
  %v224 = vld [vmem:[%s206 + $0x88] sm:$0xff]
  %v225 = vld [vmem:[%s206 + $0x90] sm:$0xff]
  %v226 = vld [vmem:[%s206 + $0x98] sm:$0xff]
  %v227 = vld [vmem:[%s206 + $0xa0] sm:$0xff]
  %v228 = vld [vmem:[%s206 + $0xa8] sm:$0xff]
  %v229 = vld [vmem:[%s206 + $0xb0] sm:$0xff]
  %v230 = vld [vmem:[%s206 + $0xb8] sm:$0xff]
  %v231 = vld [vmem:[%s206 + $0xc0] sm:$0xff]
  %v232 = vld [vmem:[%s206 + $0xc8] sm:$0xff]
  %v233 = vld [vmem:[%s206 + $0xd0] sm:$0xff]
  %v234 = vpack.c.bf16 %v180, %v179
  %v235 = vpack.c.bf16 %v208, %v207
  %v236 = vpack.c.bf16 %v182, %v181
  %v237 = vpack.c.bf16 %v210, %v209
  %v238 = vpack.c.bf16 %v184, %v183
  %v239 = vpack.c.bf16 %v212, %v211
  %v240 = vpack.c.bf16 %v186, %v185
  %v241 = vpack.c.bf16 %v214, %v213
  %v242 = vpack.c.bf16 %v188, %v187
  %v243 = vpack.c.bf16 %v216, %v215
  %v244 = vpack.c.bf16 %v190, %v189
  %v245 = vpack.c.bf16 %v218, %v217
  %v246 = vpack.c.bf16 %v192, %v191
  %v247 = vpack.c.bf16 %v220, %v219
  %v248 = vpack.c.bf16 %v194, %v193
  %v249 = vpack.c.bf16 %v222, %v221
  %v250 = vpack.c.bf16 %v196, %v195
  %v251 = vpack.c.bf16 %v224, %v223
  %v252 = vpack.c.bf16 %v198, %v197
  %v253 = vpack.c.bf16 %v226, %v225
  %v254 = vpack.c.bf16 %v200, %v199
  %v255 = vpack.c.bf16 %v228, %v227
  %v256 = vpack.c.bf16 %v202, %v201
  %v257 = vpack.c.bf16 %v230, %v229
  %v258 = vpack.c.bf16 %v204, %v203
  %v259 = vpack.c.bf16 %v232, %v231
  %v260 = vpack.c.bf16 %v205, %v205
  %v261 = vpack.c.bf16 %v233, %v233
  %v262 = vld [vmem:[%s3] sm:$0xf]
  %v263 = vld [vmem:[%s3 + $0x4] sm:$0xf]
  %v264 = vld [vmem:[%s3 + $0x8] sm:$0xf]
  %v265 = vld [vmem:[%s3 + $0xc] sm:$0xf]
  %v266 = vld [vmem:[%s3 + $0x10] sm:$0xf]
  %v267 = vld [vmem:[%s3 + $0x14] sm:$0xf]
  %v268 = vld [vmem:[%s3 + $0x18] sm:$0xf]
  %v269 = vld [vmem:[%s3 + $0x1c] sm:$0xf]
  %v270 = vld [vmem:[%s3 + $0x20] sm:$0xf]
  %v271 = vld [vmem:[%s3 + $0x24] sm:$0xf]
  %v272 = vld [vmem:[%s3 + $0x28] sm:$0xf]
  %v273 = vld [vmem:[%s3 + $0x2c] sm:$0xf]
  %v274 = vld [vmem:[%s3 + $0x30] sm:$0xf]
  %v275 = vld [vmem:[%s3 + $0x34] sm:$0xf]
  %v276 = vld [vmem:[%s3 + $0x38] sm:$0xf]
  %v277 = vld [vmem:[%s3 + $0x3c] sm:$0xf]
  %v278 = vld [vmem:[%s3 + $0x40] sm:$0xf]
  %v279 = vld [vmem:[%s3 + $0x44] sm:$0xf]
  %v280 = vld [vmem:[%s3 + $0x48] sm:$0xf]
  %v281 = vld [vmem:[%s3 + $0x4c] sm:$0xf]
  %v282 = vld [vmem:[%s3 + $0x50] sm:$0xf]
  %v283 = vld [vmem:[%s3 + $0x54] sm:$0xf]
  %v284 = vld [vmem:[%s3 + $0x58] sm:$0xf]
  %v285 = vld [vmem:[%s3 + $0x5c] sm:$0xf]
  %v286 = vld [vmem:[%s3 + $0x60] sm:$0xf]
  %v287 = vld [vmem:[%s3 + $0x64] sm:$0xf]
  %v288 = vld [vmem:[%s3 + $0x68] sm:$0xf]
  %v289 = vld [vmem:[%s3 + $0x6c] sm:$0xf]
  %v290 = vld [vmem:[%s3 + $0x70] sm:$0xf]
  %v291 = vld [vmem:[%s3 + $0x74] sm:$0xf]
  %v292 = vld [vmem:[%s3 + $0x78] sm:$0xf]
  %v293 = vld [vmem:[%s3 + $0x7c] sm:$0xf]
  %v326 = vunpack.c.l.b16 %v262
  %v327 = vunpack.c.l.b16 %v263
  %v328 = vunpack.c.l.b16 %v264
  %v329 = vunpack.c.l.b16 %v265
  %v330 = vunpack.c.l.b16 %v266
  %v331 = vunpack.c.l.b16 %v267
  %v332 = vunpack.c.l.b16 %v268
  %v333 = vunpack.c.l.b16 %v269
  %v334 = vunpack.c.l.b16 %v270
  %v335 = vunpack.c.l.b16 %v271
  %v336 = vunpack.c.l.b16 %v272
  %v337 = vunpack.c.l.b16 %v273
  %v338 = vunpack.c.l.b16 %v274
  %v339 = vunpack.c.l.b16 %v275
  %v340 = vunpack.c.l.b16 %v276
  %v341 = vunpack.c.l.b16 %v277
  %v342 = vunpack.c.l.b16 %v278
  %v343 = vunpack.c.l.b16 %v279
  %v344 = vunpack.c.l.b16 %v280
  %v345 = vunpack.c.l.b16 %v281
  %v346 = vunpack.c.l.b16 %v282
  %v347 = vunpack.c.l.b16 %v283
  %v348 = vunpack.c.l.b16 %v284
  %v349 = vunpack.c.l.b16 %v285
  %v350 = vunpack.c.l.b16 %v286
  %v351 = vunpack.c.l.b16 %v287
  %v352 = vunpack.c.l.b16 %v288
  %v353 = vunpack.c.l.b16 %v289
  %v354 = vunpack.c.l.b16 %v290
  %v355 = vunpack.c.l.b16 %v291
  %v356 = vunpack.c.l.b16 %v292
  %v357 = vunpack.c.l.b16 %v293
  %v358 = vpack.c.b16 %v327, %v326
  %v359 = vpack.c.b16 %v329, %v328
  %v360 = vpack.c.b16 %v331, %v330
  %v361 = vpack.c.b16 %v333, %v332
  %v362 = vpack.c.b16 %v335, %v334
  %v363 = vpack.c.b16 %v337, %v336
  %v364 = vpack.c.b16 %v339, %v338
  %v365 = vpack.c.b16 %v341, %v340
  %v366 = vpack.c.b16 %v343, %v342
  %v367 = vpack.c.b16 %v345, %v344
  %v368 = vpack.c.b16 %v347, %v346
  %v369 = vpack.c.b16 %v349, %v348
  %v370 = vpack.c.b16 %v351, %v350
  %v371 = vpack.c.b16 %v353, %v352
  %v372 = vpack.c.b16 %v355, %v354
  %v373 = vpack.c.b16 %v357, %v356
  %390 = vmatprep.subr.bf16.mxu0 0
  %391 = vmatpush1.bf16.msra.mxu0 %v358
  %392 = vmatprep.subr.bf16.mxu0 0
  %393 = vmatpush1.bf16.msra.mxu0 %v359
  %394 = vmatprep.subr.bf16.mxu0 0
  %395 = vmatpush1.bf16.msra.mxu0 %v360
  %396 = vmatprep.subr.bf16.mxu0 0
  %397 = vmatpush1.bf16.msra.mxu0 %v361
  %398 = vmatprep.subr.bf16.mxu0 0
  %399 = vmatpush1.bf16.msra.mxu0 %v362
  %400 = vmatprep.subr.bf16.mxu0 0
  %401 = vmatpush1.bf16.msra.mxu0 %v363
  %402 = vmatprep.subr.bf16.mxu0 0
  %403 = vmatpush1.bf16.msra.mxu0 %v364
  %404 = vmatprep.subr.bf16.mxu0 0
  %405 = vmatpush1.bf16.msra.mxu0 %v365
  %406 = vmatprep.subr.bf16.mxu0 0
  %407 = vmatpush1.bf16.msra.mxu0 %v366
  %408 = vmatprep.subr.bf16.mxu0 0
  %409 = vmatpush1.bf16.msra.mxu0 %v367
  %410 = vmatprep.subr.bf16.mxu0 0
  %411 = vmatpush1.bf16.msra.mxu0 %v368
  %412 = vmatprep.subr.bf16.mxu0 0
  %413 = vmatpush1.bf16.msra.mxu0 %v369
  %414 = vmatprep.subr.bf16.mxu0 0
  %415 = vmatpush1.bf16.msra.mxu0 %v370
  %416 = vmatprep.subr.bf16.mxu0 0
  %417 = vmatpush1.bf16.msra.mxu0 %v371
  %418 = vmatprep.subr.bf16.mxu0 0
  %419 = vmatpush1.bf16.msra.mxu0 %v372
  %420 = vmatprep.subr.bf16.mxu0 0
  %421 = vmatpush1.bf16.msra.mxu0 %v373
  %422 = vmatprep.mubr.bf16.mxu0 %v235
  %423 = vmatmul.mubr.bf16.gmra.mrb[0].mxu0 %v234
  %v424 = vpop.f32.mrb[0].mxu0
  %v425 = vadd.f32 0.0, %v424
  %v426 = vpop.f32.mrb[0].mxu0
  %v427 = vpop.f32.mrb[0].mxu0
  %v428 = vadd.f32 0.0, %v427
  %v429 = vpop.f32.mrb[0].mxu0
  %430 = vmatprep.mubr.bf16.mxu0 %v237
  %431 = vmatmul.mubr.bf16.gmra.mrb[0].mxu0 %v236
  %v432 = vpop.f32.mrb[0].mxu0
  %v433 = vadd.f32 0.0, %v432
  %v434 = vpop.f32.mrb[0].mxu0
  %v435 = vpop.f32.mrb[0].mxu0
  %v436 = vadd.f32 0.0, %v435
  %v437 = vpop.f32.mrb[0].mxu0
  %438 = vmatprep.mubr.bf16.mxu0 %v239
  %439 = vmatmul.mubr.bf16.gmra.mrb[0].mxu0 %v238
  %v440 = vpop.f32.mrb[0].mxu0
  %v441 = vadd.f32 0.0, %v440
  %v442 = vpop.f32.mrb[0].mxu0
  %v443 = vpop.f32.mrb[0].mxu0
  %v444 = vadd.f32 0.0, %v443
  %v445 = vpop.f32.mrb[0].mxu0
  %446 = vmatprep.mubr.bf16.mxu0 %v241
  %447 = vmatmul.mubr.bf16.gmra.mrb[0].mxu0 %v240
  %v448 = vpop.f32.mrb[0].mxu0
  %v449 = vadd.f32 0.0, %v448
  %v450 = vpop.f32.mrb[0].mxu0
  %v451 = vpop.f32.mrb[0].mxu0
  %v452 = vadd.f32 0.0, %v451
  %v453 = vpop.f32.mrb[0].mxu0
  %454 = vmatprep.mubr.bf16.mxu0 %v243
  %455 = vmatmul.mubr.bf16.gmra.mrb[0].mxu0 %v242
  %v456 = vpop.f32.mrb[0].mxu0
  %v457 = vadd.f32 0.0, %v456
  %v458 = vpop.f32.mrb[0].mxu0
  %v459 = vpop.f32.mrb[0].mxu0
  %v460 = vadd.f32 0.0, %v459
  %v461 = vpop.f32.mrb[0].mxu0
  %462 = vmatprep.mubr.bf16.mxu0 %v245
  %463 = vmatmul.mubr.bf16.gmra.mrb[0].mxu0 %v244
  %v464 = vpop.f32.mrb[0].mxu0
  %v465 = vadd.f32 0.0, %v464
  %v466 = vpop.f32.mrb[0].mxu0
  %v467 = vpop.f32.mrb[0].mxu0
  %v468 = vadd.f32 0.0, %v467
  %v469 = vpop.f32.mrb[0].mxu0
  %470 = vmatprep.mubr.bf16.mxu0 %v247
  %471 = vmatmul.mubr.bf16.gmra.mrb[0].mxu0 %v246
  %v472 = vpop.f32.mrb[0].mxu0
  %v473 = vadd.f32 0.0, %v472
  %v474 = vpop.f32.mrb[0].mxu0
  %v475 = vpop.f32.mrb[0].mxu0
  %v476 = vadd.f32 0.0, %v475
  %v477 = vpop.f32.mrb[0].mxu0
  %478 = vmatprep.mubr.bf16.mxu0 %v249
  %479 = vmatmul.mubr.bf16.gmra.mrb[0].mxu0 %v248
  %v480 = vpop.f32.mrb[0].mxu0
  %v481 = vadd.f32 0.0, %v480
  %v482 = vpop.f32.mrb[0].mxu0
  %v483 = vpop.f32.mrb[0].mxu0
  %v484 = vadd.f32 0.0, %v483
  %v485 = vpop.f32.mrb[0].mxu0
  %486 = vmatprep.mubr.bf16.mxu0 %v251
  %487 = vmatmul.mubr.bf16.gmra.mrb[0].mxu0 %v250
  %v488 = vpop.f32.mrb[0].mxu0
  %v489 = vadd.f32 0.0, %v488
  %v490 = vpop.f32.mrb[0].mxu0
  %v491 = vpop.f32.mrb[0].mxu0
  %v492 = vadd.f32 0.0, %v491
  %v493 = vpop.f32.mrb[0].mxu0
  %494 = vmatprep.mubr.bf16.mxu0 %v253
  %495 = vmatmul.mubr.bf16.gmra.mrb[0].mxu0 %v252
  %v496 = vpop.f32.mrb[0].mxu0
  %v497 = vadd.f32 0.0, %v496
  %v498 = vpop.f32.mrb[0].mxu0
  %v499 = vpop.f32.mrb[0].mxu0
  %v500 = vadd.f32 0.0, %v499
  %v501 = vpop.f32.mrb[0].mxu0
  %502 = vmatprep.mubr.bf16.mxu0 %v255
  %503 = vmatmul.mubr.bf16.gmra.mrb[0].mxu0 %v254
  %v504 = vpop.f32.mrb[0].mxu0
  %v505 = vadd.f32 0.0, %v504
  %v506 = vpop.f32.mrb[0].mxu0
  %v507 = vpop.f32.mrb[0].mxu0
  %v508 = vadd.f32 0.0, %v507
  %v509 = vpop.f32.mrb[0].mxu0
  %510 = vmatprep.mubr.bf16.mxu0 %v257
  %511 = vmatmul.mubr.bf16.gmra.mrb[0].mxu0 %v256
  %v512 = vpop.f32.mrb[0].mxu0
  %v513 = vadd.f32 0.0, %v512
  %v514 = vpop.f32.mrb[0].mxu0
  %v515 = vpop.f32.mrb[0].mxu0
  %v516 = vadd.f32 0.0, %v515
  %v517 = vpop.f32.mrb[0].mxu0
  %518 = vmatprep.mubr.bf16.mxu0 %v259
  %519 = vmatmul.mubr.bf16.gmra.mrb[0].mxu0 %v258
  %v520 = vpop.f32.mrb[0].mxu0
  %v521 = vadd.f32 0.0, %v520
  %v522 = vpop.f32.mrb[0].mxu0
  %v523 = vpop.f32.mrb[0].mxu0
  %v524 = vadd.f32 0.0, %v523
  %v525 = vpop.f32.mrb[0].mxu0
  %526 = vmatprep.mubr.bf16.mxu0 %v261
  %527 = vmatmul.mubr.bf16.gmra.mrb[0].mxu0 %v260
  %v528 = vpop.f32.mrb[0].mxu0
  %v529 = vadd.f32 0.0, %v528
  %v530 = vpop.f32.mrb[0].mxu0
  %v531 = vpop.f32.mrb[0].mxu0
  %v532 = vpop.f32.mrb[0].mxu0
  %533 = vdwg.mxu0
  %s534 = scalar_lea.vmem %s3, 128
  %v535 = vld [vmem:[%s534] sm:$0xf]
  %v536 = vld [vmem:[%s534 + $0x4] sm:$0xf]
  %v537 = vld [vmem:[%s534 + $0x8] sm:$0xf]
  %v538 = vld [vmem:[%s534 + $0xc] sm:$0xf]
  %v539 = vld [vmem:[%s534 + $0x10] sm:$0xf]
  %v540 = vld [vmem:[%s534 + $0x14] sm:$0xf]
  %v541 = vld [vmem:[%s534 + $0x18] sm:$0xf]
  %v542 = vld [vmem:[%s534 + $0x1c] sm:$0xf]
  %v543 = vld [vmem:[%s534 + $0x20] sm:$0xf]
  %v544 = vld [vmem:[%s534 + $0x24] sm:$0xf]
  %v545 = vld [vmem:[%s534 + $0x28] sm:$0xf]
  %v546 = vld [vmem:[%s534 + $0x2c] sm:$0xf]
  %v547 = vld [vmem:[%s534 + $0x30] sm:$0xf]
  %v548 = vld [vmem:[%s534 + $0x34] sm:$0xf]
  %v549 = vld [vmem:[%s534 + $0x38] sm:$0xf]
  %v550 = vld [vmem:[%s534 + $0x3c] sm:$0xf]
  %v551 = vld [vmem:[%s534 + $0x40] sm:$0xf]
  %v552 = vld [vmem:[%s534 + $0x44] sm:$0xf]
  %v553 = vld [vmem:[%s534 + $0x48] sm:$0xf]
  %v554 = vld [vmem:[%s534 + $0x4c] sm:$0xf]
  %v555 = vld [vmem:[%s534 + $0x50] sm:$0xf]
  %v556 = vld [vmem:[%s534 + $0x54] sm:$0xf]
  %v557 = vld [vmem:[%s534 + $0x58] sm:$0xf]
  %v558 = vld [vmem:[%s534 + $0x5c] sm:$0xf]
  %v559 = vld [vmem:[%s534 + $0x60] sm:$0xf]
  %v560 = vld [vmem:[%s534 + $0x64] sm:$0xf]
  %v561 = vld [vmem:[%s534 + $0x68] sm:$0xf]
  %v562 = vld [vmem:[%s534 + $0x6c] sm:$0xf]
  %v563 = vld [vmem:[%s534 + $0x70] sm:$0xf]
  %v564 = vld [vmem:[%s534 + $0x74] sm:$0xf]
  %v565 = vld [vmem:[%s534 + $0x78] sm:$0xf]
  %v566 = vld [vmem:[%s534 + $0x7c] sm:$0xf]
  %v599 = vunpack.c.l.b16 %v535
  %v600 = vunpack.c.l.b16 %v536
  %v601 = vunpack.c.l.b16 %v537
  %v602 = vunpack.c.l.b16 %v538
  %v603 = vunpack.c.l.b16 %v539
  %v604 = vunpack.c.l.b16 %v540
  %v605 = vunpack.c.l.b16 %v541
  %v606 = vunpack.c.l.b16 %v542
  %v607 = vunpack.c.l.b16 %v543
  %v608 = vunpack.c.l.b16 %v544
  %v609 = vunpack.c.l.b16 %v545
  %v610 = vunpack.c.l.b16 %v546
  %v611 = vunpack.c.l.b16 %v547
  %v612 = vunpack.c.l.b16 %v548
  %v613 = vunpack.c.l.b16 %v549
  %v614 = vunpack.c.l.b16 %v550
  %v615 = vunpack.c.l.b16 %v551
  %v616 = vunpack.c.l.b16 %v552
  %v617 = vunpack.c.l.b16 %v553
  %v618 = vunpack.c.l.b16 %v554
  %v619 = vunpack.c.l.b16 %v555
  %v620 = vunpack.c.l.b16 %v556
  %v621 = vunpack.c.l.b16 %v557
  %v622 = vunpack.c.l.b16 %v558
  %v623 = vunpack.c.l.b16 %v559
  %v624 = vunpack.c.l.b16 %v560
  %v625 = vunpack.c.l.b16 %v561
  %v626 = vunpack.c.l.b16 %v562
  %v627 = vunpack.c.l.b16 %v563
  %v628 = vunpack.c.l.b16 %v564
  %v629 = vunpack.c.l.b16 %v565
  %v630 = vunpack.c.l.b16 %v566
  %v631 = vpack.c.b16 %v600, %v599
  %v632 = vpack.c.b16 %v602, %v601
  %v633 = vpack.c.b16 %v604, %v603
  %v634 = vpack.c.b16 %v606, %v605
  %v635 = vpack.c.b16 %v608, %v607
  %v636 = vpack.c.b16 %v610, %v609
  %v637 = vpack.c.b16 %v612, %v611
  %v638 = vpack.c.b16 %v614, %v613
  %v639 = vpack.c.b16 %v616, %v615
  %v640 = vpack.c.b16 %v618, %v617
  %v641 = vpack.c.b16 %v620, %v619
  %v642 = vpack.c.b16 %v622, %v621
  %v643 = vpack.c.b16 %v624, %v623
  %v644 = vpack.c.b16 %v626, %v625
  %v645 = vpack.c.b16 %v628, %v627
  %v646 = vpack.c.b16 %v630, %v629
  %663 = vmatprep.subr.bf16.mxu0 0
  %664 = vmatpush1.bf16.msra.mxu0 %v631
  %665 = vmatprep.subr.bf16.mxu0 0
  %666 = vmatpush1.bf16.msra.mxu0 %v632
  %667 = vmatprep.subr.bf16.mxu0 0
  %668 = vmatpush1.bf16.msra.mxu0 %v633
  %669 = vmatprep.subr.bf16.mxu0 0
  %670 = vmatpush1.bf16.msra.mxu0 %v634
  %671 = vmatprep.subr.bf16.mxu0 0
  %672 = vmatpush1.bf16.msra.mxu0 %v635
  %673 = vmatprep.subr.bf16.mxu0 0
  %674 = vmatpush1.bf16.msra.mxu0 %v636
  %675 = vmatprep.subr.bf16.mxu0 0
  %676 = vmatpush1.bf16.msra.mxu0 %v637
  %677 = vmatprep.subr.bf16.mxu0 0
  %678 = vmatpush1.bf16.msra.mxu0 %v638
  %679 = vmatprep.subr.bf16.mxu0 0
  %680 = vmatpush1.bf16.msra.mxu0 %v639
  %681 = vmatprep.subr.bf16.mxu0 0
  %682 = vmatpush1.bf16.msra.mxu0 %v640
  %683 = vmatprep.subr.bf16.mxu0 0
  %684 = vmatpush1.bf16.msra.mxu0 %v641
  %685 = vmatprep.subr.bf16.mxu0 0
  %686 = vmatpush1.bf16.msra.mxu0 %v642
  %687 = vmatprep.subr.bf16.mxu0 0
  %688 = vmatpush1.bf16.msra.mxu0 %v643
  %689 = vmatprep.subr.bf16.mxu0 0
  %690 = vmatpush1.bf16.msra.mxu0 %v644
  %691 = vmatprep.subr.bf16.mxu0 0
  %692 = vmatpush1.bf16.msra.mxu0 %v645
  %693 = vmatprep.subr.bf16.mxu0 0
  %694 = vmatpush1.bf16.msra.mxu0 %v646
  %695 = vmatprep.mubr.bf16.mxu0 %v235
  %696 = vmatmul.mubr.bf16.gmra.mrb[0].mxu0 %v234
  %v697 = vpop.f32.mrb[0].mxu0
  %v698 = vadd.f32 0.0, %v697
  %v699 = vpop.f32.mrb[0].mxu0
  %v700 = vpop.f32.mrb[0].mxu0
  %v701 = vadd.f32 0.0, %v700
  %v702 = vpop.f32.mrb[0].mxu0
  %703 = vmatprep.mubr.bf16.mxu0 %v237
  %704 = vmatmul.mubr.bf16.gmra.mrb[0].mxu0 %v236
  %v705 = vpop.f32.mrb[0].mxu0
  %v706 = vadd.f32 0.0, %v705
  %v707 = vpop.f32.mrb[0].mxu0
  %v708 = vpop.f32.mrb[0].mxu0
  %v709 = vadd.f32 0.0, %v708
  %v710 = vpop.f32.mrb[0].mxu0
  %711 = vmatprep.mubr.bf16.mxu0 %v239
  %712 = vmatmul.mubr.bf16.gmra.mrb[0].mxu0 %v238
  %v713 = vpop.f32.mrb[0].mxu0
  %v714 = vadd.f32 0.0, %v713
  %v715 = vpop.f32.mrb[0].mxu0
  %v716 = vpop.f32.mrb[0].mxu0
  %v717 = vadd.f32 0.0, %v716
  %v718 = vpop.f32.mrb[0].mxu0
  %719 = vmatprep.mubr.bf16.mxu0 %v241
  %720 = vmatmul.mubr.bf16.gmra.mrb[0].mxu0 %v240
  %v721 = vpop.f32.mrb[0].mxu0
  %v722 = vadd.f32 0.0, %v721
  %v723 = vpop.f32.mrb[0].mxu0
  %v724 = vpop.f32.mrb[0].mxu0
  %v725 = vadd.f32 0.0, %v724
  %v726 = vpop.f32.mrb[0].mxu0
  %727 = vmatprep.mubr.bf16.mxu0 %v243
  %728 = vmatmul.mubr.bf16.gmra.mrb[0].mxu0 %v242
  %v729 = vpop.f32.mrb[0].mxu0
  %v730 = vadd.f32 0.0, %v729
  %v731 = vpop.f32.mrb[0].mxu0
  %v732 = vpop.f32.mrb[0].mxu0
  %v733 = vadd.f32 0.0, %v732
  %v734 = vpop.f32.mrb[0].mxu0
  %735 = vmatprep.mubr.bf16.mxu0 %v245
  %736 = vmatmul.mubr.bf16.gmra.mrb[0].mxu0 %v244
  %v737 = vpop.f32.mrb[0].mxu0
  %v738 = vadd.f32 0.0, %v737
  %v739 = vpop.f32.mrb[0].mxu0
  %v740 = vpop.f32.mrb[0].mxu0
  %v741 = vadd.f32 0.0, %v740
  %v742 = vpop.f32.mrb[0].mxu0
  %743 = vmatprep.mubr.bf16.mxu0 %v247
  %744 = vmatmul.mubr.bf16.gmra.mrb[0].mxu0 %v246
  %v745 = vpop.f32.mrb[0].mxu0
  %v746 = vadd.f32 0.0, %v745
  %v747 = vpop.f32.mrb[0].mxu0
  %v748 = vpop.f32.mrb[0].mxu0
  %v749 = vadd.f32 0.0, %v748
  %v750 = vpop.f32.mrb[0].mxu0
  %751 = vmatprep.mubr.bf16.mxu0 %v249
  %752 = vmatmul.mubr.bf16.gmra.mrb[0].mxu0 %v248
  %v753 = vpop.f32.mrb[0].mxu0
  %v754 = vadd.f32 0.0, %v753
  %v755 = vpop.f32.mrb[0].mxu0
  %v756 = vpop.f32.mrb[0].mxu0
  %v757 = vadd.f32 0.0, %v756
  %v758 = vpop.f32.mrb[0].mxu0
  %759 = vmatprep.mubr.bf16.mxu0 %v251
  %760 = vmatmul.mubr.bf16.gmra.mrb[0].mxu0 %v250
  %v761 = vpop.f32.mrb[0].mxu0
  %v762 = vadd.f32 0.0, %v761
  %v763 = vpop.f32.mrb[0].mxu0
  %v764 = vpop.f32.mrb[0].mxu0
  %v765 = vadd.f32 0.0, %v764
  %v766 = vpop.f32.mrb[0].mxu0
  %767 = vmatprep.mubr.bf16.mxu0 %v253
  %768 = vmatmul.mubr.bf16.gmra.mrb[0].mxu0 %v252
  %v769 = vpop.f32.mrb[0].mxu0
  %v770 = vadd.f32 0.0, %v769
  %v771 = vpop.f32.mrb[0].mxu0
  %v772 = vpop.f32.mrb[0].mxu0
  %v773 = vadd.f32 0.0, %v772
  %v774 = vpop.f32.mrb[0].mxu0
  %775 = vmatprep.mubr.bf16.mxu0 %v255
  %776 = vmatmul.mubr.bf16.gmra.mrb[0].mxu0 %v254
  %v777 = vpop.f32.mrb[0].mxu0
  %v778 = vadd.f32 0.0, %v777
  %v779 = vpop.f32.mrb[0].mxu0
  %v780 = vpop.f32.mrb[0].mxu0
  %v781 = vadd.f32 0.0, %v780
  %v782 = vpop.f32.mrb[0].mxu0
  %783 = vmatprep.mubr.bf16.mxu0 %v257
  %784 = vmatmul.mubr.bf16.gmra.mrb[0].mxu0 %v256
  %v785 = vpop.f32.mrb[0].mxu0
  %v786 = vadd.f32 0.0, %v785
  %v787 = vpop.f32.mrb[0].mxu0
  %v788 = vpop.f32.mrb[0].mxu0
  %v789 = vadd.f32 0.0, %v788
  %v790 = vpop.f32.mrb[0].mxu0
  %791 = vmatprep.mubr.bf16.mxu0 %v259
  %792 = vmatmul.mubr.bf16.gmra.mrb[0].mxu0 %v258
  %v793 = vpop.f32.mrb[0].mxu0
  %v794 = vadd.f32 0.0, %v793
  %v795 = vpop.f32.mrb[0].mxu0
  %v796 = vpop.f32.mrb[0].mxu0
  %v797 = vadd.f32 0.0, %v796
  %v798 = vpop.f32.mrb[0].mxu0
  %799 = vmatprep.mubr.bf16.mxu0 %v261
  %800 = vmatmul.mubr.bf16.gmra.mrb[0].mxu0 %v260
  %v801 = vpop.f32.mrb[0].mxu0
  %v802 = vadd.f32 0.0, %v801
  %v803 = vpop.f32.mrb[0].mxu0
  %v804 = vpop.f32.mrb[0].mxu0
  %v805 = vpop.f32.mrb[0].mxu0
  %806 = vdwg.mxu0
  %s807 = scalar_lea.vmem %s3, 256
  %v808 = vld [vmem:[%s807] sm:$0xf]
  %v809 = vld [vmem:[%s807 + $0x4] sm:$0xf]
  %v810 = vld [vmem:[%s807 + $0x8] sm:$0xf]
  %v811 = vld [vmem:[%s807 + $0xc] sm:$0xf]
  %v812 = vld [vmem:[%s807 + $0x10] sm:$0xf]
  %v813 = vld [vmem:[%s807 + $0x14] sm:$0xf]
  %v814 = vld [vmem:[%s807 + $0x18] sm:$0xf]
  %v815 = vld [vmem:[%s807 + $0x1c] sm:$0xf]
  %v816 = vld [vmem:[%s807 + $0x20] sm:$0xf]
  %v817 = vld [vmem:[%s807 + $0x24] sm:$0xf]
  %v818 = vld [vmem:[%s807 + $0x28] sm:$0xf]
  %v819 = vld [vmem:[%s807 + $0x2c] sm:$0xf]
  %v820 = vld [vmem:[%s807 + $0x30] sm:$0xf]
  %v821 = vld [vmem:[%s807 + $0x34] sm:$0xf]
  %v822 = vld [vmem:[%s807 + $0x38] sm:$0xf]
  %v823 = vld [vmem:[%s807 + $0x3c] sm:$0xf]
  %v824 = vld [vmem:[%s807 + $0x40] sm:$0xf]
  %v825 = vld [vmem:[%s807 + $0x44] sm:$0xf]
  %v826 = vld [vmem:[%s807 + $0x48] sm:$0xf]
  %v827 = vld [vmem:[%s807 + $0x4c] sm:$0xf]
  %v828 = vld [vmem:[%s807 + $0x50] sm:$0xf]
  %v829 = vld [vmem:[%s807 + $0x54] sm:$0xf]
  %v830 = vld [vmem:[%s807 + $0x58] sm:$0xf]
  %v831 = vld [vmem:[%s807 + $0x5c] sm:$0xf]
  %v832 = vld [vmem:[%s807 + $0x60] sm:$0xf]
  %v833 = vld [vmem:[%s807 + $0x64] sm:$0xf]
  %v834 = vld [vmem:[%s807 + $0x68] sm:$0xf]
  %v835 = vld [vmem:[%s807 + $0x6c] sm:$0xf]
  %v836 = vld [vmem:[%s807 + $0x70] sm:$0xf]
  %v837 = vld [vmem:[%s807 + $0x74] sm:$0xf]
  %v838 = vld [vmem:[%s807 + $0x78] sm:$0xf]
  %v839 = vld [vmem:[%s807 + $0x7c] sm:$0xf]
  %v872 = vunpack.c.l.b16 %v808
  %v873 = vunpack.c.l.b16 %v809
  %v874 = vunpack.c.l.b16 %v810
  %v875 = vunpack.c.l.b16 %v811
  %v876 = vunpack.c.l.b16 %v812
  %v877 = vunpack.c.l.b16 %v813
  %v878 = vunpack.c.l.b16 %v814
  %v879 = vunpack.c.l.b16 %v815
  %v880 = vunpack.c.l.b16 %v816
  %v881 = vunpack.c.l.b16 %v817
  %v882 = vunpack.c.l.b16 %v818
  %v883 = vunpack.c.l.b16 %v819
  %v884 = vunpack.c.l.b16 %v820
  %v885 = vunpack.c.l.b16 %v821
  %v886 = vunpack.c.l.b16 %v822
  %v887 = vunpack.c.l.b16 %v823
  %v888 = vunpack.c.l.b16 %v824
  %v889 = vunpack.c.l.b16 %v825
  %v890 = vunpack.c.l.b16 %v826
  %v891 = vunpack.c.l.b16 %v827
  %v892 = vunpack.c.l.b16 %v828
  %v893 = vunpack.c.l.b16 %v829
  %v894 = vunpack.c.l.b16 %v830
  %v895 = vunpack.c.l.b16 %v831
  %v896 = vunpack.c.l.b16 %v832
  %v897 = vunpack.c.l.b16 %v833
  %v898 = vunpack.c.l.b16 %v834
  %v899 = vunpack.c.l.b16 %v835
  %v900 = vunpack.c.l.b16 %v836
  %v901 = vunpack.c.l.b16 %v837
  %v902 = vunpack.c.l.b16 %v838
  %v903 = vunpack.c.l.b16 %v839
  %v904 = vpack.c.b16 %v873, %v872
  %v905 = vpack.c.b16 %v875, %v874
  %v906 = vpack.c.b16 %v877, %v876
  %v907 = vpack.c.b16 %v879, %v878
  %v908 = vpack.c.b16 %v881, %v880
  %v909 = vpack.c.b16 %v883, %v882
  %v910 = vpack.c.b16 %v885, %v884
  %v911 = vpack.c.b16 %v887, %v886
  %v912 = vpack.c.b16 %v889, %v888
  %v913 = vpack.c.b16 %v891, %v890
  %v914 = vpack.c.b16 %v893, %v892
  %v915 = vpack.c.b16 %v895, %v894
  %v916 = vpack.c.b16 %v897, %v896
  %v917 = vpack.c.b16 %v899, %v898
  %v918 = vpack.c.b16 %v901, %v900
  %v919 = vpack.c.b16 %v903, %v902
  %936 = vmatprep.subr.bf16.mxu0 0
  %937 = vmatpush1.bf16.msra.mxu0 %v904
  %938 = vmatprep.subr.bf16.mxu0 0
  %939 = vmatpush1.bf16.msra.mxu0 %v905
  %940 = vmatprep.subr.bf16.mxu0 0
  %941 = vmatpush1.bf16.msra.mxu0 %v906
  %942 = vmatprep.subr.bf16.mxu0 0
  %943 = vmatpush1.bf16.msra.mxu0 %v907
  %944 = vmatprep.subr.bf16.mxu0 0
  %945 = vmatpush1.bf16.msra.mxu0 %v908
  %946 = vmatprep.subr.bf16.mxu0 0
  %947 = vmatpush1.bf16.msra.mxu0 %v909
  %948 = vmatprep.subr.bf16.mxu0 0
  %949 = vmatpush1.bf16.msra.mxu0 %v910
  %950 = vmatprep.subr.bf16.mxu0 0
  %951 = vmatpush1.bf16.msra.mxu0 %v911
  %952 = vmatprep.subr.bf16.mxu0 0
  %953 = vmatpush1.bf16.msra.mxu0 %v912
  %954 = vmatprep.subr.bf16.mxu0 0
  %955 = vmatpush1.bf16.msra.mxu0 %v913
  %956 = vmatprep.subr.bf16.mxu0 0
  %957 = vmatpush1.bf16.msra.mxu0 %v914
  %958 = vmatprep.subr.bf16.mxu0 0
  %959 = vmatpush1.bf16.msra.mxu0 %v915
  %960 = vmatprep.subr.bf16.mxu0 0
  %961 = vmatpush1.bf16.msra.mxu0 %v916
  %962 = vmatprep.subr.bf16.mxu0 0
  %963 = vmatpush1.bf16.msra.mxu0 %v917
  %964 = vmatprep.subr.bf16.mxu0 0
  %965 = vmatpush1.bf16.msra.mxu0 %v918
  %966 = vmatprep.subr.bf16.mxu0 0
  %967 = vmatpush1.bf16.msra.mxu0 %v919
  %968 = vmatprep.mubr.bf16.mxu0 %v235
  %969 = vmatmul.mubr.bf16.gmra.mrb[0].mxu0 %v234
  %v970 = vpop.f32.mrb[0].mxu0
  %v971 = vadd.f32 0.0, %v970
  %v972 = vpop.f32.mrb[0].mxu0
  %v973 = vpop.f32.mrb[0].mxu0
  %v974 = vadd.f32 0.0, %v973
  %v975 = vpop.f32.mrb[0].mxu0
  %976 = vmatprep.mubr.bf16.mxu0 %v237
  %977 = vmatmul.mubr.bf16.gmra.mrb[0].mxu0 %v236
  %v978 = vpop.f32.mrb[0].mxu0
  %v979 = vadd.f32 0.0, %v978
  %v980 = vpop.f32.mrb[0].mxu0
  %v981 = vpop.f32.mrb[0].mxu0
  %v982 = vadd.f32 0.0, %v981
  %v983 = vpop.f32.mrb[0].mxu0
  %984 = vmatprep.mubr.bf16.mxu0 %v239
  %985 = vmatmul.mubr.bf16.gmra.mrb[0].mxu0 %v238
  %v986 = vpop.f32.mrb[0].mxu0
  %v987 = vadd.f32 0.0, %v986
  %v988 = vpop.f32.mrb[0].mxu0
  %v989 = vpop.f32.mrb[0].mxu0
  %v990 = vadd.f32 0.0, %v989
  %v991 = vpop.f32.mrb[0].mxu0
  %992 = vmatprep.mubr.bf16.mxu0 %v241
  %993 = vmatmul.mubr.bf16.gmra.mrb[0].mxu0 %v240
  %v994 = vpop.f32.mrb[0].mxu0
  %v995 = vadd.f32 0.0, %v994
  %v996 = vpop.f32.mrb[0].mxu0
  %v997 = vpop.f32.mrb[0].mxu0
  %v998 = vadd.f32 0.0, %v997
  %v999 = vpop.f32.mrb[0].mxu0
  %1000 = vmatprep.mubr.bf16.mxu0 %v243
  %1001 = vmatmul.mubr.bf16.gmra.mrb[0].mxu0 %v242
  %v1002 = vpop.f32.mrb[0].mxu0
  %v1003 = vadd.f32 0.0, %v1002
  %v1004 = vpop.f32.mrb[0].mxu0
  %v1005 = vpop.f32.mrb[0].mxu0
  %v1006 = vadd.f32 0.0, %v1005
  %v1007 = vpop.f32.mrb[0].mxu0
  %1008 = vmatprep.mubr.bf16.mxu0 %v245
  %1009 = vmatmul.mubr.bf16.gmra.mrb[0].mxu0 %v244
  %v1010 = vpop.f32.mrb[0].mxu0
  %v1011 = vadd.f32 0.0, %v1010
  %v1012 = vpop.f32.mrb[0].mxu0
  %v1013 = vpop.f32.mrb[0].mxu0
  %v1014 = vadd.f32 0.0, %v1013
  %v1015 = vpop.f32.mrb[0].mxu0
  %1016 = vmatprep.mubr.bf16.mxu0 %v247
  %1017 = vmatmul.mubr.bf16.gmra.mrb[0].mxu0 %v246
  %v1018 = vpop.f32.mrb[0].mxu0
  %v1019 = vadd.f32 0.0, %v1018
  %v1020 = vpop.f32.mrb[0].mxu0
  %v1021 = vpop.f32.mrb[0].mxu0
  %v1022 = vadd.f32 0.0, %v1021
  %v1023 = vpop.f32.mrb[0].mxu0
  %1024 = vmatprep.mubr.bf16.mxu0 %v249
  %1025 = vmatmul.mubr.bf16.gmra.mrb[0].mxu0 %v248
  %v1026 = vpop.f32.mrb[0].mxu0
  %v1027 = vadd.f32 0.0, %v1026
  %v1028 = vpop.f32.mrb[0].mxu0
  %v1029 = vpop.f32.mrb[0].mxu0
  %v1030 = vadd.f32 0.0, %v1029
  %v1031 = vpop.f32.mrb[0].mxu0
  %1032 = vmatprep.mubr.bf16.mxu0 %v251
  %1033 = vmatmul.mubr.bf16.gmra.mrb[0].mxu0 %v250
  %v1034 = vpop.f32.mrb[0].mxu0
  %v1035 = vadd.f32 0.0, %v1034
  %v1036 = vpop.f32.mrb[0].mxu0
  %v1037 = vpop.f32.mrb[0].mxu0
  %v1038 = vadd.f32 0.0, %v1037
  %v1039 = vpop.f32.mrb[0].mxu0
  %1040 = vmatprep.mubr.bf16.mxu0 %v253
  %1041 = vmatmul.mubr.bf16.gmra.mrb[0].mxu0 %v252
  %v1042 = vpop.f32.mrb[0].mxu0
  %v1043 = vadd.f32 0.0, %v1042
  %v1044 = vpop.f32.mrb[0].mxu0
  %v1045 = vpop.f32.mrb[0].mxu0
  %v1046 = vadd.f32 0.0, %v1045
  %v1047 = vpop.f32.mrb[0].mxu0
  %1048 = vmatprep.mubr.bf16.mxu0 %v255
  %1049 = vmatmul.mubr.bf16.gmra.mrb[0].mxu0 %v254
  %v1050 = vpop.f32.mrb[0].mxu0
  %v1051 = vadd.f32 0.0, %v1050
  %v1052 = vpop.f32.mrb[0].mxu0
  %v1053 = vpop.f32.mrb[0].mxu0
  %v1054 = vadd.f32 0.0, %v1053
  %v1055 = vpop.f32.mrb[0].mxu0
  %1056 = vmatprep.mubr.bf16.mxu0 %v257
  %1057 = vmatmul.mubr.bf16.gmra.mrb[0].mxu0 %v256
  %v1058 = vpop.f32.mrb[0].mxu0
  %v1059 = vadd.f32 0.0, %v1058
  %v1060 = vpop.f32.mrb[0].mxu0
  %v1061 = vpop.f32.mrb[0].mxu0
  %v1062 = vadd.f32 0.0, %v1061
  %v1063 = vpop.f32.mrb[0].mxu0
  %1064 = vmatprep.mubr.bf16.mxu0 %v259
  %1065 = vmatmul.mubr.bf16.gmra.mrb[0].mxu0 %v258
  %v1066 = vpop.f32.mrb[0].mxu0
  %v1067 = vadd.f32 0.0, %v1066
  %v1068 = vpop.f32.mrb[0].mxu0
  %v1069 = vpop.f32.mrb[0].mxu0
  %v1070 = vadd.f32 0.0, %v1069
  %v1071 = vpop.f32.mrb[0].mxu0
  %1072 = vmatprep.mubr.bf16.mxu0 %v261
  %1073 = vmatmul.mubr.bf16.gmra.mrb[0].mxu0 %v260
  %v1074 = vpop.f32.mrb[0].mxu0
  %v1075 = vadd.f32 0.0, %v1074
  %v1076 = vpop.f32.mrb[0].mxu0
  %v1077 = vpop.f32.mrb[0].mxu0
  %v1078 = vpop.f32.mrb[0].mxu0
  %1079 = vdwg.mxu0
  %v1080 = vld [vmem:[%s5] sm:$0xff]
  %v1081 = vld [vmem:[%s5 + $0x8] sm:$0xff]
  %v1082 = vld [vmem:[%s5 + $0x10] sm:$0xff]
  %v1083 = vld [vmem:[%s5 + $0x18] sm:$0xff]
  %v1084 = vld [vmem:[%s5 + $0x20] sm:$0xff]
  %v1085 = vld [vmem:[%s5 + $0x28] sm:$0xff]
  %v1086 = vld [vmem:[%s5 + $0x30] sm:$0xff]
  %v1087 = vld [vmem:[%s5 + $0x38] sm:$0xff]
  %v1088 = vld [vmem:[%s5 + $0x40] sm:$0xff]
  %v1089 = vld [vmem:[%s5 + $0x48] sm:$0xff]
  %v1090 = vld [vmem:[%s5 + $0x50] sm:$0xff]
  %v1091 = vld [vmem:[%s5 + $0x58] sm:$0xff]
  %v1092 = vld [vmem:[%s5 + $0x60] sm:$0xff]
  %v1093 = vld [vmem:[%s5 + $0x68] sm:$0xff]
  %v1094 = vld [vmem:[%s5 + $0x70] sm:$0xff]
  %v1095 = vld [vmem:[%s5 + $0x78] sm:$0xff]
  %v1096 = vld [vmem:[%s5 + $0x80] sm:$0xff]
  %v1097 = vld [vmem:[%s5 + $0x88] sm:$0xff]
  %v1098 = vld [vmem:[%s5 + $0x90] sm:$0xff]
  %v1099 = vld [vmem:[%s5 + $0x98] sm:$0xff]
  %v1100 = vld [vmem:[%s5 + $0xa0] sm:$0xff]
  %v1101 = vld [vmem:[%s5 + $0xa8] sm:$0xff]
  %v1102 = vld [vmem:[%s5 + $0xb0] sm:$0xff]
  %v1103 = vld [vmem:[%s5 + $0xb8] sm:$0xff]
  %v1104 = vld [vmem:[%s5 + $0xc0] sm:$0xff]
  %v1105 = vld [vmem:[%s5 + $0xc8] sm:$0xff]
  %v1106 = vld [vmem:[%s5 + $0xd0] sm:$0xff]
  %v1107 = vld [vmem:[%s5 + $0xd8] sm:$0xff]
  %v1108 = vld [vmem:[%s5 + $0xe0] sm:$0xff]
  %v1109 = vld [vmem:[%s5 + $0xe8] sm:$0xff]
  %v1110 = vld [vmem:[%s5 + $0xf0] sm:$0xff]
  %v1111 = vld [vmem:[%s5 + $0xf8] sm:$0xff]
  %v1112 = vld [vmem:[%s5 + $0x100] sm:$0xff]
  %v1113 = vld [vmem:[%s5 + $0x108] sm:$0xff]
  %v1114 = vld [vmem:[%s5 + $0x110] sm:$0xff]
  %v1115 = vld [vmem:[%s5 + $0x118] sm:$0xff]
  %v1116 = vld [vmem:[%s5 + $0x120] sm:$0xff]
  %v1117 = vld [vmem:[%s5 + $0x128] sm:$0xff]
  %v1118 = vld [vmem:[%s5 + $0x130] sm:$0xff]
  %v1119 = vld [vmem:[%s5 + $0x138] sm:$0xff]
  %v1120 = vld [vmem:[%s5 + $0x140] sm:$0xff]
  %v1121 = vld [vmem:[%s5 + $0x148] sm:$0xff]
  %v1122 = vld [vmem:[%s5 + $0x150] sm:$0xff]
  %v1123 = vld [vmem:[%s5 + $0x158] sm:$0xff]
  %v1124 = vld [vmem:[%s5 + $0x160] sm:$0xff]
  %v1125 = vld [vmem:[%s5 + $0x168] sm:$0xff]
  %v1126 = vld [vmem:[%s5 + $0x170] sm:$0xff]
  %v1127 = vld [vmem:[%s5 + $0x178] sm:$0xff]
  %v1128 = vld [vmem:[%s5 + $0x180] sm:$0xff]
  %v1129 = vld [vmem:[%s5 + $0x188] sm:$0xff]
  %v1130 = vld [vmem:[%s5 + $0x190] sm:$0xff]
  %v1131 = vld [vmem:[%s5 + $0x198] sm:$0xff]
  %v1132 = vld [vmem:[%s5 + $0x1a0] sm:$0xff]
  %v1133 = vld [vmem:[%s5 + $0x1a8] sm:$0xff]
  %v1134 = vld [vmem:[%s5 + $0x1b0] sm:$0xff]
  %v1135 = vld [vmem:[%s5 + $0x1b8] sm:$0xff]
  %v1136 = vld [vmem:[%s5 + $0x1c0] sm:$0xff]
  %v1137 = vld [vmem:[%s5 + $0x1c8] sm:$0xff]
  %v1138 = vld [vmem:[%s5 + $0x1d0] sm:$0xff]
  %v1139 = vld [vmem:[%s5 + $0x1d8] sm:$0xff]
  %v1140 = vld [vmem:[%s5 + $0x1e0] sm:$0xff]
  %v1141 = vld [vmem:[%s5 + $0x1e8] sm:$0xff]
  %v1142 = vld [vmem:[%s5 + $0x1f0] sm:$0xff]
  %v1143 = vld [vmem:[%s5 + $0x1f8] sm:$0xff]
  %v1144 = vld [vmem:[%s5 + $0x200] sm:$0xff]
  %v1145 = vld [vmem:[%s5 + $0x208] sm:$0xff]
  %v1146 = vld [vmem:[%s5 + $0x210] sm:$0xff]
  %v1147 = vld [vmem:[%s5 + $0x218] sm:$0xff]
  %v1148 = vld [vmem:[%s5 + $0x220] sm:$0xff]
  %v1149 = vld [vmem:[%s5 + $0x228] sm:$0xff]
  %v1150 = vld [vmem:[%s5 + $0x230] sm:$0xff]
  %v1151 = vld [vmem:[%s5 + $0x238] sm:$0xff]
  %v1152 = vld [vmem:[%s5 + $0x240] sm:$0xff]
  %v1153 = vld [vmem:[%s5 + $0x248] sm:$0xff]
  %v1154 = vld [vmem:[%s5 + $0x250] sm:$0xff]
  %v1155 = vld [vmem:[%s5 + $0x258] sm:$0xff]
  %v1156 = vld [vmem:[%s5 + $0x260] sm:$0xff]
  %v1157 = vld [vmem:[%s5 + $0x268] sm:$0xff]
  %v1158 = vld [vmem:[%s5 + $0x270] sm:$0xff]
  %v1159 = vld [vmem:[%s5 + $0x278] sm:$0xff]
  %v1160 = vld [vmem:[%s5 + $0x280] sm:$0xff]
  %v1161 = vld [vmem:[%s5 + $0x288] sm:$0xff]
  %v1162 = vld [vmem:[%s5 + $0x290] sm:$0xff]
  %v1163 = vld [vmem:[%s5 + $0x298] sm:$0xff]
  %v1164 = vld [vmem:[%s5 + $0x2a0] sm:$0xff]
  %v1165 = vld [vmem:[%s5 + $0x2a8] sm:$0xff]
  %v1166 = vld [vmem:[%s5 + $0x2b0] sm:$0xff]
  %v1167 = vld [vmem:[%s5 + $0x2b8] sm:$0xff]
  %v1168 = vld [vmem:[%s5 + $0x2c0] sm:$0xff]
  %v1169 = vld [vmem:[%s5 + $0x2c8] sm:$0xff]
  %v1170 = vld [vmem:[%s5 + $0x2d0] sm:$0xff]
  %v1171 = vld [vmem:[%s5 + $0x2d8] sm:$0xff]
  %v1172 = vld [vmem:[%s5 + $0x2e0] sm:$0xff]
  %v1173 = vld [vmem:[%s5 + $0x2e8] sm:$0xff]
  %v1174 = vld [vmem:[%s5 + $0x2f0] sm:$0xff]
  %v1175 = vld [vmem:[%s5 + $0x2f8] sm:$0xff]
  %v1176 = vld [vmem:[%s5 + $0x300] sm:$0xff]
  %v1177 = vld [vmem:[%s5 + $0x308] sm:$0xff]
  %v1178 = vld [vmem:[%s5 + $0x310] sm:$0xff]
  %v1179 = vld [vmem:[%s5 + $0x318] sm:$0xff]
  %v1180 = vld [vmem:[%s5 + $0x320] sm:$0xff]
  %v1181 = vld [vmem:[%s5 + $0x328] sm:$0xff]
  %v1182 = vld [vmem:[%s5 + $0x330] sm:$0xff]
  %v1183 = vld [vmem:[%s5 + $0x338] sm:$0xff]
  %v1184 = vld [vmem:[%s5 + $0x340] sm:$0xff]
  %v1185 = vpack.c.bf16 %v428, %v425
  %v1186 = vpack.c.bf16 %v436, %v433
  %v1187 = vpack.c.bf16 %v444, %v441
  %v1188 = vpack.c.bf16 %v452, %v449
  %v1189 = vpack.c.bf16 %v460, %v457
  %v1190 = vpack.c.bf16 %v468, %v465
  %v1191 = vpack.c.bf16 %v476, %v473
  %v1192 = vpack.c.bf16 %v484, %v481
  %v1193 = vpack.c.bf16 %v492, %v489
  %v1194 = vpack.c.bf16 %v500, %v497
  %v1195 = vpack.c.bf16 %v508, %v505
  %v1196 = vpack.c.bf16 %v516, %v513
  %v1197 = vpack.c.bf16 %v524, %v521
  %v1198 = vpack.c.bf16 %v698, %v529
  %v1199 = vpack.c.bf16 %v706, %v701
  %v1200 = vpack.c.bf16 %v714, %v709
  %v1201 = vpack.c.bf16 %v722, %v717
  %v1202 = vpack.c.bf16 %v730, %v725
  %v1203 = vpack.c.bf16 %v738, %v733
  %v1204 = vpack.c.bf16 %v746, %v741
  %v1205 = vpack.c.bf16 %v754, %v749
  %v1206 = vpack.c.bf16 %v762, %v757
  %v1207 = vpack.c.bf16 %v770, %v765
  %v1208 = vpack.c.bf16 %v778, %v773
  %v1209 = vpack.c.bf16 %v786, %v781
  %v1210 = vpack.c.bf16 %v794, %v789
  %v1211 = vpack.c.bf16 %v802, %v797
  %v1212 = vpack.c.bf16 %v974, %v971
  %v1213 = vpack.c.bf16 %v982, %v979
  %v1214 = vpack.c.bf16 %v990, %v987
  %v1215 = vpack.c.bf16 %v998, %v995
  %v1216 = vpack.c.bf16 %v1006, %v1003
  %v1217 = vpack.c.bf16 %v1014, %v1011
  %v1218 = vpack.c.bf16 %v1022, %v1019
  %v1219 = vpack.c.bf16 %v1030, %v1027
  %v1220 = vpack.c.bf16 %v1038, %v1035
  %v1221 = vpack.c.bf16 %v1046, %v1043
  %v1222 = vpack.c.bf16 %v1054, %v1051
  %v1223 = vpack.c.bf16 %v1062, %v1059
  %v1224 = vpack.c.bf16 %v1070, %v1067
  %v1225 = vpack.c.bf16 %v1075, %v1075
  %v1226 = vld [vmem:[%s7] sm:$0xff]
  %v1227 = vld [vmem:[%s7 + $0x8] sm:$0xff]
  %v1228 = vld [vmem:[%s7 + $0x10] sm:$0xff]
  %v1229 = vld [vmem:[%s7 + $0x18] sm:$0xff]
  %v1230 = vld [vmem:[%s7 + $0x20] sm:$0xff]
  %v1231 = vld [vmem:[%s7 + $0x28] sm:$0xff]
  %v1232 = vld [vmem:[%s7 + $0x30] sm:$0xff]
  %v1233 = vld [vmem:[%s7 + $0x38] sm:$0xff]
  %v1234 = vld [vmem:[%s7 + $0x40] sm:$0xff]
  %v1235 = vld [vmem:[%s7 + $0x48] sm:$0xff]
  %v1236 = vld [vmem:[%s7 + $0x50] sm:$0xff]
  %v1237 = vld [vmem:[%s7 + $0x58] sm:$0xff]
  %v1238 = vld [vmem:[%s7 + $0x60] sm:$0xff]
  %v1239 = vld [vmem:[%s7 + $0x68] sm:$0xff]
  %v1240 = vld [vmem:[%s7 + $0x70] sm:$0xff]
  %v1241 = vld [vmem:[%s7 + $0x78] sm:$0xff]
  %v1242 = vld [vmem:[%s7 + $0x80] sm:$0xff]
  %v1243 = vld [vmem:[%s7 + $0x88] sm:$0xff]
  %v1244 = vld [vmem:[%s7 + $0x90] sm:$0xff]
  %v1245 = vld [vmem:[%s7 + $0x98] sm:$0xff]
  %v1246 = vld [vmem:[%s7 + $0xa0] sm:$0xff]
  %v1247 = vld [vmem:[%s7 + $0xa8] sm:$0xff]
  %v1248 = vld [vmem:[%s7 + $0xb0] sm:$0xff]
  %v1249 = vld [vmem:[%s7 + $0xb8] sm:$0xff]
  %v1250 = vld [vmem:[%s7 + $0xc0] sm:$0xff]
  %v1251 = vld [vmem:[%s7 + $0xc8] sm:$0xff]
  %v1252 = vld [vmem:[%s7 + $0xd0] sm:$0xff]
  %v1253 = vld [vmem:[%s7 + $0xd8] sm:$0xff]
  %v1254 = vld [vmem:[%s7 + $0xe0] sm:$0xff]
  %v1255 = vld [vmem:[%s7 + $0xe8] sm:$0xff]
  %v1256 = vld [vmem:[%s7 + $0xf0] sm:$0xff]
  %v1257 = vld [vmem:[%s7 + $0xf8] sm:$0xff]
  %v1258 = vld [vmem:[%s7 + $0x100] sm:$0xff]
  %v1259 = vld [vmem:[%s7 + $0x108] sm:$0xff]
  %v1260 = vld [vmem:[%s7 + $0x110] sm:$0xff]
  %1262 = vset.pattern.permute.xlu0 0
  %1263 = vperm.xlu0 %1262, %v1226
  %v1264 = vpop.permute.xlu0 %1263
  %1267 = vset.pattern.permute.xlu0 0
  %1268 = vperm.xlu0 %1267, %v1227
  %v1269 = vpop.permute.xlu0 %1268
  %1272 = vset.pattern.permute.xlu0 0
  %1273 = vperm.xlu0 %1272, %v1228
  %v1274 = vpop.permute.xlu0 %1273
  %1277 = vset.pattern.permute.xlu0 0
  %1278 = vperm.xlu0 %1277, %v1229
  %v1279 = vpop.permute.xlu0 %1278
  %1282 = vset.pattern.permute.xlu0 0
  %1283 = vperm.xlu0 %1282, %v1230
  %v1284 = vpop.permute.xlu0 %1283
  %1287 = vset.pattern.permute.xlu0 0
  %1288 = vperm.xlu0 %1287, %v1231
  %v1289 = vpop.permute.xlu0 %1288
  %1292 = vset.pattern.permute.xlu0 0
  %1293 = vperm.xlu0 %1292, %v1232
  %v1294 = vpop.permute.xlu0 %1293
  %1297 = vset.pattern.permute.xlu0 0
  %1298 = vperm.xlu0 %1297, %v1233
  %v1299 = vpop.permute.xlu0 %1298
  %1302 = vset.pattern.permute.xlu0 0
  %1303 = vperm.xlu0 %1302, %v1234
  %v1304 = vpop.permute.xlu0 %1303
  %1307 = vset.pattern.permute.xlu0 0
  %1308 = vperm.xlu0 %1307, %v1235
  %v1309 = vpop.permute.xlu0 %1308
  %1312 = vset.pattern.permute.xlu0 0
  %1313 = vperm.xlu0 %1312, %v1236
  %v1314 = vpop.permute.xlu0 %1313
  %1317 = vset.pattern.permute.xlu0 0
  %1318 = vperm.xlu0 %1317, %v1237
  %v1319 = vpop.permute.xlu0 %1318
  %1322 = vset.pattern.permute.xlu0 0
  %1323 = vperm.xlu0 %1322, %v1238
  %v1324 = vpop.permute.xlu0 %1323
  %1327 = vset.pattern.permute.xlu0 0
  %1328 = vperm.xlu0 %1327, %v1239
  %v1329 = vpop.permute.xlu0 %1328
  %1332 = vset.pattern.permute.xlu0 0
  %1333 = vperm.xlu0 %1332, %v1240
  %v1334 = vpop.permute.xlu0 %1333
  %1337 = vset.pattern.permute.xlu0 0
  %1338 = vperm.xlu0 %1337, %v1241
  %v1339 = vpop.permute.xlu0 %1338
  %1342 = vset.pattern.permute.xlu0 0
  %1343 = vperm.xlu0 %1342, %v1242
  %v1344 = vpop.permute.xlu0 %1343
  %1347 = vset.pattern.permute.xlu0 0
  %1348 = vperm.xlu0 %1347, %v1243
  %v1349 = vpop.permute.xlu0 %1348
  %1352 = vset.pattern.permute.xlu0 0
  %1353 = vperm.xlu0 %1352, %v1244
  %v1354 = vpop.permute.xlu0 %1353
  %1357 = vset.pattern.permute.xlu0 0
  %1358 = vperm.xlu0 %1357, %v1245
  %v1359 = vpop.permute.xlu0 %1358
  %1362 = vset.pattern.permute.xlu0 0
  %1363 = vperm.xlu0 %1362, %v1246
  %v1364 = vpop.permute.xlu0 %1363
  %1367 = vset.pattern.permute.xlu0 0
  %1368 = vperm.xlu0 %1367, %v1247
  %v1369 = vpop.permute.xlu0 %1368
  %1372 = vset.pattern.permute.xlu0 0
  %1373 = vperm.xlu0 %1372, %v1248
  %v1374 = vpop.permute.xlu0 %1373
  %1377 = vset.pattern.permute.xlu0 0
  %1378 = vperm.xlu0 %1377, %v1249
  %v1379 = vpop.permute.xlu0 %1378
  %1382 = vset.pattern.permute.xlu0 0
  %1383 = vperm.xlu0 %1382, %v1250
  %v1384 = vpop.permute.xlu0 %1383
  %1387 = vset.pattern.permute.xlu0 0
  %1388 = vperm.xlu0 %1387, %v1251
  %v1389 = vpop.permute.xlu0 %1388
  %1392 = vset.pattern.permute.xlu0 0
  %1393 = vperm.xlu0 %1392, %v1252
  %v1394 = vpop.permute.xlu0 %1393
  %1397 = vset.pattern.permute.xlu0 0
  %1398 = vperm.xlu0 %1397, %v1253
  %v1399 = vpop.permute.xlu0 %1398
  %1402 = vset.pattern.permute.xlu0 0
  %1403 = vperm.xlu0 %1402, %v1254
  %v1404 = vpop.permute.xlu0 %1403
  %1407 = vset.pattern.permute.xlu0 0
  %1408 = vperm.xlu0 %1407, %v1255
  %v1409 = vpop.permute.xlu0 %1408
  %1412 = vset.pattern.permute.xlu0 0
  %1413 = vperm.xlu0 %1412, %v1256
  %v1414 = vpop.permute.xlu0 %1413
  %1417 = vset.pattern.permute.xlu0 0
  %1418 = vperm.xlu0 %1417, %v1257
  %v1419 = vpop.permute.xlu0 %1418
  %1422 = vset.pattern.permute.xlu0 0
  %1423 = vperm.xlu0 %1422, %v1258
  %v1424 = vpop.permute.xlu0 %1423
  %1427 = vset.pattern.permute.xlu0 0
  %1428 = vperm.xlu0 %1427, %v1259
  %v1429 = vpop.permute.xlu0 %1428
  %1432 = vset.pattern.permute.xlu0 0
  %1433 = vperm.xlu0 %1432, %v1260
  %v1434 = vpop.permute.xlu0 %1433
  %v1541 = vunpack.c.l.b16 %v1080
  %v1542 = vunpack.c.h.b16 %v1080
  %v1543 = vunpack.c.l.b16 %v1081
  %v1544 = vunpack.c.h.b16 %v1081
  %v1545 = vunpack.c.l.b16 %v1082
  %v1546 = vunpack.c.h.b16 %v1082
  %v1547 = vunpack.c.l.b16 %v1083
  %v1548 = vunpack.c.h.b16 %v1083
  %v1549 = vunpack.c.l.b16 %v1084
  %v1550 = vunpack.c.h.b16 %v1084
  %v1551 = vunpack.c.l.b16 %v1085
  %v1552 = vunpack.c.h.b16 %v1085
  %v1553 = vunpack.c.l.b16 %v1086
  %v1554 = vunpack.c.h.b16 %v1086
  %v1555 = vunpack.c.l.b16 %v1087
  %v1556 = vunpack.c.h.b16 %v1087
  %v1557 = vunpack.c.l.b16 %v1088
  %v1558 = vunpack.c.h.b16 %v1088
  %v1559 = vunpack.c.l.b16 %v1089
  %v1560 = vunpack.c.h.b16 %v1089
  %v1561 = vunpack.c.l.b16 %v1090
  %v1562 = vunpack.c.h.b16 %v1090
  %v1563 = vunpack.c.l.b16 %v1091
  %v1564 = vunpack.c.h.b16 %v1091
  %v1565 = vunpack.c.l.b16 %v1092
  %v1566 = vunpack.c.h.b16 %v1092
  %v1567 = vunpack.c.l.b16 %v1093
  %v1568 = vunpack.c.h.b16 %v1093
  %v1569 = vunpack.c.l.b16 %v1094
  %v1570 = vunpack.c.h.b16 %v1094
  %v1571 = vunpack.c.l.b16 %v1095
  %v1572 = vunpack.c.h.b16 %v1095
  %v1573 = vunpack.c.l.b16 %v1096
  %v1574 = vunpack.c.h.b16 %v1096
  %v1575 = vunpack.c.l.b16 %v1097
  %v1576 = vunpack.c.h.b16 %v1097
  %v1577 = vunpack.c.l.b16 %v1098
  %v1578 = vunpack.c.h.b16 %v1098
  %v1579 = vunpack.c.l.b16 %v1099
  %v1580 = vunpack.c.h.b16 %v1099
  %v1581 = vunpack.c.l.b16 %v1100
  %v1582 = vunpack.c.h.b16 %v1100
  %v1583 = vunpack.c.l.b16 %v1101
  %v1584 = vunpack.c.h.b16 %v1101
  %v1585 = vunpack.c.l.b16 %v1102
  %v1586 = vunpack.c.h.b16 %v1102
  %v1587 = vunpack.c.l.b16 %v1103
  %v1588 = vunpack.c.h.b16 %v1103
  %v1589 = vunpack.c.l.b16 %v1104
  %v1590 = vunpack.c.h.b16 %v1104
  %v1591 = vunpack.c.l.b16 %v1105
  %v1592 = vunpack.c.h.b16 %v1105
  %v1593 = vunpack.c.l.b16 %v1106
  %v1594 = vunpack.c.h.b16 %v1106
  %v1595 = vunpack.c.l.b16 %v1107
  %v1596 = vunpack.c.h.b16 %v1107
  %v1597 = vunpack.c.l.b16 %v1108
  %v1598 = vunpack.c.h.b16 %v1108
  %v1599 = vunpack.c.l.b16 %v1109
  %v1600 = vunpack.c.h.b16 %v1109
  %v1601 = vunpack.c.l.b16 %v1110
  %v1602 = vunpack.c.h.b16 %v1110
  %v1603 = vunpack.c.l.b16 %v1111
  %v1604 = vunpack.c.h.b16 %v1111
  %v1605 = vunpack.c.l.b16 %v1112
  %v1606 = vunpack.c.h.b16 %v1112
  %v1607 = vunpack.c.l.b16 %v1113
  %v1608 = vunpack.c.h.b16 %v1113
  %v1609 = vunpack.c.l.b16 %v1114
  %v1610 = vunpack.c.h.b16 %v1114
  %v1611 = vunpack.c.l.b16 %v1115
  %v1612 = vunpack.c.h.b16 %v1115
  %v1613 = vunpack.c.l.b16 %v1116
  %v1614 = vunpack.c.h.b16 %v1116
  %v1615 = vunpack.c.l.b16 %v1117
  %v1616 = vunpack.c.h.b16 %v1117
  %v1617 = vunpack.c.l.b16 %v1118
  %v1618 = vunpack.c.h.b16 %v1118
  %v1619 = vunpack.c.l.b16 %v1119
  %v1620 = vunpack.c.h.b16 %v1119
  %v1621 = vunpack.c.l.b16 %v1120
  %v1622 = vunpack.c.h.b16 %v1120
  %v1623 = vunpack.c.l.b16 %v1121
  %v1624 = vunpack.c.h.b16 %v1121
  %v1625 = vunpack.c.l.b16 %v1122
  %v1626 = vunpack.c.h.b16 %v1122
  %v1627 = vunpack.c.l.b16 %v1123
  %v1628 = vunpack.c.h.b16 %v1123
  %v1629 = vunpack.c.l.b16 %v1124
  %v1630 = vunpack.c.h.b16 %v1124
  %v1631 = vunpack.c.l.b16 %v1125
  %v1632 = vunpack.c.h.b16 %v1125
  %v1633 = vunpack.c.l.b16 %v1126
  %v1634 = vunpack.c.h.b16 %v1126
  %v1635 = vunpack.c.l.b16 %v1127
  %v1636 = vunpack.c.h.b16 %v1127
  %v1637 = vunpack.c.l.b16 %v1128
  %v1638 = vunpack.c.h.b16 %v1128
  %v1639 = vunpack.c.l.b16 %v1129
  %v1640 = vunpack.c.h.b16 %v1129
  %v1641 = vunpack.c.l.b16 %v1130
  %v1642 = vunpack.c.h.b16 %v1130
  %v1643 = vunpack.c.l.b16 %v1131
  %v1644 = vunpack.c.h.b16 %v1131
  %v1645 = vunpack.c.l.b16 %v1132
  %v1646 = vunpack.c.h.b16 %v1132
  %v1647 = vunpack.c.l.b16 %v1133
  %v1648 = vunpack.c.h.b16 %v1133
  %v1649 = vunpack.c.l.b16 %v1134
  %v1650 = vunpack.c.h.b16 %v1134
  %v1651 = vunpack.c.l.b16 %v1135
  %v1652 = vunpack.c.h.b16 %v1135
  %v1653 = vunpack.c.l.b16 %v1136
  %v1654 = vunpack.c.h.b16 %v1136
  %v1655 = vunpack.c.l.b16 %v1137
  %v1656 = vunpack.c.h.b16 %v1137
  %v1657 = vunpack.c.l.b16 %v1138
  %v1658 = vunpack.c.h.b16 %v1138
  %v1659 = vunpack.c.l.b16 %v1139
  %v1660 = vunpack.c.h.b16 %v1139
  %v1661 = vunpack.c.l.b16 %v1140
  %v1662 = vunpack.c.h.b16 %v1140
  %v1663 = vunpack.c.l.b16 %v1141
  %v1664 = vunpack.c.h.b16 %v1141
  %v1665 = vunpack.c.l.b16 %v1142
  %v1666 = vunpack.c.h.b16 %v1142
  %v1667 = vunpack.c.l.b16 %v1143
  %v1668 = vunpack.c.h.b16 %v1143
  %v1669 = vunpack.c.l.b16 %v1144
  %v1670 = vunpack.c.h.b16 %v1144
  %v1671 = vunpack.c.l.b16 %v1145
  %v1672 = vunpack.c.h.b16 %v1145
  %v1673 = vunpack.c.l.b16 %v1146
  %v1674 = vunpack.c.h.b16 %v1146
  %v1675 = vunpack.c.l.b16 %v1147
  %v1676 = vunpack.c.h.b16 %v1147
  %v1677 = vunpack.c.l.b16 %v1148
  %v1678 = vunpack.c.h.b16 %v1148
  %v1679 = vunpack.c.l.b16 %v1149
  %v1680 = vunpack.c.h.b16 %v1149
  %v1681 = vunpack.c.l.b16 %v1150
  %v1682 = vunpack.c.h.b16 %v1150
  %v1683 = vunpack.c.l.b16 %v1151
  %v1684 = vunpack.c.h.b16 %v1151
  %v1685 = vunpack.c.l.b16 %v1152
  %v1686 = vunpack.c.h.b16 %v1152
  %v1687 = vunpack.c.l.b16 %v1153
  %v1688 = vunpack.c.h.b16 %v1153
  %v1689 = vunpack.c.l.b16 %v1154
  %v1690 = vunpack.c.h.b16 %v1154
  %v1691 = vunpack.c.l.b16 %v1155
  %v1692 = vunpack.c.h.b16 %v1155
  %v1693 = vunpack.c.l.b16 %v1156
  %v1694 = vunpack.c.h.b16 %v1156
  %v1695 = vunpack.c.l.b16 %v1157
  %v1696 = vunpack.c.h.b16 %v1157
  %v1697 = vunpack.c.l.b16 %v1158
  %v1698 = vunpack.c.h.b16 %v1158
  %v1699 = vunpack.c.l.b16 %v1159
  %v1700 = vunpack.c.h.b16 %v1159
  %v1701 = vunpack.c.l.b16 %v1160
  %v1702 = vunpack.c.h.b16 %v1160
  %v1703 = vunpack.c.l.b16 %v1161
  %v1704 = vunpack.c.h.b16 %v1161
  %v1705 = vunpack.c.l.b16 %v1162
  %v1706 = vunpack.c.h.b16 %v1162
  %v1707 = vunpack.c.l.b16 %v1163
  %v1708 = vunpack.c.h.b16 %v1163
  %v1709 = vunpack.c.l.b16 %v1164
  %v1710 = vunpack.c.h.b16 %v1164
  %v1711 = vunpack.c.l.b16 %v1165
  %v1712 = vunpack.c.h.b16 %v1165
  %v1713 = vunpack.c.l.b16 %v1166
  %v1714 = vunpack.c.h.b16 %v1166
  %v1715 = vunpack.c.l.b16 %v1167
  %v1716 = vunpack.c.h.b16 %v1167
  %v1717 = vunpack.c.l.b16 %v1168
  %v1718 = vunpack.c.h.b16 %v1168
  %v1719 = vunpack.c.l.b16 %v1169
  %v1720 = vunpack.c.h.b16 %v1169
  %v1721 = vunpack.c.l.b16 %v1170
  %v1722 = vunpack.c.h.b16 %v1170
  %v1723 = vunpack.c.l.b16 %v1171
  %v1724 = vunpack.c.h.b16 %v1171
  %v1725 = vunpack.c.l.b16 %v1172
  %v1726 = vunpack.c.h.b16 %v1172
  %v1727 = vunpack.c.l.b16 %v1173
  %v1728 = vunpack.c.h.b16 %v1173
  %v1729 = vunpack.c.l.b16 %v1174
  %v1730 = vunpack.c.h.b16 %v1174
  %v1731 = vunpack.c.l.b16 %v1175
  %v1732 = vunpack.c.h.b16 %v1175
  %v1733 = vunpack.c.l.b16 %v1176
  %v1734 = vunpack.c.h.b16 %v1176
  %v1735 = vunpack.c.l.b16 %v1177
  %v1736 = vunpack.c.h.b16 %v1177
  %v1737 = vunpack.c.l.b16 %v1178
  %v1738 = vunpack.c.h.b16 %v1178
  %v1739 = vunpack.c.l.b16 %v1179
  %v1740 = vunpack.c.h.b16 %v1179
  %v1741 = vunpack.c.l.b16 %v1180
  %v1742 = vunpack.c.h.b16 %v1180
  %v1743 = vunpack.c.l.b16 %v1181
  %v1744 = vunpack.c.h.b16 %v1181
  %v1745 = vunpack.c.l.b16 %v1182
  %v1746 = vunpack.c.h.b16 %v1182
  %v1747 = vunpack.c.l.b16 %v1183
  %v1748 = vunpack.c.h.b16 %v1183
  %v1749 = vunpack.c.l.b16 %v1184
  %v1750 = vunpack.c.h.b16 %v1184
  %v1751 = vpack.c.b16 %v1547, %v1541
  %v1752 = vpack.c.b16 %v1548, %v1542
  %v1753 = vpack.c.b16 %v1549, %v1543
  %v1754 = vpack.c.b16 %v1550, %v1544
  %v1755 = vpack.c.b16 %v1551, %v1545
  %v1756 = vpack.c.b16 %v1552, %v1546
  %v1757 = vpack.c.b16 %v1559, %v1553
  %v1758 = vpack.c.b16 %v1560, %v1554
  %v1759 = vpack.c.b16 %v1561, %v1555
  %v1760 = vpack.c.b16 %v1562, %v1556
  %v1761 = vpack.c.b16 %v1563, %v1557
  %v1762 = vpack.c.b16 %v1564, %v1558
  %v1763 = vpack.c.b16 %v1571, %v1565
  %v1764 = vpack.c.b16 %v1572, %v1566
  %v1765 = vpack.c.b16 %v1573, %v1567
  %v1766 = vpack.c.b16 %v1574, %v1568
  %v1767 = vpack.c.b16 %v1575, %v1569
  %v1768 = vpack.c.b16 %v1576, %v1570
  %v1769 = vpack.c.b16 %v1583, %v1577
  %v1770 = vpack.c.b16 %v1584, %v1578
  %v1771 = vpack.c.b16 %v1585, %v1579
  %v1772 = vpack.c.b16 %v1586, %v1580
  %v1773 = vpack.c.b16 %v1587, %v1581
  %v1774 = vpack.c.b16 %v1588, %v1582
  %v1775 = vpack.c.b16 %v1595, %v1589
  %v1776 = vpack.c.b16 %v1596, %v1590
  %v1777 = vpack.c.b16 %v1597, %v1591
  %v1778 = vpack.c.b16 %v1598, %v1592
  %v1779 = vpack.c.b16 %v1599, %v1593
  %v1780 = vpack.c.b16 %v1600, %v1594
  %v1781 = vpack.c.b16 %v1607, %v1601
  %v1782 = vpack.c.b16 %v1608, %v1602
  %v1783 = vpack.c.b16 %v1609, %v1603
  %v1784 = vpack.c.b16 %v1610, %v1604
  %v1785 = vpack.c.b16 %v1611, %v1605
  %v1786 = vpack.c.b16 %v1612, %v1606
  %v1787 = vpack.c.b16 %v1619, %v1613
  %v1788 = vpack.c.b16 %v1620, %v1614
  %v1789 = vpack.c.b16 %v1621, %v1615
  %v1790 = vpack.c.b16 %v1622, %v1616
  %v1791 = vpack.c.b16 %v1623, %v1617
  %v1792 = vpack.c.b16 %v1624, %v1618
  %v1793 = vpack.c.b16 %v1631, %v1625
  %v1794 = vpack.c.b16 %v1632, %v1626
  %v1795 = vpack.c.b16 %v1633, %v1627
  %v1796 = vpack.c.b16 %v1634, %v1628
  %v1797 = vpack.c.b16 %v1635, %v1629
  %v1798 = vpack.c.b16 %v1636, %v1630
  %v1799 = vpack.c.b16 %v1643, %v1637
  %v1800 = vpack.c.b16 %v1644, %v1638
  %v1801 = vpack.c.b16 %v1645, %v1639
  %v1802 = vpack.c.b16 %v1646, %v1640
  %v1803 = vpack.c.b16 %v1647, %v1641
  %v1804 = vpack.c.b16 %v1648, %v1642
  %v1805 = vpack.c.b16 %v1655, %v1649
  %v1806 = vpack.c.b16 %v1656, %v1650
  %v1807 = vpack.c.b16 %v1657, %v1651
  %v1808 = vpack.c.b16 %v1658, %v1652
  %v1809 = vpack.c.b16 %v1659, %v1653
  %v1810 = vpack.c.b16 %v1660, %v1654
  %v1811 = vpack.c.b16 %v1667, %v1661
  %v1812 = vpack.c.b16 %v1668, %v1662
  %v1813 = vpack.c.b16 %v1669, %v1663
  %v1814 = vpack.c.b16 %v1670, %v1664
  %v1815 = vpack.c.b16 %v1671, %v1665
  %v1816 = vpack.c.b16 %v1672, %v1666
  %v1817 = vpack.c.b16 %v1679, %v1673
  %v1818 = vpack.c.b16 %v1680, %v1674
  %v1819 = vpack.c.b16 %v1681, %v1675
  %v1820 = vpack.c.b16 %v1682, %v1676
  %v1821 = vpack.c.b16 %v1683, %v1677
  %v1822 = vpack.c.b16 %v1684, %v1678
  %v1823 = vpack.c.b16 %v1691, %v1685
  %v1824 = vpack.c.b16 %v1692, %v1686
  %v1825 = vpack.c.b16 %v1693, %v1687
  %v1826 = vpack.c.b16 %v1694, %v1688
  %v1827 = vpack.c.b16 %v1695, %v1689
  %v1828 = vpack.c.b16 %v1696, %v1690
  %v1829 = vpack.c.b16 %v1703, %v1697
  %v1830 = vpack.c.b16 %v1704, %v1698
  %v1831 = vpack.c.b16 %v1705, %v1699
  %v1832 = vpack.c.b16 %v1706, %v1700
  %v1833 = vpack.c.b16 %v1707, %v1701
  %v1834 = vpack.c.b16 %v1708, %v1702
  %v1835 = vpack.c.b16 %v1715, %v1709
  %v1836 = vpack.c.b16 %v1716, %v1710
  %v1837 = vpack.c.b16 %v1717, %v1711
  %v1838 = vpack.c.b16 %v1718, %v1712
  %v1839 = vpack.c.b16 %v1719, %v1713
  %v1840 = vpack.c.b16 %v1720, %v1714
  %v1841 = vpack.c.b16 %v1727, %v1721
  %v1842 = vpack.c.b16 %v1728, %v1722
  %v1843 = vpack.c.b16 %v1729, %v1723
  %v1844 = vpack.c.b16 %v1730, %v1724
  %v1845 = vpack.c.b16 %v1731, %v1725
  %v1846 = vpack.c.b16 %v1732, %v1726
  %v1847 = vpack.c.b16 %v1739, %v1733
  %v1848 = vpack.c.b16 %v1740, %v1734
  %v1849 = vpack.c.b16 %v1741, %v1735
  %v1850 = vpack.c.b16 %v1742, %v1736
  %v1851 = vpack.c.b16 %v1743, %v1737
  %v1852 = vpack.c.b16 %v1744, %v1738
  %v1853 = vpack.c.b16 %v1745, %v1745
  %v1854 = vpack.c.b16 %v1746, %v1746
  %v1855 = vpack.c.b16 %v1747, %v1747
  %v1856 = vpack.c.b16 %v1748, %v1748
  %v1857 = vpack.c.b16 %v1749, %v1749
  %v1858 = vpack.c.b16 %v1750, %v1750
  %vm1949 = vcmask 64512
  %v1951 = vsel %vm1949, %v1756, 0
  %v1954 = vsel %vm1949, %v1762, 0
  %v1957 = vsel %vm1949, %v1768, 0
  %v1960 = vsel %vm1949, %v1774, 0
  %v1963 = vsel %vm1949, %v1780, 0
  %v1966 = vsel %vm1949, %v1786, 0
  %v1969 = vsel %vm1949, %v1792, 0
  %v1972 = vsel %vm1949, %v1798, 0
  %v1975 = vsel %vm1949, %v1804, 0
  %v1978 = vsel %vm1949, %v1810, 0
  %v1981 = vsel %vm1949, %v1816, 0
  %v1984 = vsel %vm1949, %v1822, 0
  %v1987 = vsel %vm1949, %v1828, 0
  %v1990 = vsel %vm1949, %v1834, 0
  %v1993 = vsel %vm1949, %v1840, 0
  %v1996 = vsel %vm1949, %v1846, 0
  %v1999 = vsel %vm1949, %v1852, 0
  %v2002 = vsel %vm1949, %v1858, 0
  %vm2004 = vcmask 1043456
  %v2006 = vsel %vm2004, %v1225, 0
  %2008 = vmatprep.subr.bf16.mxu0 0
  %2009 = vmatpush1.bf16.msra.mxu0 %v1185
  %2010 = vmatprep.subr.bf16.mxu0 0
  %2011 = vmatpush1.bf16.msra.mxu0 %v1186
  %2012 = vmatprep.subr.bf16.mxu0 0
  %2013 = vmatpush1.bf16.msra.mxu0 %v1187
  %2014 = vmatprep.subr.bf16.mxu0 0
  %2015 = vmatpush1.bf16.msra.mxu0 %v1188
  %2016 = vmatprep.subr.bf16.mxu0 0
  %2017 = vmatpush1.bf16.msra.mxu0 %v1189
  %2018 = vmatprep.subr.bf16.mxu0 0
  %2019 = vmatpush1.bf16.msra.mxu0 %v1190
  %2020 = vmatprep.subr.bf16.mxu0 0
  %2021 = vmatpush1.bf16.msra.mxu0 %v1191
  %2022 = vmatprep.subr.bf16.mxu0 0
  %2023 = vmatpush1.bf16.msra.mxu0 %v1192
  %2024 = vmatprep.subr.bf16.mxu0 0
  %2025 = vmatpush1.bf16.msra.mxu0 %v1193
  %2026 = vmatprep.subr.bf16.mxu0 0
  %2027 = vmatpush1.bf16.msra.mxu0 %v1194
  %2028 = vmatprep.subr.bf16.mxu0 0
  %2029 = vmatpush1.bf16.msra.mxu0 %v1195
  %2030 = vmatprep.subr.bf16.mxu0 0
  %2031 = vmatpush1.bf16.msra.mxu0 %v1196
  %2032 = vmatprep.subr.bf16.mxu0 0
  %2033 = vmatpush1.bf16.msra.mxu0 %v1197
  %2034 = vmatprep.subr.bf16.mxu0 0
  %2035 = vmatpush1.bf16.msra.mxu0 %v1198
  %2036 = vmatprep.subr.bf16.mxu0 0
  %2037 = vmatpush1.bf16.msra.mxu0 %v1199
  %2038 = vmatprep.subr.bf16.mxu0 0
  %2039 = vmatpush1.bf16.msra.mxu0 %v1200
  %2040 = vmatprep.mubr.bf16.mxu0 %v1752
  %2041 = vmatmul.mubr.bf16.gmra.mrb[0].mxu0 %v1751
  %v2042 = vpop.f32.mrb[0].mxu0
  %v2043 = vadd.f32 %v1264, %v2042
  %v2044 = vpop.f32.mrb[0].mxu0
  %v2045 = vpop.f32.mrb[0].mxu0
  %v2046 = vadd.f32 %v1269, %v2045
  %v2047 = vpop.f32.mrb[0].mxu0
  %2048 = vmatprep.mubr.bf16.mxu0 %v1758
  %2049 = vmatmul.mubr.bf16.gmra.mrb[0].mxu0 %v1757
  %v2050 = vpop.f32.mrb[0].mxu0
  %v2051 = vadd.f32 %v1274, %v2050
  %v2052 = vpop.f32.mrb[0].mxu0
  %v2053 = vpop.f32.mrb[0].mxu0
  %v2054 = vadd.f32 %v1279, %v2053
  %v2055 = vpop.f32.mrb[0].mxu0
  %2056 = vmatprep.mubr.bf16.mxu0 %v1764
  %2057 = vmatmul.mubr.bf16.gmra.mrb[0].mxu0 %v1763
  %v2058 = vpop.f32.mrb[0].mxu0
  %v2059 = vadd.f32 %v1284, %v2058
  %v2060 = vpop.f32.mrb[0].mxu0
  %v2061 = vpop.f32.mrb[0].mxu0
  %v2062 = vadd.f32 %v1289, %v2061
  %v2063 = vpop.f32.mrb[0].mxu0
  %2064 = vmatprep.mubr.bf16.mxu0 %v1770
  %2065 = vmatmul.mubr.bf16.gmra.mrb[0].mxu0 %v1769
  %v2066 = vpop.f32.mrb[0].mxu0
  %v2067 = vadd.f32 %v1294, %v2066
  %v2068 = vpop.f32.mrb[0].mxu0
  %v2069 = vpop.f32.mrb[0].mxu0
  %v2070 = vadd.f32 %v1299, %v2069
  %v2071 = vpop.f32.mrb[0].mxu0
  %2072 = vmatprep.mubr.bf16.mxu0 %v1776
  %2073 = vmatmul.mubr.bf16.gmra.mrb[0].mxu0 %v1775
  %v2074 = vpop.f32.mrb[0].mxu0
  %v2075 = vadd.f32 %v1304, %v2074
  %v2076 = vpop.f32.mrb[0].mxu0
  %v2077 = vpop.f32.mrb[0].mxu0
  %v2078 = vadd.f32 %v1309, %v2077
  %v2079 = vpop.f32.mrb[0].mxu0
  %2080 = vmatprep.mubr.bf16.mxu0 %v1782
  %2081 = vmatmul.mubr.bf16.gmra.mrb[0].mxu0 %v1781
  %v2082 = vpop.f32.mrb[0].mxu0
  %v2083 = vadd.f32 %v1314, %v2082
  %v2084 = vpop.f32.mrb[0].mxu0
  %v2085 = vpop.f32.mrb[0].mxu0
  %v2086 = vadd.f32 %v1319, %v2085
  %v2087 = vpop.f32.mrb[0].mxu0
  %2088 = vmatprep.mubr.bf16.mxu0 %v1788
  %2089 = vmatmul.mubr.bf16.gmra.mrb[0].mxu0 %v1787
  %v2090 = vpop.f32.mrb[0].mxu0
  %v2091 = vadd.f32 %v1324, %v2090
  %v2092 = vpop.f32.mrb[0].mxu0
  %v2093 = vpop.f32.mrb[0].mxu0
  %v2094 = vadd.f32 %v1329, %v2093
  %v2095 = vpop.f32.mrb[0].mxu0
  %2096 = vmatprep.mubr.bf16.mxu0 %v1794
  %2097 = vmatmul.mubr.bf16.gmra.mrb[0].mxu0 %v1793
  %v2098 = vpop.f32.mrb[0].mxu0
  %v2099 = vadd.f32 %v1334, %v2098
  %v2100 = vpop.f32.mrb[0].mxu0
  %v2101 = vpop.f32.mrb[0].mxu0
  %v2102 = vadd.f32 %v1339, %v2101
  %v2103 = vpop.f32.mrb[0].mxu0
  %2104 = vmatprep.mubr.bf16.mxu0 %v1800
  %2105 = vmatmul.mubr.bf16.gmra.mrb[0].mxu0 %v1799
  %v2106 = vpop.f32.mrb[0].mxu0
  %v2107 = vadd.f32 %v1344, %v2106
  %v2108 = vpop.f32.mrb[0].mxu0
  %v2109 = vpop.f32.mrb[0].mxu0
  %v2110 = vadd.f32 %v1349, %v2109
  %v2111 = vpop.f32.mrb[0].mxu0
  %2112 = vmatprep.mubr.bf16.mxu0 %v1806
  %2113 = vmatmul.mubr.bf16.gmra.mrb[0].mxu0 %v1805
  %v2114 = vpop.f32.mrb[0].mxu0
  %v2115 = vadd.f32 %v1354, %v2114
  %v2116 = vpop.f32.mrb[0].mxu0
  %v2117 = vpop.f32.mrb[0].mxu0
  %v2118 = vadd.f32 %v1359, %v2117
  %v2119 = vpop.f32.mrb[0].mxu0
  %2120 = vmatprep.mubr.bf16.mxu0 %v1812
  %2121 = vmatmul.mubr.bf16.gmra.mrb[0].mxu0 %v1811
  %v2122 = vpop.f32.mrb[0].mxu0
  %v2123 = vadd.f32 %v1364, %v2122
  %v2124 = vpop.f32.mrb[0].mxu0
  %v2125 = vpop.f32.mrb[0].mxu0
  %v2126 = vadd.f32 %v1369, %v2125
  %v2127 = vpop.f32.mrb[0].mxu0
  %2128 = vmatprep.mubr.bf16.mxu0 %v1818
  %2129 = vmatmul.mubr.bf16.gmra.mrb[0].mxu0 %v1817
  %v2130 = vpop.f32.mrb[0].mxu0
  %v2131 = vadd.f32 %v1374, %v2130
  %v2132 = vpop.f32.mrb[0].mxu0
  %v2133 = vpop.f32.mrb[0].mxu0
  %v2134 = vadd.f32 %v1379, %v2133
  %v2135 = vpop.f32.mrb[0].mxu0
  %2136 = vmatprep.mubr.bf16.mxu0 %v1824
  %2137 = vmatmul.mubr.bf16.gmra.mrb[0].mxu0 %v1823
  %v2138 = vpop.f32.mrb[0].mxu0
  %v2139 = vadd.f32 %v1384, %v2138
  %v2140 = vpop.f32.mrb[0].mxu0
  %v2141 = vpop.f32.mrb[0].mxu0
  %v2142 = vadd.f32 %v1389, %v2141
  %v2143 = vpop.f32.mrb[0].mxu0
  %2144 = vmatprep.mubr.bf16.mxu0 %v1830
  %2145 = vmatmul.mubr.bf16.gmra.mrb[0].mxu0 %v1829
  %v2146 = vpop.f32.mrb[0].mxu0
  %v2147 = vadd.f32 %v1394, %v2146
  %v2148 = vpop.f32.mrb[0].mxu0
  %v2149 = vpop.f32.mrb[0].mxu0
  %v2150 = vadd.f32 %v1399, %v2149
  %v2151 = vpop.f32.mrb[0].mxu0
  %2152 = vmatprep.mubr.bf16.mxu0 %v1836
  %2153 = vmatmul.mubr.bf16.gmra.mrb[0].mxu0 %v1835
  %v2154 = vpop.f32.mrb[0].mxu0
  %v2155 = vadd.f32 %v1404, %v2154
  %v2156 = vpop.f32.mrb[0].mxu0
  %v2157 = vpop.f32.mrb[0].mxu0
  %v2158 = vadd.f32 %v1409, %v2157
  %v2159 = vpop.f32.mrb[0].mxu0
  %2160 = vmatprep.mubr.bf16.mxu0 %v1842
  %2161 = vmatmul.mubr.bf16.gmra.mrb[0].mxu0 %v1841
  %v2162 = vpop.f32.mrb[0].mxu0
  %v2163 = vadd.f32 %v1414, %v2162
  %v2164 = vpop.f32.mrb[0].mxu0
  %v2165 = vpop.f32.mrb[0].mxu0
  %v2166 = vadd.f32 %v1419, %v2165
  %v2167 = vpop.f32.mrb[0].mxu0
  %2168 = vmatprep.mubr.bf16.mxu0 %v1848
  %2169 = vmatmul.mubr.bf16.gmra.mrb[0].mxu0 %v1847
  %v2170 = vpop.f32.mrb[0].mxu0
  %v2171 = vadd.f32 %v1424, %v2170
  %v2172 = vpop.f32.mrb[0].mxu0
  %v2173 = vpop.f32.mrb[0].mxu0
  %v2174 = vadd.f32 %v1429, %v2173
  %v2175 = vpop.f32.mrb[0].mxu0
  %2176 = vmatprep.mubr.bf16.mxu0 %v1854
  %2177 = vmatmul.mubr.bf16.gmra.mrb[0].mxu0 %v1853
  %v2178 = vpop.f32.mrb[0].mxu0
  %v2179 = vadd.f32 %v1434, %v2178
  %v2180 = vpop.f32.mrb[0].mxu0
  %v2181 = vpop.f32.mrb[0].mxu0
  %v2182 = vpop.f32.mrb[0].mxu0
  %2183 = vdwg.mxu0
  %2184 = vmatprep.subr.bf16.mxu0 0
  %2185 = vmatpush1.bf16.msra.mxu0 %v1201
  %2186 = vmatprep.subr.bf16.mxu0 0
  %2187 = vmatpush1.bf16.msra.mxu0 %v1202
  %2188 = vmatprep.subr.bf16.mxu0 0
  %2189 = vmatpush1.bf16.msra.mxu0 %v1203
  %2190 = vmatprep.subr.bf16.mxu0 0
  %2191 = vmatpush1.bf16.msra.mxu0 %v1204
  %2192 = vmatprep.subr.bf16.mxu0 0
  %2193 = vmatpush1.bf16.msra.mxu0 %v1205
  %2194 = vmatprep.subr.bf16.mxu0 0
  %2195 = vmatpush1.bf16.msra.mxu0 %v1206
  %2196 = vmatprep.subr.bf16.mxu0 0
  %2197 = vmatpush1.bf16.msra.mxu0 %v1207
  %2198 = vmatprep.subr.bf16.mxu0 0
  %2199 = vmatpush1.bf16.msra.mxu0 %v1208
  %2200 = vmatprep.subr.bf16.mxu0 0
  %2201 = vmatpush1.bf16.msra.mxu0 %v1209
  %2202 = vmatprep.subr.bf16.mxu0 0
  %2203 = vmatpush1.bf16.msra.mxu0 %v1210
  %2204 = vmatprep.subr.bf16.mxu0 0
  %2205 = vmatpush1.bf16.msra.mxu0 %v1211
  %2206 = vmatprep.subr.bf16.mxu0 0
  %2207 = vmatpush1.bf16.msra.mxu0 %v1212
  %2208 = vmatprep.subr.bf16.mxu0 0
  %2209 = vmatpush1.bf16.msra.mxu0 %v1213
  %2210 = vmatprep.subr.bf16.mxu0 0
  %2211 = vmatpush1.bf16.msra.mxu0 %v1214
  %2212 = vmatprep.subr.bf16.mxu0 0
  %2213 = vmatpush1.bf16.msra.mxu0 %v1215
  %2214 = vmatprep.subr.bf16.mxu0 0
  %2215 = vmatpush1.bf16.msra.mxu0 %v1216
  %2216 = vmatprep.mubr.bf16.mxu0 %v1754
  %2217 = vmatmul.mubr.bf16.gmra.mrb[0].mxu0 %v1753
  %v2218 = vpop.f32.mrb[0].mxu0
  %v2219 = vadd.f32 %v2043, %v2218
  %v2220 = vpop.f32.mrb[0].mxu0
  %v2221 = vpop.f32.mrb[0].mxu0
  %v2222 = vadd.f32 %v2046, %v2221
  %v2223 = vpop.f32.mrb[0].mxu0
  %2224 = vmatprep.mubr.bf16.mxu0 %v1760
  %2225 = vmatmul.mubr.bf16.gmra.mrb[0].mxu0 %v1759
  %v2226 = vpop.f32.mrb[0].mxu0
  %v2227 = vadd.f32 %v2051, %v2226
  %v2228 = vpop.f32.mrb[0].mxu0
  %v2229 = vpop.f32.mrb[0].mxu0
  %v2230 = vadd.f32 %v2054, %v2229
  %v2231 = vpop.f32.mrb[0].mxu0
  %2232 = vmatprep.mubr.bf16.mxu0 %v1766
  %2233 = vmatmul.mubr.bf16.gmra.mrb[0].mxu0 %v1765
  %v2234 = vpop.f32.mrb[0].mxu0
  %v2235 = vadd.f32 %v2059, %v2234
  %v2236 = vpop.f32.mrb[0].mxu0
  %v2237 = vpop.f32.mrb[0].mxu0
  %v2238 = vadd.f32 %v2062, %v2237
  %v2239 = vpop.f32.mrb[0].mxu0
  %2240 = vmatprep.mubr.bf16.mxu0 %v1772
  %2241 = vmatmul.mubr.bf16.gmra.mrb[0].mxu0 %v1771
  %v2242 = vpop.f32.mrb[0].mxu0
  %v2243 = vadd.f32 %v2067, %v2242
  %v2244 = vpop.f32.mrb[0].mxu0
  %v2245 = vpop.f32.mrb[0].mxu0
  %v2246 = vadd.f32 %v2070, %v2245
  %v2247 = vpop.f32.mrb[0].mxu0
  %2248 = vmatprep.mubr.bf16.mxu0 %v1778
  %2249 = vmatmul.mubr.bf16.gmra.mrb[0].mxu0 %v1777
  %v2250 = vpop.f32.mrb[0].mxu0
  %v2251 = vadd.f32 %v2075, %v2250
  %v2252 = vpop.f32.mrb[0].mxu0
  %v2253 = vpop.f32.mrb[0].mxu0
  %v2254 = vadd.f32 %v2078, %v2253
  %v2255 = vpop.f32.mrb[0].mxu0
  %2256 = vmatprep.mubr.bf16.mxu0 %v1784
  %2257 = vmatmul.mubr.bf16.gmra.mrb[0].mxu0 %v1783
  %v2258 = vpop.f32.mrb[0].mxu0
  %v2259 = vadd.f32 %v2083, %v2258
  %v2260 = vpop.f32.mrb[0].mxu0
  %v2261 = vpop.f32.mrb[0].mxu0
  %v2262 = vadd.f32 %v2086, %v2261
  %v2263 = vpop.f32.mrb[0].mxu0
  %2264 = vmatprep.mubr.bf16.mxu0 %v1790
  %2265 = vmatmul.mubr.bf16.gmra.mrb[0].mxu0 %v1789
  %v2266 = vpop.f32.mrb[0].mxu0
  %v2267 = vadd.f32 %v2091, %v2266
  %v2268 = vpop.f32.mrb[0].mxu0
  %v2269 = vpop.f32.mrb[0].mxu0
  %v2270 = vadd.f32 %v2094, %v2269
  %v2271 = vpop.f32.mrb[0].mxu0
  %2272 = vmatprep.mubr.bf16.mxu0 %v1796
  %2273 = vmatmul.mubr.bf16.gmra.mrb[0].mxu0 %v1795
  %v2274 = vpop.f32.mrb[0].mxu0
  %v2275 = vadd.f32 %v2099, %v2274
  %v2276 = vpop.f32.mrb[0].mxu0
  %v2277 = vpop.f32.mrb[0].mxu0
  %v2278 = vadd.f32 %v2102, %v2277
  %v2279 = vpop.f32.mrb[0].mxu0
  %2280 = vmatprep.mubr.bf16.mxu0 %v1802
  %2281 = vmatmul.mubr.bf16.gmra.mrb[0].mxu0 %v1801
  %v2282 = vpop.f32.mrb[0].mxu0
  %v2283 = vadd.f32 %v2107, %v2282
  %v2284 = vpop.f32.mrb[0].mxu0
  %v2285 = vpop.f32.mrb[0].mxu0
  %v2286 = vadd.f32 %v2110, %v2285
  %v2287 = vpop.f32.mrb[0].mxu0
  %2288 = vmatprep.mubr.bf16.mxu0 %v1808
  %2289 = vmatmul.mubr.bf16.gmra.mrb[0].mxu0 %v1807
  %v2290 = vpop.f32.mrb[0].mxu0
  %v2291 = vadd.f32 %v2115, %v2290
  %v2292 = vpop.f32.mrb[0].mxu0
  %v2293 = vpop.f32.mrb[0].mxu0
  %v2294 = vadd.f32 %v2118, %v2293
  %v2295 = vpop.f32.mrb[0].mxu0
  %2296 = vmatprep.mubr.bf16.mxu0 %v1814
  %2297 = vmatmul.mubr.bf16.gmra.mrb[0].mxu0 %v1813
  %v2298 = vpop.f32.mrb[0].mxu0
  %v2299 = vadd.f32 %v2123, %v2298
  %v2300 = vpop.f32.mrb[0].mxu0
  %v2301 = vpop.f32.mrb[0].mxu0
  %v2302 = vadd.f32 %v2126, %v2301
  %v2303 = vpop.f32.mrb[0].mxu0
  %2304 = vmatprep.mubr.bf16.mxu0 %v1820
  %2305 = vmatmul.mubr.bf16.gmra.mrb[0].mxu0 %v1819
  %v2306 = vpop.f32.mrb[0].mxu0
  %v2307 = vadd.f32 %v2131, %v2306
  %v2308 = vpop.f32.mrb[0].mxu0
  %v2309 = vpop.f32.mrb[0].mxu0
  %v2310 = vadd.f32 %v2134, %v2309
  %v2311 = vpop.f32.mrb[0].mxu0
  %2312 = vmatprep.mubr.bf16.mxu0 %v1826
  %2313 = vmatmul.mubr.bf16.gmra.mrb[0].mxu0 %v1825
  %v2314 = vpop.f32.mrb[0].mxu0
  %v2315 = vadd.f32 %v2139, %v2314
  %v2316 = vpop.f32.mrb[0].mxu0
  %v2317 = vpop.f32.mrb[0].mxu0
  %v2318 = vadd.f32 %v2142, %v2317
  %v2319 = vpop.f32.mrb[0].mxu0
  %2320 = vmatprep.mubr.bf16.mxu0 %v1832
  %2321 = vmatmul.mubr.bf16.gmra.mrb[0].mxu0 %v1831
  %v2322 = vpop.f32.mrb[0].mxu0
  %v2323 = vadd.f32 %v2147, %v2322
  %v2324 = vpop.f32.mrb[0].mxu0
  %v2325 = vpop.f32.mrb[0].mxu0
  %v2326 = vadd.f32 %v2150, %v2325
  %v2327 = vpop.f32.mrb[0].mxu0
  %2328 = vmatprep.mubr.bf16.mxu0 %v1838
  %2329 = vmatmul.mubr.bf16.gmra.mrb[0].mxu0 %v1837
  %v2330 = vpop.f32.mrb[0].mxu0
  %v2331 = vadd.f32 %v2155, %v2330
  %v2332 = vpop.f32.mrb[0].mxu0
  %v2333 = vpop.f32.mrb[0].mxu0
  %v2334 = vadd.f32 %v2158, %v2333
  %v2335 = vpop.f32.mrb[0].mxu0
  %2336 = vmatprep.mubr.bf16.mxu0 %v1844
  %2337 = vmatmul.mubr.bf16.gmra.mrb[0].mxu0 %v1843
  %v2338 = vpop.f32.mrb[0].mxu0
  %v2339 = vadd.f32 %v2163, %v2338
  %v2340 = vpop.f32.mrb[0].mxu0
  %v2341 = vpop.f32.mrb[0].mxu0
  %v2342 = vadd.f32 %v2166, %v2341
  %v2343 = vpop.f32.mrb[0].mxu0
  %2344 = vmatprep.mubr.bf16.mxu0 %v1850
  %2345 = vmatmul.mubr.bf16.gmra.mrb[0].mxu0 %v1849
  %v2346 = vpop.f32.mrb[0].mxu0
  %v2347 = vadd.f32 %v2171, %v2346
  %v2348 = vpop.f32.mrb[0].mxu0
  %v2349 = vpop.f32.mrb[0].mxu0
  %v2350 = vadd.f32 %v2174, %v2349
  %v2351 = vpop.f32.mrb[0].mxu0
  %2352 = vmatprep.mubr.bf16.mxu0 %v1856
  %2353 = vmatmul.mubr.bf16.gmra.mrb[0].mxu0 %v1855
  %v2354 = vpop.f32.mrb[0].mxu0
  %v2355 = vadd.f32 %v2179, %v2354
  %v2356 = vpop.f32.mrb[0].mxu0
  %v2357 = vpop.f32.mrb[0].mxu0
  %v2358 = vpop.f32.mrb[0].mxu0
  %2359 = vdwg.mxu0
  %2360 = vmatprep.subr.bf16.mxu0 0
  %2361 = vmatpush1.bf16.msra.mxu0 %v1217
  %2362 = vmatprep.subr.bf16.mxu0 0
  %2363 = vmatpush1.bf16.msra.mxu0 %v1218
  %2364 = vmatprep.subr.bf16.mxu0 0
  %2365 = vmatpush1.bf16.msra.mxu0 %v1219
  %2366 = vmatprep.subr.bf16.mxu0 0
  %2367 = vmatpush1.bf16.msra.mxu0 %v1220
  %2368 = vmatprep.subr.bf16.mxu0 0
  %2369 = vmatpush1.bf16.msra.mxu0 %v1221
  %2370 = vmatprep.subr.bf16.mxu0 0
  %2371 = vmatpush1.bf16.msra.mxu0 %v1222
  %2372 = vmatprep.subr.bf16.mxu0 0
  %2373 = vmatpush1.bf16.msra.mxu0 %v1223
  %2374 = vmatprep.subr.bf16.mxu0 0
  %2375 = vmatpush1.bf16.msra.mxu0 %v1224
  %2376 = vmatprep.subr.bf16.mxu0 0
  %2377 = vmatpush1.bf16.msra.mxu0 %v2006
  %2378 = vmatprep.subr.bf16.mxu0 0
  %2379 = vmatpush1.bf16.msra.mxu0 0
  %2380 = vmatprep.subr.bf16.mxu0 0
  %2381 = vmatpush1.bf16.msra.mxu0 0
  %2382 = vmatprep.subr.bf16.mxu0 0
  %2383 = vmatpush1.bf16.msra.mxu0 0
  %2384 = vmatprep.subr.bf16.mxu0 0
  %2385 = vmatpush1.bf16.msra.mxu0 0
  %2386 = vmatprep.subr.bf16.mxu0 0
  %2387 = vmatpush1.bf16.msra.mxu0 0
  %2388 = vmatprep.subr.bf16.mxu0 0
  %2389 = vmatpush1.bf16.msra.mxu0 0
  %2390 = vmatprep.subr.bf16.mxu0 0
  %2391 = vmatpush1.bf16.msra.mxu0 0
  %2392 = vmatprep.mubr.bf16.mxu0 %v1951
  %2393 = vmatmul.mubr.bf16.gmra.mrb[0].mxu0 %v1755
  %v2394 = vpop.f32.mrb[0].mxu0
  %v2395 = vadd.f32 %v2219, %v2394
  %v2396 = vpop.f32.mrb[0].mxu0
  %v2397 = vpop.f32.mrb[0].mxu0
  %v2398 = vadd.f32 %v2222, %v2397
  %v2399 = vpop.f32.mrb[0].mxu0
  %2400 = vmatprep.mubr.bf16.mxu0 %v1954
  %2401 = vmatmul.mubr.bf16.gmra.mrb[0].mxu0 %v1761
  %v2402 = vpop.f32.mrb[0].mxu0
  %v2403 = vadd.f32 %v2227, %v2402
  %v2404 = vpop.f32.mrb[0].mxu0
  %v2405 = vpop.f32.mrb[0].mxu0
  %v2406 = vadd.f32 %v2230, %v2405
  %v2407 = vpop.f32.mrb[0].mxu0
  %2408 = vmatprep.mubr.bf16.mxu0 %v1957
  %2409 = vmatmul.mubr.bf16.gmra.mrb[0].mxu0 %v1767
  %v2410 = vpop.f32.mrb[0].mxu0
  %v2411 = vadd.f32 %v2235, %v2410
  %v2412 = vpop.f32.mrb[0].mxu0
  %v2413 = vpop.f32.mrb[0].mxu0
  %v2414 = vadd.f32 %v2238, %v2413
  %v2415 = vpop.f32.mrb[0].mxu0
  %2416 = vmatprep.mubr.bf16.mxu0 %v1960
  %2417 = vmatmul.mubr.bf16.gmra.mrb[0].mxu0 %v1773
  %v2418 = vpop.f32.mrb[0].mxu0
  %v2419 = vadd.f32 %v2243, %v2418
  %v2420 = vpop.f32.mrb[0].mxu0
  %v2421 = vpop.f32.mrb[0].mxu0
  %v2422 = vadd.f32 %v2246, %v2421
  %v2423 = vpop.f32.mrb[0].mxu0
  %2424 = vmatprep.mubr.bf16.mxu0 %v1963
  %2425 = vmatmul.mubr.bf16.gmra.mrb[0].mxu0 %v1779
  %v2426 = vpop.f32.mrb[0].mxu0
  %v2427 = vadd.f32 %v2251, %v2426
  %v2428 = vpop.f32.mrb[0].mxu0
  %v2429 = vpop.f32.mrb[0].mxu0
  %v2430 = vadd.f32 %v2254, %v2429
  %v2431 = vpop.f32.mrb[0].mxu0
  %2432 = vmatprep.mubr.bf16.mxu0 %v1966
  %2433 = vmatmul.mubr.bf16.gmra.mrb[0].mxu0 %v1785
  %v2434 = vpop.f32.mrb[0].mxu0
  %v2435 = vadd.f32 %v2259, %v2434
  %v2436 = vpop.f32.mrb[0].mxu0
  %v2437 = vpop.f32.mrb[0].mxu0
  %v2438 = vadd.f32 %v2262, %v2437
  %v2439 = vpop.f32.mrb[0].mxu0
  %2440 = vmatprep.mubr.bf16.mxu0 %v1969
  %2441 = vmatmul.mubr.bf16.gmra.mrb[0].mxu0 %v1791
  %v2442 = vpop.f32.mrb[0].mxu0
  %v2443 = vadd.f32 %v2267, %v2442
  %v2444 = vpop.f32.mrb[0].mxu0
  %v2445 = vpop.f32.mrb[0].mxu0
  %v2446 = vadd.f32 %v2270, %v2445
  %v2447 = vpop.f32.mrb[0].mxu0
  %2448 = vmatprep.mubr.bf16.mxu0 %v1972
  %2449 = vmatmul.mubr.bf16.gmra.mrb[0].mxu0 %v1797
  %v2450 = vpop.f32.mrb[0].mxu0
  %v2451 = vadd.f32 %v2275, %v2450
  %v2452 = vpop.f32.mrb[0].mxu0
  %v2453 = vpop.f32.mrb[0].mxu0
  %v2454 = vadd.f32 %v2278, %v2453
  %v2455 = vpop.f32.mrb[0].mxu0
  %2456 = vmatprep.mubr.bf16.mxu0 %v1975
  %2457 = vmatmul.mubr.bf16.gmra.mrb[0].mxu0 %v1803
  %v2458 = vpop.f32.mrb[0].mxu0
  %v2459 = vadd.f32 %v2283, %v2458
  %v2460 = vpop.f32.mrb[0].mxu0
  %v2461 = vpop.f32.mrb[0].mxu0
  %v2462 = vadd.f32 %v2286, %v2461
  %v2463 = vpop.f32.mrb[0].mxu0
  %2464 = vmatprep.mubr.bf16.mxu0 %v1978
  %2465 = vmatmul.mubr.bf16.gmra.mrb[0].mxu0 %v1809
  %v2466 = vpop.f32.mrb[0].mxu0
  %v2467 = vadd.f32 %v2291, %v2466
  %v2468 = vpop.f32.mrb[0].mxu0
  %v2469 = vpop.f32.mrb[0].mxu0
  %v2470 = vadd.f32 %v2294, %v2469
  %v2471 = vpop.f32.mrb[0].mxu0
  %2472 = vmatprep.mubr.bf16.mxu0 %v1981
  %2473 = vmatmul.mubr.bf16.gmra.mrb[0].mxu0 %v1815
  %v2474 = vpop.f32.mrb[0].mxu0
  %v2475 = vadd.f32 %v2299, %v2474
  %v2476 = vpop.f32.mrb[0].mxu0
  %v2477 = vpop.f32.mrb[0].mxu0
  %v2478 = vadd.f32 %v2302, %v2477
  %v2479 = vpop.f32.mrb[0].mxu0
  %2480 = vmatprep.mubr.bf16.mxu0 %v1984
  %2481 = vmatmul.mubr.bf16.gmra.mrb[0].mxu0 %v1821
  %v2482 = vpop.f32.mrb[0].mxu0
  %v2483 = vadd.f32 %v2307, %v2482
  %v2484 = vpop.f32.mrb[0].mxu0
  %v2485 = vpop.f32.mrb[0].mxu0
  %v2486 = vadd.f32 %v2310, %v2485
  %v2487 = vpop.f32.mrb[0].mxu0
  %2488 = vmatprep.mubr.bf16.mxu0 %v1987
  %2489 = vmatmul.mubr.bf16.gmra.mrb[0].mxu0 %v1827
  %v2490 = vpop.f32.mrb[0].mxu0
  %v2491 = vadd.f32 %v2315, %v2490
  %v2492 = vpop.f32.mrb[0].mxu0
  %v2493 = vpop.f32.mrb[0].mxu0
  %v2494 = vadd.f32 %v2318, %v2493
  %v2495 = vpop.f32.mrb[0].mxu0
  %2496 = vmatprep.mubr.bf16.mxu0 %v1990
  %2497 = vmatmul.mubr.bf16.gmra.mrb[0].mxu0 %v1833
  %v2498 = vpop.f32.mrb[0].mxu0
  %v2499 = vadd.f32 %v2323, %v2498
  %v2500 = vpop.f32.mrb[0].mxu0
  %v2501 = vpop.f32.mrb[0].mxu0
  %v2502 = vadd.f32 %v2326, %v2501
  %v2503 = vpop.f32.mrb[0].mxu0
  %2504 = vmatprep.mubr.bf16.mxu0 %v1993
  %2505 = vmatmul.mubr.bf16.gmra.mrb[0].mxu0 %v1839
  %v2506 = vpop.f32.mrb[0].mxu0
  %v2507 = vadd.f32 %v2331, %v2506
  %v2508 = vpop.f32.mrb[0].mxu0
  %v2509 = vpop.f32.mrb[0].mxu0
  %v2510 = vadd.f32 %v2334, %v2509
  %v2511 = vpop.f32.mrb[0].mxu0
  %2512 = vmatprep.mubr.bf16.mxu0 %v1996
  %2513 = vmatmul.mubr.bf16.gmra.mrb[0].mxu0 %v1845
  %v2514 = vpop.f32.mrb[0].mxu0
  %v2515 = vadd.f32 %v2339, %v2514
  %v2516 = vpop.f32.mrb[0].mxu0
  %v2517 = vpop.f32.mrb[0].mxu0
  %v2518 = vadd.f32 %v2342, %v2517
  %v2519 = vpop.f32.mrb[0].mxu0
  %2520 = vmatprep.mubr.bf16.mxu0 %v1999
  %2521 = vmatmul.mubr.bf16.gmra.mrb[0].mxu0 %v1851
  %v2522 = vpop.f32.mrb[0].mxu0
  %v2523 = vadd.f32 %v2347, %v2522
  %v2524 = vpop.f32.mrb[0].mxu0
  %v2525 = vpop.f32.mrb[0].mxu0
  %v2526 = vadd.f32 %v2350, %v2525
  %v2527 = vpop.f32.mrb[0].mxu0
  %2528 = vmatprep.mubr.bf16.mxu0 %v2002
  %2529 = vmatmul.mubr.bf16.gmra.mrb[0].mxu0 %v1857
  %v2530 = vpop.f32.mrb[0].mxu0
  %v2531 = vadd.f32 %v2355, %v2530
  %v2532 = vpop.f32.mrb[0].mxu0
  %v2533 = vpop.f32.mrb[0].mxu0
  %v2534 = vpop.f32.mrb[0].mxu0
  %2535 = vdwg.mxu0
  %v2536 = vmax.f32 %v2395, 0.0
  %v2537 = vmax.f32 %v2398, 0.0
  %v2538 = vmax.f32 %v2403, 0.0
  %v2539 = vmax.f32 %v2406, 0.0
  %v2540 = vmax.f32 %v2411, 0.0
  %v2541 = vmax.f32 %v2414, 0.0
  %v2542 = vmax.f32 %v2419, 0.0
  %v2543 = vmax.f32 %v2422, 0.0
  %v2544 = vmax.f32 %v2427, 0.0
  %v2545 = vmax.f32 %v2430, 0.0
  %v2546 = vmax.f32 %v2435, 0.0
  %v2547 = vmax.f32 %v2438, 0.0
  %v2548 = vmax.f32 %v2443, 0.0
  %v2549 = vmax.f32 %v2446, 0.0
  %v2550 = vmax.f32 %v2451, 0.0
  %v2551 = vmax.f32 %v2454, 0.0
  %v2552 = vmax.f32 %v2459, 0.0
  %v2553 = vmax.f32 %v2462, 0.0
  %v2554 = vmax.f32 %v2467, 0.0
  %v2555 = vmax.f32 %v2470, 0.0
  %v2556 = vmax.f32 %v2475, 0.0
  %v2557 = vmax.f32 %v2478, 0.0
  %v2558 = vmax.f32 %v2483, 0.0
  %v2559 = vmax.f32 %v2486, 0.0
  %v2560 = vmax.f32 %v2491, 0.0
  %v2561 = vmax.f32 %v2494, 0.0
  %v2562 = vmax.f32 %v2499, 0.0
  %v2563 = vmax.f32 %v2502, 0.0
  %v2564 = vmax.f32 %v2507, 0.0
  %v2565 = vmax.f32 %v2510, 0.0
  %v2566 = vmax.f32 %v2515, 0.0
  %v2567 = vmax.f32 %v2518, 0.0
  %v2568 = vmax.f32 %v2523, 0.0
  %v2569 = vmax.f32 %v2526, 0.0
  %v2570 = vmax.f32 %v2531, 0.0
  %v2571 = vmul.f32 %v2536, %v2536
  %v2572 = vmul.f32 %v2537, %v2537
  %v2573 = vmul.f32 %v2538, %v2538
  %v2574 = vmul.f32 %v2539, %v2539
  %v2575 = vmul.f32 %v2540, %v2540
  %v2576 = vmul.f32 %v2541, %v2541
  %v2577 = vmul.f32 %v2542, %v2542
  %v2578 = vmul.f32 %v2543, %v2543
  %v2579 = vmul.f32 %v2544, %v2544
  %v2580 = vmul.f32 %v2545, %v2545
  %v2581 = vmul.f32 %v2546, %v2546
  %v2582 = vmul.f32 %v2547, %v2547
  %v2583 = vmul.f32 %v2548, %v2548
  %v2584 = vmul.f32 %v2549, %v2549
  %v2585 = vmul.f32 %v2550, %v2550
  %v2586 = vmul.f32 %v2551, %v2551
  %v2587 = vmul.f32 %v2552, %v2552
  %v2588 = vmul.f32 %v2553, %v2553
  %v2589 = vmul.f32 %v2554, %v2554
  %v2590 = vmul.f32 %v2555, %v2555
  %v2591 = vmul.f32 %v2556, %v2556
  %v2592 = vmul.f32 %v2557, %v2557
  %v2593 = vmul.f32 %v2558, %v2558
  %v2594 = vmul.f32 %v2559, %v2559
  %v2595 = vmul.f32 %v2560, %v2560
  %v2596 = vmul.f32 %v2561, %v2561
  %v2597 = vmul.f32 %v2562, %v2562
  %v2598 = vmul.f32 %v2563, %v2563
  %v2599 = vmul.f32 %v2564, %v2564
  %v2600 = vmul.f32 %v2565, %v2565
  %v2601 = vmul.f32 %v2566, %v2566
  %v2602 = vmul.f32 %v2567, %v2567
  %v2603 = vmul.f32 %v2568, %v2568
  %v2604 = vmul.f32 %v2569, %v2569
  %v2605 = vmul.f32 %v2570, %v2570
  %vm2606 = vcmask 1031168
  %v2607 = vsel %vm2606, %v2536, 0.0
  %2608 = vadd.xlane.f32.xlu0 %v2607
  %v2609 = vpop.xlane.xlu0 %2608
  %v2610 = vsel %vm2606, %v2537, 0.0
  %2611 = vadd.xlane.f32.xlu0 %v2610
  %v2612 = vpop.xlane.xlu0 %2611
  %v2613 = vsel %vm2606, %v2538, 0.0
  %2614 = vadd.xlane.f32.xlu0 %v2613
  %v2615 = vpop.xlane.xlu0 %2614
  %v2616 = vsel %vm2606, %v2539, 0.0
  %2617 = vadd.xlane.f32.xlu0 %v2616
  %v2618 = vpop.xlane.xlu0 %2617
  %v2619 = vsel %vm2606, %v2540, 0.0
  %2620 = vadd.xlane.f32.xlu0 %v2619
  %v2621 = vpop.xlane.xlu0 %2620
  %v2622 = vsel %vm2606, %v2541, 0.0
  %2623 = vadd.xlane.f32.xlu0 %v2622
  %v2624 = vpop.xlane.xlu0 %2623
  %v2625 = vsel %vm2606, %v2542, 0.0
  %2626 = vadd.xlane.f32.xlu0 %v2625
  %v2627 = vpop.xlane.xlu0 %2626
  %v2628 = vsel %vm2606, %v2543, 0.0
  %2629 = vadd.xlane.f32.xlu0 %v2628
  %v2630 = vpop.xlane.xlu0 %2629
  %v2631 = vsel %vm2606, %v2544, 0.0
  %2632 = vadd.xlane.f32.xlu0 %v2631
  %v2633 = vpop.xlane.xlu0 %2632
  %v2634 = vsel %vm2606, %v2545, 0.0
  %2635 = vadd.xlane.f32.xlu0 %v2634
  %v2636 = vpop.xlane.xlu0 %2635
  %v2637 = vsel %vm2606, %v2546, 0.0
  %2638 = vadd.xlane.f32.xlu0 %v2637
  %v2639 = vpop.xlane.xlu0 %2638
  %v2640 = vsel %vm2606, %v2547, 0.0
  %2641 = vadd.xlane.f32.xlu0 %v2640
  %v2642 = vpop.xlane.xlu0 %2641
  %v2643 = vsel %vm2606, %v2548, 0.0
  %2644 = vadd.xlane.f32.xlu0 %v2643
  %v2645 = vpop.xlane.xlu0 %2644
  %v2646 = vsel %vm2606, %v2549, 0.0
  %2647 = vadd.xlane.f32.xlu0 %v2646
  %v2648 = vpop.xlane.xlu0 %2647
  %v2649 = vsel %vm2606, %v2550, 0.0
  %2650 = vadd.xlane.f32.xlu0 %v2649
  %v2651 = vpop.xlane.xlu0 %2650
  %v2652 = vsel %vm2606, %v2551, 0.0
  %2653 = vadd.xlane.f32.xlu0 %v2652
  %v2654 = vpop.xlane.xlu0 %2653
  %v2655 = vsel %vm2606, %v2552, 0.0
  %2656 = vadd.xlane.f32.xlu0 %v2655
  %v2657 = vpop.xlane.xlu0 %2656
  %v2658 = vsel %vm2606, %v2553, 0.0
  %2659 = vadd.xlane.f32.xlu0 %v2658
  %v2660 = vpop.xlane.xlu0 %2659
  %v2661 = vsel %vm2606, %v2554, 0.0
  %2662 = vadd.xlane.f32.xlu0 %v2661
  %v2663 = vpop.xlane.xlu0 %2662
  %v2664 = vsel %vm2606, %v2555, 0.0
  %2665 = vadd.xlane.f32.xlu0 %v2664
  %v2666 = vpop.xlane.xlu0 %2665
  %v2667 = vsel %vm2606, %v2556, 0.0
  %2668 = vadd.xlane.f32.xlu0 %v2667
  %v2669 = vpop.xlane.xlu0 %2668
  %v2670 = vsel %vm2606, %v2557, 0.0
  %2671 = vadd.xlane.f32.xlu0 %v2670
  %v2672 = vpop.xlane.xlu0 %2671
  %v2673 = vsel %vm2606, %v2558, 0.0
  %2674 = vadd.xlane.f32.xlu0 %v2673
  %v2675 = vpop.xlane.xlu0 %2674
  %v2676 = vsel %vm2606, %v2559, 0.0
  %2677 = vadd.xlane.f32.xlu0 %v2676
  %v2678 = vpop.xlane.xlu0 %2677
  %v2679 = vsel %vm2606, %v2560, 0.0
  %2680 = vadd.xlane.f32.xlu0 %v2679
  %v2681 = vpop.xlane.xlu0 %2680
  %v2682 = vsel %vm2606, %v2561, 0.0
  %2683 = vadd.xlane.f32.xlu0 %v2682
  %v2684 = vpop.xlane.xlu0 %2683
  %v2685 = vsel %vm2606, %v2562, 0.0
  %2686 = vadd.xlane.f32.xlu0 %v2685
  %v2687 = vpop.xlane.xlu0 %2686
  %v2688 = vsel %vm2606, %v2563, 0.0
  %2689 = vadd.xlane.f32.xlu0 %v2688
  %v2690 = vpop.xlane.xlu0 %2689
  %v2691 = vsel %vm2606, %v2564, 0.0
  %2692 = vadd.xlane.f32.xlu0 %v2691
  %v2693 = vpop.xlane.xlu0 %2692
  %v2694 = vsel %vm2606, %v2565, 0.0
  %2695 = vadd.xlane.f32.xlu0 %v2694
  %v2696 = vpop.xlane.xlu0 %2695
  %v2697 = vsel %vm2606, %v2566, 0.0
  %2698 = vadd.xlane.f32.xlu0 %v2697
  %v2699 = vpop.xlane.xlu0 %2698
  %v2700 = vsel %vm2606, %v2567, 0.0
  %2701 = vadd.xlane.f32.xlu0 %v2700
  %v2702 = vpop.xlane.xlu0 %2701
  %v2703 = vsel %vm2606, %v2568, 0.0
  %2704 = vadd.xlane.f32.xlu0 %v2703
  %v2705 = vpop.xlane.xlu0 %2704
  %v2706 = vsel %vm2606, %v2569, 0.0
  %2707 = vadd.xlane.f32.xlu0 %v2706
  %v2708 = vpop.xlane.xlu0 %2707
  %v2709 = vsel %vm2606, %v2570, 0.0
  %2710 = vadd.xlane.f32.xlu0 %v2709
  %v2711 = vpop.xlane.xlu0 %2710
  %v2712 = vsel %vm2606, %v2571, 0.0
  %2713 = vadd.xlane.f32.xlu0 %v2712
  %v2714 = vpop.xlane.xlu0 %2713
  %v2715 = vsel %vm2606, %v2572, 0.0
  %2716 = vadd.xlane.f32.xlu0 %v2715
  %v2717 = vpop.xlane.xlu0 %2716
  %v2718 = vsel %vm2606, %v2573, 0.0
  %2719 = vadd.xlane.f32.xlu0 %v2718
  %v2720 = vpop.xlane.xlu0 %2719
  %v2721 = vsel %vm2606, %v2574, 0.0
  %2722 = vadd.xlane.f32.xlu0 %v2721
  %v2723 = vpop.xlane.xlu0 %2722
  %v2724 = vsel %vm2606, %v2575, 0.0
  %2725 = vadd.xlane.f32.xlu0 %v2724
  %v2726 = vpop.xlane.xlu0 %2725
  %v2727 = vsel %vm2606, %v2576, 0.0
  %2728 = vadd.xlane.f32.xlu0 %v2727
  %v2729 = vpop.xlane.xlu0 %2728
  %v2730 = vsel %vm2606, %v2577, 0.0
  %2731 = vadd.xlane.f32.xlu0 %v2730
  %v2732 = vpop.xlane.xlu0 %2731
  %v2733 = vsel %vm2606, %v2578, 0.0
  %2734 = vadd.xlane.f32.xlu0 %v2733
  %v2735 = vpop.xlane.xlu0 %2734
  %v2736 = vsel %vm2606, %v2579, 0.0
  %2737 = vadd.xlane.f32.xlu0 %v2736
  %v2738 = vpop.xlane.xlu0 %2737
  %v2739 = vsel %vm2606, %v2580, 0.0
  %2740 = vadd.xlane.f32.xlu0 %v2739
  %v2741 = vpop.xlane.xlu0 %2740
  %v2742 = vsel %vm2606, %v2581, 0.0
  %2743 = vadd.xlane.f32.xlu0 %v2742
  %v2744 = vpop.xlane.xlu0 %2743
  %v2745 = vsel %vm2606, %v2582, 0.0
  %2746 = vadd.xlane.f32.xlu0 %v2745
  %v2747 = vpop.xlane.xlu0 %2746
  %v2748 = vsel %vm2606, %v2583, 0.0
  %2749 = vadd.xlane.f32.xlu0 %v2748
  %v2750 = vpop.xlane.xlu0 %2749
  %v2751 = vsel %vm2606, %v2584, 0.0
  %2752 = vadd.xlane.f32.xlu0 %v2751
  %v2753 = vpop.xlane.xlu0 %2752
  %v2754 = vsel %vm2606, %v2585, 0.0
  %2755 = vadd.xlane.f32.xlu0 %v2754
  %v2756 = vpop.xlane.xlu0 %2755
  %v2757 = vsel %vm2606, %v2586, 0.0
  %2758 = vadd.xlane.f32.xlu0 %v2757
  %v2759 = vpop.xlane.xlu0 %2758
  %v2760 = vsel %vm2606, %v2587, 0.0
  %2761 = vadd.xlane.f32.xlu0 %v2760
  %v2762 = vpop.xlane.xlu0 %2761
  %v2763 = vsel %vm2606, %v2588, 0.0
  %2764 = vadd.xlane.f32.xlu0 %v2763
  %v2765 = vpop.xlane.xlu0 %2764
  %v2766 = vsel %vm2606, %v2589, 0.0
  %2767 = vadd.xlane.f32.xlu0 %v2766
  %v2768 = vpop.xlane.xlu0 %2767
  %v2769 = vsel %vm2606, %v2590, 0.0
  %2770 = vadd.xlane.f32.xlu0 %v2769
  %v2771 = vpop.xlane.xlu0 %2770
  %v2772 = vsel %vm2606, %v2591, 0.0
  %2773 = vadd.xlane.f32.xlu0 %v2772
  %v2774 = vpop.xlane.xlu0 %2773
  %v2775 = vsel %vm2606, %v2592, 0.0
  %2776 = vadd.xlane.f32.xlu0 %v2775
  %v2777 = vpop.xlane.xlu0 %2776
  %v2778 = vsel %vm2606, %v2593, 0.0
  %2779 = vadd.xlane.f32.xlu0 %v2778
  %v2780 = vpop.xlane.xlu0 %2779
  %v2781 = vsel %vm2606, %v2594, 0.0
  %2782 = vadd.xlane.f32.xlu0 %v2781
  %v2783 = vpop.xlane.xlu0 %2782
  %v2784 = vsel %vm2606, %v2595, 0.0
  %2785 = vadd.xlane.f32.xlu0 %v2784
  %v2786 = vpop.xlane.xlu0 %2785
  %v2787 = vsel %vm2606, %v2596, 0.0
  %2788 = vadd.xlane.f32.xlu0 %v2787
  %v2789 = vpop.xlane.xlu0 %2788
  %v2790 = vsel %vm2606, %v2597, 0.0
  %2791 = vadd.xlane.f32.xlu0 %v2790
  %v2792 = vpop.xlane.xlu0 %2791
  %v2793 = vsel %vm2606, %v2598, 0.0
  %2794 = vadd.xlane.f32.xlu0 %v2793
  %v2795 = vpop.xlane.xlu0 %2794
  %v2796 = vsel %vm2606, %v2599, 0.0
  %2797 = vadd.xlane.f32.xlu0 %v2796
  %v2798 = vpop.xlane.xlu0 %2797
  %v2799 = vsel %vm2606, %v2600, 0.0
  %2800 = vadd.xlane.f32.xlu0 %v2799
  %v2801 = vpop.xlane.xlu0 %2800
  %v2802 = vsel %vm2606, %v2601, 0.0
  %2803 = vadd.xlane.f32.xlu0 %v2802
  %v2804 = vpop.xlane.xlu0 %2803
  %v2805 = vsel %vm2606, %v2602, 0.0
  %2806 = vadd.xlane.f32.xlu0 %v2805
  %v2807 = vpop.xlane.xlu0 %2806
  %v2808 = vsel %vm2606, %v2603, 0.0
  %2809 = vadd.xlane.f32.xlu0 %v2808
  %v2810 = vpop.xlane.xlu0 %2809
  %v2811 = vsel %vm2606, %v2604, 0.0
  %2812 = vadd.xlane.f32.xlu0 %v2811
  %v2813 = vpop.xlane.xlu0 %2812
  %v2814 = vsel %vm2606, %v2605, 0.0
  %2815 = vadd.xlane.f32.xlu0 %v2814
  %v2816 = vpop.xlane.xlu0 %2815
  %v2817 = vld [vmem:[%s9] sm:$0xff]
  %v2818 = vld [vmem:[%s9 + $0x8] sm:$0xff]
  %v2819 = vld [vmem:[%s9 + $0x10] sm:$0xff]
  %v2820 = vld [vmem:[%s9 + $0x18] sm:$0xff]
  %v2821 = vld [vmem:[%s9 + $0x20] sm:$0xff]
  %v2822 = vld [vmem:[%s9 + $0x28] sm:$0xff]
  %v2823 = vld [vmem:[%s9 + $0x30] sm:$0xff]
  %v2824 = vld [vmem:[%s9 + $0x38] sm:$0xff]
  %v2825 = vld [vmem:[%s9 + $0x40] sm:$0xff]
  %v2826 = vld [vmem:[%s9 + $0x48] sm:$0xff]
  %vm2827 = vcmask 392192
  %v2829 = vsel %vm2827, %v2821, 0
  %v2832 = vsel %vm2827, %v2826, 0
  %2834 = vmatprep.subr.mxu0 0.0
  %2835 = vmatpush1.msra.mxu0 %v2609
  %2836 = vmatprep.subr.mxu0 0.0
  %2837 = vmatpush1.msra.mxu0 %v2612
  %2838 = vmatprep.subr.mxu0 0.0
  %2839 = vmatpush1.msra.mxu0 %v2615
  %2840 = vmatprep.subr.mxu0 0.0
  %2841 = vmatpush1.msra.mxu0 %v2618
  %2842 = vmatprep.subr.mxu0 0.0
  %2843 = vmatpush1.msra.mxu0 %v2621
  %2844 = vmatprep.subr.mxu0 0.0
  %2845 = vmatpush1.msra.mxu0 %v2624
  %2846 = vmatprep.subr.mxu0 0.0
  %2847 = vmatpush1.msra.mxu0 %v2627
  %2848 = vmatprep.subr.mxu0 0.0
  %2849 = vmatpush1.msra.mxu0 %v2630
  %2850 = vmatprep.subr.mxu0 0.0
  %2851 = vmatpush1.msra.mxu0 %v2633
  %2852 = vmatprep.subr.mxu0 0.0
  %2853 = vmatpush1.msra.mxu0 %v2636
  %2854 = vmatprep.subr.mxu0 0.0
  %2855 = vmatpush1.msra.mxu0 %v2639
  %2856 = vmatprep.subr.mxu0 0.0
  %2857 = vmatpush1.msra.mxu0 %v2642
  %2858 = vmatprep.subr.mxu0 0.0
  %2859 = vmatpush1.msra.mxu0 %v2645
  %2860 = vmatprep.subr.mxu0 0.0
  %2861 = vmatpush1.msra.mxu0 %v2648
  %2862 = vmatprep.subr.mxu0 0.0
  %2863 = vmatpush1.msra.mxu0 %v2651
  %2864 = vmatprep.subr.mxu0 0.0
  %2865 = vmatpush1.msra.mxu0 %v2654
  %2866 = vmatprep.subr.mxu0 0.0
  %2867 = vmatpush1.msra.mxu0 %v2657
  %2868 = vmatprep.subr.mxu0 0.0
  %2869 = vmatpush1.msra.mxu0 %v2660
  %2870 = vmatprep.subr.mxu0 0.0
  %2871 = vmatpush1.msra.mxu0 %v2663
  %2872 = vmatprep.subr.mxu0 0.0
  %2873 = vmatpush1.msra.mxu0 %v2666
  %2874 = vmatprep.subr.mxu0 0.0
  %2875 = vmatpush1.msra.mxu0 %v2669
  %2876 = vmatprep.subr.mxu0 0.0
  %2877 = vmatpush1.msra.mxu0 %v2672
  %2878 = vmatprep.subr.mxu0 0.0
  %2879 = vmatpush1.msra.mxu0 %v2675
  %2880 = vmatprep.subr.mxu0 0.0
  %2881 = vmatpush1.msra.mxu0 %v2678
  %2882 = vmatprep.subr.mxu0 0.0
  %2883 = vmatpush1.msra.mxu0 %v2681
  %2884 = vmatprep.subr.mxu0 0.0
  %2885 = vmatpush1.msra.mxu0 %v2684
  %2886 = vmatprep.subr.mxu0 0.0
  %2887 = vmatpush1.msra.mxu0 %v2687
  %2888 = vmatprep.subr.mxu0 0.0
  %2889 = vmatpush1.msra.mxu0 %v2690
  %2890 = vmatprep.subr.mxu0 0.0
  %2891 = vmatpush1.msra.mxu0 %v2693
  %2892 = vmatprep.subr.mxu0 0.0
  %2893 = vmatpush1.msra.mxu0 %v2696
  %2894 = vmatprep.subr.mxu0 0.0
  %2895 = vmatpush1.msra.mxu0 %v2699
  %2896 = vmatprep.subr.mxu0 0.0
  %2897 = vmatpush1.msra.mxu0 %v2702
  %2898 = vmatprep.mubr.f32.mxu0 %v2818
  %2899 = vmatmul.mubr.f32.gmra.mrb[0].mxu0 %v2817
  %v2900 = vpop.f32.mrb[0].mxu0
  %v2901 = vadd.f32 0.0, %v2900
  %v2902 = vpop.f32.mrb[0].mxu0
  %2903 = vmatprep.mubr.f32.mxu0 %v2823
  %2904 = vmatmul.mubr.f32.gmra.mrb[0].mxu0 %v2822
  %v2905 = vpop.f32.mrb[0].mxu0
  %v2906 = vadd.f32 0.0, %v2905
  %v2907 = vpop.f32.mrb[0].mxu0
  %2908 = vdwg.mxu0
  %2909 = vmatprep.subr.mxu0 0.0
  %2910 = vmatpush1.msra.mxu0 %v2705
  %2911 = vmatprep.subr.mxu0 0.0
  %2912 = vmatpush1.msra.mxu0 %v2708
  %2913 = vmatprep.subr.mxu0 0.0
  %2914 = vmatpush1.msra.mxu0 %v2711
  %2915 = vmatprep.subr.mxu0 0.0
  %2916 = vmatpush1.msra.mxu0 %v2714
  %2917 = vmatprep.subr.mxu0 0.0
  %2918 = vmatpush1.msra.mxu0 %v2717
  %2919 = vmatprep.subr.mxu0 0.0
  %2920 = vmatpush1.msra.mxu0 %v2720
  %2921 = vmatprep.subr.mxu0 0.0
  %2922 = vmatpush1.msra.mxu0 %v2723
  %2923 = vmatprep.subr.mxu0 0.0
  %2924 = vmatpush1.msra.mxu0 %v2726
  %2925 = vmatprep.subr.mxu0 0.0
  %2926 = vmatpush1.msra.mxu0 %v2729
  %2927 = vmatprep.subr.mxu0 0.0
  %2928 = vmatpush1.msra.mxu0 %v2732
  %2929 = vmatprep.subr.mxu0 0.0
  %2930 = vmatpush1.msra.mxu0 %v2735
  %2931 = vmatprep.subr.mxu0 0.0
  %2932 = vmatpush1.msra.mxu0 %v2738
  %2933 = vmatprep.subr.mxu0 0.0
  %2934 = vmatpush1.msra.mxu0 %v2741
  %2935 = vmatprep.subr.mxu0 0.0
  %2936 = vmatpush1.msra.mxu0 %v2744
  %2937 = vmatprep.subr.mxu0 0.0
  %2938 = vmatpush1.msra.mxu0 %v2747
  %2939 = vmatprep.subr.mxu0 0.0
  %2940 = vmatpush1.msra.mxu0 %v2750
  %2941 = vmatprep.subr.mxu0 0.0
  %2942 = vmatpush1.msra.mxu0 %v2753
  %2943 = vmatprep.subr.mxu0 0.0
  %2944 = vmatpush1.msra.mxu0 %v2756
  %2945 = vmatprep.subr.mxu0 0.0
  %2946 = vmatpush1.msra.mxu0 %v2759
  %2947 = vmatprep.subr.mxu0 0.0
  %2948 = vmatpush1.msra.mxu0 %v2762
  %2949 = vmatprep.subr.mxu0 0.0
  %2950 = vmatpush1.msra.mxu0 %v2765
  %2951 = vmatprep.subr.mxu0 0.0
  %2952 = vmatpush1.msra.mxu0 %v2768
  %2953 = vmatprep.subr.mxu0 0.0
  %2954 = vmatpush1.msra.mxu0 %v2771
  %2955 = vmatprep.subr.mxu0 0.0
  %2956 = vmatpush1.msra.mxu0 %v2774
  %2957 = vmatprep.subr.mxu0 0.0
  %2958 = vmatpush1.msra.mxu0 %v2777
  %2959 = vmatprep.subr.mxu0 0.0
  %2960 = vmatpush1.msra.mxu0 %v2780
  %2961 = vmatprep.subr.mxu0 0.0
  %2962 = vmatpush1.msra.mxu0 %v2783
  %2963 = vmatprep.subr.mxu0 0.0
  %2964 = vmatpush1.msra.mxu0 %v2786
  %2965 = vmatprep.subr.mxu0 0.0
  %2966 = vmatpush1.msra.mxu0 %v2789
  %2967 = vmatprep.subr.mxu0 0.0
  %2968 = vmatpush1.msra.mxu0 %v2792
  %2969 = vmatprep.subr.mxu0 0.0
  %2970 = vmatpush1.msra.mxu0 %v2795
  %2971 = vmatprep.subr.mxu0 0.0
  %2972 = vmatpush1.msra.mxu0 %v2798
  %2973 = vmatprep.mubr.f32.mxu0 %v2820
  %2974 = vmatmul.mubr.f32.gmra.mrb[0].mxu0 %v2819
  %v2975 = vpop.f32.mrb[0].mxu0
  %v2976 = vadd.f32 %v2901, %v2975
  %v2977 = vpop.f32.mrb[0].mxu0
  %2978 = vmatprep.mubr.f32.mxu0 %v2825
  %2979 = vmatmul.mubr.f32.gmra.mrb[0].mxu0 %v2824
  %v2980 = vpop.f32.mrb[0].mxu0
  %v2981 = vadd.f32 %v2906, %v2980
  %v2982 = vpop.f32.mrb[0].mxu0
  %2983 = vdwg.mxu0
  %2984 = vmatprep.subr.mxu0 0.0
  %2985 = vmatpush1.msra.mxu0 %v2801
  %2986 = vmatprep.subr.mxu0 0.0
  %2987 = vmatpush1.msra.mxu0 %v2804
  %2988 = vmatprep.subr.mxu0 0.0
  %2989 = vmatpush1.msra.mxu0 %v2807
  %2990 = vmatprep.subr.mxu0 0.0
  %2991 = vmatpush1.msra.mxu0 %v2810
  %2992 = vmatprep.subr.mxu0 0.0
  %2993 = vmatpush1.msra.mxu0 %v2813
  %2994 = vmatprep.subr.mxu0 0.0
  %2995 = vmatpush1.msra.mxu0 %v2816
  %2996 = vmatprep.subr.mxu0 0.0
  %2997 = vmatpush1.msra.mxu0 0.0
  %2998 = vmatprep.subr.mxu0 0.0
  %2999 = vmatpush1.msra.mxu0 0.0
  %3000 = vmatprep.subr.mxu0 0.0
  %3001 = vmatpush1.msra.mxu0 0.0
  %3002 = vmatprep.subr.mxu0 0.0
  %3003 = vmatpush1.msra.mxu0 0.0
  %3004 = vmatprep.subr.mxu0 0.0
  %3005 = vmatpush1.msra.mxu0 0.0
  %3006 = vmatprep.subr.mxu0 0.0
  %3007 = vmatpush1.msra.mxu0 0.0
  %3008 = vmatprep.subr.mxu0 0.0
  %3009 = vmatpush1.msra.mxu0 0.0
  %3010 = vmatprep.subr.mxu0 0.0
  %3011 = vmatpush1.msra.mxu0 0.0
  %3012 = vmatprep.subr.mxu0 0.0
  %3013 = vmatpush1.msra.mxu0 0.0
  %3014 = vmatprep.subr.mxu0 0.0
  %3015 = vmatpush1.msra.mxu0 0.0
  %3016 = vmatprep.subr.mxu0 0.0
  %3017 = vmatpush1.msra.mxu0 0.0
  %3018 = vmatprep.subr.mxu0 0.0
  %3019 = vmatpush1.msra.mxu0 0.0
  %3020 = vmatprep.subr.mxu0 0.0
  %3021 = vmatpush1.msra.mxu0 0.0
  %3022 = vmatprep.subr.mxu0 0.0
  %3023 = vmatpush1.msra.mxu0 0.0
  %3024 = vmatprep.subr.mxu0 0.0
  %3025 = vmatpush1.msra.mxu0 0.0
  %3026 = vmatprep.subr.mxu0 0.0
  %3027 = vmatpush1.msra.mxu0 0.0
  %3028 = vmatprep.subr.mxu0 0.0
  %3029 = vmatpush1.msra.mxu0 0.0
  %3030 = vmatprep.subr.mxu0 0.0
  %3031 = vmatpush1.msra.mxu0 0.0
  %3032 = vmatprep.subr.mxu0 0.0
  %3033 = vmatpush1.msra.mxu0 0.0
  %3034 = vmatprep.subr.mxu0 0.0
  %3035 = vmatpush1.msra.mxu0 0.0
  %3036 = vmatprep.subr.mxu0 0.0
  %3037 = vmatpush1.msra.mxu0 0.0
  %3038 = vmatprep.subr.mxu0 0.0
  %3039 = vmatpush1.msra.mxu0 0.0
  %3040 = vmatprep.subr.mxu0 0.0
  %3041 = vmatpush1.msra.mxu0 0.0
  %3042 = vmatprep.subr.mxu0 0.0
  %3043 = vmatpush1.msra.mxu0 0.0
  %3044 = vmatprep.subr.mxu0 0.0
  %3045 = vmatpush1.msra.mxu0 0.0
  %3046 = vmatprep.subr.mxu0 0.0
  %3047 = vmatpush1.msra.mxu0 0.0
  %3048 = vmatprep.mubr.f32.mxu0 0.0
  %3049 = vmatmul.mubr.f32.gmra.mrb[0].mxu0 %v2829
  %v3050 = vpop.f32.mrb[0].mxu0
  %v3051 = vadd.f32 %v2976, %v3050
  %v3052 = vpop.f32.mrb[0].mxu0
  %3053 = vmatprep.mubr.f32.mxu0 0.0
  %3054 = vmatmul.mubr.f32.gmra.mrb[0].mxu0 %v2832
  %v3055 = vpop.f32.mrb[0].mxu0
  %v3056 = vadd.f32 %v2981, %v3055
  %v3057 = vpop.f32.mrb[0].mxu0
  %3058 = vdwg.mxu0
  %v3059 = vmul.f32 %v3051, 0.00022675737
  %v3060 = vmul.f32 %v3056, 0.00022675737
  %v3061 = vmul.f32 %v3059, %v3059
  %v3062 = vsub.f32 %v3060, %v3061
  %v3063 = vmax.f32 %v3062, 0.0
  %v3064 = vld [vmem:[%s13] sm:$0xff]
  %v3065 = vadd.f32 %v3063, 1e-05
  %v3066 = vrsqrt.pop %v3065
  %v3067 = vmul.f32 %v3064, %v3066
  %v3068 = vld [vmem:[%s15] sm:$0xff]
  %v3069 = vmul.f32 %v3059, %v3067
  %v3070 = vsub.f32 %v3068, %v3069
  %v3071 = vld [vmem:[%s11] sm:$0xff]
  %v3072 = vld [vmem:[%s11 + $0x8] sm:$0xff]
  %v3073 = vld [vmem:[%s11 + $0x10] sm:$0xff]
  %v3074 = vld [vmem:[%s11 + $0x18] sm:$0xff]
  %v3075 = vld [vmem:[%s11 + $0x20] sm:$0xff]
  %v3076 = vld [vmem:[%s11 + $0x28] sm:$0xff]
  %v3077 = vld [vmem:[%s11 + $0x30] sm:$0xff]
  %v3078 = vld [vmem:[%s11 + $0x38] sm:$0xff]
  %v3079 = vld [vmem:[%s11 + $0x40] sm:$0xff]
  %v3080 = vld [vmem:[%s11 + $0x48] sm:$0xff]
  %v3081 = vld [vmem:[%s11 + $0x50] sm:$0xff]
  %v3082 = vld [vmem:[%s11 + $0x58] sm:$0xff]
  %v3083 = vld [vmem:[%s11 + $0x60] sm:$0xff]
  %v3084 = vld [vmem:[%s11 + $0x68] sm:$0xff]
  %v3085 = vld [vmem:[%s11 + $0x70] sm:$0xff]
  %v3086 = vld [vmem:[%s11 + $0x78] sm:$0xff]
  %v3087 = vld [vmem:[%s11 + $0x80] sm:$0xff]
  %v3088 = vld [vmem:[%s11 + $0x88] sm:$0xff]
  %v3089 = vld [vmem:[%s11 + $0x90] sm:$0xff]
  %v3090 = vld [vmem:[%s11 + $0x98] sm:$0xff]
  %v3091 = vld [vmem:[%s11 + $0xa0] sm:$0xff]
  %v3092 = vld [vmem:[%s11 + $0xa8] sm:$0xff]
  %v3093 = vld [vmem:[%s11 + $0xb0] sm:$0xff]
  %v3094 = vld [vmem:[%s11 + $0xb8] sm:$0xff]
  %v3095 = vld [vmem:[%s11 + $0xc0] sm:$0xff]
  %v3096 = vld [vmem:[%s11 + $0xc8] sm:$0xff]
  %v3097 = vld [vmem:[%s11 + $0xd0] sm:$0xff]
  %v3098 = vld [vmem:[%s11 + $0xd8] sm:$0xff]
  %v3099 = vld [vmem:[%s11 + $0xe0] sm:$0xff]
  %v3100 = vld [vmem:[%s11 + $0xe8] sm:$0xff]
  %v3101 = vld [vmem:[%s11 + $0xf0] sm:$0xff]
  %v3102 = vld [vmem:[%s11 + $0xf8] sm:$0xff]
  %v3103 = vld [vmem:[%s11 + $0x100] sm:$0xff]
  %v3104 = vld [vmem:[%s11 + $0x108] sm:$0xff]
  %v3105 = vld [vmem:[%s11 + $0x110] sm:$0xff]
  %v3106 = vld [vmem:[%s11 + $0x118] sm:$0xff]
  %v3107 = vld [vmem:[%s11 + $0x120] sm:$0xff]
  %v3108 = vld [vmem:[%s11 + $0x128] sm:$0xff]
  %v3109 = vld [vmem:[%s11 + $0x130] sm:$0xff]
  %v3110 = vld [vmem:[%s11 + $0x138] sm:$0xff]
  %v3111 = vld [vmem:[%s11 + $0x140] sm:$0xff]
  %v3112 = vld [vmem:[%s11 + $0x148] sm:$0xff]
  %v3113 = vld [vmem:[%s11 + $0x150] sm:$0xff]
  %v3114 = vld [vmem:[%s11 + $0x158] sm:$0xff]
  %v3115 = vld [vmem:[%s11 + $0x160] sm:$0xff]
  %v3116 = vld [vmem:[%s11 + $0x168] sm:$0xff]
  %v3117 = vld [vmem:[%s11 + $0x170] sm:$0xff]
  %v3118 = vld [vmem:[%s11 + $0x178] sm:$0xff]
  %v3119 = vld [vmem:[%s11 + $0x180] sm:$0xff]
  %v3120 = vld [vmem:[%s11 + $0x188] sm:$0xff]
  %v3121 = vld [vmem:[%s11 + $0x190] sm:$0xff]
  %v3122 = vld [vmem:[%s11 + $0x198] sm:$0xff]
  %v3123 = vld [vmem:[%s11 + $0x1a0] sm:$0xff]
  %v3124 = vld [vmem:[%s11 + $0x1a8] sm:$0xff]
  %v3125 = vld [vmem:[%s11 + $0x1b0] sm:$0xff]
  %v3126 = vld [vmem:[%s11 + $0x1b8] sm:$0xff]
  %v3127 = vld [vmem:[%s11 + $0x1c0] sm:$0xff]
  %v3128 = vld [vmem:[%s11 + $0x1c8] sm:$0xff]
  %v3129 = vld [vmem:[%s11 + $0x1d0] sm:$0xff]
  %v3130 = vld [vmem:[%s11 + $0x1d8] sm:$0xff]
  %v3131 = vld [vmem:[%s11 + $0x1e0] sm:$0xff]
  %v3132 = vld [vmem:[%s11 + $0x1e8] sm:$0xff]
  %v3133 = vld [vmem:[%s11 + $0x1f0] sm:$0xff]
  %v3134 = vld [vmem:[%s11 + $0x1f8] sm:$0xff]
  %v3135 = vld [vmem:[%s11 + $0x200] sm:$0xff]
  %v3136 = vld [vmem:[%s11 + $0x208] sm:$0xff]
  %v3137 = vld [vmem:[%s11 + $0x210] sm:$0xff]
  %v3138 = vld [vmem:[%s11 + $0x218] sm:$0xff]
  %v3139 = vld [vmem:[%s11 + $0x220] sm:$0xff]
  %v3140 = vld [vmem:[%s11 + $0x228] sm:$0xff]
  %vm3141 = vcmask 130048
  %v3143 = vsel %vm3141, %v3071, 0
  %v3146 = vsel %vm3141, %v3072, 0
  %v3149 = vsel %vm3141, %v3073, 0
  %v3152 = vsel %vm3141, %v3074, 0
  %v3155 = vsel %vm3141, %v3075, 0
  %v3158 = vsel %vm3141, %v3076, 0
  %v3161 = vsel %vm3141, %v3077, 0
  %v3164 = vsel %vm3141, %v3078, 0
  %v3167 = vsel %vm3141, %v3079, 0
  %v3170 = vsel %vm3141, %v3080, 0
  %v3173 = vsel %vm3141, %v3081, 0
  %v3176 = vsel %vm3141, %v3082, 0
  %v3179 = vsel %vm3141, %v3083, 0
  %v3182 = vsel %vm3141, %v3084, 0
  %v3185 = vsel %vm3141, %v3085, 0
  %v3188 = vsel %vm3141, %v3086, 0
  %v3191 = vsel %vm3141, %v3087, 0
  %v3194 = vsel %vm3141, %v3088, 0
  %v3197 = vsel %vm3141, %v3089, 0
  %v3200 = vsel %vm3141, %v3090, 0
  %v3203 = vsel %vm3141, %v3091, 0
  %v3206 = vsel %vm3141, %v3092, 0
  %v3209 = vsel %vm3141, %v3093, 0
  %v3212 = vsel %vm3141, %v3094, 0
  %v3215 = vsel %vm3141, %v3095, 0
  %v3218 = vsel %vm3141, %v3096, 0
  %v3221 = vsel %vm3141, %v3097, 0
  %v3224 = vsel %vm3141, %v3098, 0
  %v3227 = vsel %vm3141, %v3099, 0
  %v3230 = vsel %vm3141, %v3100, 0
  %v3233 = vsel %vm3141, %v3101, 0
  %v3236 = vsel %vm3141, %v3102, 0
  %v3239 = vsel %vm3141, %v3103, 0
  %v3242 = vsel %vm3141, %v3104, 0
  %v3245 = vsel %vm3141, %v3105, 0
  %v3248 = vsel %vm3141, %v3106, 0
  %v3251 = vsel %vm3141, %v3107, 0
  %v3254 = vsel %vm3141, %v3108, 0
  %v3257 = vsel %vm3141, %v3109, 0
  %v3260 = vsel %vm3141, %v3110, 0
  %v3263 = vsel %vm3141, %v3111, 0
  %v3266 = vsel %vm3141, %v3112, 0
  %v3269 = vsel %vm3141, %v3113, 0
  %v3272 = vsel %vm3141, %v3114, 0
  %v3275 = vsel %vm3141, %v3115, 0
  %v3278 = vsel %vm3141, %v3116, 0
  %v3281 = vsel %vm3141, %v3117, 0
  %v3284 = vsel %vm3141, %v3118, 0
  %v3287 = vsel %vm3141, %v3119, 0
  %v3290 = vsel %vm3141, %v3120, 0
  %v3293 = vsel %vm3141, %v3121, 0
  %v3296 = vsel %vm3141, %v3122, 0
  %v3299 = vsel %vm3141, %v3123, 0
  %v3302 = vsel %vm3141, %v3124, 0
  %v3305 = vsel %vm3141, %v3125, 0
  %v3308 = vsel %vm3141, %v3126, 0
  %v3311 = vsel %vm3141, %v3127, 0
  %v3314 = vsel %vm3141, %v3128, 0
  %v3317 = vsel %vm3141, %v3129, 0
  %v3320 = vsel %vm3141, %v3130, 0
  %v3323 = vsel %vm3141, %v3131, 0
  %v3326 = vsel %vm3141, %v3132, 0
  %v3329 = vsel %vm3141, %v3133, 0
  %v3332 = vsel %vm3141, %v3134, 0
  %v3335 = vsel %vm3141, %v3135, 0
  %v3338 = vsel %vm3141, %v3136, 0
  %v3341 = vsel %vm3141, %v3137, 0
  %v3344 = vsel %vm3141, %v3138, 0
  %v3347 = vsel %vm3141, %v3139, 0
  %v3350 = vsel %vm3141, %v3140, 0
  %3352 = vmatprep.subr.mxu0 0.0
  %3353 = vmatpush1.msra.mxu0 %v3067
  %3354 = vmatprep.subr.mxu0 0.0
  %3355 = vmatpush1.msra.mxu0 %v3070
  %3356 = vmatprep.subr.mxu0 0.0
  %3357 = vmatpush1.msra.mxu0 0.0
  %3358 = vmatprep.subr.mxu0 0.0
  %3359 = vmatpush1.msra.mxu0 0.0
  %3360 = vmatprep.subr.mxu0 0.0
  %3361 = vmatpush1.msra.mxu0 0.0
  %3362 = vmatprep.subr.mxu0 0.0
  %3363 = vmatpush1.msra.mxu0 0.0
  %3364 = vmatprep.subr.mxu0 0.0
  %3365 = vmatpush1.msra.mxu0 0.0
  %3366 = vmatprep.subr.mxu0 0.0
  %3367 = vmatpush1.msra.mxu0 0.0
  %3368 = vmatprep.subr.mxu0 0.0
  %3369 = vmatpush1.msra.mxu0 0.0
  %3370 = vmatprep.subr.mxu0 0.0
  %3371 = vmatpush1.msra.mxu0 0.0
  %3372 = vmatprep.subr.mxu0 0.0
  %3373 = vmatpush1.msra.mxu0 0.0
  %3374 = vmatprep.subr.mxu0 0.0
  %3375 = vmatpush1.msra.mxu0 0.0
  %3376 = vmatprep.subr.mxu0 0.0
  %3377 = vmatpush1.msra.mxu0 0.0
  %3378 = vmatprep.subr.mxu0 0.0
  %3379 = vmatpush1.msra.mxu0 0.0
  %3380 = vmatprep.subr.mxu0 0.0
  %3381 = vmatpush1.msra.mxu0 0.0
  %3382 = vmatprep.subr.mxu0 0.0
  %3383 = vmatpush1.msra.mxu0 0.0
  %3384 = vmatprep.subr.mxu0 0.0
  %3385 = vmatpush1.msra.mxu0 0.0
  %3386 = vmatprep.subr.mxu0 0.0
  %3387 = vmatpush1.msra.mxu0 0.0
  %3388 = vmatprep.subr.mxu0 0.0
  %3389 = vmatpush1.msra.mxu0 0.0
  %3390 = vmatprep.subr.mxu0 0.0
  %3391 = vmatpush1.msra.mxu0 0.0
  %3392 = vmatprep.subr.mxu0 0.0
  %3393 = vmatpush1.msra.mxu0 0.0
  %3394 = vmatprep.subr.mxu0 0.0
  %3395 = vmatpush1.msra.mxu0 0.0
  %3396 = vmatprep.subr.mxu0 0.0
  %3397 = vmatpush1.msra.mxu0 0.0
  %3398 = vmatprep.subr.mxu0 0.0
  %3399 = vmatpush1.msra.mxu0 0.0
  %3400 = vmatprep.subr.mxu0 0.0
  %3401 = vmatpush1.msra.mxu0 0.0
  %3402 = vmatprep.subr.mxu0 0.0
  %3403 = vmatpush1.msra.mxu0 0.0
  %3404 = vmatprep.subr.mxu0 0.0
  %3405 = vmatpush1.msra.mxu0 0.0
  %3406 = vmatprep.subr.mxu0 0.0
  %3407 = vmatpush1.msra.mxu0 0.0
  %3408 = vmatprep.subr.mxu0 0.0
  %3409 = vmatpush1.msra.mxu0 0.0
  %3410 = vmatprep.subr.mxu0 0.0
  %3411 = vmatpush1.msra.mxu0 0.0
  %3412 = vmatprep.subr.mxu0 0.0
  %3413 = vmatpush1.msra.mxu0 0.0
  %3414 = vmatprep.subr.mxu0 0.0
  %3415 = vmatpush1.msra.mxu0 0.0
  %3416 = vmatprep.mubr.f32.mxu0 0.0
  %3417 = vmatmul.mubr.f32.gmra.mrb[0].mxu0 %v3143
  %v3418 = vpop.f32.mrb[0].mxu0
  %v3419 = vadd.f32 0.0, %v3418
  %v3420 = vpop.f32.mrb[0].mxu0
  %3421 = vmatprep.mubr.f32.mxu0 0.0
  %3422 = vmatmul.mubr.f32.gmra.mrb[0].mxu0 %v3146
  %v3423 = vpop.f32.mrb[0].mxu0
  %v3424 = vadd.f32 0.0, %v3423
  %v3425 = vpop.f32.mrb[0].mxu0
  %3426 = vmatprep.mubr.f32.mxu0 0.0
  %3427 = vmatmul.mubr.f32.gmra.mrb[0].mxu0 %v3149
  %v3428 = vpop.f32.mrb[0].mxu0
  %v3429 = vadd.f32 0.0, %v3428
  %v3430 = vpop.f32.mrb[0].mxu0
  %3431 = vmatprep.mubr.f32.mxu0 0.0
  %3432 = vmatmul.mubr.f32.gmra.mrb[0].mxu0 %v3152
  %v3433 = vpop.f32.mrb[0].mxu0
  %v3434 = vadd.f32 0.0, %v3433
  %v3435 = vpop.f32.mrb[0].mxu0
  %3436 = vmatprep.mubr.f32.mxu0 0.0
  %3437 = vmatmul.mubr.f32.gmra.mrb[0].mxu0 %v3155
  %v3438 = vpop.f32.mrb[0].mxu0
  %v3439 = vadd.f32 0.0, %v3438
  %v3440 = vpop.f32.mrb[0].mxu0
  %3441 = vmatprep.mubr.f32.mxu0 0.0
  %3442 = vmatmul.mubr.f32.gmra.mrb[0].mxu0 %v3158
  %v3443 = vpop.f32.mrb[0].mxu0
  %v3444 = vadd.f32 0.0, %v3443
  %v3445 = vpop.f32.mrb[0].mxu0
  %3446 = vmatprep.mubr.f32.mxu0 0.0
  %3447 = vmatmul.mubr.f32.gmra.mrb[0].mxu0 %v3161
  %v3448 = vpop.f32.mrb[0].mxu0
  %v3449 = vadd.f32 0.0, %v3448
  %v3450 = vpop.f32.mrb[0].mxu0
  %3451 = vmatprep.mubr.f32.mxu0 0.0
  %3452 = vmatmul.mubr.f32.gmra.mrb[0].mxu0 %v3164
  %v3453 = vpop.f32.mrb[0].mxu0
  %v3454 = vadd.f32 0.0, %v3453
  %v3455 = vpop.f32.mrb[0].mxu0
  %3456 = vmatprep.mubr.f32.mxu0 0.0
  %3457 = vmatmul.mubr.f32.gmra.mrb[0].mxu0 %v3167
  %v3458 = vpop.f32.mrb[0].mxu0
  %v3459 = vadd.f32 0.0, %v3458
  %v3460 = vpop.f32.mrb[0].mxu0
  %3461 = vmatprep.mubr.f32.mxu0 0.0
  %3462 = vmatmul.mubr.f32.gmra.mrb[0].mxu0 %v3170
  %v3463 = vpop.f32.mrb[0].mxu0
  %v3464 = vadd.f32 0.0, %v3463
  %v3465 = vpop.f32.mrb[0].mxu0
  %3466 = vmatprep.mubr.f32.mxu0 0.0
  %3467 = vmatmul.mubr.f32.gmra.mrb[0].mxu0 %v3173
  %v3468 = vpop.f32.mrb[0].mxu0
  %v3469 = vadd.f32 0.0, %v3468
  %v3470 = vpop.f32.mrb[0].mxu0
  %3471 = vmatprep.mubr.f32.mxu0 0.0
  %3472 = vmatmul.mubr.f32.gmra.mrb[0].mxu0 %v3176
  %v3473 = vpop.f32.mrb[0].mxu0
  %v3474 = vadd.f32 0.0, %v3473
  %v3475 = vpop.f32.mrb[0].mxu0
  %3476 = vmatprep.mubr.f32.mxu0 0.0
  %3477 = vmatmul.mubr.f32.gmra.mrb[0].mxu0 %v3179
  %v3478 = vpop.f32.mrb[0].mxu0
  %v3479 = vadd.f32 0.0, %v3478
  %v3480 = vpop.f32.mrb[0].mxu0
  %3481 = vmatprep.mubr.f32.mxu0 0.0
  %3482 = vmatmul.mubr.f32.gmra.mrb[0].mxu0 %v3182
  %v3483 = vpop.f32.mrb[0].mxu0
  %v3484 = vadd.f32 0.0, %v3483
  %v3485 = vpop.f32.mrb[0].mxu0
  %3486 = vmatprep.mubr.f32.mxu0 0.0
  %3487 = vmatmul.mubr.f32.gmra.mrb[0].mxu0 %v3185
  %v3488 = vpop.f32.mrb[0].mxu0
  %v3489 = vadd.f32 0.0, %v3488
  %v3490 = vpop.f32.mrb[0].mxu0
  %3491 = vmatprep.mubr.f32.mxu0 0.0
  %3492 = vmatmul.mubr.f32.gmra.mrb[0].mxu0 %v3188
  %v3493 = vpop.f32.mrb[0].mxu0
  %v3494 = vadd.f32 0.0, %v3493
  %v3495 = vpop.f32.mrb[0].mxu0
  %3496 = vmatprep.mubr.f32.mxu0 0.0
  %3497 = vmatmul.mubr.f32.gmra.mrb[0].mxu0 %v3191
  %v3498 = vpop.f32.mrb[0].mxu0
  %v3499 = vadd.f32 0.0, %v3498
  %v3500 = vpop.f32.mrb[0].mxu0
  %3501 = vmatprep.mubr.f32.mxu0 0.0
  %3502 = vmatmul.mubr.f32.gmra.mrb[0].mxu0 %v3194
  %v3503 = vpop.f32.mrb[0].mxu0
  %v3504 = vadd.f32 0.0, %v3503
  %v3505 = vpop.f32.mrb[0].mxu0
  %3506 = vmatprep.mubr.f32.mxu0 0.0
  %3507 = vmatmul.mubr.f32.gmra.mrb[0].mxu0 %v3197
  %v3508 = vpop.f32.mrb[0].mxu0
  %v3509 = vadd.f32 0.0, %v3508
  %v3510 = vpop.f32.mrb[0].mxu0
  %3511 = vmatprep.mubr.f32.mxu0 0.0
  %3512 = vmatmul.mubr.f32.gmra.mrb[0].mxu0 %v3200
  %v3513 = vpop.f32.mrb[0].mxu0
  %v3514 = vadd.f32 0.0, %v3513
  %v3515 = vpop.f32.mrb[0].mxu0
  %3516 = vmatprep.mubr.f32.mxu0 0.0
  %3517 = vmatmul.mubr.f32.gmra.mrb[0].mxu0 %v3203
  %v3518 = vpop.f32.mrb[0].mxu0
  %v3519 = vadd.f32 0.0, %v3518
  %v3520 = vpop.f32.mrb[0].mxu0
  %3521 = vmatprep.mubr.f32.mxu0 0.0
  %3522 = vmatmul.mubr.f32.gmra.mrb[0].mxu0 %v3206
  %v3523 = vpop.f32.mrb[0].mxu0
  %v3524 = vadd.f32 0.0, %v3523
  %v3525 = vpop.f32.mrb[0].mxu0
  %3526 = vmatprep.mubr.f32.mxu0 0.0
  %3527 = vmatmul.mubr.f32.gmra.mrb[0].mxu0 %v3209
  %v3528 = vpop.f32.mrb[0].mxu0
  %v3529 = vadd.f32 0.0, %v3528
  %v3530 = vpop.f32.mrb[0].mxu0
  %3531 = vmatprep.mubr.f32.mxu0 0.0
  %3532 = vmatmul.mubr.f32.gmra.mrb[0].mxu0 %v3212
  %v3533 = vpop.f32.mrb[0].mxu0
  %v3534 = vadd.f32 0.0, %v3533
  %v3535 = vpop.f32.mrb[0].mxu0
  %3536 = vmatprep.mubr.f32.mxu0 0.0
  %3537 = vmatmul.mubr.f32.gmra.mrb[0].mxu0 %v3215
  %v3538 = vpop.f32.mrb[0].mxu0
  %v3539 = vadd.f32 0.0, %v3538
  %v3540 = vpop.f32.mrb[0].mxu0
  %3541 = vmatprep.mubr.f32.mxu0 0.0
  %3542 = vmatmul.mubr.f32.gmra.mrb[0].mxu0 %v3218
  %v3543 = vpop.f32.mrb[0].mxu0
  %v3544 = vadd.f32 0.0, %v3543
  %v3545 = vpop.f32.mrb[0].mxu0
  %3546 = vmatprep.mubr.f32.mxu0 0.0
  %3547 = vmatmul.mubr.f32.gmra.mrb[0].mxu0 %v3221
  %v3548 = vpop.f32.mrb[0].mxu0
  %v3549 = vadd.f32 0.0, %v3548
  %v3550 = vpop.f32.mrb[0].mxu0
  %3551 = vmatprep.mubr.f32.mxu0 0.0
  %3552 = vmatmul.mubr.f32.gmra.mrb[0].mxu0 %v3224
  %v3553 = vpop.f32.mrb[0].mxu0
  %v3554 = vadd.f32 0.0, %v3553
  %v3555 = vpop.f32.mrb[0].mxu0
  %3556 = vmatprep.mubr.f32.mxu0 0.0
  %3557 = vmatmul.mubr.f32.gmra.mrb[0].mxu0 %v3227
  %v3558 = vpop.f32.mrb[0].mxu0
  %v3559 = vadd.f32 0.0, %v3558
  %v3560 = vpop.f32.mrb[0].mxu0
  %3561 = vmatprep.mubr.f32.mxu0 0.0
  %3562 = vmatmul.mubr.f32.gmra.mrb[0].mxu0 %v3230
  %v3563 = vpop.f32.mrb[0].mxu0
  %v3564 = vadd.f32 0.0, %v3563
  %v3565 = vpop.f32.mrb[0].mxu0
  %3566 = vmatprep.mubr.f32.mxu0 0.0
  %3567 = vmatmul.mubr.f32.gmra.mrb[0].mxu0 %v3233
  %v3568 = vpop.f32.mrb[0].mxu0
  %v3569 = vadd.f32 0.0, %v3568
  %v3570 = vpop.f32.mrb[0].mxu0
  %3571 = vmatprep.mubr.f32.mxu0 0.0
  %3572 = vmatmul.mubr.f32.gmra.mrb[0].mxu0 %v3236
  %v3573 = vpop.f32.mrb[0].mxu0
  %v3574 = vadd.f32 0.0, %v3573
  %v3575 = vpop.f32.mrb[0].mxu0
  %3576 = vmatprep.mubr.f32.mxu0 0.0
  %3577 = vmatmul.mubr.f32.gmra.mrb[0].mxu0 %v3239
  %v3578 = vpop.f32.mrb[0].mxu0
  %v3579 = vadd.f32 0.0, %v3578
  %v3580 = vpop.f32.mrb[0].mxu0
  %3581 = vmatprep.mubr.f32.mxu0 0.0
  %3582 = vmatmul.mubr.f32.gmra.mrb[0].mxu0 %v3242
  %v3583 = vpop.f32.mrb[0].mxu0
  %v3584 = vadd.f32 0.0, %v3583
  %v3585 = vpop.f32.mrb[0].mxu0
  %3586 = vmatprep.mubr.f32.mxu0 0.0
  %3587 = vmatmul.mubr.f32.gmra.mrb[0].mxu0 %v3245
  %v3588 = vpop.f32.mrb[0].mxu0
  %v3589 = vadd.f32 0.0, %v3588
  %v3590 = vpop.f32.mrb[0].mxu0
  %3591 = vmatprep.mubr.f32.mxu0 0.0
  %3592 = vmatmul.mubr.f32.gmra.mrb[0].mxu0 %v3248
  %v3593 = vpop.f32.mrb[0].mxu0
  %v3594 = vadd.f32 0.0, %v3593
  %v3595 = vpop.f32.mrb[0].mxu0
  %3596 = vmatprep.mubr.f32.mxu0 0.0
  %3597 = vmatmul.mubr.f32.gmra.mrb[0].mxu0 %v3251
  %v3598 = vpop.f32.mrb[0].mxu0
  %v3599 = vadd.f32 0.0, %v3598
  %v3600 = vpop.f32.mrb[0].mxu0
  %3601 = vmatprep.mubr.f32.mxu0 0.0
  %3602 = vmatmul.mubr.f32.gmra.mrb[0].mxu0 %v3254
  %v3603 = vpop.f32.mrb[0].mxu0
  %v3604 = vadd.f32 0.0, %v3603
  %v3605 = vpop.f32.mrb[0].mxu0
  %3606 = vmatprep.mubr.f32.mxu0 0.0
  %3607 = vmatmul.mubr.f32.gmra.mrb[0].mxu0 %v3257
  %v3608 = vpop.f32.mrb[0].mxu0
  %v3609 = vadd.f32 0.0, %v3608
  %v3610 = vpop.f32.mrb[0].mxu0
  %3611 = vmatprep.mubr.f32.mxu0 0.0
  %3612 = vmatmul.mubr.f32.gmra.mrb[0].mxu0 %v3260
  %v3613 = vpop.f32.mrb[0].mxu0
  %v3614 = vadd.f32 0.0, %v3613
  %v3615 = vpop.f32.mrb[0].mxu0
  %3616 = vmatprep.mubr.f32.mxu0 0.0
  %3617 = vmatmul.mubr.f32.gmra.mrb[0].mxu0 %v3263
  %v3618 = vpop.f32.mrb[0].mxu0
  %v3619 = vadd.f32 0.0, %v3618
  %v3620 = vpop.f32.mrb[0].mxu0
  %3621 = vmatprep.mubr.f32.mxu0 0.0
  %3622 = vmatmul.mubr.f32.gmra.mrb[0].mxu0 %v3266
  %v3623 = vpop.f32.mrb[0].mxu0
  %v3624 = vadd.f32 0.0, %v3623
  %v3625 = vpop.f32.mrb[0].mxu0
  %3626 = vmatprep.mubr.f32.mxu0 0.0
  %3627 = vmatmul.mubr.f32.gmra.mrb[0].mxu0 %v3269
  %v3628 = vpop.f32.mrb[0].mxu0
  %v3629 = vadd.f32 0.0, %v3628
  %v3630 = vpop.f32.mrb[0].mxu0
  %3631 = vmatprep.mubr.f32.mxu0 0.0
  %3632 = vmatmul.mubr.f32.gmra.mrb[0].mxu0 %v3272
  %v3633 = vpop.f32.mrb[0].mxu0
  %v3634 = vadd.f32 0.0, %v3633
  %v3635 = vpop.f32.mrb[0].mxu0
  %3636 = vmatprep.mubr.f32.mxu0 0.0
  %3637 = vmatmul.mubr.f32.gmra.mrb[0].mxu0 %v3275
  %v3638 = vpop.f32.mrb[0].mxu0
  %v3639 = vadd.f32 0.0, %v3638
  %v3640 = vpop.f32.mrb[0].mxu0
  %3641 = vmatprep.mubr.f32.mxu0 0.0
  %3642 = vmatmul.mubr.f32.gmra.mrb[0].mxu0 %v3278
  %v3643 = vpop.f32.mrb[0].mxu0
  %v3644 = vadd.f32 0.0, %v3643
  %v3645 = vpop.f32.mrb[0].mxu0
  %3646 = vmatprep.mubr.f32.mxu0 0.0
  %3647 = vmatmul.mubr.f32.gmra.mrb[0].mxu0 %v3281
  %v3648 = vpop.f32.mrb[0].mxu0
  %v3649 = vadd.f32 0.0, %v3648
  %v3650 = vpop.f32.mrb[0].mxu0
  %3651 = vmatprep.mubr.f32.mxu0 0.0
  %3652 = vmatmul.mubr.f32.gmra.mrb[0].mxu0 %v3284
  %v3653 = vpop.f32.mrb[0].mxu0
  %v3654 = vadd.f32 0.0, %v3653
  %v3655 = vpop.f32.mrb[0].mxu0
  %3656 = vmatprep.mubr.f32.mxu0 0.0
  %3657 = vmatmul.mubr.f32.gmra.mrb[0].mxu0 %v3287
  %v3658 = vpop.f32.mrb[0].mxu0
  %v3659 = vadd.f32 0.0, %v3658
  %v3660 = vpop.f32.mrb[0].mxu0
  %3661 = vmatprep.mubr.f32.mxu0 0.0
  %3662 = vmatmul.mubr.f32.gmra.mrb[0].mxu0 %v3290
  %v3663 = vpop.f32.mrb[0].mxu0
  %v3664 = vadd.f32 0.0, %v3663
  %v3665 = vpop.f32.mrb[0].mxu0
  %3666 = vmatprep.mubr.f32.mxu0 0.0
  %3667 = vmatmul.mubr.f32.gmra.mrb[0].mxu0 %v3293
  %v3668 = vpop.f32.mrb[0].mxu0
  %v3669 = vadd.f32 0.0, %v3668
  %v3670 = vpop.f32.mrb[0].mxu0
  %3671 = vmatprep.mubr.f32.mxu0 0.0
  %3672 = vmatmul.mubr.f32.gmra.mrb[0].mxu0 %v3296
  %v3673 = vpop.f32.mrb[0].mxu0
  %v3674 = vadd.f32 0.0, %v3673
  %v3675 = vpop.f32.mrb[0].mxu0
  %3676 = vmatprep.mubr.f32.mxu0 0.0
  %3677 = vmatmul.mubr.f32.gmra.mrb[0].mxu0 %v3299
  %v3678 = vpop.f32.mrb[0].mxu0
  %v3679 = vadd.f32 0.0, %v3678
  %v3680 = vpop.f32.mrb[0].mxu0
  %3681 = vmatprep.mubr.f32.mxu0 0.0
  %3682 = vmatmul.mubr.f32.gmra.mrb[0].mxu0 %v3302
  %v3683 = vpop.f32.mrb[0].mxu0
  %v3684 = vadd.f32 0.0, %v3683
  %v3685 = vpop.f32.mrb[0].mxu0
  %3686 = vmatprep.mubr.f32.mxu0 0.0
  %3687 = vmatmul.mubr.f32.gmra.mrb[0].mxu0 %v3305
  %v3688 = vpop.f32.mrb[0].mxu0
  %v3689 = vadd.f32 0.0, %v3688
  %v3690 = vpop.f32.mrb[0].mxu0
  %3691 = vmatprep.mubr.f32.mxu0 0.0
  %3692 = vmatmul.mubr.f32.gmra.mrb[0].mxu0 %v3308
  %v3693 = vpop.f32.mrb[0].mxu0
  %v3694 = vadd.f32 0.0, %v3693
  %v3695 = vpop.f32.mrb[0].mxu0
  %3696 = vmatprep.mubr.f32.mxu0 0.0
  %3697 = vmatmul.mubr.f32.gmra.mrb[0].mxu0 %v3311
  %v3698 = vpop.f32.mrb[0].mxu0
  %v3699 = vadd.f32 0.0, %v3698
  %v3700 = vpop.f32.mrb[0].mxu0
  %3701 = vmatprep.mubr.f32.mxu0 0.0
  %3702 = vmatmul.mubr.f32.gmra.mrb[0].mxu0 %v3314
  %v3703 = vpop.f32.mrb[0].mxu0
  %v3704 = vadd.f32 0.0, %v3703
  %v3705 = vpop.f32.mrb[0].mxu0
  %3706 = vmatprep.mubr.f32.mxu0 0.0
  %3707 = vmatmul.mubr.f32.gmra.mrb[0].mxu0 %v3317
  %v3708 = vpop.f32.mrb[0].mxu0
  %v3709 = vadd.f32 0.0, %v3708
  %v3710 = vpop.f32.mrb[0].mxu0
  %3711 = vmatprep.mubr.f32.mxu0 0.0
  %3712 = vmatmul.mubr.f32.gmra.mrb[0].mxu0 %v3320
  %v3713 = vpop.f32.mrb[0].mxu0
  %v3714 = vadd.f32 0.0, %v3713
  %v3715 = vpop.f32.mrb[0].mxu0
  %3716 = vmatprep.mubr.f32.mxu0 0.0
  %3717 = vmatmul.mubr.f32.gmra.mrb[0].mxu0 %v3323
  %v3718 = vpop.f32.mrb[0].mxu0
  %v3719 = vadd.f32 0.0, %v3718
  %v3720 = vpop.f32.mrb[0].mxu0
  %3721 = vmatprep.mubr.f32.mxu0 0.0
  %3722 = vmatmul.mubr.f32.gmra.mrb[0].mxu0 %v3326
  %v3723 = vpop.f32.mrb[0].mxu0
  %v3724 = vadd.f32 0.0, %v3723
  %v3725 = vpop.f32.mrb[0].mxu0
  %3726 = vmatprep.mubr.f32.mxu0 0.0
  %3727 = vmatmul.mubr.f32.gmra.mrb[0].mxu0 %v3329
  %v3728 = vpop.f32.mrb[0].mxu0
  %v3729 = vadd.f32 0.0, %v3728
  %v3730 = vpop.f32.mrb[0].mxu0
  %3731 = vmatprep.mubr.f32.mxu0 0.0
  %3732 = vmatmul.mubr.f32.gmra.mrb[0].mxu0 %v3332
  %v3733 = vpop.f32.mrb[0].mxu0
  %v3734 = vadd.f32 0.0, %v3733
  %v3735 = vpop.f32.mrb[0].mxu0
  %3736 = vmatprep.mubr.f32.mxu0 0.0
  %3737 = vmatmul.mubr.f32.gmra.mrb[0].mxu0 %v3335
  %v3738 = vpop.f32.mrb[0].mxu0
  %v3739 = vadd.f32 0.0, %v3738
  %v3740 = vpop.f32.mrb[0].mxu0
  %3741 = vmatprep.mubr.f32.mxu0 0.0
  %3742 = vmatmul.mubr.f32.gmra.mrb[0].mxu0 %v3338
  %v3743 = vpop.f32.mrb[0].mxu0
  %v3744 = vadd.f32 0.0, %v3743
  %v3745 = vpop.f32.mrb[0].mxu0
  %3746 = vmatprep.mubr.f32.mxu0 0.0
  %3747 = vmatmul.mubr.f32.gmra.mrb[0].mxu0 %v3341
  %v3748 = vpop.f32.mrb[0].mxu0
  %v3749 = vadd.f32 0.0, %v3748
  %v3750 = vpop.f32.mrb[0].mxu0
  %3751 = vmatprep.mubr.f32.mxu0 0.0
  %3752 = vmatmul.mubr.f32.gmra.mrb[0].mxu0 %v3344
  %v3753 = vpop.f32.mrb[0].mxu0
  %v3754 = vadd.f32 0.0, %v3753
  %v3755 = vpop.f32.mrb[0].mxu0
  %3756 = vmatprep.mubr.f32.mxu0 0.0
  %3757 = vmatmul.mubr.f32.gmra.mrb[0].mxu0 %v3347
  %v3758 = vpop.f32.mrb[0].mxu0
  %v3759 = vadd.f32 0.0, %v3758
  %v3760 = vpop.f32.mrb[0].mxu0
  %3761 = vmatprep.mubr.f32.mxu0 0.0
  %3762 = vmatmul.mubr.f32.gmra.mrb[0].mxu0 %v3350
  %v3763 = vpop.f32.mrb[0].mxu0
  %v3764 = vadd.f32 0.0, %v3763
  %v3765 = vpop.f32.mrb[0].mxu0
  %3766 = vdwg.mxu0
  %3768 = vset.pattern.permute.xlu0 0
  %3769 = vperm.xlu0 %3768, %v3419
  %v3770 = vpop.permute.xlu0 %3769
  %3773 = vset.pattern.permute.xlu0 0
  %3774 = vperm.xlu0 %3773, %v3424
  %v3775 = vpop.permute.xlu0 %3774
  %3778 = vset.pattern.permute.xlu0 0
  %3779 = vperm.xlu0 %3778, %v3429
  %v3780 = vpop.permute.xlu0 %3779
  %3783 = vset.pattern.permute.xlu0 0
  %3784 = vperm.xlu0 %3783, %v3434
  %v3785 = vpop.permute.xlu0 %3784
  %3788 = vset.pattern.permute.xlu0 0
  %3789 = vperm.xlu0 %3788, %v3439
  %v3790 = vpop.permute.xlu0 %3789
  %3793 = vset.pattern.permute.xlu0 0
  %3794 = vperm.xlu0 %3793, %v3444
  %v3795 = vpop.permute.xlu0 %3794
  %3798 = vset.pattern.permute.xlu0 0
  %3799 = vperm.xlu0 %3798, %v3449
  %v3800 = vpop.permute.xlu0 %3799
  %3803 = vset.pattern.permute.xlu0 0
  %3804 = vperm.xlu0 %3803, %v3454
  %v3805 = vpop.permute.xlu0 %3804
  %3808 = vset.pattern.permute.xlu0 0
  %3809 = vperm.xlu0 %3808, %v3459
  %v3810 = vpop.permute.xlu0 %3809
  %3813 = vset.pattern.permute.xlu0 0
  %3814 = vperm.xlu0 %3813, %v3464
  %v3815 = vpop.permute.xlu0 %3814
  %3818 = vset.pattern.permute.xlu0 0
  %3819 = vperm.xlu0 %3818, %v3469
  %v3820 = vpop.permute.xlu0 %3819
  %3823 = vset.pattern.permute.xlu0 0
  %3824 = vperm.xlu0 %3823, %v3474
  %v3825 = vpop.permute.xlu0 %3824
  %3828 = vset.pattern.permute.xlu0 0
  %3829 = vperm.xlu0 %3828, %v3479
  %v3830 = vpop.permute.xlu0 %3829
  %3833 = vset.pattern.permute.xlu0 0
  %3834 = vperm.xlu0 %3833, %v3484
  %v3835 = vpop.permute.xlu0 %3834
  %3838 = vset.pattern.permute.xlu0 0
  %3839 = vperm.xlu0 %3838, %v3489
  %v3840 = vpop.permute.xlu0 %3839
  %3843 = vset.pattern.permute.xlu0 0
  %3844 = vperm.xlu0 %3843, %v3494
  %v3845 = vpop.permute.xlu0 %3844
  %3848 = vset.pattern.permute.xlu0 0
  %3849 = vperm.xlu0 %3848, %v3499
  %v3850 = vpop.permute.xlu0 %3849
  %3853 = vset.pattern.permute.xlu0 0
  %3854 = vperm.xlu0 %3853, %v3504
  %v3855 = vpop.permute.xlu0 %3854
  %3858 = vset.pattern.permute.xlu0 0
  %3859 = vperm.xlu0 %3858, %v3509
  %v3860 = vpop.permute.xlu0 %3859
  %3863 = vset.pattern.permute.xlu0 0
  %3864 = vperm.xlu0 %3863, %v3514
  %v3865 = vpop.permute.xlu0 %3864
  %3868 = vset.pattern.permute.xlu0 0
  %3869 = vperm.xlu0 %3868, %v3519
  %v3870 = vpop.permute.xlu0 %3869
  %3873 = vset.pattern.permute.xlu0 0
  %3874 = vperm.xlu0 %3873, %v3524
  %v3875 = vpop.permute.xlu0 %3874
  %3878 = vset.pattern.permute.xlu0 0
  %3879 = vperm.xlu0 %3878, %v3529
  %v3880 = vpop.permute.xlu0 %3879
  %3883 = vset.pattern.permute.xlu0 0
  %3884 = vperm.xlu0 %3883, %v3534
  %v3885 = vpop.permute.xlu0 %3884
  %3888 = vset.pattern.permute.xlu0 0
  %3889 = vperm.xlu0 %3888, %v3539
  %v3890 = vpop.permute.xlu0 %3889
  %3893 = vset.pattern.permute.xlu0 0
  %3894 = vperm.xlu0 %3893, %v3544
  %v3895 = vpop.permute.xlu0 %3894
  %3898 = vset.pattern.permute.xlu0 0
  %3899 = vperm.xlu0 %3898, %v3549
  %v3900 = vpop.permute.xlu0 %3899
  %3903 = vset.pattern.permute.xlu0 0
  %3904 = vperm.xlu0 %3903, %v3554
  %v3905 = vpop.permute.xlu0 %3904
  %3908 = vset.pattern.permute.xlu0 0
  %3909 = vperm.xlu0 %3908, %v3559
  %v3910 = vpop.permute.xlu0 %3909
  %3913 = vset.pattern.permute.xlu0 0
  %3914 = vperm.xlu0 %3913, %v3564
  %v3915 = vpop.permute.xlu0 %3914
  %3918 = vset.pattern.permute.xlu0 0
  %3919 = vperm.xlu0 %3918, %v3569
  %v3920 = vpop.permute.xlu0 %3919
  %3923 = vset.pattern.permute.xlu0 0
  %3924 = vperm.xlu0 %3923, %v3574
  %v3925 = vpop.permute.xlu0 %3924
  %3928 = vset.pattern.permute.xlu0 0
  %3929 = vperm.xlu0 %3928, %v3579
  %v3930 = vpop.permute.xlu0 %3929
  %3933 = vset.pattern.permute.xlu0 0
  %3934 = vperm.xlu0 %3933, %v3584
  %v3935 = vpop.permute.xlu0 %3934
  %3938 = vset.pattern.permute.xlu0 0
  %3939 = vperm.xlu0 %3938, %v3589
  %v3940 = vpop.permute.xlu0 %3939
  %v3942 = vmul.f32 %v2536, %v3770
  %v3943 = vmul.f32 %v2537, %v3775
  %v3944 = vmul.f32 %v2538, %v3780
  %v3945 = vmul.f32 %v2539, %v3785
  %v3946 = vmul.f32 %v2540, %v3790
  %v3947 = vmul.f32 %v2541, %v3795
  %v3948 = vmul.f32 %v2542, %v3800
  %v3949 = vmul.f32 %v2543, %v3805
  %v3950 = vmul.f32 %v2544, %v3810
  %v3951 = vmul.f32 %v2545, %v3815
  %v3952 = vmul.f32 %v2546, %v3820
  %v3953 = vmul.f32 %v2547, %v3825
  %v3954 = vmul.f32 %v2548, %v3830
  %v3955 = vmul.f32 %v2549, %v3835
  %v3956 = vmul.f32 %v2550, %v3840
  %v3957 = vmul.f32 %v2551, %v3845
  %v3958 = vmul.f32 %v2552, %v3850
  %v3959 = vmul.f32 %v2553, %v3855
  %v3960 = vmul.f32 %v2554, %v3860
  %v3961 = vmul.f32 %v2555, %v3865
  %v3962 = vmul.f32 %v2556, %v3870
  %v3963 = vmul.f32 %v2557, %v3875
  %v3964 = vmul.f32 %v2558, %v3880
  %v3965 = vmul.f32 %v2559, %v3885
  %v3966 = vmul.f32 %v2560, %v3890
  %v3967 = vmul.f32 %v2561, %v3895
  %v3968 = vmul.f32 %v2562, %v3900
  %v3969 = vmul.f32 %v2563, %v3905
  %v3970 = vmul.f32 %v2564, %v3910
  %v3971 = vmul.f32 %v2565, %v3915
  %v3972 = vmul.f32 %v2566, %v3920
  %v3973 = vmul.f32 %v2567, %v3925
  %v3974 = vmul.f32 %v2568, %v3930
  %v3975 = vmul.f32 %v2569, %v3935
  %v3976 = vmul.f32 %v2570, %v3940
  %3978 = vset.pattern.permute.xlu0 0
  %3979 = vperm.xlu0 %3978, %v3594
  %v3980 = vpop.permute.xlu0 %3979
  %3983 = vset.pattern.permute.xlu0 0
  %3984 = vperm.xlu0 %3983, %v3599
  %v3985 = vpop.permute.xlu0 %3984
  %3988 = vset.pattern.permute.xlu0 0
  %3989 = vperm.xlu0 %3988, %v3604
  %v3990 = vpop.permute.xlu0 %3989
  %3993 = vset.pattern.permute.xlu0 0
  %3994 = vperm.xlu0 %3993, %v3609
  %v3995 = vpop.permute.xlu0 %3994
  %3998 = vset.pattern.permute.xlu0 0
  %3999 = vperm.xlu0 %3998, %v3614
  %v4000 = vpop.permute.xlu0 %3999
  %4003 = vset.pattern.permute.xlu0 0
  %4004 = vperm.xlu0 %4003, %v3619
  %v4005 = vpop.permute.xlu0 %4004
  %4008 = vset.pattern.permute.xlu0 0
  %4009 = vperm.xlu0 %4008, %v3624
  %v4010 = vpop.permute.xlu0 %4009
  %4013 = vset.pattern.permute.xlu0 0
  %4014 = vperm.xlu0 %4013, %v3629
  %v4015 = vpop.permute.xlu0 %4014
  %4018 = vset.pattern.permute.xlu0 0
  %4019 = vperm.xlu0 %4018, %v3634
  %v4020 = vpop.permute.xlu0 %4019
  %4023 = vset.pattern.permute.xlu0 0
  %4024 = vperm.xlu0 %4023, %v3639
  %v4025 = vpop.permute.xlu0 %4024
  %4028 = vset.pattern.permute.xlu0 0
  %4029 = vperm.xlu0 %4028, %v3644
  %v4030 = vpop.permute.xlu0 %4029
  %4033 = vset.pattern.permute.xlu0 0
  %4034 = vperm.xlu0 %4033, %v3649
  %v4035 = vpop.permute.xlu0 %4034
  %4038 = vset.pattern.permute.xlu0 0
  %4039 = vperm.xlu0 %4038, %v3654
  %v4040 = vpop.permute.xlu0 %4039
  %4043 = vset.pattern.permute.xlu0 0
  %4044 = vperm.xlu0 %4043, %v3659
  %v4045 = vpop.permute.xlu0 %4044
  %4048 = vset.pattern.permute.xlu0 0
  %4049 = vperm.xlu0 %4048, %v3664
  %v4050 = vpop.permute.xlu0 %4049
  %4053 = vset.pattern.permute.xlu0 0
  %4054 = vperm.xlu0 %4053, %v3669
  %v4055 = vpop.permute.xlu0 %4054
  %4058 = vset.pattern.permute.xlu0 0
  %4059 = vperm.xlu0 %4058, %v3674
  %v4060 = vpop.permute.xlu0 %4059
  %4063 = vset.pattern.permute.xlu0 0
  %4064 = vperm.xlu0 %4063, %v3679
  %v4065 = vpop.permute.xlu0 %4064
  %4068 = vset.pattern.permute.xlu0 0
  %4069 = vperm.xlu0 %4068, %v3684
  %v4070 = vpop.permute.xlu0 %4069
  %4073 = vset.pattern.permute.xlu0 0
  %4074 = vperm.xlu0 %4073, %v3689
  %v4075 = vpop.permute.xlu0 %4074
  %4078 = vset.pattern.permute.xlu0 0
  %4079 = vperm.xlu0 %4078, %v3694
  %v4080 = vpop.permute.xlu0 %4079
  %4083 = vset.pattern.permute.xlu0 0
  %4084 = vperm.xlu0 %4083, %v3699
  %v4085 = vpop.permute.xlu0 %4084
  %4088 = vset.pattern.permute.xlu0 0
  %4089 = vperm.xlu0 %4088, %v3704
  %v4090 = vpop.permute.xlu0 %4089
  %4093 = vset.pattern.permute.xlu0 0
  %4094 = vperm.xlu0 %4093, %v3709
  %v4095 = vpop.permute.xlu0 %4094
  %4098 = vset.pattern.permute.xlu0 0
  %4099 = vperm.xlu0 %4098, %v3714
  %v4100 = vpop.permute.xlu0 %4099
  %4103 = vset.pattern.permute.xlu0 0
  %4104 = vperm.xlu0 %4103, %v3719
  %v4105 = vpop.permute.xlu0 %4104
  %4108 = vset.pattern.permute.xlu0 0
  %4109 = vperm.xlu0 %4108, %v3724
  %v4110 = vpop.permute.xlu0 %4109
  %4113 = vset.pattern.permute.xlu0 0
  %4114 = vperm.xlu0 %4113, %v3729
  %v4115 = vpop.permute.xlu0 %4114
  %4118 = vset.pattern.permute.xlu0 0
  %4119 = vperm.xlu0 %4118, %v3734
  %v4120 = vpop.permute.xlu0 %4119
  %4123 = vset.pattern.permute.xlu0 0
  %4124 = vperm.xlu0 %4123, %v3739
  %v4125 = vpop.permute.xlu0 %4124
  %4128 = vset.pattern.permute.xlu0 0
  %4129 = vperm.xlu0 %4128, %v3744
  %v4130 = vpop.permute.xlu0 %4129
  %4133 = vset.pattern.permute.xlu0 0
  %4134 = vperm.xlu0 %4133, %v3749
  %v4135 = vpop.permute.xlu0 %4134
  %4138 = vset.pattern.permute.xlu0 0
  %4139 = vperm.xlu0 %4138, %v3754
  %v4140 = vpop.permute.xlu0 %4139
  %4143 = vset.pattern.permute.xlu0 0
  %4144 = vperm.xlu0 %4143, %v3759
  %v4145 = vpop.permute.xlu0 %4144
  %4148 = vset.pattern.permute.xlu0 0
  %4149 = vperm.xlu0 %4148, %v3764
  %v4150 = vpop.permute.xlu0 %4149
  %v4152 = vadd.f32 %v3942, %v3980
  %v4153 = vadd.f32 %v3943, %v3985
  %v4154 = vadd.f32 %v3944, %v3990
  %v4155 = vadd.f32 %v3945, %v3995
  %v4156 = vadd.f32 %v3946, %v4000
  %v4157 = vadd.f32 %v3947, %v4005
  %v4158 = vadd.f32 %v3948, %v4010
  %v4159 = vadd.f32 %v3949, %v4015
  %v4160 = vadd.f32 %v3950, %v4020
  %v4161 = vadd.f32 %v3951, %v4025
  %v4162 = vadd.f32 %v3952, %v4030
  %v4163 = vadd.f32 %v3953, %v4035
  %v4164 = vadd.f32 %v3954, %v4040
  %v4165 = vadd.f32 %v3955, %v4045
  %v4166 = vadd.f32 %v3956, %v4050
  %v4167 = vadd.f32 %v3957, %v4055
  %v4168 = vadd.f32 %v3958, %v4060
  %v4169 = vadd.f32 %v3959, %v4065
  %v4170 = vadd.f32 %v3960, %v4070
  %v4171 = vadd.f32 %v3961, %v4075
  %v4172 = vadd.f32 %v3962, %v4080
  %v4173 = vadd.f32 %v3963, %v4085
  %v4174 = vadd.f32 %v3964, %v4090
  %v4175 = vadd.f32 %v3965, %v4095
  %v4176 = vadd.f32 %v3966, %v4100
  %v4177 = vadd.f32 %v3967, %v4105
  %v4178 = vadd.f32 %v3968, %v4110
  %v4179 = vadd.f32 %v3969, %v4115
  %v4180 = vadd.f32 %v3970, %v4120
  %v4181 = vadd.f32 %v3971, %v4125
  %v4182 = vadd.f32 %v3972, %v4130
  %v4183 = vadd.f32 %v3973, %v4135
  %v4184 = vadd.f32 %v3974, %v4140
  %v4185 = vadd.f32 %v3975, %v4145
  %v4186 = vadd.f32 %v3976, %v4150
  %v4187 = vpack.c.bf16 %v4153, %v4152
  %v4188 = vpack.c.bf16 %v4155, %v4154
  %v4189 = vpack.c.bf16 %v4157, %v4156
  %v4190 = vpack.c.bf16 %v4159, %v4158
  %v4191 = vpack.c.bf16 %v4161, %v4160
  %v4192 = vpack.c.bf16 %v4163, %v4162
  %v4193 = vpack.c.bf16 %v4165, %v4164
  %v4194 = vpack.c.bf16 %v4167, %v4166
  %v4195 = vpack.c.bf16 %v4169, %v4168
  %v4196 = vpack.c.bf16 %v4171, %v4170
  %v4197 = vpack.c.bf16 %v4173, %v4172
  %v4198 = vpack.c.bf16 %v4175, %v4174
  %v4199 = vpack.c.bf16 %v4177, %v4176
  %v4200 = vpack.c.bf16 %v4179, %v4178
  %v4201 = vpack.c.bf16 %v4181, %v4180
  %v4202 = vpack.c.bf16 %v4183, %v4182
  %v4203 = vpack.c.bf16 %v4185, %v4184
  %v4204 = vpack.c.bf16 %v4186, %v4186
  %v4205 = vld [vmem:[%s17] sm:$0xf]
  %v4206 = vld [vmem:[%s17 + $0x4] sm:$0xf]
  %v4207 = vld [vmem:[%s17 + $0x8] sm:$0xf]
  %v4208 = vld [vmem:[%s17 + $0xc] sm:$0xf]
  %v4209 = vld [vmem:[%s17 + $0x10] sm:$0xf]
  %v4210 = vld [vmem:[%s17 + $0x14] sm:$0xf]
  %v4211 = vld [vmem:[%s17 + $0x18] sm:$0xf]
  %v4212 = vld [vmem:[%s17 + $0x1c] sm:$0xf]
  %v4213 = vld [vmem:[%s17 + $0x20] sm:$0xf]
  %v4214 = vld [vmem:[%s17 + $0x24] sm:$0xf]
  %v4215 = vld [vmem:[%s17 + $0x28] sm:$0xf]
  %v4216 = vld [vmem:[%s17 + $0x2c] sm:$0xf]
  %v4217 = vld [vmem:[%s17 + $0x30] sm:$0xf]
  %v4218 = vld [vmem:[%s17 + $0x34] sm:$0xf]
  %v4219 = vld [vmem:[%s17 + $0x38] sm:$0xf]
  %v4220 = vld [vmem:[%s17 + $0x3c] sm:$0x7]
  %v4237 = vunpack.c.l.b16 %v4205
  %v4238 = vunpack.c.l.b16 %v4206
  %v4239 = vunpack.c.l.b16 %v4207
  %v4240 = vunpack.c.l.b16 %v4208
  %v4241 = vunpack.c.l.b16 %v4209
  %v4242 = vunpack.c.l.b16 %v4210
  %v4243 = vunpack.c.l.b16 %v4211
  %v4244 = vunpack.c.l.b16 %v4212
  %v4245 = vunpack.c.l.b16 %v4213
  %v4246 = vunpack.c.l.b16 %v4214
  %v4247 = vunpack.c.l.b16 %v4215
  %v4248 = vunpack.c.l.b16 %v4216
  %v4249 = vunpack.c.l.b16 %v4217
  %v4250 = vunpack.c.l.b16 %v4218
  %v4251 = vunpack.c.l.b16 %v4219
  %v4252 = vunpack.c.l.b16 %v4220
  %v4253 = vpack.c.b16 %v4238, %v4237
  %v4254 = vpack.c.b16 %v4240, %v4239
  %v4255 = vpack.c.b16 %v4242, %v4241
  %v4256 = vpack.c.b16 %v4244, %v4243
  %v4257 = vpack.c.b16 %v4246, %v4245
  %v4258 = vpack.c.b16 %v4248, %v4247
  %v4259 = vpack.c.b16 %v4250, %v4249
  %v4260 = vpack.c.b16 %v4252, %v4251
  %v4269 = vsel %vm2606, %v4187, 0
  %v4272 = vsel %vm2606, %v4188, 0
  %v4275 = vsel %vm2606, %v4189, 0
  %v4278 = vsel %vm2606, %v4190, 0
  %v4281 = vsel %vm2606, %v4191, 0
  %v4284 = vsel %vm2606, %v4192, 0
  %v4287 = vsel %vm2606, %v4193, 0
  %v4290 = vsel %vm2606, %v4194, 0
  %v4293 = vsel %vm2606, %v4195, 0
  %v4296 = vsel %vm2606, %v4196, 0
  %v4299 = vsel %vm2606, %v4197, 0
  %v4302 = vsel %vm2606, %v4198, 0
  %v4305 = vsel %vm2606, %v4199, 0
  %v4308 = vsel %vm2606, %v4200, 0
  %v4311 = vsel %vm2606, %v4201, 0
  %v4314 = vsel %vm2606, %v4202, 0
  %v4317 = vsel %vm2606, %v4203, 0
  %v4320 = vsel %vm2606, %v4204, 0
  %vm4322 = vcmask 1046528
  %v4324 = vsel %vm4322, %v4260, 0
  %4326 = vmatprep.subr.bf16.mxu0 0
  %4327 = vmatpush1.bf16.msra.mxu0 %v4253
  %4328 = vmatprep.subr.bf16.mxu0 0
  %4329 = vmatpush1.bf16.msra.mxu0 %v4254
  %4330 = vmatprep.subr.bf16.mxu0 0
  %4331 = vmatpush1.bf16.msra.mxu0 %v4255
  %4332 = vmatprep.subr.bf16.mxu0 0
  %4333 = vmatpush1.bf16.msra.mxu0 %v4256
  %4334 = vmatprep.subr.bf16.mxu0 0
  %4335 = vmatpush1.bf16.msra.mxu0 %v4257
  %4336 = vmatprep.subr.bf16.mxu0 0
  %4337 = vmatpush1.bf16.msra.mxu0 %v4258
  %4338 = vmatprep.subr.bf16.mxu0 0
  %4339 = vmatpush1.bf16.msra.mxu0 %v4259
  %4340 = vmatprep.subr.bf16.mxu0 0
  %4341 = vmatpush1.bf16.msra.mxu0 %v4324
  %4342 = vmatprep.subr.bf16.mxu0 0
  %4343 = vmatpush1.bf16.msra.mxu0 0
  %4344 = vmatprep.subr.bf16.mxu0 0
  %4345 = vmatpush1.bf16.msra.mxu0 0
  %4346 = vmatprep.subr.bf16.mxu0 0
  %4347 = vmatpush1.bf16.msra.mxu0 0
  %4348 = vmatprep.subr.bf16.mxu0 0
  %4349 = vmatpush1.bf16.msra.mxu0 0
  %4350 = vmatprep.subr.bf16.mxu0 0
  %4351 = vmatpush1.bf16.msra.mxu0 0
  %4352 = vmatprep.subr.bf16.mxu0 0
  %4353 = vmatpush1.bf16.msra.mxu0 0
  %4354 = vmatprep.subr.bf16.mxu0 0
  %4355 = vmatpush1.bf16.msra.mxu0 0
  %4356 = vmatprep.subr.bf16.mxu0 0
  %4357 = vmatpush1.bf16.msra.mxu0 0
  %4358 = vmatprep.mubr.bf16.mxu0 0
  %4359 = vmatmul.mubr.bf16.gmra.mrb[0].mxu0 %v4269
  %v4360 = vpop.f32.mrb[0].mxu0
  %v4361 = vadd.f32 0.0, %v4360
  %v4362 = vpop.f32.mrb[0].mxu0
  %v4363 = vpop.f32.mrb[0].mxu0
  %v4364 = vadd.f32 0.0, %v4363
  %v4365 = vpop.f32.mrb[0].mxu0
  %4366 = vmatprep.mubr.bf16.mxu0 0
  %4367 = vmatmul.mubr.bf16.gmra.mrb[0].mxu0 %v4272
  %v4368 = vpop.f32.mrb[0].mxu0
  %v4369 = vadd.f32 0.0, %v4368
  %v4370 = vpop.f32.mrb[0].mxu0
  %v4371 = vpop.f32.mrb[0].mxu0
  %v4372 = vadd.f32 0.0, %v4371
  %v4373 = vpop.f32.mrb[0].mxu0
  %4374 = vmatprep.mubr.bf16.mxu0 0
  %4375 = vmatmul.mubr.bf16.gmra.mrb[0].mxu0 %v4275
  %v4376 = vpop.f32.mrb[0].mxu0
  %v4377 = vadd.f32 0.0, %v4376
  %v4378 = vpop.f32.mrb[0].mxu0
  %v4379 = vpop.f32.mrb[0].mxu0
  %v4380 = vadd.f32 0.0, %v4379
  %v4381 = vpop.f32.mrb[0].mxu0
  %4382 = vmatprep.mubr.bf16.mxu0 0
  %4383 = vmatmul.mubr.bf16.gmra.mrb[0].mxu0 %v4278
  %v4384 = vpop.f32.mrb[0].mxu0
  %v4385 = vadd.f32 0.0, %v4384
  %v4386 = vpop.f32.mrb[0].mxu0
  %v4387 = vpop.f32.mrb[0].mxu0
  %v4388 = vadd.f32 0.0, %v4387
  %v4389 = vpop.f32.mrb[0].mxu0
  %4390 = vmatprep.mubr.bf16.mxu0 0
  %4391 = vmatmul.mubr.bf16.gmra.mrb[0].mxu0 %v4281
  %v4392 = vpop.f32.mrb[0].mxu0
  %v4393 = vadd.f32 0.0, %v4392
  %v4394 = vpop.f32.mrb[0].mxu0
  %v4395 = vpop.f32.mrb[0].mxu0
  %v4396 = vadd.f32 0.0, %v4395
  %v4397 = vpop.f32.mrb[0].mxu0
  %4398 = vmatprep.mubr.bf16.mxu0 0
  %4399 = vmatmul.mubr.bf16.gmra.mrb[0].mxu0 %v4284
  %v4400 = vpop.f32.mrb[0].mxu0
  %v4401 = vadd.f32 0.0, %v4400
  %v4402 = vpop.f32.mrb[0].mxu0
  %v4403 = vpop.f32.mrb[0].mxu0
  %v4404 = vadd.f32 0.0, %v4403
  %v4405 = vpop.f32.mrb[0].mxu0
  %4406 = vmatprep.mubr.bf16.mxu0 0
  %4407 = vmatmul.mubr.bf16.gmra.mrb[0].mxu0 %v4287
  %v4408 = vpop.f32.mrb[0].mxu0
  %v4409 = vadd.f32 0.0, %v4408
  %v4410 = vpop.f32.mrb[0].mxu0
  %v4411 = vpop.f32.mrb[0].mxu0
  %v4412 = vadd.f32 0.0, %v4411
  %v4413 = vpop.f32.mrb[0].mxu0
  %4414 = vmatprep.mubr.bf16.mxu0 0
  %4415 = vmatmul.mubr.bf16.gmra.mrb[0].mxu0 %v4290
  %v4416 = vpop.f32.mrb[0].mxu0
  %v4417 = vadd.f32 0.0, %v4416
  %v4418 = vpop.f32.mrb[0].mxu0
  %v4419 = vpop.f32.mrb[0].mxu0
  %v4420 = vadd.f32 0.0, %v4419
  %v4421 = vpop.f32.mrb[0].mxu0
  %4422 = vmatprep.mubr.bf16.mxu0 0
  %4423 = vmatmul.mubr.bf16.gmra.mrb[0].mxu0 %v4293
  %v4424 = vpop.f32.mrb[0].mxu0
  %v4425 = vadd.f32 0.0, %v4424
  %v4426 = vpop.f32.mrb[0].mxu0
  %v4427 = vpop.f32.mrb[0].mxu0
  %v4428 = vadd.f32 0.0, %v4427
  %v4429 = vpop.f32.mrb[0].mxu0
  %4430 = vmatprep.mubr.bf16.mxu0 0
  %4431 = vmatmul.mubr.bf16.gmra.mrb[0].mxu0 %v4296
  %v4432 = vpop.f32.mrb[0].mxu0
  %v4433 = vadd.f32 0.0, %v4432
  %v4434 = vpop.f32.mrb[0].mxu0
  %v4435 = vpop.f32.mrb[0].mxu0
  %v4436 = vadd.f32 0.0, %v4435
  %v4437 = vpop.f32.mrb[0].mxu0
  %4438 = vmatprep.mubr.bf16.mxu0 0
  %4439 = vmatmul.mubr.bf16.gmra.mrb[0].mxu0 %v4299
  %v4440 = vpop.f32.mrb[0].mxu0
  %v4441 = vadd.f32 0.0, %v4440
  %v4442 = vpop.f32.mrb[0].mxu0
  %v4443 = vpop.f32.mrb[0].mxu0
  %v4444 = vadd.f32 0.0, %v4443
  %v4445 = vpop.f32.mrb[0].mxu0
  %4446 = vmatprep.mubr.bf16.mxu0 0
  %4447 = vmatmul.mubr.bf16.gmra.mrb[0].mxu0 %v4302
  %v4448 = vpop.f32.mrb[0].mxu0
  %v4449 = vadd.f32 0.0, %v4448
  %v4450 = vpop.f32.mrb[0].mxu0
  %v4451 = vpop.f32.mrb[0].mxu0
  %v4452 = vadd.f32 0.0, %v4451
  %v4453 = vpop.f32.mrb[0].mxu0
  %4454 = vmatprep.mubr.bf16.mxu0 0
  %4455 = vmatmul.mubr.bf16.gmra.mrb[0].mxu0 %v4305
  %v4456 = vpop.f32.mrb[0].mxu0
  %v4457 = vadd.f32 0.0, %v4456
  %v4458 = vpop.f32.mrb[0].mxu0
  %v4459 = vpop.f32.mrb[0].mxu0
  %v4460 = vadd.f32 0.0, %v4459
  %v4461 = vpop.f32.mrb[0].mxu0
  %4462 = vmatprep.mubr.bf16.mxu0 0
  %4463 = vmatmul.mubr.bf16.gmra.mrb[0].mxu0 %v4308
  %v4464 = vpop.f32.mrb[0].mxu0
  %v4465 = vadd.f32 0.0, %v4464
  %v4466 = vpop.f32.mrb[0].mxu0
  %v4467 = vpop.f32.mrb[0].mxu0
  %v4468 = vadd.f32 0.0, %v4467
  %v4469 = vpop.f32.mrb[0].mxu0
  %4470 = vmatprep.mubr.bf16.mxu0 0
  %4471 = vmatmul.mubr.bf16.gmra.mrb[0].mxu0 %v4311
  %v4472 = vpop.f32.mrb[0].mxu0
  %v4473 = vadd.f32 0.0, %v4472
  %v4474 = vpop.f32.mrb[0].mxu0
  %v4475 = vpop.f32.mrb[0].mxu0
  %v4476 = vadd.f32 0.0, %v4475
  %v4477 = vpop.f32.mrb[0].mxu0
  %4478 = vmatprep.mubr.bf16.mxu0 0
  %4479 = vmatmul.mubr.bf16.gmra.mrb[0].mxu0 %v4314
  %v4480 = vpop.f32.mrb[0].mxu0
  %v4481 = vadd.f32 0.0, %v4480
  %v4482 = vpop.f32.mrb[0].mxu0
  %v4483 = vpop.f32.mrb[0].mxu0
  %v4484 = vadd.f32 0.0, %v4483
  %v4485 = vpop.f32.mrb[0].mxu0
  %4486 = vmatprep.mubr.bf16.mxu0 0
  %4487 = vmatmul.mubr.bf16.gmra.mrb[0].mxu0 %v4317
  %v4488 = vpop.f32.mrb[0].mxu0
  %v4489 = vadd.f32 0.0, %v4488
  %v4490 = vpop.f32.mrb[0].mxu0
  %v4491 = vpop.f32.mrb[0].mxu0
  %v4492 = vadd.f32 0.0, %v4491
  %v4493 = vpop.f32.mrb[0].mxu0
  %4494 = vmatprep.mubr.bf16.mxu0 0
  %4495 = vmatmul.mubr.bf16.gmra.mrb[0].mxu0 %v4320
  %v4496 = vpop.f32.mrb[0].mxu0
  %v4497 = vadd.f32 0.0, %v4496
  %v4498 = vpop.f32.mrb[0].mxu0
  %v4499 = vpop.f32.mrb[0].mxu0
  %v4500 = vpop.f32.mrb[0].mxu0
  %4501 = vdwg.mxu0
  %s4502 = scalar_lea.vmem %s17, 64
  %v4503 = vld [vmem:[%s4502] sm:$0xf]
  %v4504 = vld [vmem:[%s4502 + $0x4] sm:$0xf]
  %v4505 = vld [vmem:[%s4502 + $0x8] sm:$0xf]
  %v4506 = vld [vmem:[%s4502 + $0xc] sm:$0xf]
  %v4507 = vld [vmem:[%s4502 + $0x10] sm:$0xf]
  %v4508 = vld [vmem:[%s4502 + $0x14] sm:$0xf]
  %v4509 = vld [vmem:[%s4502 + $0x18] sm:$0xf]
  %v4510 = vld [vmem:[%s4502 + $0x1c] sm:$0xf]
  %v4511 = vld [vmem:[%s4502 + $0x20] sm:$0xf]
  %v4512 = vld [vmem:[%s4502 + $0x24] sm:$0xf]
  %v4513 = vld [vmem:[%s4502 + $0x28] sm:$0xf]
  %v4514 = vld [vmem:[%s4502 + $0x2c] sm:$0xf]
  %v4515 = vld [vmem:[%s4502 + $0x30] sm:$0xf]
  %v4516 = vld [vmem:[%s4502 + $0x34] sm:$0xf]
  %v4517 = vld [vmem:[%s4502 + $0x38] sm:$0xf]
  %v4518 = vld [vmem:[%s4502 + $0x3c] sm:$0x7]
  %v4535 = vunpack.c.l.b16 %v4503
  %v4536 = vunpack.c.l.b16 %v4504
  %v4537 = vunpack.c.l.b16 %v4505
  %v4538 = vunpack.c.l.b16 %v4506
  %v4539 = vunpack.c.l.b16 %v4507
  %v4540 = vunpack.c.l.b16 %v4508
  %v4541 = vunpack.c.l.b16 %v4509
  %v4542 = vunpack.c.l.b16 %v4510
  %v4543 = vunpack.c.l.b16 %v4511
  %v4544 = vunpack.c.l.b16 %v4512
  %v4545 = vunpack.c.l.b16 %v4513
  %v4546 = vunpack.c.l.b16 %v4514
  %v4547 = vunpack.c.l.b16 %v4515
  %v4548 = vunpack.c.l.b16 %v4516
  %v4549 = vunpack.c.l.b16 %v4517
  %v4550 = vunpack.c.l.b16 %v4518
  %v4551 = vpack.c.b16 %v4536, %v4535
  %v4552 = vpack.c.b16 %v4538, %v4537
  %v4553 = vpack.c.b16 %v4540, %v4539
  %v4554 = vpack.c.b16 %v4542, %v4541
  %v4555 = vpack.c.b16 %v4544, %v4543
  %v4556 = vpack.c.b16 %v4546, %v4545
  %v4557 = vpack.c.b16 %v4548, %v4547
  %v4558 = vpack.c.b16 %v4550, %v4549
  %v4567 = vsel %vm4322, %v4558, 0
  %4569 = vmatprep.subr.bf16.mxu0 0
  %4570 = vmatpush1.bf16.msra.mxu0 %v4551
  %4571 = vmatprep.subr.bf16.mxu0 0
  %4572 = vmatpush1.bf16.msra.mxu0 %v4552
  %4573 = vmatprep.subr.bf16.mxu0 0
  %4574 = vmatpush1.bf16.msra.mxu0 %v4553
  %4575 = vmatprep.subr.bf16.mxu0 0
  %4576 = vmatpush1.bf16.msra.mxu0 %v4554
  %4577 = vmatprep.subr.bf16.mxu0 0
  %4578 = vmatpush1.bf16.msra.mxu0 %v4555
  %4579 = vmatprep.subr.bf16.mxu0 0
  %4580 = vmatpush1.bf16.msra.mxu0 %v4556
  %4581 = vmatprep.subr.bf16.mxu0 0
  %4582 = vmatpush1.bf16.msra.mxu0 %v4557
  %4583 = vmatprep.subr.bf16.mxu0 0
  %4584 = vmatpush1.bf16.msra.mxu0 %v4567
  %4585 = vmatprep.subr.bf16.mxu0 0
  %4586 = vmatpush1.bf16.msra.mxu0 0
  %4587 = vmatprep.subr.bf16.mxu0 0
  %4588 = vmatpush1.bf16.msra.mxu0 0
  %4589 = vmatprep.subr.bf16.mxu0 0
  %4590 = vmatpush1.bf16.msra.mxu0 0
  %4591 = vmatprep.subr.bf16.mxu0 0
  %4592 = vmatpush1.bf16.msra.mxu0 0
  %4593 = vmatprep.subr.bf16.mxu0 0
  %4594 = vmatpush1.bf16.msra.mxu0 0
  %4595 = vmatprep.subr.bf16.mxu0 0
  %4596 = vmatpush1.bf16.msra.mxu0 0
  %4597 = vmatprep.subr.bf16.mxu0 0
  %4598 = vmatpush1.bf16.msra.mxu0 0
  %4599 = vmatprep.subr.bf16.mxu0 0
  %4600 = vmatpush1.bf16.msra.mxu0 0
  %4601 = vmatprep.mubr.bf16.mxu0 0
  %4602 = vmatmul.mubr.bf16.gmra.mrb[0].mxu0 %v4269
  %v4603 = vpop.f32.mrb[0].mxu0
  %v4604 = vadd.f32 0.0, %v4603
  %v4605 = vpop.f32.mrb[0].mxu0
  %v4606 = vpop.f32.mrb[0].mxu0
  %v4607 = vadd.f32 0.0, %v4606
  %v4608 = vpop.f32.mrb[0].mxu0
  %4609 = vmatprep.mubr.bf16.mxu0 0
  %4610 = vmatmul.mubr.bf16.gmra.mrb[0].mxu0 %v4272
  %v4611 = vpop.f32.mrb[0].mxu0
  %v4612 = vadd.f32 0.0, %v4611
  %v4613 = vpop.f32.mrb[0].mxu0
  %v4614 = vpop.f32.mrb[0].mxu0
  %v4615 = vadd.f32 0.0, %v4614
  %v4616 = vpop.f32.mrb[0].mxu0
  %4617 = vmatprep.mubr.bf16.mxu0 0
  %4618 = vmatmul.mubr.bf16.gmra.mrb[0].mxu0 %v4275
  %v4619 = vpop.f32.mrb[0].mxu0
  %v4620 = vadd.f32 0.0, %v4619
  %v4621 = vpop.f32.mrb[0].mxu0
  %v4622 = vpop.f32.mrb[0].mxu0
  %v4623 = vadd.f32 0.0, %v4622
  %v4624 = vpop.f32.mrb[0].mxu0
  %4625 = vmatprep.mubr.bf16.mxu0 0
  %4626 = vmatmul.mubr.bf16.gmra.mrb[0].mxu0 %v4278
  %v4627 = vpop.f32.mrb[0].mxu0
  %v4628 = vadd.f32 0.0, %v4627
  %v4629 = vpop.f32.mrb[0].mxu0
  %v4630 = vpop.f32.mrb[0].mxu0
  %v4631 = vadd.f32 0.0, %v4630
  %v4632 = vpop.f32.mrb[0].mxu0
  %4633 = vmatprep.mubr.bf16.mxu0 0
  %4634 = vmatmul.mubr.bf16.gmra.mrb[0].mxu0 %v4281
  %v4635 = vpop.f32.mrb[0].mxu0
  %v4636 = vadd.f32 0.0, %v4635
  %v4637 = vpop.f32.mrb[0].mxu0
  %v4638 = vpop.f32.mrb[0].mxu0
  %v4639 = vadd.f32 0.0, %v4638
  %v4640 = vpop.f32.mrb[0].mxu0
  %4641 = vmatprep.mubr.bf16.mxu0 0
  %4642 = vmatmul.mubr.bf16.gmra.mrb[0].mxu0 %v4284
  %v4643 = vpop.f32.mrb[0].mxu0
  %v4644 = vadd.f32 0.0, %v4643
  %v4645 = vpop.f32.mrb[0].mxu0
  %v4646 = vpop.f32.mrb[0].mxu0
  %v4647 = vadd.f32 0.0, %v4646
  %v4648 = vpop.f32.mrb[0].mxu0
  %4649 = vmatprep.mubr.bf16.mxu0 0
  %4650 = vmatmul.mubr.bf16.gmra.mrb[0].mxu0 %v4287
  %v4651 = vpop.f32.mrb[0].mxu0
  %v4652 = vadd.f32 0.0, %v4651
  %v4653 = vpop.f32.mrb[0].mxu0
  %v4654 = vpop.f32.mrb[0].mxu0
  %v4655 = vadd.f32 0.0, %v4654
  %v4656 = vpop.f32.mrb[0].mxu0
  %4657 = vmatprep.mubr.bf16.mxu0 0
  %4658 = vmatmul.mubr.bf16.gmra.mrb[0].mxu0 %v4290
  %v4659 = vpop.f32.mrb[0].mxu0
  %v4660 = vadd.f32 0.0, %v4659
  %v4661 = vpop.f32.mrb[0].mxu0
  %v4662 = vpop.f32.mrb[0].mxu0
  %v4663 = vadd.f32 0.0, %v4662
  %v4664 = vpop.f32.mrb[0].mxu0
  %4665 = vmatprep.mubr.bf16.mxu0 0
  %4666 = vmatmul.mubr.bf16.gmra.mrb[0].mxu0 %v4293
  %v4667 = vpop.f32.mrb[0].mxu0
  %v4668 = vadd.f32 0.0, %v4667
  %v4669 = vpop.f32.mrb[0].mxu0
  %v4670 = vpop.f32.mrb[0].mxu0
  %v4671 = vadd.f32 0.0, %v4670
  %v4672 = vpop.f32.mrb[0].mxu0
  %4673 = vmatprep.mubr.bf16.mxu0 0
  %4674 = vmatmul.mubr.bf16.gmra.mrb[0].mxu0 %v4296
  %v4675 = vpop.f32.mrb[0].mxu0
  %v4676 = vadd.f32 0.0, %v4675
  %v4677 = vpop.f32.mrb[0].mxu0
  %v4678 = vpop.f32.mrb[0].mxu0
  %v4679 = vadd.f32 0.0, %v4678
  %v4680 = vpop.f32.mrb[0].mxu0
  %4681 = vmatprep.mubr.bf16.mxu0 0
  %4682 = vmatmul.mubr.bf16.gmra.mrb[0].mxu0 %v4299
  %v4683 = vpop.f32.mrb[0].mxu0
  %v4684 = vadd.f32 0.0, %v4683
  %v4685 = vpop.f32.mrb[0].mxu0
  %v4686 = vpop.f32.mrb[0].mxu0
  %v4687 = vadd.f32 0.0, %v4686
  %v4688 = vpop.f32.mrb[0].mxu0
  %4689 = vmatprep.mubr.bf16.mxu0 0
  %4690 = vmatmul.mubr.bf16.gmra.mrb[0].mxu0 %v4302
  %v4691 = vpop.f32.mrb[0].mxu0
  %v4692 = vadd.f32 0.0, %v4691
  %v4693 = vpop.f32.mrb[0].mxu0
  %v4694 = vpop.f32.mrb[0].mxu0
  %v4695 = vadd.f32 0.0, %v4694
  %v4696 = vpop.f32.mrb[0].mxu0
  %4697 = vmatprep.mubr.bf16.mxu0 0
  %4698 = vmatmul.mubr.bf16.gmra.mrb[0].mxu0 %v4305
  %v4699 = vpop.f32.mrb[0].mxu0
  %v4700 = vadd.f32 0.0, %v4699
  %v4701 = vpop.f32.mrb[0].mxu0
  %v4702 = vpop.f32.mrb[0].mxu0
  %v4703 = vadd.f32 0.0, %v4702
  %v4704 = vpop.f32.mrb[0].mxu0
  %4705 = vmatprep.mubr.bf16.mxu0 0
  %4706 = vmatmul.mubr.bf16.gmra.mrb[0].mxu0 %v4308
  %v4707 = vpop.f32.mrb[0].mxu0
  %v4708 = vadd.f32 0.0, %v4707
  %v4709 = vpop.f32.mrb[0].mxu0
  %v4710 = vpop.f32.mrb[0].mxu0
  %v4711 = vadd.f32 0.0, %v4710
  %v4712 = vpop.f32.mrb[0].mxu0
  %4713 = vmatprep.mubr.bf16.mxu0 0
  %4714 = vmatmul.mubr.bf16.gmra.mrb[0].mxu0 %v4311
  %v4715 = vpop.f32.mrb[0].mxu0
  %v4716 = vadd.f32 0.0, %v4715
  %v4717 = vpop.f32.mrb[0].mxu0
  %v4718 = vpop.f32.mrb[0].mxu0
  %v4719 = vadd.f32 0.0, %v4718
  %v4720 = vpop.f32.mrb[0].mxu0
  %4721 = vmatprep.mubr.bf16.mxu0 0
  %4722 = vmatmul.mubr.bf16.gmra.mrb[0].mxu0 %v4314
  %v4723 = vpop.f32.mrb[0].mxu0
  %v4724 = vadd.f32 0.0, %v4723
  %v4725 = vpop.f32.mrb[0].mxu0
  %v4726 = vpop.f32.mrb[0].mxu0
  %v4727 = vadd.f32 0.0, %v4726
  %v4728 = vpop.f32.mrb[0].mxu0
  %4729 = vmatprep.mubr.bf16.mxu0 0
  %4730 = vmatmul.mubr.bf16.gmra.mrb[0].mxu0 %v4317
  %v4731 = vpop.f32.mrb[0].mxu0
  %v4732 = vadd.f32 0.0, %v4731
  %v4733 = vpop.f32.mrb[0].mxu0
  %v4734 = vpop.f32.mrb[0].mxu0
  %v4735 = vadd.f32 0.0, %v4734
  %v4736 = vpop.f32.mrb[0].mxu0
  %4737 = vmatprep.mubr.bf16.mxu0 0
  %4738 = vmatmul.mubr.bf16.gmra.mrb[0].mxu0 %v4320
  %v4739 = vpop.f32.mrb[0].mxu0
  %v4740 = vadd.f32 0.0, %v4739
  %v4741 = vpop.f32.mrb[0].mxu0
  %v4742 = vpop.f32.mrb[0].mxu0
  %v4743 = vpop.f32.mrb[0].mxu0
  %4744 = vdwg.mxu0
  %s4745 = scalar_lea.vmem %s17, 128
  %v4746 = vld [vmem:[%s4745] sm:$0xf]
  %v4747 = vld [vmem:[%s4745 + $0x4] sm:$0xf]
  %v4748 = vld [vmem:[%s4745 + $0x8] sm:$0xf]
  %v4749 = vld [vmem:[%s4745 + $0xc] sm:$0xf]
  %v4750 = vld [vmem:[%s4745 + $0x10] sm:$0xf]
  %v4751 = vld [vmem:[%s4745 + $0x14] sm:$0xf]
  %v4752 = vld [vmem:[%s4745 + $0x18] sm:$0xf]
  %v4753 = vld [vmem:[%s4745 + $0x1c] sm:$0xf]
  %v4754 = vld [vmem:[%s4745 + $0x20] sm:$0xf]
  %v4755 = vld [vmem:[%s4745 + $0x24] sm:$0xf]
  %v4756 = vld [vmem:[%s4745 + $0x28] sm:$0xf]
  %v4757 = vld [vmem:[%s4745 + $0x2c] sm:$0xf]
  %v4758 = vld [vmem:[%s4745 + $0x30] sm:$0xf]
  %v4759 = vld [vmem:[%s4745 + $0x34] sm:$0xf]
  %v4760 = vld [vmem:[%s4745 + $0x38] sm:$0xf]
  %v4761 = vld [vmem:[%s4745 + $0x3c] sm:$0x7]
  %v4778 = vunpack.c.l.b16 %v4746
  %v4779 = vunpack.c.l.b16 %v4747
  %v4780 = vunpack.c.l.b16 %v4748
  %v4781 = vunpack.c.l.b16 %v4749
  %v4782 = vunpack.c.l.b16 %v4750
  %v4783 = vunpack.c.l.b16 %v4751
  %v4784 = vunpack.c.l.b16 %v4752
  %v4785 = vunpack.c.l.b16 %v4753
  %v4786 = vunpack.c.l.b16 %v4754
  %v4787 = vunpack.c.l.b16 %v4755
  %v4788 = vunpack.c.l.b16 %v4756
  %v4789 = vunpack.c.l.b16 %v4757
  %v4790 = vunpack.c.l.b16 %v4758
  %v4791 = vunpack.c.l.b16 %v4759
  %v4792 = vunpack.c.l.b16 %v4760
  %v4793 = vunpack.c.l.b16 %v4761
  %v4794 = vpack.c.b16 %v4779, %v4778
  %v4795 = vpack.c.b16 %v4781, %v4780
  %v4796 = vpack.c.b16 %v4783, %v4782
  %v4797 = vpack.c.b16 %v4785, %v4784
  %v4798 = vpack.c.b16 %v4787, %v4786
  %v4799 = vpack.c.b16 %v4789, %v4788
  %v4800 = vpack.c.b16 %v4791, %v4790
  %v4801 = vpack.c.b16 %v4793, %v4792
  %v4810 = vsel %vm4322, %v4801, 0
  %4812 = vmatprep.subr.bf16.mxu0 0
  %4813 = vmatpush1.bf16.msra.mxu0 %v4794
  %4814 = vmatprep.subr.bf16.mxu0 0
  %4815 = vmatpush1.bf16.msra.mxu0 %v4795
  %4816 = vmatprep.subr.bf16.mxu0 0
  %4817 = vmatpush1.bf16.msra.mxu0 %v4796
  %4818 = vmatprep.subr.bf16.mxu0 0
  %4819 = vmatpush1.bf16.msra.mxu0 %v4797
  %4820 = vmatprep.subr.bf16.mxu0 0
  %4821 = vmatpush1.bf16.msra.mxu0 %v4798
  %4822 = vmatprep.subr.bf16.mxu0 0
  %4823 = vmatpush1.bf16.msra.mxu0 %v4799
  %4824 = vmatprep.subr.bf16.mxu0 0
  %4825 = vmatpush1.bf16.msra.mxu0 %v4800
  %4826 = vmatprep.subr.bf16.mxu0 0
  %4827 = vmatpush1.bf16.msra.mxu0 %v4810
  %4828 = vmatprep.subr.bf16.mxu0 0
  %4829 = vmatpush1.bf16.msra.mxu0 0
  %4830 = vmatprep.subr.bf16.mxu0 0
  %4831 = vmatpush1.bf16.msra.mxu0 0
  %4832 = vmatprep.subr.bf16.mxu0 0
  %4833 = vmatpush1.bf16.msra.mxu0 0
  %4834 = vmatprep.subr.bf16.mxu0 0
  %4835 = vmatpush1.bf16.msra.mxu0 0
  %4836 = vmatprep.subr.bf16.mxu0 0
  %4837 = vmatpush1.bf16.msra.mxu0 0
  %4838 = vmatprep.subr.bf16.mxu0 0
  %4839 = vmatpush1.bf16.msra.mxu0 0
  %4840 = vmatprep.subr.bf16.mxu0 0
  %4841 = vmatpush1.bf16.msra.mxu0 0
  %4842 = vmatprep.subr.bf16.mxu0 0
  %4843 = vmatpush1.bf16.msra.mxu0 0
  %4844 = vmatprep.mubr.bf16.mxu0 0
  %4845 = vmatmul.mubr.bf16.gmra.mrb[0].mxu0 %v4269
  %v4846 = vpop.f32.mrb[0].mxu0
  %v4847 = vadd.f32 0.0, %v4846
  %v4848 = vpop.f32.mrb[0].mxu0
  %v4849 = vpop.f32.mrb[0].mxu0
  %v4850 = vadd.f32 0.0, %v4849
  %v4851 = vpop.f32.mrb[0].mxu0
  %4852 = vmatprep.mubr.bf16.mxu0 0
  %4853 = vmatmul.mubr.bf16.gmra.mrb[0].mxu0 %v4272
  %v4854 = vpop.f32.mrb[0].mxu0
  %v4855 = vadd.f32 0.0, %v4854
  %v4856 = vpop.f32.mrb[0].mxu0
  %v4857 = vpop.f32.mrb[0].mxu0
  %v4858 = vadd.f32 0.0, %v4857
  %v4859 = vpop.f32.mrb[0].mxu0
  %4860 = vmatprep.mubr.bf16.mxu0 0
  %4861 = vmatmul.mubr.bf16.gmra.mrb[0].mxu0 %v4275
  %v4862 = vpop.f32.mrb[0].mxu0
  %v4863 = vadd.f32 0.0, %v4862
  %v4864 = vpop.f32.mrb[0].mxu0
  %v4865 = vpop.f32.mrb[0].mxu0
  %v4866 = vadd.f32 0.0, %v4865
  %v4867 = vpop.f32.mrb[0].mxu0
  %4868 = vmatprep.mubr.bf16.mxu0 0
  %4869 = vmatmul.mubr.bf16.gmra.mrb[0].mxu0 %v4278
  %v4870 = vpop.f32.mrb[0].mxu0
  %v4871 = vadd.f32 0.0, %v4870
  %v4872 = vpop.f32.mrb[0].mxu0
  %v4873 = vpop.f32.mrb[0].mxu0
  %v4874 = vadd.f32 0.0, %v4873
  %v4875 = vpop.f32.mrb[0].mxu0
  %4876 = vmatprep.mubr.bf16.mxu0 0
  %4877 = vmatmul.mubr.bf16.gmra.mrb[0].mxu0 %v4281
  %v4878 = vpop.f32.mrb[0].mxu0
  %v4879 = vadd.f32 0.0, %v4878
  %v4880 = vpop.f32.mrb[0].mxu0
  %v4881 = vpop.f32.mrb[0].mxu0
  %v4882 = vadd.f32 0.0, %v4881
  %v4883 = vpop.f32.mrb[0].mxu0
  %4884 = vmatprep.mubr.bf16.mxu0 0
  %4885 = vmatmul.mubr.bf16.gmra.mrb[0].mxu0 %v4284
  %v4886 = vpop.f32.mrb[0].mxu0
  %v4887 = vadd.f32 0.0, %v4886
  %v4888 = vpop.f32.mrb[0].mxu0
  %v4889 = vpop.f32.mrb[0].mxu0
  %v4890 = vadd.f32 0.0, %v4889
  %v4891 = vpop.f32.mrb[0].mxu0
  %4892 = vmatprep.mubr.bf16.mxu0 0
  %4893 = vmatmul.mubr.bf16.gmra.mrb[0].mxu0 %v4287
  %v4894 = vpop.f32.mrb[0].mxu0
  %v4895 = vadd.f32 0.0, %v4894
  %v4896 = vpop.f32.mrb[0].mxu0
  %v4897 = vpop.f32.mrb[0].mxu0
  %v4898 = vadd.f32 0.0, %v4897
  %v4899 = vpop.f32.mrb[0].mxu0
  %4900 = vmatprep.mubr.bf16.mxu0 0
  %4901 = vmatmul.mubr.bf16.gmra.mrb[0].mxu0 %v4290
  %v4902 = vpop.f32.mrb[0].mxu0
  %v4903 = vadd.f32 0.0, %v4902
  %v4904 = vpop.f32.mrb[0].mxu0
  %v4905 = vpop.f32.mrb[0].mxu0
  %v4906 = vadd.f32 0.0, %v4905
  %v4907 = vpop.f32.mrb[0].mxu0
  %4908 = vmatprep.mubr.bf16.mxu0 0
  %4909 = vmatmul.mubr.bf16.gmra.mrb[0].mxu0 %v4293
  %v4910 = vpop.f32.mrb[0].mxu0
  %v4911 = vadd.f32 0.0, %v4910
  %v4912 = vpop.f32.mrb[0].mxu0
  %v4913 = vpop.f32.mrb[0].mxu0
  %v4914 = vadd.f32 0.0, %v4913
  %v4915 = vpop.f32.mrb[0].mxu0
  %4916 = vmatprep.mubr.bf16.mxu0 0
  %4917 = vmatmul.mubr.bf16.gmra.mrb[0].mxu0 %v4296
  %v4918 = vpop.f32.mrb[0].mxu0
  %v4919 = vadd.f32 0.0, %v4918
  %v4920 = vpop.f32.mrb[0].mxu0
  %v4921 = vpop.f32.mrb[0].mxu0
  %v4922 = vadd.f32 0.0, %v4921
  %v4923 = vpop.f32.mrb[0].mxu0
  %4924 = vmatprep.mubr.bf16.mxu0 0
  %4925 = vmatmul.mubr.bf16.gmra.mrb[0].mxu0 %v4299
  %v4926 = vpop.f32.mrb[0].mxu0
  %v4927 = vadd.f32 0.0, %v4926
  %v4928 = vpop.f32.mrb[0].mxu0
  %v4929 = vpop.f32.mrb[0].mxu0
  %v4930 = vadd.f32 0.0, %v4929
  %v4931 = vpop.f32.mrb[0].mxu0
  %4932 = vmatprep.mubr.bf16.mxu0 0
  %4933 = vmatmul.mubr.bf16.gmra.mrb[0].mxu0 %v4302
  %v4934 = vpop.f32.mrb[0].mxu0
  %v4935 = vadd.f32 0.0, %v4934
  %v4936 = vpop.f32.mrb[0].mxu0
  %v4937 = vpop.f32.mrb[0].mxu0
  %v4938 = vadd.f32 0.0, %v4937
  %v4939 = vpop.f32.mrb[0].mxu0
  %4940 = vmatprep.mubr.bf16.mxu0 0
  %4941 = vmatmul.mubr.bf16.gmra.mrb[0].mxu0 %v4305
  %v4942 = vpop.f32.mrb[0].mxu0
  %v4943 = vadd.f32 0.0, %v4942
  %v4944 = vpop.f32.mrb[0].mxu0
  %v4945 = vpop.f32.mrb[0].mxu0
  %v4946 = vadd.f32 0.0, %v4945
  %v4947 = vpop.f32.mrb[0].mxu0
  %4948 = vmatprep.mubr.bf16.mxu0 0
  %4949 = vmatmul.mubr.bf16.gmra.mrb[0].mxu0 %v4308
  %v4950 = vpop.f32.mrb[0].mxu0
  %v4951 = vadd.f32 0.0, %v4950
  %v4952 = vpop.f32.mrb[0].mxu0
  %v4953 = vpop.f32.mrb[0].mxu0
  %v4954 = vadd.f32 0.0, %v4953
  %v4955 = vpop.f32.mrb[0].mxu0
  %4956 = vmatprep.mubr.bf16.mxu0 0
  %4957 = vmatmul.mubr.bf16.gmra.mrb[0].mxu0 %v4311
  %v4958 = vpop.f32.mrb[0].mxu0
  %v4959 = vadd.f32 0.0, %v4958
  %v4960 = vpop.f32.mrb[0].mxu0
  %v4961 = vpop.f32.mrb[0].mxu0
  %v4962 = vadd.f32 0.0, %v4961
  %v4963 = vpop.f32.mrb[0].mxu0
  %4964 = vmatprep.mubr.bf16.mxu0 0
  %4965 = vmatmul.mubr.bf16.gmra.mrb[0].mxu0 %v4314
  %v4966 = vpop.f32.mrb[0].mxu0
  %v4967 = vadd.f32 0.0, %v4966
  %v4968 = vpop.f32.mrb[0].mxu0
  %v4969 = vpop.f32.mrb[0].mxu0
  %v4970 = vadd.f32 0.0, %v4969
  %v4971 = vpop.f32.mrb[0].mxu0
  %4972 = vmatprep.mubr.bf16.mxu0 0
  %4973 = vmatmul.mubr.bf16.gmra.mrb[0].mxu0 %v4317
  %v4974 = vpop.f32.mrb[0].mxu0
  %v4975 = vadd.f32 0.0, %v4974
  %v4976 = vpop.f32.mrb[0].mxu0
  %v4977 = vpop.f32.mrb[0].mxu0
  %v4978 = vadd.f32 0.0, %v4977
  %v4979 = vpop.f32.mrb[0].mxu0
  %4980 = vmatprep.mubr.bf16.mxu0 0
  %4981 = vmatmul.mubr.bf16.gmra.mrb[0].mxu0 %v4320
  %v4982 = vpop.f32.mrb[0].mxu0
  %v4983 = vadd.f32 0.0, %v4982
  %v4984 = vpop.f32.mrb[0].mxu0
  %v4985 = vpop.f32.mrb[0].mxu0
  %v4986 = vpop.f32.mrb[0].mxu0
  %4987 = vdwg.mxu0
  %v4988 = vld [vmem:[%s19] sm:$0xff]
  %v4989 = vld [vmem:[%s19 + $0x8] sm:$0xff]
  %v4990 = vld [vmem:[%s19 + $0x10] sm:$0xff]
  %v4991 = vld [vmem:[%s19 + $0x18] sm:$0xf]
  %v4992 = vld [vmem:[%s19 + $0x1c] sm:$0xff]
  %v4993 = vld [vmem:[%s19 + $0x24] sm:$0xff]
  %v4994 = vld [vmem:[%s19 + $0x2c] sm:$0xff]
  %v4995 = vld [vmem:[%s19 + $0x34] sm:$0xf]
  %v4996 = vld [vmem:[%s19 + $0x38] sm:$0xff]
  %v4997 = vld [vmem:[%s19 + $0x40] sm:$0xff]
  %v4998 = vld [vmem:[%s19 + $0x48] sm:$0xff]
  %v4999 = vld [vmem:[%s19 + $0x50] sm:$0xf]
  %v5000 = vld [vmem:[%s19 + $0x54] sm:$0xff]
  %v5001 = vld [vmem:[%s19 + $0x5c] sm:$0xff]
  %v5002 = vld [vmem:[%s19 + $0x64] sm:$0xff]
  %v5003 = vld [vmem:[%s19 + $0x6c] sm:$0xf]
  %v5004 = vld [vmem:[%s19 + $0x70] sm:$0xff]
  %v5005 = vld [vmem:[%s19 + $0x78] sm:$0xff]
  %v5006 = vld [vmem:[%s19 + $0x80] sm:$0xff]
  %v5007 = vld [vmem:[%s19 + $0x88] sm:$0xf]
  %v5008 = vld [vmem:[%s19 + $0x8c] sm:$0xff]
  %v5009 = vld [vmem:[%s19 + $0x94] sm:$0xff]
  %v5010 = vld [vmem:[%s19 + $0x9c] sm:$0xff]
  %v5011 = vld [vmem:[%s19 + $0xa4] sm:$0xf]
  %v5012 = vld [vmem:[%s19 + $0xa8] sm:$0xff]
  %v5013 = vld [vmem:[%s19 + $0xb0] sm:$0xff]
  %v5014 = vld [vmem:[%s19 + $0xb8] sm:$0xff]
  %v5015 = vld [vmem:[%s19 + $0xc0] sm:$0xf]
  %v5016 = vld [vmem:[%s19 + $0xc4] sm:$0xff]
  %v5017 = vld [vmem:[%s19 + $0xcc] sm:$0xff]
  %v5018 = vld [vmem:[%s19 + $0xd4] sm:$0xff]
  %v5019 = vld [vmem:[%s19 + $0xdc] sm:$0xf]
  %v5020 = vld [vmem:[%s19 + $0xe0] sm:$0xff]
  %v5021 = vld [vmem:[%s19 + $0xe8] sm:$0xff]
  %v5022 = vld [vmem:[%s19 + $0xf0] sm:$0xff]
  %v5023 = vld [vmem:[%s19 + $0xf8] sm:$0xf]
  %v5024 = vld [vmem:[%s19 + $0xfc] sm:$0xff]
  %v5025 = vld [vmem:[%s19 + $0x104] sm:$0xff]
  %v5026 = vld [vmem:[%s19 + $0x10c] sm:$0xff]
  %v5027 = vld [vmem:[%s19 + $0x114] sm:$0xf]
  %v5028 = vld [vmem:[%s19 + $0x118] sm:$0xff]
  %v5029 = vld [vmem:[%s19 + $0x120] sm:$0xff]
  %v5030 = vld [vmem:[%s19 + $0x128] sm:$0xff]
  %v5031 = vld [vmem:[%s19 + $0x130] sm:$0xf]
  %v5032 = vld [vmem:[%s19 + $0x134] sm:$0xff]
  %v5033 = vld [vmem:[%s19 + $0x13c] sm:$0xff]
  %v5034 = vld [vmem:[%s19 + $0x144] sm:$0xff]
  %v5035 = vld [vmem:[%s19 + $0x14c] sm:$0xf]
  %v5036 = vld [vmem:[%s19 + $0x150] sm:$0xff]
  %v5037 = vld [vmem:[%s19 + $0x158] sm:$0xff]
  %v5038 = vld [vmem:[%s19 + $0x160] sm:$0xff]
  %v5039 = vld [vmem:[%s19 + $0x168] sm:$0xf]
  %v5040 = vld [vmem:[%s19 + $0x16c] sm:$0xff]
  %v5041 = vld [vmem:[%s19 + $0x174] sm:$0xff]
  %v5042 = vld [vmem:[%s19 + $0x17c] sm:$0xff]
  %v5043 = vld [vmem:[%s19 + $0x184] sm:$0xf]
  %v5044 = vld [vmem:[%s19 + $0x188] sm:$0xff]
  %v5045 = vld [vmem:[%s19 + $0x190] sm:$0xff]
  %v5046 = vld [vmem:[%s19 + $0x198] sm:$0xff]
  %v5047 = vld [vmem:[%s19 + $0x1a0] sm:$0xf]
  %v5048 = vld [vmem:[%s19 + $0x1a4] sm:$0xff]
  %v5049 = vld [vmem:[%s19 + $0x1ac] sm:$0xff]
  %v5050 = vld [vmem:[%s19 + $0x1b4] sm:$0xff]
  %v5051 = vld [vmem:[%s19 + $0x1bc] sm:$0xf]
  %v5052 = vld [vmem:[%s19 + $0x1c0] sm:$0xff]
  %v5053 = vld [vmem:[%s19 + $0x1c8] sm:$0xff]
  %v5054 = vld [vmem:[%s19 + $0x1d0] sm:$0xff]
  %v5055 = vld [vmem:[%s19 + $0x1d8] sm:$0xf]
  %v5056 = vpack.c.bf16 %v4364, %v4361
  %v5057 = vpack.c.bf16 %v4372, %v4369
  %v5058 = vpack.c.bf16 %v4380, %v4377
  %v5059 = vpack.c.bf16 %v4388, %v4385
  %v5060 = vpack.c.bf16 %v4396, %v4393
  %v5061 = vpack.c.bf16 %v4404, %v4401
  %v5062 = vpack.c.bf16 %v4412, %v4409
  %v5063 = vpack.c.bf16 %v4420, %v4417
  %v5064 = vpack.c.bf16 %v4428, %v4425
  %v5065 = vpack.c.bf16 %v4436, %v4433
  %v5066 = vpack.c.bf16 %v4444, %v4441
  %v5067 = vpack.c.bf16 %v4452, %v4449
  %v5068 = vpack.c.bf16 %v4460, %v4457
  %v5069 = vpack.c.bf16 %v4468, %v4465
  %v5070 = vpack.c.bf16 %v4476, %v4473
  %v5071 = vpack.c.bf16 %v4484, %v4481
  %v5072 = vpack.c.bf16 %v4492, %v4489
  %v5073 = vpack.c.bf16 %v4604, %v4497
  %v5074 = vpack.c.bf16 %v4612, %v4607
  %v5075 = vpack.c.bf16 %v4620, %v4615
  %v5076 = vpack.c.bf16 %v4628, %v4623
  %v5077 = vpack.c.bf16 %v4636, %v4631
  %v5078 = vpack.c.bf16 %v4644, %v4639
  %v5079 = vpack.c.bf16 %v4652, %v4647
  %v5080 = vpack.c.bf16 %v4660, %v4655
  %v5081 = vpack.c.bf16 %v4668, %v4663
  %v5082 = vpack.c.bf16 %v4676, %v4671
  %v5083 = vpack.c.bf16 %v4684, %v4679
  %v5084 = vpack.c.bf16 %v4692, %v4687
  %v5085 = vpack.c.bf16 %v4700, %v4695
  %v5086 = vpack.c.bf16 %v4708, %v4703
  %v5087 = vpack.c.bf16 %v4716, %v4711
  %v5088 = vpack.c.bf16 %v4724, %v4719
  %v5089 = vpack.c.bf16 %v4732, %v4727
  %v5090 = vpack.c.bf16 %v4740, %v4735
  %v5091 = vpack.c.bf16 %v4850, %v4847
  %v5092 = vpack.c.bf16 %v4858, %v4855
  %v5093 = vpack.c.bf16 %v4866, %v4863
  %v5094 = vpack.c.bf16 %v4874, %v4871
  %v5095 = vpack.c.bf16 %v4882, %v4879
  %v5096 = vpack.c.bf16 %v4890, %v4887
  %v5097 = vpack.c.bf16 %v4898, %v4895
  %v5098 = vpack.c.bf16 %v4906, %v4903
  %v5099 = vpack.c.bf16 %v4914, %v4911
  %v5100 = vpack.c.bf16 %v4922, %v4919
  %v5101 = vpack.c.bf16 %v4930, %v4927
  %v5102 = vpack.c.bf16 %v4938, %v4935
  %v5103 = vpack.c.bf16 %v4946, %v4943
  %v5104 = vpack.c.bf16 %v4954, %v4951
  %v5105 = vpack.c.bf16 %v4962, %v4959
  %v5106 = vpack.c.bf16 %v4970, %v4967
  %v5107 = vpack.c.bf16 %v4978, %v4975
  %v5108 = vpack.c.bf16 %v4983, %v4983
  %v5109 = vld [vmem:[%s21] sm:$0xff]
  %v5110 = vld [vmem:[%s21 + $0x8] sm:$0xff]
  %v5111 = vld [vmem:[%s21 + $0x10] sm:$0xff]
  %v5112 = vld [vmem:[%s21 + $0x18] sm:$0xff]
  %v5113 = vld [vmem:[%s21 + $0x20] sm:$0xff]
  %v5114 = vld [vmem:[%s21 + $0x28] sm:$0xff]
  %v5115 = vld [vmem:[%s21 + $0x30] sm:$0xff]
  %v5116 = vld [vmem:[%s21 + $0x38] sm:$0xff]
  %v5117 = vld [vmem:[%s21 + $0x40] sm:$0xff]
  %v5118 = vld [vmem:[%s21 + $0x48] sm:$0xff]
  %v5119 = vld [vmem:[%s21 + $0x50] sm:$0xff]
  %v5120 = vld [vmem:[%s21 + $0x58] sm:$0xff]
  %v5121 = vld [vmem:[%s21 + $0x60] sm:$0xff]
  %v5122 = vld [vmem:[%s21 + $0x68] sm:$0xff]
  %v5123 = vld [vmem:[%s21 + $0x70] sm:$0xff]
  %v5124 = vld [vmem:[%s21 + $0x78] sm:$0xff]
  %v5125 = vld [vmem:[%s21 + $0x80] sm:$0xff]
  %5127 = vset.pattern.permute.xlu0 0
  %5128 = vperm.xlu0 %5127, %v5109
  %v5129 = vpop.permute.xlu0 %5128
  %5132 = vset.pattern.permute.xlu0 0
  %5133 = vperm.xlu0 %5132, %v5110
  %v5134 = vpop.permute.xlu0 %5133
  %5137 = vset.pattern.permute.xlu0 0
  %5138 = vperm.xlu0 %5137, %v5111
  %v5139 = vpop.permute.xlu0 %5138
  %5142 = vset.pattern.permute.xlu0 0
  %5143 = vperm.xlu0 %5142, %v5112
  %v5144 = vpop.permute.xlu0 %5143
  %5147 = vset.pattern.permute.xlu0 0
  %5148 = vperm.xlu0 %5147, %v5113
  %v5149 = vpop.permute.xlu0 %5148
  %5152 = vset.pattern.permute.xlu0 0
  %5153 = vperm.xlu0 %5152, %v5114
  %v5154 = vpop.permute.xlu0 %5153
  %5157 = vset.pattern.permute.xlu0 0
  %5158 = vperm.xlu0 %5157, %v5115
  %v5159 = vpop.permute.xlu0 %5158
  %5162 = vset.pattern.permute.xlu0 0
  %5163 = vperm.xlu0 %5162, %v5116
  %v5164 = vpop.permute.xlu0 %5163
  %5167 = vset.pattern.permute.xlu0 0
  %5168 = vperm.xlu0 %5167, %v5117
  %v5169 = vpop.permute.xlu0 %5168
  %5172 = vset.pattern.permute.xlu0 0
  %5173 = vperm.xlu0 %5172, %v5118
  %v5174 = vpop.permute.xlu0 %5173
  %5177 = vset.pattern.permute.xlu0 0
  %5178 = vperm.xlu0 %5177, %v5119
  %v5179 = vpop.permute.xlu0 %5178
  %5182 = vset.pattern.permute.xlu0 0
  %5183 = vperm.xlu0 %5182, %v5120
  %v5184 = vpop.permute.xlu0 %5183
  %5187 = vset.pattern.permute.xlu0 0
  %5188 = vperm.xlu0 %5187, %v5121
  %v5189 = vpop.permute.xlu0 %5188
  %5192 = vset.pattern.permute.xlu0 0
  %5193 = vperm.xlu0 %5192, %v5122
  %v5194 = vpop.permute.xlu0 %5193
  %5197 = vset.pattern.permute.xlu0 0
  %5198 = vperm.xlu0 %5197, %v5123
  %v5199 = vpop.permute.xlu0 %5198
  %5202 = vset.pattern.permute.xlu0 0
  %5203 = vperm.xlu0 %5202, %v5124
  %v5204 = vpop.permute.xlu0 %5203
  %5207 = vset.pattern.permute.xlu0 0
  %5208 = vperm.xlu0 %5207, %v5125
  %v5209 = vpop.permute.xlu0 %5208
  %v5279 = vunpack.c.l.b16 %v4988
  %v5280 = vunpack.c.h.b16 %v4988
  %v5281 = vunpack.c.l.b16 %v4989
  %v5282 = vunpack.c.h.b16 %v4989
  %v5283 = vunpack.c.l.b16 %v4990
  %v5284 = vunpack.c.h.b16 %v4990
  %v5285 = vunpack.c.l.b16 %v4991
  %v5286 = vunpack.c.l.b16 %v4992
  %v5287 = vunpack.c.h.b16 %v4992
  %v5288 = vunpack.c.l.b16 %v4993
  %v5289 = vunpack.c.h.b16 %v4993
  %v5290 = vunpack.c.l.b16 %v4994
  %v5291 = vunpack.c.h.b16 %v4994
  %v5292 = vunpack.c.l.b16 %v4995
  %v5293 = vunpack.c.l.b16 %v4996
  %v5294 = vunpack.c.h.b16 %v4996
  %v5295 = vunpack.c.l.b16 %v4997
  %v5296 = vunpack.c.h.b16 %v4997
  %v5297 = vunpack.c.l.b16 %v4998
  %v5298 = vunpack.c.h.b16 %v4998
  %v5299 = vunpack.c.l.b16 %v4999
  %v5300 = vunpack.c.l.b16 %v5000
  %v5301 = vunpack.c.h.b16 %v5000
  %v5302 = vunpack.c.l.b16 %v5001
  %v5303 = vunpack.c.h.b16 %v5001
  %v5304 = vunpack.c.l.b16 %v5002
  %v5305 = vunpack.c.h.b16 %v5002
  %v5306 = vunpack.c.l.b16 %v5003
  %v5307 = vunpack.c.l.b16 %v5004
  %v5308 = vunpack.c.h.b16 %v5004
  %v5309 = vunpack.c.l.b16 %v5005
  %v5310 = vunpack.c.h.b16 %v5005
  %v5311 = vunpack.c.l.b16 %v5006
  %v5312 = vunpack.c.h.b16 %v5006
  %v5313 = vunpack.c.l.b16 %v5007
  %v5314 = vunpack.c.l.b16 %v5008
  %v5315 = vunpack.c.h.b16 %v5008
  %v5316 = vunpack.c.l.b16 %v5009
  %v5317 = vunpack.c.h.b16 %v5009
  %v5318 = vunpack.c.l.b16 %v5010
  %v5319 = vunpack.c.h.b16 %v5010
  %v5320 = vunpack.c.l.b16 %v5011
  %v5321 = vunpack.c.l.b16 %v5012
  %v5322 = vunpack.c.h.b16 %v5012
  %v5323 = vunpack.c.l.b16 %v5013
  %v5324 = vunpack.c.h.b16 %v5013
  %v5325 = vunpack.c.l.b16 %v5014
  %v5326 = vunpack.c.h.b16 %v5014
  %v5327 = vunpack.c.l.b16 %v5015
  %v5328 = vunpack.c.l.b16 %v5016
  %v5329 = vunpack.c.h.b16 %v5016
  %v5330 = vunpack.c.l.b16 %v5017
  %v5331 = vunpack.c.h.b16 %v5017
  %v5332 = vunpack.c.l.b16 %v5018
  %v5333 = vunpack.c.h.b16 %v5018
  %v5334 = vunpack.c.l.b16 %v5019
  %v5335 = vunpack.c.l.b16 %v5020
  %v5336 = vunpack.c.h.b16 %v5020
  %v5337 = vunpack.c.l.b16 %v5021
  %v5338 = vunpack.c.h.b16 %v5021
  %v5339 = vunpack.c.l.b16 %v5022
  %v5340 = vunpack.c.h.b16 %v5022
  %v5341 = vunpack.c.l.b16 %v5023
  %v5342 = vunpack.c.l.b16 %v5024
  %v5343 = vunpack.c.h.b16 %v5024
  %v5344 = vunpack.c.l.b16 %v5025
  %v5345 = vunpack.c.h.b16 %v5025
  %v5346 = vunpack.c.l.b16 %v5026
  %v5347 = vunpack.c.h.b16 %v5026
  %v5348 = vunpack.c.l.b16 %v5027
  %v5349 = vunpack.c.l.b16 %v5028
  %v5350 = vunpack.c.h.b16 %v5028
  %v5351 = vunpack.c.l.b16 %v5029
  %v5352 = vunpack.c.h.b16 %v5029
  %v5353 = vunpack.c.l.b16 %v5030
  %v5354 = vunpack.c.h.b16 %v5030
  %v5355 = vunpack.c.l.b16 %v5031
  %v5356 = vunpack.c.l.b16 %v5032
  %v5357 = vunpack.c.h.b16 %v5032
  %v5358 = vunpack.c.l.b16 %v5033
  %v5359 = vunpack.c.h.b16 %v5033
  %v5360 = vunpack.c.l.b16 %v5034
  %v5361 = vunpack.c.h.b16 %v5034
  %v5362 = vunpack.c.l.b16 %v5035
  %v5363 = vunpack.c.l.b16 %v5036
  %v5364 = vunpack.c.h.b16 %v5036
  %v5365 = vunpack.c.l.b16 %v5037
  %v5366 = vunpack.c.h.b16 %v5037
  %v5367 = vunpack.c.l.b16 %v5038
  %v5368 = vunpack.c.h.b16 %v5038
  %v5369 = vunpack.c.l.b16 %v5039
  %v5370 = vunpack.c.l.b16 %v5040
  %v5371 = vunpack.c.h.b16 %v5040
  %v5372 = vunpack.c.l.b16 %v5041
  %v5373 = vunpack.c.h.b16 %v5041
  %v5374 = vunpack.c.l.b16 %v5042
  %v5375 = vunpack.c.h.b16 %v5042
  %v5376 = vunpack.c.l.b16 %v5043
  %v5377 = vunpack.c.l.b16 %v5044
  %v5378 = vunpack.c.h.b16 %v5044
  %v5379 = vunpack.c.l.b16 %v5045
  %v5380 = vunpack.c.h.b16 %v5045
  %v5381 = vunpack.c.l.b16 %v5046
  %v5382 = vunpack.c.h.b16 %v5046
  %v5383 = vunpack.c.l.b16 %v5047
  %v5384 = vunpack.c.l.b16 %v5048
  %v5385 = vunpack.c.h.b16 %v5048
  %v5386 = vunpack.c.l.b16 %v5049
  %v5387 = vunpack.c.h.b16 %v5049
  %v5388 = vunpack.c.l.b16 %v5050
  %v5389 = vunpack.c.h.b16 %v5050
  %v5390 = vunpack.c.l.b16 %v5051
  %v5391 = vunpack.c.l.b16 %v5052
  %v5392 = vunpack.c.h.b16 %v5052
  %v5393 = vunpack.c.l.b16 %v5053
  %v5394 = vunpack.c.h.b16 %v5053
  %v5395 = vunpack.c.l.b16 %v5054
  %v5396 = vunpack.c.h.b16 %v5054
  %v5397 = vunpack.c.l.b16 %v5055
  %v5398 = vpack.c.b16 %v5286, %v5279
  %v5399 = vpack.c.b16 %v5287, %v5280
  %v5400 = vpack.c.b16 %v5288, %v5281
  %v5401 = vpack.c.b16 %v5289, %v5282
  %v5402 = vpack.c.b16 %v5290, %v5283
  %v5403 = vpack.c.b16 %v5291, %v5284
  %v5404 = vpack.c.b16 %v5292, %v5285
  %v5405 = vpack.c.b16 %v5300, %v5293
  %v5406 = vpack.c.b16 %v5301, %v5294
  %v5407 = vpack.c.b16 %v5302, %v5295
  %v5408 = vpack.c.b16 %v5303, %v5296
  %v5409 = vpack.c.b16 %v5304, %v5297
  %v5410 = vpack.c.b16 %v5305, %v5298
  %v5411 = vpack.c.b16 %v5306, %v5299
  %v5412 = vpack.c.b16 %v5314, %v5307
  %v5413 = vpack.c.b16 %v5315, %v5308
  %v5414 = vpack.c.b16 %v5316, %v5309
  %v5415 = vpack.c.b16 %v5317, %v5310
  %v5416 = vpack.c.b16 %v5318, %v5311
  %v5417 = vpack.c.b16 %v5319, %v5312
  %v5418 = vpack.c.b16 %v5320, %v5313
  %v5419 = vpack.c.b16 %v5328, %v5321
  %v5420 = vpack.c.b16 %v5329, %v5322
  %v5421 = vpack.c.b16 %v5330, %v5323
  %v5422 = vpack.c.b16 %v5331, %v5324
  %v5423 = vpack.c.b16 %v5332, %v5325
  %v5424 = vpack.c.b16 %v5333, %v5326
  %v5425 = vpack.c.b16 %v5334, %v5327
  %v5426 = vpack.c.b16 %v5342, %v5335
  %v5427 = vpack.c.b16 %v5343, %v5336
  %v5428 = vpack.c.b16 %v5344, %v5337
  %v5429 = vpack.c.b16 %v5345, %v5338
  %v5430 = vpack.c.b16 %v5346, %v5339
  %v5431 = vpack.c.b16 %v5347, %v5340
  %v5432 = vpack.c.b16 %v5348, %v5341
  %v5433 = vpack.c.b16 %v5356, %v5349
  %v5434 = vpack.c.b16 %v5357, %v5350
  %v5435 = vpack.c.b16 %v5358, %v5351
  %v5436 = vpack.c.b16 %v5359, %v5352
  %v5437 = vpack.c.b16 %v5360, %v5353
  %v5438 = vpack.c.b16 %v5361, %v5354
  %v5439 = vpack.c.b16 %v5362, %v5355
  %v5440 = vpack.c.b16 %v5370, %v5363
  %v5441 = vpack.c.b16 %v5371, %v5364
  %v5442 = vpack.c.b16 %v5372, %v5365
  %v5443 = vpack.c.b16 %v5373, %v5366
  %v5444 = vpack.c.b16 %v5374, %v5367
  %v5445 = vpack.c.b16 %v5375, %v5368
  %v5446 = vpack.c.b16 %v5376, %v5369
  %v5447 = vpack.c.b16 %v5384, %v5377
  %v5448 = vpack.c.b16 %v5385, %v5378
  %v5449 = vpack.c.b16 %v5386, %v5379
  %v5450 = vpack.c.b16 %v5387, %v5380
  %v5451 = vpack.c.b16 %v5388, %v5381
  %v5452 = vpack.c.b16 %v5389, %v5382
  %v5453 = vpack.c.b16 %v5390, %v5383
  %v5454 = vpack.c.b16 %v5391, %v5391
  %v5455 = vpack.c.b16 %v5392, %v5392
  %v5456 = vpack.c.b16 %v5393, %v5393
  %v5457 = vpack.c.b16 %v5394, %v5394
  %v5458 = vpack.c.b16 %v5395, %v5395
  %v5459 = vpack.c.b16 %v5396, %v5396
  %v5460 = vpack.c.b16 %v5397, %v5397
  %vm5515 = vcmask 588800
  %v5517 = vsel %vm5515, %v5404, 0
  %v5520 = vsel %vm5515, %v5411, 0
  %v5523 = vsel %vm5515, %v5418, 0
  %v5526 = vsel %vm5515, %v5425, 0
  %v5529 = vsel %vm5515, %v5432, 0
  %v5532 = vsel %vm5515, %v5439, 0
  %v5535 = vsel %vm5515, %v5446, 0
  %v5538 = vsel %vm5515, %v5453, 0
  %v5541 = vsel %vm5515, %v5460, 0
  %v5544 = vsel %vm2004, %v5108, 0
  %5546 = vmatprep.subr.bf16.mxu0 0
  %5547 = vmatpush1.bf16.msra.mxu0 %v5056
  %5548 = vmatprep.subr.bf16.mxu0 0
  %5549 = vmatpush1.bf16.msra.mxu0 %v5057
  %5550 = vmatprep.subr.bf16.mxu0 0
  %5551 = vmatpush1.bf16.msra.mxu0 %v5058
  %5552 = vmatprep.subr.bf16.mxu0 0
  %5553 = vmatpush1.bf16.msra.mxu0 %v5059
  %5554 = vmatprep.subr.bf16.mxu0 0
  %5555 = vmatpush1.bf16.msra.mxu0 %v5060
  %5556 = vmatprep.subr.bf16.mxu0 0
  %5557 = vmatpush1.bf16.msra.mxu0 %v5061
  %5558 = vmatprep.subr.bf16.mxu0 0
  %5559 = vmatpush1.bf16.msra.mxu0 %v5062
  %5560 = vmatprep.subr.bf16.mxu0 0
  %5561 = vmatpush1.bf16.msra.mxu0 %v5063
  %5562 = vmatprep.subr.bf16.mxu0 0
  %5563 = vmatpush1.bf16.msra.mxu0 %v5064
  %5564 = vmatprep.subr.bf16.mxu0 0
  %5565 = vmatpush1.bf16.msra.mxu0 %v5065
  %5566 = vmatprep.subr.bf16.mxu0 0
  %5567 = vmatpush1.bf16.msra.mxu0 %v5066
  %5568 = vmatprep.subr.bf16.mxu0 0
  %5569 = vmatpush1.bf16.msra.mxu0 %v5067
  %5570 = vmatprep.subr.bf16.mxu0 0
  %5571 = vmatpush1.bf16.msra.mxu0 %v5068
  %5572 = vmatprep.subr.bf16.mxu0 0
  %5573 = vmatpush1.bf16.msra.mxu0 %v5069
  %5574 = vmatprep.subr.bf16.mxu0 0
  %5575 = vmatpush1.bf16.msra.mxu0 %v5070
  %5576 = vmatprep.subr.bf16.mxu0 0
  %5577 = vmatpush1.bf16.msra.mxu0 %v5071
  %5578 = vmatprep.mubr.bf16.mxu0 %v5399
  %5579 = vmatmul.mubr.bf16.gmra.mrb[0].mxu0 %v5398
  %v5580 = vpop.f32.mrb[0].mxu0
  %v5581 = vadd.f32 %v5129, %v5580
  %v5582 = vpop.f32.mrb[0].mxu0
  %v5583 = vpop.f32.mrb[0].mxu0
  %v5584 = vadd.f32 %v5134, %v5583
  %v5585 = vpop.f32.mrb[0].mxu0
  %5586 = vmatprep.mubr.bf16.mxu0 %v5406
  %5587 = vmatmul.mubr.bf16.gmra.mrb[0].mxu0 %v5405
  %v5588 = vpop.f32.mrb[0].mxu0
  %v5589 = vadd.f32 %v5139, %v5588
  %v5590 = vpop.f32.mrb[0].mxu0
  %v5591 = vpop.f32.mrb[0].mxu0
  %v5592 = vadd.f32 %v5144, %v5591
  %v5593 = vpop.f32.mrb[0].mxu0
  %5594 = vmatprep.mubr.bf16.mxu0 %v5413
  %5595 = vmatmul.mubr.bf16.gmra.mrb[0].mxu0 %v5412
  %v5596 = vpop.f32.mrb[0].mxu0
  %v5597 = vadd.f32 %v5149, %v5596
  %v5598 = vpop.f32.mrb[0].mxu0
  %v5599 = vpop.f32.mrb[0].mxu0
  %v5600 = vadd.f32 %v5154, %v5599
  %v5601 = vpop.f32.mrb[0].mxu0
  %5602 = vmatprep.mubr.bf16.mxu0 %v5420
  %5603 = vmatmul.mubr.bf16.gmra.mrb[0].mxu0 %v5419
  %v5604 = vpop.f32.mrb[0].mxu0
  %v5605 = vadd.f32 %v5159, %v5604
  %v5606 = vpop.f32.mrb[0].mxu0
  %v5607 = vpop.f32.mrb[0].mxu0
  %v5608 = vadd.f32 %v5164, %v5607
  %v5609 = vpop.f32.mrb[0].mxu0
  %5610 = vmatprep.mubr.bf16.mxu0 %v5427
  %5611 = vmatmul.mubr.bf16.gmra.mrb[0].mxu0 %v5426
  %v5612 = vpop.f32.mrb[0].mxu0
  %v5613 = vadd.f32 %v5169, %v5612
  %v5614 = vpop.f32.mrb[0].mxu0
  %v5615 = vpop.f32.mrb[0].mxu0
  %v5616 = vadd.f32 %v5174, %v5615
  %v5617 = vpop.f32.mrb[0].mxu0
  %5618 = vmatprep.mubr.bf16.mxu0 %v5434
  %5619 = vmatmul.mubr.bf16.gmra.mrb[0].mxu0 %v5433
  %v5620 = vpop.f32.mrb[0].mxu0
  %v5621 = vadd.f32 %v5179, %v5620
  %v5622 = vpop.f32.mrb[0].mxu0
  %v5623 = vpop.f32.mrb[0].mxu0
  %v5624 = vadd.f32 %v5184, %v5623
  %v5625 = vpop.f32.mrb[0].mxu0
  %5626 = vmatprep.mubr.bf16.mxu0 %v5441
  %5627 = vmatmul.mubr.bf16.gmra.mrb[0].mxu0 %v5440
  %v5628 = vpop.f32.mrb[0].mxu0
  %v5629 = vadd.f32 %v5189, %v5628
  %v5630 = vpop.f32.mrb[0].mxu0
  %v5631 = vpop.f32.mrb[0].mxu0
  %v5632 = vadd.f32 %v5194, %v5631
  %v5633 = vpop.f32.mrb[0].mxu0
  %5634 = vmatprep.mubr.bf16.mxu0 %v5448
  %5635 = vmatmul.mubr.bf16.gmra.mrb[0].mxu0 %v5447
  %v5636 = vpop.f32.mrb[0].mxu0
  %v5637 = vadd.f32 %v5199, %v5636
  %v5638 = vpop.f32.mrb[0].mxu0
  %v5639 = vpop.f32.mrb[0].mxu0
  %v5640 = vadd.f32 %v5204, %v5639
  %v5641 = vpop.f32.mrb[0].mxu0
  %5642 = vmatprep.mubr.bf16.mxu0 %v5455
  %5643 = vmatmul.mubr.bf16.gmra.mrb[0].mxu0 %v5454
  %v5644 = vpop.f32.mrb[0].mxu0
  %v5645 = vadd.f32 %v5209, %v5644
  %v5646 = vpop.f32.mrb[0].mxu0
  %v5647 = vpop.f32.mrb[0].mxu0
  %v5648 = vpop.f32.mrb[0].mxu0
  %5649 = vdwg.mxu0
  %5650 = vmatprep.subr.bf16.mxu0 0
  %5651 = vmatpush1.bf16.msra.mxu0 %v5072
  %5652 = vmatprep.subr.bf16.mxu0 0
  %5653 = vmatpush1.bf16.msra.mxu0 %v5073
  %5654 = vmatprep.subr.bf16.mxu0 0
  %5655 = vmatpush1.bf16.msra.mxu0 %v5074
  %5656 = vmatprep.subr.bf16.mxu0 0
  %5657 = vmatpush1.bf16.msra.mxu0 %v5075
  %5658 = vmatprep.subr.bf16.mxu0 0
  %5659 = vmatpush1.bf16.msra.mxu0 %v5076
  %5660 = vmatprep.subr.bf16.mxu0 0
  %5661 = vmatpush1.bf16.msra.mxu0 %v5077
  %5662 = vmatprep.subr.bf16.mxu0 0
  %5663 = vmatpush1.bf16.msra.mxu0 %v5078
  %5664 = vmatprep.subr.bf16.mxu0 0
  %5665 = vmatpush1.bf16.msra.mxu0 %v5079
  %5666 = vmatprep.subr.bf16.mxu0 0
  %5667 = vmatpush1.bf16.msra.mxu0 %v5080
  %5668 = vmatprep.subr.bf16.mxu0 0
  %5669 = vmatpush1.bf16.msra.mxu0 %v5081
  %5670 = vmatprep.subr.bf16.mxu0 0
  %5671 = vmatpush1.bf16.msra.mxu0 %v5082
  %5672 = vmatprep.subr.bf16.mxu0 0
  %5673 = vmatpush1.bf16.msra.mxu0 %v5083
  %5674 = vmatprep.subr.bf16.mxu0 0
  %5675 = vmatpush1.bf16.msra.mxu0 %v5084
  %5676 = vmatprep.subr.bf16.mxu0 0
  %5677 = vmatpush1.bf16.msra.mxu0 %v5085
  %5678 = vmatprep.subr.bf16.mxu0 0
  %5679 = vmatpush1.bf16.msra.mxu0 %v5086
  %5680 = vmatprep.subr.bf16.mxu0 0
  %5681 = vmatpush1.bf16.msra.mxu0 %v5087
  %5682 = vmatprep.mubr.bf16.mxu0 %v5401
  %5683 = vmatmul.mubr.bf16.gmra.mrb[0].mxu0 %v5400
  %v5684 = vpop.f32.mrb[0].mxu0
  %v5685 = vadd.f32 %v5581, %v5684
  %v5686 = vpop.f32.mrb[0].mxu0
  %v5687 = vpop.f32.mrb[0].mxu0
  %v5688 = vadd.f32 %v5584, %v5687
  %v5689 = vpop.f32.mrb[0].mxu0
  %5690 = vmatprep.mubr.bf16.mxu0 %v5408
  %5691 = vmatmul.mubr.bf16.gmra.mrb[0].mxu0 %v5407
  %v5692 = vpop.f32.mrb[0].mxu0
  %v5693 = vadd.f32 %v5589, %v5692
  %v5694 = vpop.f32.mrb[0].mxu0
  %v5695 = vpop.f32.mrb[0].mxu0
  %v5696 = vadd.f32 %v5592, %v5695
  %v5697 = vpop.f32.mrb[0].mxu0
  %5698 = vmatprep.mubr.bf16.mxu0 %v5415
  %5699 = vmatmul.mubr.bf16.gmra.mrb[0].mxu0 %v5414
  %v5700 = vpop.f32.mrb[0].mxu0
  %v5701 = vadd.f32 %v5597, %v5700
  %v5702 = vpop.f32.mrb[0].mxu0
  %v5703 = vpop.f32.mrb[0].mxu0
  %v5704 = vadd.f32 %v5600, %v5703
  %v5705 = vpop.f32.mrb[0].mxu0
  %5706 = vmatprep.mubr.bf16.mxu0 %v5422
  %5707 = vmatmul.mubr.bf16.gmra.mrb[0].mxu0 %v5421
  %v5708 = vpop.f32.mrb[0].mxu0
  %v5709 = vadd.f32 %v5605, %v5708
  %v5710 = vpop.f32.mrb[0].mxu0
  %v5711 = vpop.f32.mrb[0].mxu0
  %v5712 = vadd.f32 %v5608, %v5711
  %v5713 = vpop.f32.mrb[0].mxu0
  %5714 = vmatprep.mubr.bf16.mxu0 %v5429
  %5715 = vmatmul.mubr.bf16.gmra.mrb[0].mxu0 %v5428
  %v5716 = vpop.f32.mrb[0].mxu0
  %v5717 = vadd.f32 %v5613, %v5716
  %v5718 = vpop.f32.mrb[0].mxu0
  %v5719 = vpop.f32.mrb[0].mxu0
  %v5720 = vadd.f32 %v5616, %v5719
  %v5721 = vpop.f32.mrb[0].mxu0
  %5722 = vmatprep.mubr.bf16.mxu0 %v5436
  %5723 = vmatmul.mubr.bf16.gmra.mrb[0].mxu0 %v5435
  %v5724 = vpop.f32.mrb[0].mxu0
  %v5725 = vadd.f32 %v5621, %v5724
  %v5726 = vpop.f32.mrb[0].mxu0
  %v5727 = vpop.f32.mrb[0].mxu0
  %v5728 = vadd.f32 %v5624, %v5727
  %v5729 = vpop.f32.mrb[0].mxu0
  %5730 = vmatprep.mubr.bf16.mxu0 %v5443
  %5731 = vmatmul.mubr.bf16.gmra.mrb[0].mxu0 %v5442
  %v5732 = vpop.f32.mrb[0].mxu0
  %v5733 = vadd.f32 %v5629, %v5732
  %v5734 = vpop.f32.mrb[0].mxu0
  %v5735 = vpop.f32.mrb[0].mxu0
  %v5736 = vadd.f32 %v5632, %v5735
  %v5737 = vpop.f32.mrb[0].mxu0
  %5738 = vmatprep.mubr.bf16.mxu0 %v5450
  %5739 = vmatmul.mubr.bf16.gmra.mrb[0].mxu0 %v5449
  %v5740 = vpop.f32.mrb[0].mxu0
  %v5741 = vadd.f32 %v5637, %v5740
  %v5742 = vpop.f32.mrb[0].mxu0
  %v5743 = vpop.f32.mrb[0].mxu0
  %v5744 = vadd.f32 %v5640, %v5743
  %v5745 = vpop.f32.mrb[0].mxu0
  %5746 = vmatprep.mubr.bf16.mxu0 %v5457
  %5747 = vmatmul.mubr.bf16.gmra.mrb[0].mxu0 %v5456
  %v5748 = vpop.f32.mrb[0].mxu0
  %v5749 = vadd.f32 %v5645, %v5748
  %v5750 = vpop.f32.mrb[0].mxu0
  %v5751 = vpop.f32.mrb[0].mxu0
  %v5752 = vpop.f32.mrb[0].mxu0
  %5753 = vdwg.mxu0
  %5754 = vmatprep.subr.bf16.mxu0 0
  %5755 = vmatpush1.bf16.msra.mxu0 %v5088
  %5756 = vmatprep.subr.bf16.mxu0 0
  %5757 = vmatpush1.bf16.msra.mxu0 %v5089
  %5758 = vmatprep.subr.bf16.mxu0 0
  %5759 = vmatpush1.bf16.msra.mxu0 %v5090
  %5760 = vmatprep.subr.bf16.mxu0 0
  %5761 = vmatpush1.bf16.msra.mxu0 %v5091
  %5762 = vmatprep.subr.bf16.mxu0 0
  %5763 = vmatpush1.bf16.msra.mxu0 %v5092
  %5764 = vmatprep.subr.bf16.mxu0 0
  %5765 = vmatpush1.bf16.msra.mxu0 %v5093
  %5766 = vmatprep.subr.bf16.mxu0 0
  %5767 = vmatpush1.bf16.msra.mxu0 %v5094
  %5768 = vmatprep.subr.bf16.mxu0 0
  %5769 = vmatpush1.bf16.msra.mxu0 %v5095
  %5770 = vmatprep.subr.bf16.mxu0 0
  %5771 = vmatpush1.bf16.msra.mxu0 %v5096
  %5772 = vmatprep.subr.bf16.mxu0 0
  %5773 = vmatpush1.bf16.msra.mxu0 %v5097
  %5774 = vmatprep.subr.bf16.mxu0 0
  %5775 = vmatpush1.bf16.msra.mxu0 %v5098
  %5776 = vmatprep.subr.bf16.mxu0 0
  %5777 = vmatpush1.bf16.msra.mxu0 %v5099
  %5778 = vmatprep.subr.bf16.mxu0 0
  %5779 = vmatpush1.bf16.msra.mxu0 %v5100
  %5780 = vmatprep.subr.bf16.mxu0 0
  %5781 = vmatpush1.bf16.msra.mxu0 %v5101
  %5782 = vmatprep.subr.bf16.mxu0 0
  %5783 = vmatpush1.bf16.msra.mxu0 %v5102
  %5784 = vmatprep.subr.bf16.mxu0 0
  %5785 = vmatpush1.bf16.msra.mxu0 %v5103
  %5786 = vmatprep.mubr.bf16.mxu0 %v5403
  %5787 = vmatmul.mubr.bf16.gmra.mrb[0].mxu0 %v5402
  %v5788 = vpop.f32.mrb[0].mxu0
  %v5789 = vadd.f32 %v5685, %v5788
  %v5790 = vpop.f32.mrb[0].mxu0
  %v5791 = vpop.f32.mrb[0].mxu0
  %v5792 = vadd.f32 %v5688, %v5791
  %v5793 = vpop.f32.mrb[0].mxu0
  %5794 = vmatprep.mubr.bf16.mxu0 %v5410
  %5795 = vmatmul.mubr.bf16.gmra.mrb[0].mxu0 %v5409
  %v5796 = vpop.f32.mrb[0].mxu0
  %v5797 = vadd.f32 %v5693, %v5796
  %v5798 = vpop.f32.mrb[0].mxu0
  %v5799 = vpop.f32.mrb[0].mxu0
  %v5800 = vadd.f32 %v5696, %v5799
  %v5801 = vpop.f32.mrb[0].mxu0
  %5802 = vmatprep.mubr.bf16.mxu0 %v5417
  %5803 = vmatmul.mubr.bf16.gmra.mrb[0].mxu0 %v5416
  %v5804 = vpop.f32.mrb[0].mxu0
  %v5805 = vadd.f32 %v5701, %v5804
  %v5806 = vpop.f32.mrb[0].mxu0
  %v5807 = vpop.f32.mrb[0].mxu0
  %v5808 = vadd.f32 %v5704, %v5807
  %v5809 = vpop.f32.mrb[0].mxu0
  %5810 = vmatprep.mubr.bf16.mxu0 %v5424
  %5811 = vmatmul.mubr.bf16.gmra.mrb[0].mxu0 %v5423
  %v5812 = vpop.f32.mrb[0].mxu0
  %v5813 = vadd.f32 %v5709, %v5812
  %v5814 = vpop.f32.mrb[0].mxu0
  %v5815 = vpop.f32.mrb[0].mxu0
  %v5816 = vadd.f32 %v5712, %v5815
  %v5817 = vpop.f32.mrb[0].mxu0
  %5818 = vmatprep.mubr.bf16.mxu0 %v5431
  %5819 = vmatmul.mubr.bf16.gmra.mrb[0].mxu0 %v5430
  %v5820 = vpop.f32.mrb[0].mxu0
  %v5821 = vadd.f32 %v5717, %v5820
  %v5822 = vpop.f32.mrb[0].mxu0
  %v5823 = vpop.f32.mrb[0].mxu0
  %v5824 = vadd.f32 %v5720, %v5823
  %v5825 = vpop.f32.mrb[0].mxu0
  %5826 = vmatprep.mubr.bf16.mxu0 %v5438
  %5827 = vmatmul.mubr.bf16.gmra.mrb[0].mxu0 %v5437
  %v5828 = vpop.f32.mrb[0].mxu0
  %v5829 = vadd.f32 %v5725, %v5828
  %v5830 = vpop.f32.mrb[0].mxu0
  %v5831 = vpop.f32.mrb[0].mxu0
  %v5832 = vadd.f32 %v5728, %v5831
  %v5833 = vpop.f32.mrb[0].mxu0
  %5834 = vmatprep.mubr.bf16.mxu0 %v5445
  %5835 = vmatmul.mubr.bf16.gmra.mrb[0].mxu0 %v5444
  %v5836 = vpop.f32.mrb[0].mxu0
  %v5837 = vadd.f32 %v5733, %v5836
  %v5838 = vpop.f32.mrb[0].mxu0
  %v5839 = vpop.f32.mrb[0].mxu0
  %v5840 = vadd.f32 %v5736, %v5839
  %v5841 = vpop.f32.mrb[0].mxu0
  %5842 = vmatprep.mubr.bf16.mxu0 %v5452
  %5843 = vmatmul.mubr.bf16.gmra.mrb[0].mxu0 %v5451
  %v5844 = vpop.f32.mrb[0].mxu0
  %v5845 = vadd.f32 %v5741, %v5844
  %v5846 = vpop.f32.mrb[0].mxu0
  %v5847 = vpop.f32.mrb[0].mxu0
  %v5848 = vadd.f32 %v5744, %v5847
  %v5849 = vpop.f32.mrb[0].mxu0
  %5850 = vmatprep.mubr.bf16.mxu0 %v5459
  %5851 = vmatmul.mubr.bf16.gmra.mrb[0].mxu0 %v5458
  %v5852 = vpop.f32.mrb[0].mxu0
  %v5853 = vadd.f32 %v5749, %v5852
  %v5854 = vpop.f32.mrb[0].mxu0
  %v5855 = vpop.f32.mrb[0].mxu0
  %v5856 = vpop.f32.mrb[0].mxu0
  %5857 = vdwg.mxu0
  %5858 = vmatprep.subr.bf16.mxu0 0
  %5859 = vmatpush1.bf16.msra.mxu0 %v5104
  %5860 = vmatprep.subr.bf16.mxu0 0
  %5861 = vmatpush1.bf16.msra.mxu0 %v5105
  %5862 = vmatprep.subr.bf16.mxu0 0
  %5863 = vmatpush1.bf16.msra.mxu0 %v5106
  %5864 = vmatprep.subr.bf16.mxu0 0
  %5865 = vmatpush1.bf16.msra.mxu0 %v5107
  %5866 = vmatprep.subr.bf16.mxu0 0
  %5867 = vmatpush1.bf16.msra.mxu0 %v5544
  %5868 = vmatprep.subr.bf16.mxu0 0
  %5869 = vmatpush1.bf16.msra.mxu0 0
  %5870 = vmatprep.subr.bf16.mxu0 0
  %5871 = vmatpush1.bf16.msra.mxu0 0
  %5872 = vmatprep.subr.bf16.mxu0 0
  %5873 = vmatpush1.bf16.msra.mxu0 0
  %5874 = vmatprep.subr.bf16.mxu0 0
  %5875 = vmatpush1.bf16.msra.mxu0 0
  %5876 = vmatprep.subr.bf16.mxu0 0
  %5877 = vmatpush1.bf16.msra.mxu0 0
  %5878 = vmatprep.subr.bf16.mxu0 0
  %5879 = vmatpush1.bf16.msra.mxu0 0
  %5880 = vmatprep.subr.bf16.mxu0 0
  %5881 = vmatpush1.bf16.msra.mxu0 0
  %5882 = vmatprep.subr.bf16.mxu0 0
  %5883 = vmatpush1.bf16.msra.mxu0 0
  %5884 = vmatprep.subr.bf16.mxu0 0
  %5885 = vmatpush1.bf16.msra.mxu0 0
  %5886 = vmatprep.subr.bf16.mxu0 0
  %5887 = vmatpush1.bf16.msra.mxu0 0
  %5888 = vmatprep.subr.bf16.mxu0 0
  %5889 = vmatpush1.bf16.msra.mxu0 0
  %5890 = vmatprep.mubr.bf16.mxu0 0
  %5891 = vmatmul.mubr.bf16.gmra.mrb[0].mxu0 %v5517
  %v5892 = vpop.f32.mrb[0].mxu0
  %v5893 = vadd.f32 %v5789, %v5892
  %v5894 = vpop.f32.mrb[0].mxu0
  %v5895 = vpop.f32.mrb[0].mxu0
  %v5896 = vadd.f32 %v5792, %v5895
  %v5897 = vpop.f32.mrb[0].mxu0
  %5898 = vmatprep.mubr.bf16.mxu0 0
  %5899 = vmatmul.mubr.bf16.gmra.mrb[0].mxu0 %v5520
  %v5900 = vpop.f32.mrb[0].mxu0
  %v5901 = vadd.f32 %v5797, %v5900
  %v5902 = vpop.f32.mrb[0].mxu0
  %v5903 = vpop.f32.mrb[0].mxu0
  %v5904 = vadd.f32 %v5800, %v5903
  %v5905 = vpop.f32.mrb[0].mxu0
  %5906 = vmatprep.mubr.bf16.mxu0 0
  %5907 = vmatmul.mubr.bf16.gmra.mrb[0].mxu0 %v5523
  %v5908 = vpop.f32.mrb[0].mxu0
  %v5909 = vadd.f32 %v5805, %v5908
  %v5910 = vpop.f32.mrb[0].mxu0
  %v5911 = vpop.f32.mrb[0].mxu0
  %v5912 = vadd.f32 %v5808, %v5911
  %v5913 = vpop.f32.mrb[0].mxu0
  %5914 = vmatprep.mubr.bf16.mxu0 0
  %5915 = vmatmul.mubr.bf16.gmra.mrb[0].mxu0 %v5526
  %v5916 = vpop.f32.mrb[0].mxu0
  %v5917 = vadd.f32 %v5813, %v5916
  %v5918 = vpop.f32.mrb[0].mxu0
  %v5919 = vpop.f32.mrb[0].mxu0
  %v5920 = vadd.f32 %v5816, %v5919
  %v5921 = vpop.f32.mrb[0].mxu0
  %5922 = vmatprep.mubr.bf16.mxu0 0
  %5923 = vmatmul.mubr.bf16.gmra.mrb[0].mxu0 %v5529
  %v5924 = vpop.f32.mrb[0].mxu0
  %v5925 = vadd.f32 %v5821, %v5924
  %v5926 = vpop.f32.mrb[0].mxu0
  %v5927 = vpop.f32.mrb[0].mxu0
  %v5928 = vadd.f32 %v5824, %v5927
  %v5929 = vpop.f32.mrb[0].mxu0
  %5930 = vmatprep.mubr.bf16.mxu0 0
  %5931 = vmatmul.mubr.bf16.gmra.mrb[0].mxu0 %v5532
  %v5932 = vpop.f32.mrb[0].mxu0
  %v5933 = vadd.f32 %v5829, %v5932
  %v5934 = vpop.f32.mrb[0].mxu0
  %v5935 = vpop.f32.mrb[0].mxu0
  %v5936 = vadd.f32 %v5832, %v5935
  %v5937 = vpop.f32.mrb[0].mxu0
  %5938 = vmatprep.mubr.bf16.mxu0 0
  %5939 = vmatmul.mubr.bf16.gmra.mrb[0].mxu0 %v5535
  %v5940 = vpop.f32.mrb[0].mxu0
  %v5941 = vadd.f32 %v5837, %v5940
  %v5942 = vpop.f32.mrb[0].mxu0
  %v5943 = vpop.f32.mrb[0].mxu0
  %v5944 = vadd.f32 %v5840, %v5943
  %v5945 = vpop.f32.mrb[0].mxu0
  %5946 = vmatprep.mubr.bf16.mxu0 0
  %5947 = vmatmul.mubr.bf16.gmra.mrb[0].mxu0 %v5538
  %v5948 = vpop.f32.mrb[0].mxu0
  %v5949 = vadd.f32 %v5845, %v5948
  %v5950 = vpop.f32.mrb[0].mxu0
  %v5951 = vpop.f32.mrb[0].mxu0
  %v5952 = vadd.f32 %v5848, %v5951
  %v5953 = vpop.f32.mrb[0].mxu0
  %5954 = vmatprep.mubr.bf16.mxu0 0
  %5955 = vmatmul.mubr.bf16.gmra.mrb[0].mxu0 %v5541
  %v5956 = vpop.f32.mrb[0].mxu0
  %v5957 = vadd.f32 %v5853, %v5956
  %v5958 = vpop.f32.mrb[0].mxu0
  %v5959 = vpop.f32.mrb[0].mxu0
  %v5960 = vpop.f32.mrb[0].mxu0
  %5961 = vdwg.mxu0
  %v5962 = vmax.f32 %v5893, 0.0
  %v5963 = vmax.f32 %v5896, 0.0
  %v5964 = vmax.f32 %v5901, 0.0
  %v5965 = vmax.f32 %v5904, 0.0
  %v5966 = vmax.f32 %v5909, 0.0
  %v5967 = vmax.f32 %v5912, 0.0
  %v5968 = vmax.f32 %v5917, 0.0
  %v5969 = vmax.f32 %v5920, 0.0
  %v5970 = vmax.f32 %v5925, 0.0
  %v5971 = vmax.f32 %v5928, 0.0
  %v5972 = vmax.f32 %v5933, 0.0
  %v5973 = vmax.f32 %v5936, 0.0
  %v5974 = vmax.f32 %v5941, 0.0
  %v5975 = vmax.f32 %v5944, 0.0
  %v5976 = vmax.f32 %v5949, 0.0
  %v5977 = vmax.f32 %v5952, 0.0
  %v5978 = vmax.f32 %v5957, 0.0
  %v5979 = vmul.f32 %v5962, %v5962
  %v5980 = vmul.f32 %v5963, %v5963
  %v5981 = vmul.f32 %v5964, %v5964
  %v5982 = vmul.f32 %v5965, %v5965
  %v5983 = vmul.f32 %v5966, %v5966
  %v5984 = vmul.f32 %v5967, %v5967
  %v5985 = vmul.f32 %v5968, %v5968
  %v5986 = vmul.f32 %v5969, %v5969
  %v5987 = vmul.f32 %v5970, %v5970
  %v5988 = vmul.f32 %v5971, %v5971
  %v5989 = vmul.f32 %v5972, %v5972
  %v5990 = vmul.f32 %v5973, %v5973
  %v5991 = vmul.f32 %v5974, %v5974
  %v5992 = vmul.f32 %v5975, %v5975
  %v5993 = vmul.f32 %v5976, %v5976
  %v5994 = vmul.f32 %v5977, %v5977
  %v5995 = vmul.f32 %v5978, %v5978
  %vm5996 = vcmask 506880
  %v5997 = vsel %vm5996, %v5962, 0.0
  %5998 = vadd.xlane.f32.xlu0 %v5997
  %v5999 = vpop.xlane.xlu0 %5998
  %v6000 = vsel %vm5996, %v5963, 0.0
  %6001 = vadd.xlane.f32.xlu0 %v6000
  %v6002 = vpop.xlane.xlu0 %6001
  %v6003 = vsel %vm5996, %v5964, 0.0
  %6004 = vadd.xlane.f32.xlu0 %v6003
  %v6005 = vpop.xlane.xlu0 %6004
  %v6006 = vsel %vm5996, %v5965, 0.0
  %6007 = vadd.xlane.f32.xlu0 %v6006
  %v6008 = vpop.xlane.xlu0 %6007
  %v6009 = vsel %vm5996, %v5966, 0.0
  %6010 = vadd.xlane.f32.xlu0 %v6009
  %v6011 = vpop.xlane.xlu0 %6010
  %v6012 = vsel %vm5996, %v5967, 0.0
  %6013 = vadd.xlane.f32.xlu0 %v6012
  %v6014 = vpop.xlane.xlu0 %6013
  %v6015 = vsel %vm5996, %v5968, 0.0
  %6016 = vadd.xlane.f32.xlu0 %v6015
  %v6017 = vpop.xlane.xlu0 %6016
  %v6018 = vsel %vm5996, %v5969, 0.0
  %6019 = vadd.xlane.f32.xlu0 %v6018
  %v6020 = vpop.xlane.xlu0 %6019
  %v6021 = vsel %vm5996, %v5970, 0.0
  %6022 = vadd.xlane.f32.xlu0 %v6021
  %v6023 = vpop.xlane.xlu0 %6022
  %v6024 = vsel %vm5996, %v5971, 0.0
  %6025 = vadd.xlane.f32.xlu0 %v6024
  %v6026 = vpop.xlane.xlu0 %6025
  %v6027 = vsel %vm5996, %v5972, 0.0
  %6028 = vadd.xlane.f32.xlu0 %v6027
  %v6029 = vpop.xlane.xlu0 %6028
  %v6030 = vsel %vm5996, %v5973, 0.0
  %6031 = vadd.xlane.f32.xlu0 %v6030
  %v6032 = vpop.xlane.xlu0 %6031
  %v6033 = vsel %vm5996, %v5974, 0.0
  %6034 = vadd.xlane.f32.xlu0 %v6033
  %v6035 = vpop.xlane.xlu0 %6034
  %v6036 = vsel %vm5996, %v5975, 0.0
  %6037 = vadd.xlane.f32.xlu0 %v6036
  %v6038 = vpop.xlane.xlu0 %6037
  %v6039 = vsel %vm5996, %v5976, 0.0
  %6040 = vadd.xlane.f32.xlu0 %v6039
  %v6041 = vpop.xlane.xlu0 %6040
  %v6042 = vsel %vm5996, %v5977, 0.0
  %6043 = vadd.xlane.f32.xlu0 %v6042
  %v6044 = vpop.xlane.xlu0 %6043
  %v6045 = vsel %vm5996, %v5978, 0.0
  %6046 = vadd.xlane.f32.xlu0 %v6045
  %v6047 = vpop.xlane.xlu0 %6046
  %v6048 = vsel %vm5996, %v5979, 0.0
  %6049 = vadd.xlane.f32.xlu0 %v6048
  %v6050 = vpop.xlane.xlu0 %6049
  %v6051 = vsel %vm5996, %v5980, 0.0
  %6052 = vadd.xlane.f32.xlu0 %v6051
  %v6053 = vpop.xlane.xlu0 %6052
  %v6054 = vsel %vm5996, %v5981, 0.0
  %6055 = vadd.xlane.f32.xlu0 %v6054
  %v6056 = vpop.xlane.xlu0 %6055
  %v6057 = vsel %vm5996, %v5982, 0.0
  %6058 = vadd.xlane.f32.xlu0 %v6057
  %v6059 = vpop.xlane.xlu0 %6058
  %v6060 = vsel %vm5996, %v5983, 0.0
  %6061 = vadd.xlane.f32.xlu0 %v6060
  %v6062 = vpop.xlane.xlu0 %6061
  %v6063 = vsel %vm5996, %v5984, 0.0
  %6064 = vadd.xlane.f32.xlu0 %v6063
  %v6065 = vpop.xlane.xlu0 %6064
  %v6066 = vsel %vm5996, %v5985, 0.0
  %6067 = vadd.xlane.f32.xlu0 %v6066
  %v6068 = vpop.xlane.xlu0 %6067
  %v6069 = vsel %vm5996, %v5986, 0.0
  %6070 = vadd.xlane.f32.xlu0 %v6069
  %v6071 = vpop.xlane.xlu0 %6070
  %v6072 = vsel %vm5996, %v5987, 0.0
  %6073 = vadd.xlane.f32.xlu0 %v6072
  %v6074 = vpop.xlane.xlu0 %6073
  %v6075 = vsel %vm5996, %v5988, 0.0
  %6076 = vadd.xlane.f32.xlu0 %v6075
  %v6077 = vpop.xlane.xlu0 %6076
  %v6078 = vsel %vm5996, %v5989, 0.0
  %6079 = vadd.xlane.f32.xlu0 %v6078
  %v6080 = vpop.xlane.xlu0 %6079
  %v6081 = vsel %vm5996, %v5990, 0.0
  %6082 = vadd.xlane.f32.xlu0 %v6081
  %v6083 = vpop.xlane.xlu0 %6082
  %v6084 = vsel %vm5996, %v5991, 0.0
  %6085 = vadd.xlane.f32.xlu0 %v6084
  %v6086 = vpop.xlane.xlu0 %6085
  %v6087 = vsel %vm5996, %v5992, 0.0
  %6088 = vadd.xlane.f32.xlu0 %v6087
  %v6089 = vpop.xlane.xlu0 %6088
  %v6090 = vsel %vm5996, %v5993, 0.0
  %6091 = vadd.xlane.f32.xlu0 %v6090
  %v6092 = vpop.xlane.xlu0 %6091
  %v6093 = vsel %vm5996, %v5994, 0.0
  %6094 = vadd.xlane.f32.xlu0 %v6093
  %v6095 = vpop.xlane.xlu0 %6094
  %v6096 = vsel %vm5996, %v5995, 0.0
  %6097 = vadd.xlane.f32.xlu0 %v6096
  %v6098 = vpop.xlane.xlu0 %6097
  %v6099 = vld [vmem:[%s23] sm:$0xff]
  %v6100 = vld [vmem:[%s23 + $0x8] sm:$0xff]
  %v6101 = vld [vmem:[%s23 + $0x10] sm:$0xff]
  %v6102 = vld [vmem:[%s23 + $0x18] sm:$0xff]
  %v6103 = vld [vmem:[%s23 + $0x20] sm:$0xff]
  %v6104 = vld [vmem:[%s23 + $0x28] sm:$0xff]
  %v6106 = vsel %vm3141, %v6101, 0
  %v6109 = vsel %vm3141, %v6104, 0
  %6111 = vmatprep.subr.mxu0 0.0
  %6112 = vmatpush1.msra.mxu0 %v5999
  %6113 = vmatprep.subr.mxu0 0.0
  %6114 = vmatpush1.msra.mxu0 %v6002
  %6115 = vmatprep.subr.mxu0 0.0
  %6116 = vmatpush1.msra.mxu0 %v6005
  %6117 = vmatprep.subr.mxu0 0.0
  %6118 = vmatpush1.msra.mxu0 %v6008
  %6119 = vmatprep.subr.mxu0 0.0
  %6120 = vmatpush1.msra.mxu0 %v6011
  %6121 = vmatprep.subr.mxu0 0.0
  %6122 = vmatpush1.msra.mxu0 %v6014
  %6123 = vmatprep.subr.mxu0 0.0
  %6124 = vmatpush1.msra.mxu0 %v6017
  %6125 = vmatprep.subr.mxu0 0.0
  %6126 = vmatpush1.msra.mxu0 %v6020
  %6127 = vmatprep.subr.mxu0 0.0
  %6128 = vmatpush1.msra.mxu0 %v6023
  %6129 = vmatprep.subr.mxu0 0.0
  %6130 = vmatpush1.msra.mxu0 %v6026
  %6131 = vmatprep.subr.mxu0 0.0
  %6132 = vmatpush1.msra.mxu0 %v6029
  %6133 = vmatprep.subr.mxu0 0.0
  %6134 = vmatpush1.msra.mxu0 %v6032
  %6135 = vmatprep.subr.mxu0 0.0
  %6136 = vmatpush1.msra.mxu0 %v6035
  %6137 = vmatprep.subr.mxu0 0.0
  %6138 = vmatpush1.msra.mxu0 %v6038
  %6139 = vmatprep.subr.mxu0 0.0
  %6140 = vmatpush1.msra.mxu0 %v6041
  %6141 = vmatprep.subr.mxu0 0.0
  %6142 = vmatpush1.msra.mxu0 %v6044
  %6143 = vmatprep.subr.mxu0 0.0
  %6144 = vmatpush1.msra.mxu0 %v6047
  %6145 = vmatprep.subr.mxu0 0.0
  %6146 = vmatpush1.msra.mxu0 %v6050
  %6147 = vmatprep.subr.mxu0 0.0
  %6148 = vmatpush1.msra.mxu0 %v6053
  %6149 = vmatprep.subr.mxu0 0.0
  %6150 = vmatpush1.msra.mxu0 %v6056
  %6151 = vmatprep.subr.mxu0 0.0
  %6152 = vmatpush1.msra.mxu0 %v6059
  %6153 = vmatprep.subr.mxu0 0.0
  %6154 = vmatpush1.msra.mxu0 %v6062
  %6155 = vmatprep.subr.mxu0 0.0
  %6156 = vmatpush1.msra.mxu0 %v6065
  %6157 = vmatprep.subr.mxu0 0.0
  %6158 = vmatpush1.msra.mxu0 %v6068
  %6159 = vmatprep.subr.mxu0 0.0
  %6160 = vmatpush1.msra.mxu0 %v6071
  %6161 = vmatprep.subr.mxu0 0.0
  %6162 = vmatpush1.msra.mxu0 %v6074
  %6163 = vmatprep.subr.mxu0 0.0
  %6164 = vmatpush1.msra.mxu0 %v6077
  %6165 = vmatprep.subr.mxu0 0.0
  %6166 = vmatpush1.msra.mxu0 %v6080
  %6167 = vmatprep.subr.mxu0 0.0
  %6168 = vmatpush1.msra.mxu0 %v6083
  %6169 = vmatprep.subr.mxu0 0.0
  %6170 = vmatpush1.msra.mxu0 %v6086
  %6171 = vmatprep.subr.mxu0 0.0
  %6172 = vmatpush1.msra.mxu0 %v6089
  %6173 = vmatprep.subr.mxu0 0.0
  %6174 = vmatpush1.msra.mxu0 %v6092
  %6175 = vmatprep.mubr.f32.mxu0 %v6100
  %6176 = vmatmul.mubr.f32.gmra.mrb[0].mxu0 %v6099
  %v6177 = vpop.f32.mrb[0].mxu0
  %v6178 = vadd.f32 0.0, %v6177
  %v6179 = vpop.f32.mrb[0].mxu0
  %6180 = vmatprep.mubr.f32.mxu0 %v6103
  %6181 = vmatmul.mubr.f32.gmra.mrb[0].mxu0 %v6102
  %v6182 = vpop.f32.mrb[0].mxu0
  %v6183 = vadd.f32 0.0, %v6182
  %v6184 = vpop.f32.mrb[0].mxu0
  %6185 = vdwg.mxu0
  %6186 = vmatprep.subr.mxu0 0.0
  %6187 = vmatpush1.msra.mxu0 %v6095
  %6188 = vmatprep.subr.mxu0 0.0
  %6189 = vmatpush1.msra.mxu0 %v6098
  %6190 = vmatprep.subr.mxu0 0.0
  %6191 = vmatpush1.msra.mxu0 0.0
  %6192 = vmatprep.subr.mxu0 0.0
  %6193 = vmatpush1.msra.mxu0 0.0
  %6194 = vmatprep.subr.mxu0 0.0
  %6195 = vmatpush1.msra.mxu0 0.0
  %6196 = vmatprep.subr.mxu0 0.0
  %6197 = vmatpush1.msra.mxu0 0.0
  %6198 = vmatprep.subr.mxu0 0.0
  %6199 = vmatpush1.msra.mxu0 0.0
  %6200 = vmatprep.subr.mxu0 0.0
  %6201 = vmatpush1.msra.mxu0 0.0
  %6202 = vmatprep.subr.mxu0 0.0
  %6203 = vmatpush1.msra.mxu0 0.0
  %6204 = vmatprep.subr.mxu0 0.0
  %6205 = vmatpush1.msra.mxu0 0.0
  %6206 = vmatprep.subr.mxu0 0.0
  %6207 = vmatpush1.msra.mxu0 0.0
  %6208 = vmatprep.subr.mxu0 0.0
  %6209 = vmatpush1.msra.mxu0 0.0
  %6210 = vmatprep.subr.mxu0 0.0
  %6211 = vmatpush1.msra.mxu0 0.0
  %6212 = vmatprep.subr.mxu0 0.0
  %6213 = vmatpush1.msra.mxu0 0.0
  %6214 = vmatprep.subr.mxu0 0.0
  %6215 = vmatpush1.msra.mxu0 0.0
  %6216 = vmatprep.subr.mxu0 0.0
  %6217 = vmatpush1.msra.mxu0 0.0
  %6218 = vmatprep.subr.mxu0 0.0
  %6219 = vmatpush1.msra.mxu0 0.0
  %6220 = vmatprep.subr.mxu0 0.0
  %6221 = vmatpush1.msra.mxu0 0.0
  %6222 = vmatprep.subr.mxu0 0.0
  %6223 = vmatpush1.msra.mxu0 0.0
  %6224 = vmatprep.subr.mxu0 0.0
  %6225 = vmatpush1.msra.mxu0 0.0
  %6226 = vmatprep.subr.mxu0 0.0
  %6227 = vmatpush1.msra.mxu0 0.0
  %6228 = vmatprep.subr.mxu0 0.0
  %6229 = vmatpush1.msra.mxu0 0.0
  %6230 = vmatprep.subr.mxu0 0.0
  %6231 = vmatpush1.msra.mxu0 0.0
  %6232 = vmatprep.subr.mxu0 0.0
  %6233 = vmatpush1.msra.mxu0 0.0
  %6234 = vmatprep.subr.mxu0 0.0
  %6235 = vmatpush1.msra.mxu0 0.0
  %6236 = vmatprep.subr.mxu0 0.0
  %6237 = vmatpush1.msra.mxu0 0.0
  %6238 = vmatprep.subr.mxu0 0.0
  %6239 = vmatpush1.msra.mxu0 0.0
  %6240 = vmatprep.subr.mxu0 0.0
  %6241 = vmatpush1.msra.mxu0 0.0
  %6242 = vmatprep.subr.mxu0 0.0
  %6243 = vmatpush1.msra.mxu0 0.0
  %6244 = vmatprep.subr.mxu0 0.0
  %6245 = vmatpush1.msra.mxu0 0.0
  %6246 = vmatprep.subr.mxu0 0.0
  %6247 = vmatpush1.msra.mxu0 0.0
  %6248 = vmatprep.subr.mxu0 0.0
  %6249 = vmatpush1.msra.mxu0 0.0
  %6250 = vmatprep.mubr.f32.mxu0 0.0
  %6251 = vmatmul.mubr.f32.gmra.mrb[0].mxu0 %v6106
  %v6252 = vpop.f32.mrb[0].mxu0
  %v6253 = vadd.f32 %v6178, %v6252
  %v6254 = vpop.f32.mrb[0].mxu0
  %6255 = vmatprep.mubr.f32.mxu0 0.0
  %6256 = vmatmul.mubr.f32.gmra.mrb[0].mxu0 %v6109
  %v6257 = vpop.f32.mrb[0].mxu0
  %v6258 = vadd.f32 %v6183, %v6257
  %v6259 = vpop.f32.mrb[0].mxu0
  %6260 = vdwg.mxu0
  %v6261 = vmul.f32 %v6253, 0.0009487666
  %v6262 = vmul.f32 %v6258, 0.0009487666
  %v6263 = vmul.f32 %v6261, %v6261
  %v6264 = vsub.f32 %v6262, %v6263
  %v6265 = vmax.f32 %v6264, 0.0
  %v6266 = vld [vmem:[%s27] sm:$0xff]
  %v6267 = vadd.f32 %v6265, 1e-05
  %v6268 = vrsqrt.pop %v6267
  %v6269 = vmul.f32 %v6266, %v6268
  %v6270 = vld [vmem:[%s29] sm:$0xff]
  %v6271 = vmul.f32 %v6261, %v6269
  %v6272 = vsub.f32 %v6270, %v6271
  %v6273 = vld [vmem:[%s25] sm:$0xff]
  %v6274 = vld [vmem:[%s25 + $0x8] sm:$0xff]
  %v6275 = vld [vmem:[%s25 + $0x10] sm:$0xff]
  %v6276 = vld [vmem:[%s25 + $0x18] sm:$0xff]
  %v6277 = vld [vmem:[%s25 + $0x20] sm:$0xff]
  %v6278 = vld [vmem:[%s25 + $0x28] sm:$0xff]
  %v6279 = vld [vmem:[%s25 + $0x30] sm:$0xff]
  %v6280 = vld [vmem:[%s25 + $0x38] sm:$0xff]
  %v6281 = vld [vmem:[%s25 + $0x40] sm:$0xff]
  %v6282 = vld [vmem:[%s25 + $0x48] sm:$0xff]
  %v6283 = vld [vmem:[%s25 + $0x50] sm:$0xff]
  %v6284 = vld [vmem:[%s25 + $0x58] sm:$0xff]
  %v6285 = vld [vmem:[%s25 + $0x60] sm:$0xff]
  %v6286 = vld [vmem:[%s25 + $0x68] sm:$0xff]
  %v6287 = vld [vmem:[%s25 + $0x70] sm:$0xff]
  %v6288 = vld [vmem:[%s25 + $0x78] sm:$0xff]
  %v6289 = vld [vmem:[%s25 + $0x80] sm:$0xff]
  %v6290 = vld [vmem:[%s25 + $0x88] sm:$0xff]
  %v6291 = vld [vmem:[%s25 + $0x90] sm:$0xff]
  %v6292 = vld [vmem:[%s25 + $0x98] sm:$0xff]
  %v6293 = vld [vmem:[%s25 + $0xa0] sm:$0xff]
  %v6294 = vld [vmem:[%s25 + $0xa8] sm:$0xff]
  %v6295 = vld [vmem:[%s25 + $0xb0] sm:$0xff]
  %v6296 = vld [vmem:[%s25 + $0xb8] sm:$0xff]
  %v6297 = vld [vmem:[%s25 + $0xc0] sm:$0xff]
  %v6298 = vld [vmem:[%s25 + $0xc8] sm:$0xff]
  %v6299 = vld [vmem:[%s25 + $0xd0] sm:$0xff]
  %v6300 = vld [vmem:[%s25 + $0xd8] sm:$0xff]
  %v6301 = vld [vmem:[%s25 + $0xe0] sm:$0xff]
  %v6302 = vld [vmem:[%s25 + $0xe8] sm:$0xff]
  %v6303 = vld [vmem:[%s25 + $0xf0] sm:$0xff]
  %v6304 = vld [vmem:[%s25 + $0xf8] sm:$0xff]
  %v6305 = vld [vmem:[%s25 + $0x100] sm:$0xff]
  %v6306 = vld [vmem:[%s25 + $0x108] sm:$0xff]
  %v6308 = vsel %vm3141, %v6273, 0
  %v6311 = vsel %vm3141, %v6274, 0
  %v6314 = vsel %vm3141, %v6275, 0
  %v6317 = vsel %vm3141, %v6276, 0
  %v6320 = vsel %vm3141, %v6277, 0
  %v6323 = vsel %vm3141, %v6278, 0
  %v6326 = vsel %vm3141, %v6279, 0
  %v6329 = vsel %vm3141, %v6280, 0
  %v6332 = vsel %vm3141, %v6281, 0
  %v6335 = vsel %vm3141, %v6282, 0
  %v6338 = vsel %vm3141, %v6283, 0
  %v6341 = vsel %vm3141, %v6284, 0
  %v6344 = vsel %vm3141, %v6285, 0
  %v6347 = vsel %vm3141, %v6286, 0
  %v6350 = vsel %vm3141, %v6287, 0
  %v6353 = vsel %vm3141, %v6288, 0
  %v6356 = vsel %vm3141, %v6289, 0
  %v6359 = vsel %vm3141, %v6290, 0
  %v6362 = vsel %vm3141, %v6291, 0
  %v6365 = vsel %vm3141, %v6292, 0
  %v6368 = vsel %vm3141, %v6293, 0
  %v6371 = vsel %vm3141, %v6294, 0
  %v6374 = vsel %vm3141, %v6295, 0
  %v6377 = vsel %vm3141, %v6296, 0
  %v6380 = vsel %vm3141, %v6297, 0
  %v6383 = vsel %vm3141, %v6298, 0
  %v6386 = vsel %vm3141, %v6299, 0
  %v6389 = vsel %vm3141, %v6300, 0
  %v6392 = vsel %vm3141, %v6301, 0
  %v6395 = vsel %vm3141, %v6302, 0
  %v6398 = vsel %vm3141, %v6303, 0
  %v6401 = vsel %vm3141, %v6304, 0
  %v6404 = vsel %vm3141, %v6305, 0
  %v6407 = vsel %vm3141, %v6306, 0
  %6409 = vmatprep.subr.mxu0 0.0
  %6410 = vmatpush1.msra.mxu0 %v6269
  %6411 = vmatprep.subr.mxu0 0.0
  %6412 = vmatpush1.msra.mxu0 %v6272
  %6413 = vmatprep.subr.mxu0 0.0
  %6414 = vmatpush1.msra.mxu0 0.0
  %6415 = vmatprep.subr.mxu0 0.0
  %6416 = vmatpush1.msra.mxu0 0.0
  %6417 = vmatprep.subr.mxu0 0.0
  %6418 = vmatpush1.msra.mxu0 0.0
  %6419 = vmatprep.subr.mxu0 0.0
  %6420 = vmatpush1.msra.mxu0 0.0
  %6421 = vmatprep.subr.mxu0 0.0
  %6422 = vmatpush1.msra.mxu0 0.0
  %6423 = vmatprep.subr.mxu0 0.0
  %6424 = vmatpush1.msra.mxu0 0.0
  %6425 = vmatprep.subr.mxu0 0.0
  %6426 = vmatpush1.msra.mxu0 0.0
  %6427 = vmatprep.subr.mxu0 0.0
  %6428 = vmatpush1.msra.mxu0 0.0
  %6429 = vmatprep.subr.mxu0 0.0
  %6430 = vmatpush1.msra.mxu0 0.0
  %6431 = vmatprep.subr.mxu0 0.0
  %6432 = vmatpush1.msra.mxu0 0.0
  %6433 = vmatprep.subr.mxu0 0.0
  %6434 = vmatpush1.msra.mxu0 0.0
  %6435 = vmatprep.subr.mxu0 0.0
  %6436 = vmatpush1.msra.mxu0 0.0
  %6437 = vmatprep.subr.mxu0 0.0
  %6438 = vmatpush1.msra.mxu0 0.0
  %6439 = vmatprep.subr.mxu0 0.0
  %6440 = vmatpush1.msra.mxu0 0.0
  %6441 = vmatprep.subr.mxu0 0.0
  %6442 = vmatpush1.msra.mxu0 0.0
  %6443 = vmatprep.subr.mxu0 0.0
  %6444 = vmatpush1.msra.mxu0 0.0
  %6445 = vmatprep.subr.mxu0 0.0
  %6446 = vmatpush1.msra.mxu0 0.0
  %6447 = vmatprep.subr.mxu0 0.0
  %6448 = vmatpush1.msra.mxu0 0.0
  %6449 = vmatprep.subr.mxu0 0.0
  %6450 = vmatpush1.msra.mxu0 0.0
  %6451 = vmatprep.subr.mxu0 0.0
  %6452 = vmatpush1.msra.mxu0 0.0
  %6453 = vmatprep.subr.mxu0 0.0
  %6454 = vmatpush1.msra.mxu0 0.0
  %6455 = vmatprep.subr.mxu0 0.0
  %6456 = vmatpush1.msra.mxu0 0.0
  %6457 = vmatprep.subr.mxu0 0.0
  %6458 = vmatpush1.msra.mxu0 0.0
  %6459 = vmatprep.subr.mxu0 0.0
  %6460 = vmatpush1.msra.mxu0 0.0
  %6461 = vmatprep.subr.mxu0 0.0
  %6462 = vmatpush1.msra.mxu0 0.0
  %6463 = vmatprep.subr.mxu0 0.0
  %6464 = vmatpush1.msra.mxu0 0.0
  %6465 = vmatprep.subr.mxu0 0.0
  %6466 = vmatpush1.msra.mxu0 0.0
  %6467 = vmatprep.subr.mxu0 0.0
  %6468 = vmatpush1.msra.mxu0 0.0
  %6469 = vmatprep.subr.mxu0 0.0
  %6470 = vmatpush1.msra.mxu0 0.0
  %6471 = vmatprep.subr.mxu0 0.0
  %6472 = vmatpush1.msra.mxu0 0.0
  %6473 = vmatprep.mubr.f32.mxu0 0.0
  %6474 = vmatmul.mubr.f32.gmra.mrb[0].mxu0 %v6308
  %v6475 = vpop.f32.mrb[0].mxu0
  %v6476 = vadd.f32 0.0, %v6475
  %v6477 = vpop.f32.mrb[0].mxu0
  %6478 = vmatprep.mubr.f32.mxu0 0.0
  %6479 = vmatmul.mubr.f32.gmra.mrb[0].mxu0 %v6311
  %v6480 = vpop.f32.mrb[0].mxu0
  %v6481 = vadd.f32 0.0, %v6480
  %v6482 = vpop.f32.mrb[0].mxu0
  %6483 = vmatprep.mubr.f32.mxu0 0.0
  %6484 = vmatmul.mubr.f32.gmra.mrb[0].mxu0 %v6314
  %v6485 = vpop.f32.mrb[0].mxu0
  %v6486 = vadd.f32 0.0, %v6485
  %v6487 = vpop.f32.mrb[0].mxu0
  %6488 = vmatprep.mubr.f32.mxu0 0.0
  %6489 = vmatmul.mubr.f32.gmra.mrb[0].mxu0 %v6317
  %v6490 = vpop.f32.mrb[0].mxu0
  %v6491 = vadd.f32 0.0, %v6490
  %v6492 = vpop.f32.mrb[0].mxu0
  %6493 = vmatprep.mubr.f32.mxu0 0.0
  %6494 = vmatmul.mubr.f32.gmra.mrb[0].mxu0 %v6320
  %v6495 = vpop.f32.mrb[0].mxu0
  %v6496 = vadd.f32 0.0, %v6495
  %v6497 = vpop.f32.mrb[0].mxu0
  %6498 = vmatprep.mubr.f32.mxu0 0.0
  %6499 = vmatmul.mubr.f32.gmra.mrb[0].mxu0 %v6323
  %v6500 = vpop.f32.mrb[0].mxu0
  %v6501 = vadd.f32 0.0, %v6500
  %v6502 = vpop.f32.mrb[0].mxu0
  %6503 = vmatprep.mubr.f32.mxu0 0.0
  %6504 = vmatmul.mubr.f32.gmra.mrb[0].mxu0 %v6326
  %v6505 = vpop.f32.mrb[0].mxu0
  %v6506 = vadd.f32 0.0, %v6505
  %v6507 = vpop.f32.mrb[0].mxu0
  %6508 = vmatprep.mubr.f32.mxu0 0.0
  %6509 = vmatmul.mubr.f32.gmra.mrb[0].mxu0 %v6329
  %v6510 = vpop.f32.mrb[0].mxu0
  %v6511 = vadd.f32 0.0, %v6510
  %v6512 = vpop.f32.mrb[0].mxu0
  %6513 = vmatprep.mubr.f32.mxu0 0.0
  %6514 = vmatmul.mubr.f32.gmra.mrb[0].mxu0 %v6332
  %v6515 = vpop.f32.mrb[0].mxu0
  %v6516 = vadd.f32 0.0, %v6515
  %v6517 = vpop.f32.mrb[0].mxu0
  %6518 = vmatprep.mubr.f32.mxu0 0.0
  %6519 = vmatmul.mubr.f32.gmra.mrb[0].mxu0 %v6335
  %v6520 = vpop.f32.mrb[0].mxu0
  %v6521 = vadd.f32 0.0, %v6520
  %v6522 = vpop.f32.mrb[0].mxu0
  %6523 = vmatprep.mubr.f32.mxu0 0.0
  %6524 = vmatmul.mubr.f32.gmra.mrb[0].mxu0 %v6338
  %v6525 = vpop.f32.mrb[0].mxu0
  %v6526 = vadd.f32 0.0, %v6525
  %v6527 = vpop.f32.mrb[0].mxu0
  %6528 = vmatprep.mubr.f32.mxu0 0.0
  %6529 = vmatmul.mubr.f32.gmra.mrb[0].mxu0 %v6341
  %v6530 = vpop.f32.mrb[0].mxu0
  %v6531 = vadd.f32 0.0, %v6530
  %v6532 = vpop.f32.mrb[0].mxu0
  %6533 = vmatprep.mubr.f32.mxu0 0.0
  %6534 = vmatmul.mubr.f32.gmra.mrb[0].mxu0 %v6344
  %v6535 = vpop.f32.mrb[0].mxu0
  %v6536 = vadd.f32 0.0, %v6535
  %v6537 = vpop.f32.mrb[0].mxu0
  %6538 = vmatprep.mubr.f32.mxu0 0.0
  %6539 = vmatmul.mubr.f32.gmra.mrb[0].mxu0 %v6347
  %v6540 = vpop.f32.mrb[0].mxu0
  %v6541 = vadd.f32 0.0, %v6540
  %v6542 = vpop.f32.mrb[0].mxu0
  %6543 = vmatprep.mubr.f32.mxu0 0.0
  %6544 = vmatmul.mubr.f32.gmra.mrb[0].mxu0 %v6350
  %v6545 = vpop.f32.mrb[0].mxu0
  %v6546 = vadd.f32 0.0, %v6545
  %v6547 = vpop.f32.mrb[0].mxu0
  %6548 = vmatprep.mubr.f32.mxu0 0.0
  %6549 = vmatmul.mubr.f32.gmra.mrb[0].mxu0 %v6353
  %v6550 = vpop.f32.mrb[0].mxu0
  %v6551 = vadd.f32 0.0, %v6550
  %v6552 = vpop.f32.mrb[0].mxu0
  %6553 = vmatprep.mubr.f32.mxu0 0.0
  %6554 = vmatmul.mubr.f32.gmra.mrb[0].mxu0 %v6356
  %v6555 = vpop.f32.mrb[0].mxu0
  %v6556 = vadd.f32 0.0, %v6555
  %v6557 = vpop.f32.mrb[0].mxu0
  %6558 = vmatprep.mubr.f32.mxu0 0.0
  %6559 = vmatmul.mubr.f32.gmra.mrb[0].mxu0 %v6359
  %v6560 = vpop.f32.mrb[0].mxu0
  %v6561 = vadd.f32 0.0, %v6560
  %v6562 = vpop.f32.mrb[0].mxu0
  %6563 = vmatprep.mubr.f32.mxu0 0.0
  %6564 = vmatmul.mubr.f32.gmra.mrb[0].mxu0 %v6362
  %v6565 = vpop.f32.mrb[0].mxu0
  %v6566 = vadd.f32 0.0, %v6565
  %v6567 = vpop.f32.mrb[0].mxu0
  %6568 = vmatprep.mubr.f32.mxu0 0.0
  %6569 = vmatmul.mubr.f32.gmra.mrb[0].mxu0 %v6365
  %v6570 = vpop.f32.mrb[0].mxu0
  %v6571 = vadd.f32 0.0, %v6570
  %v6572 = vpop.f32.mrb[0].mxu0
  %6573 = vmatprep.mubr.f32.mxu0 0.0
  %6574 = vmatmul.mubr.f32.gmra.mrb[0].mxu0 %v6368
  %v6575 = vpop.f32.mrb[0].mxu0
  %v6576 = vadd.f32 0.0, %v6575
  %v6577 = vpop.f32.mrb[0].mxu0
  %6578 = vmatprep.mubr.f32.mxu0 0.0
  %6579 = vmatmul.mubr.f32.gmra.mrb[0].mxu0 %v6371
  %v6580 = vpop.f32.mrb[0].mxu0
  %v6581 = vadd.f32 0.0, %v6580
  %v6582 = vpop.f32.mrb[0].mxu0
  %6583 = vmatprep.mubr.f32.mxu0 0.0
  %6584 = vmatmul.mubr.f32.gmra.mrb[0].mxu0 %v6374
  %v6585 = vpop.f32.mrb[0].mxu0
  %v6586 = vadd.f32 0.0, %v6585
  %v6587 = vpop.f32.mrb[0].mxu0
  %6588 = vmatprep.mubr.f32.mxu0 0.0
  %6589 = vmatmul.mubr.f32.gmra.mrb[0].mxu0 %v6377
  %v6590 = vpop.f32.mrb[0].mxu0
  %v6591 = vadd.f32 0.0, %v6590
  %v6592 = vpop.f32.mrb[0].mxu0
  %6593 = vmatprep.mubr.f32.mxu0 0.0
  %6594 = vmatmul.mubr.f32.gmra.mrb[0].mxu0 %v6380
  %v6595 = vpop.f32.mrb[0].mxu0
  %v6596 = vadd.f32 0.0, %v6595
  %v6597 = vpop.f32.mrb[0].mxu0
  %6598 = vmatprep.mubr.f32.mxu0 0.0
  %6599 = vmatmul.mubr.f32.gmra.mrb[0].mxu0 %v6383
  %v6600 = vpop.f32.mrb[0].mxu0
  %v6601 = vadd.f32 0.0, %v6600
  %v6602 = vpop.f32.mrb[0].mxu0
  %6603 = vmatprep.mubr.f32.mxu0 0.0
  %6604 = vmatmul.mubr.f32.gmra.mrb[0].mxu0 %v6386
  %v6605 = vpop.f32.mrb[0].mxu0
  %v6606 = vadd.f32 0.0, %v6605
  %v6607 = vpop.f32.mrb[0].mxu0
  %6608 = vmatprep.mubr.f32.mxu0 0.0
  %6609 = vmatmul.mubr.f32.gmra.mrb[0].mxu0 %v6389
  %v6610 = vpop.f32.mrb[0].mxu0
  %v6611 = vadd.f32 0.0, %v6610
  %v6612 = vpop.f32.mrb[0].mxu0
  %6613 = vmatprep.mubr.f32.mxu0 0.0
  %6614 = vmatmul.mubr.f32.gmra.mrb[0].mxu0 %v6392
  %v6615 = vpop.f32.mrb[0].mxu0
  %v6616 = vadd.f32 0.0, %v6615
  %v6617 = vpop.f32.mrb[0].mxu0
  %6618 = vmatprep.mubr.f32.mxu0 0.0
  %6619 = vmatmul.mubr.f32.gmra.mrb[0].mxu0 %v6395
  %v6620 = vpop.f32.mrb[0].mxu0
  %v6621 = vadd.f32 0.0, %v6620
  %v6622 = vpop.f32.mrb[0].mxu0
  %6623 = vmatprep.mubr.f32.mxu0 0.0
  %6624 = vmatmul.mubr.f32.gmra.mrb[0].mxu0 %v6398
  %v6625 = vpop.f32.mrb[0].mxu0
  %v6626 = vadd.f32 0.0, %v6625
  %v6627 = vpop.f32.mrb[0].mxu0
  %6628 = vmatprep.mubr.f32.mxu0 0.0
  %6629 = vmatmul.mubr.f32.gmra.mrb[0].mxu0 %v6401
  %v6630 = vpop.f32.mrb[0].mxu0
  %v6631 = vadd.f32 0.0, %v6630
  %v6632 = vpop.f32.mrb[0].mxu0
  %6633 = vmatprep.mubr.f32.mxu0 0.0
  %6634 = vmatmul.mubr.f32.gmra.mrb[0].mxu0 %v6404
  %v6635 = vpop.f32.mrb[0].mxu0
  %v6636 = vadd.f32 0.0, %v6635
  %v6637 = vpop.f32.mrb[0].mxu0
  %6638 = vmatprep.mubr.f32.mxu0 0.0
  %6639 = vmatmul.mubr.f32.gmra.mrb[0].mxu0 %v6407
  %v6640 = vpop.f32.mrb[0].mxu0
  %v6641 = vadd.f32 0.0, %v6640
  %v6642 = vpop.f32.mrb[0].mxu0
  %6643 = vdwg.mxu0
  %6645 = vset.pattern.permute.xlu0 0
  %6646 = vperm.xlu0 %6645, %v6476
  %v6647 = vpop.permute.xlu0 %6646
  %6650 = vset.pattern.permute.xlu0 0
  %6651 = vperm.xlu0 %6650, %v6481
  %v6652 = vpop.permute.xlu0 %6651
  %6655 = vset.pattern.permute.xlu0 0
  %6656 = vperm.xlu0 %6655, %v6486
  %v6657 = vpop.permute.xlu0 %6656
  %6660 = vset.pattern.permute.xlu0 0
  %6661 = vperm.xlu0 %6660, %v6491
  %v6662 = vpop.permute.xlu0 %6661
  %6665 = vset.pattern.permute.xlu0 0
  %6666 = vperm.xlu0 %6665, %v6496
  %v6667 = vpop.permute.xlu0 %6666
  %6670 = vset.pattern.permute.xlu0 0
  %6671 = vperm.xlu0 %6670, %v6501
  %v6672 = vpop.permute.xlu0 %6671
  %6675 = vset.pattern.permute.xlu0 0
  %6676 = vperm.xlu0 %6675, %v6506
  %v6677 = vpop.permute.xlu0 %6676
  %6680 = vset.pattern.permute.xlu0 0
  %6681 = vperm.xlu0 %6680, %v6511
  %v6682 = vpop.permute.xlu0 %6681
  %6685 = vset.pattern.permute.xlu0 0
  %6686 = vperm.xlu0 %6685, %v6516
  %v6687 = vpop.permute.xlu0 %6686
  %6690 = vset.pattern.permute.xlu0 0
  %6691 = vperm.xlu0 %6690, %v6521
  %v6692 = vpop.permute.xlu0 %6691
  %6695 = vset.pattern.permute.xlu0 0
  %6696 = vperm.xlu0 %6695, %v6526
  %v6697 = vpop.permute.xlu0 %6696
  %6700 = vset.pattern.permute.xlu0 0
  %6701 = vperm.xlu0 %6700, %v6531
  %v6702 = vpop.permute.xlu0 %6701
  %6705 = vset.pattern.permute.xlu0 0
  %6706 = vperm.xlu0 %6705, %v6536
  %v6707 = vpop.permute.xlu0 %6706
  %6710 = vset.pattern.permute.xlu0 0
  %6711 = vperm.xlu0 %6710, %v6541
  %v6712 = vpop.permute.xlu0 %6711
  %6715 = vset.pattern.permute.xlu0 0
  %6716 = vperm.xlu0 %6715, %v6546
  %v6717 = vpop.permute.xlu0 %6716
  %6720 = vset.pattern.permute.xlu0 0
  %6721 = vperm.xlu0 %6720, %v6551
  %v6722 = vpop.permute.xlu0 %6721
  %6725 = vset.pattern.permute.xlu0 0
  %6726 = vperm.xlu0 %6725, %v6556
  %v6727 = vpop.permute.xlu0 %6726
  %v6729 = vmul.f32 %v5962, %v6647
  %v6730 = vmul.f32 %v5963, %v6652
  %v6731 = vmul.f32 %v5964, %v6657
  %v6732 = vmul.f32 %v5965, %v6662
  %v6733 = vmul.f32 %v5966, %v6667
  %v6734 = vmul.f32 %v5967, %v6672
  %v6735 = vmul.f32 %v5968, %v6677
  %v6736 = vmul.f32 %v5969, %v6682
  %v6737 = vmul.f32 %v5970, %v6687
  %v6738 = vmul.f32 %v5971, %v6692
  %v6739 = vmul.f32 %v5972, %v6697
  %v6740 = vmul.f32 %v5973, %v6702
  %v6741 = vmul.f32 %v5974, %v6707
  %v6742 = vmul.f32 %v5975, %v6712
  %v6743 = vmul.f32 %v5976, %v6717
  %v6744 = vmul.f32 %v5977, %v6722
  %v6745 = vmul.f32 %v5978, %v6727
  %6747 = vset.pattern.permute.xlu0 0
  %6748 = vperm.xlu0 %6747, %v6561
  %v6749 = vpop.permute.xlu0 %6748
  %6752 = vset.pattern.permute.xlu0 0
  %6753 = vperm.xlu0 %6752, %v6566
  %v6754 = vpop.permute.xlu0 %6753
  %6757 = vset.pattern.permute.xlu0 0
  %6758 = vperm.xlu0 %6757, %v6571
  %v6759 = vpop.permute.xlu0 %6758
  %6762 = vset.pattern.permute.xlu0 0
  %6763 = vperm.xlu0 %6762, %v6576
  %v6764 = vpop.permute.xlu0 %6763
  %6767 = vset.pattern.permute.xlu0 0
  %6768 = vperm.xlu0 %6767, %v6581
  %v6769 = vpop.permute.xlu0 %6768
  %6772 = vset.pattern.permute.xlu0 0
  %6773 = vperm.xlu0 %6772, %v6586
  %v6774 = vpop.permute.xlu0 %6773
  %6777 = vset.pattern.permute.xlu0 0
  %6778 = vperm.xlu0 %6777, %v6591
  %v6779 = vpop.permute.xlu0 %6778
  %6782 = vset.pattern.permute.xlu0 0
  %6783 = vperm.xlu0 %6782, %v6596
  %v6784 = vpop.permute.xlu0 %6783
  %6787 = vset.pattern.permute.xlu0 0
  %6788 = vperm.xlu0 %6787, %v6601
  %v6789 = vpop.permute.xlu0 %6788
  %6792 = vset.pattern.permute.xlu0 0
  %6793 = vperm.xlu0 %6792, %v6606
  %v6794 = vpop.permute.xlu0 %6793
  %6797 = vset.pattern.permute.xlu0 0
  %6798 = vperm.xlu0 %6797, %v6611
  %v6799 = vpop.permute.xlu0 %6798
  %6802 = vset.pattern.permute.xlu0 0
  %6803 = vperm.xlu0 %6802, %v6616
  %v6804 = vpop.permute.xlu0 %6803
  %6807 = vset.pattern.permute.xlu0 0
  %6808 = vperm.xlu0 %6807, %v6621
  %v6809 = vpop.permute.xlu0 %6808
  %6812 = vset.pattern.permute.xlu0 0
  %6813 = vperm.xlu0 %6812, %v6626
  %v6814 = vpop.permute.xlu0 %6813
  %6817 = vset.pattern.permute.xlu0 0
  %6818 = vperm.xlu0 %6817, %v6631
  %v6819 = vpop.permute.xlu0 %6818
  %6822 = vset.pattern.permute.xlu0 0
  %6823 = vperm.xlu0 %6822, %v6636
  %v6824 = vpop.permute.xlu0 %6823
  %6827 = vset.pattern.permute.xlu0 0
  %6828 = vperm.xlu0 %6827, %v6641
  %v6829 = vpop.permute.xlu0 %6828
  %v6831 = vadd.f32 %v6729, %v6749
  %v6832 = vadd.f32 %v6730, %v6754
  %v6833 = vadd.f32 %v6731, %v6759
  %v6834 = vadd.f32 %v6732, %v6764
  %v6835 = vadd.f32 %v6733, %v6769
  %v6836 = vadd.f32 %v6734, %v6774
  %v6837 = vadd.f32 %v6735, %v6779
  %v6838 = vadd.f32 %v6736, %v6784
  %v6839 = vadd.f32 %v6737, %v6789
  %v6840 = vadd.f32 %v6738, %v6794
  %v6841 = vadd.f32 %v6739, %v6799
  %v6842 = vadd.f32 %v6740, %v6804
  %v6843 = vadd.f32 %v6741, %v6809
  %v6844 = vadd.f32 %v6742, %v6814
  %v6845 = vadd.f32 %v6743, %v6819
  %v6846 = vadd.f32 %v6744, %v6824
  %v6847 = vadd.f32 %v6745, %v6829
  %v6848 = vpack.c.bf16 %v6832, %v6831
  %v6849 = vpack.c.bf16 %v6834, %v6833
  %v6850 = vpack.c.bf16 %v6836, %v6835
  %v6851 = vpack.c.bf16 %v6838, %v6837
  %v6852 = vpack.c.bf16 %v6840, %v6839
  %v6853 = vpack.c.bf16 %v6842, %v6841
  %v6854 = vpack.c.bf16 %v6844, %v6843
  %v6855 = vpack.c.bf16 %v6846, %v6845
  %v6856 = vpack.c.bf16 %v6847, %v6847
  %v6857 = vld [vmem:[%s31] sm:$0xf]
  %v6858 = vld [vmem:[%s31 + $0x4] sm:$0xf]
  %v6859 = vld [vmem:[%s31 + $0x8] sm:$0xf]
  %v6860 = vld [vmem:[%s31 + $0xc] sm:$0xf]
  %v6861 = vld [vmem:[%s31 + $0x10] sm:$0xf]
  %v6862 = vld [vmem:[%s31 + $0x14] sm:$0xf]
  %v6863 = vld [vmem:[%s31 + $0x18] sm:$0xf]
  %v6864 = vld [vmem:[%s31 + $0x1c] sm:$0x7]
  %v6873 = vunpack.c.l.b16 %v6857
  %v6874 = vunpack.c.l.b16 %v6858
  %v6875 = vunpack.c.l.b16 %v6859
  %v6876 = vunpack.c.l.b16 %v6860
  %v6877 = vunpack.c.l.b16 %v6861
  %v6878 = vunpack.c.l.b16 %v6862
  %v6879 = vunpack.c.l.b16 %v6863
  %v6880 = vunpack.c.l.b16 %v6864
  %v6881 = vpack.c.b16 %v6874, %v6873
  %v6882 = vpack.c.b16 %v6876, %v6875
  %v6883 = vpack.c.b16 %v6878, %v6877
  %v6884 = vpack.c.b16 %v6880, %v6879
  %v6889 = vsel %vm5996, %v6848, 0
  %v6892 = vsel %vm5996, %v6849, 0
  %v6895 = vsel %vm5996, %v6850, 0
  %v6898 = vsel %vm5996, %v6851, 0
  %v6901 = vsel %vm5996, %v6852, 0
  %v6904 = vsel %vm5996, %v6853, 0
  %v6907 = vsel %vm5996, %v6854, 0
  %v6910 = vsel %vm5996, %v6855, 0
  %v6913 = vsel %vm5996, %v6856, 0
  %v6916 = vsel %vm4322, %v6884, 0
  %6918 = vmatprep.subr.bf16.mxu0 0
  %6919 = vmatpush1.bf16.msra.mxu0 %v6881
  %6920 = vmatprep.subr.bf16.mxu0 0
  %6921 = vmatpush1.bf16.msra.mxu0 %v6882
  %6922 = vmatprep.subr.bf16.mxu0 0
  %6923 = vmatpush1.bf16.msra.mxu0 %v6883
  %6924 = vmatprep.subr.bf16.mxu0 0
  %6925 = vmatpush1.bf16.msra.mxu0 %v6916
  %6926 = vmatprep.subr.bf16.mxu0 0
  %6927 = vmatpush1.bf16.msra.mxu0 0
  %6928 = vmatprep.subr.bf16.mxu0 0
  %6929 = vmatpush1.bf16.msra.mxu0 0
  %6930 = vmatprep.subr.bf16.mxu0 0
  %6931 = vmatpush1.bf16.msra.mxu0 0
  %6932 = vmatprep.subr.bf16.mxu0 0
  %6933 = vmatpush1.bf16.msra.mxu0 0
  %6934 = vmatprep.subr.bf16.mxu0 0
  %6935 = vmatpush1.bf16.msra.mxu0 0
  %6936 = vmatprep.subr.bf16.mxu0 0
  %6937 = vmatpush1.bf16.msra.mxu0 0
  %6938 = vmatprep.subr.bf16.mxu0 0
  %6939 = vmatpush1.bf16.msra.mxu0 0
  %6940 = vmatprep.subr.bf16.mxu0 0
  %6941 = vmatpush1.bf16.msra.mxu0 0
  %6942 = vmatprep.subr.bf16.mxu0 0
  %6943 = vmatpush1.bf16.msra.mxu0 0
  %6944 = vmatprep.subr.bf16.mxu0 0
  %6945 = vmatpush1.bf16.msra.mxu0 0
  %6946 = vmatprep.subr.bf16.mxu0 0
  %6947 = vmatpush1.bf16.msra.mxu0 0
  %6948 = vmatprep.subr.bf16.mxu0 0
  %6949 = vmatpush1.bf16.msra.mxu0 0
  %6950 = vmatprep.mubr.bf16.mxu0 0
  %6951 = vmatmul.mubr.bf16.gmra.mrb[0].mxu0 %v6889
  %v6952 = vpop.f32.mrb[0].mxu0
  %v6953 = vadd.f32 0.0, %v6952
  %v6954 = vpop.f32.mrb[0].mxu0
  %v6955 = vpop.f32.mrb[0].mxu0
  %v6956 = vadd.f32 0.0, %v6955
  %v6957 = vpop.f32.mrb[0].mxu0
  %6958 = vmatprep.mubr.bf16.mxu0 0
  %6959 = vmatmul.mubr.bf16.gmra.mrb[0].mxu0 %v6892
  %v6960 = vpop.f32.mrb[0].mxu0
  %v6961 = vadd.f32 0.0, %v6960
  %v6962 = vpop.f32.mrb[0].mxu0
  %v6963 = vpop.f32.mrb[0].mxu0
  %v6964 = vadd.f32 0.0, %v6963
  %v6965 = vpop.f32.mrb[0].mxu0
  %6966 = vmatprep.mubr.bf16.mxu0 0
  %6967 = vmatmul.mubr.bf16.gmra.mrb[0].mxu0 %v6895
  %v6968 = vpop.f32.mrb[0].mxu0
  %v6969 = vadd.f32 0.0, %v6968
  %v6970 = vpop.f32.mrb[0].mxu0
  %v6971 = vpop.f32.mrb[0].mxu0
  %v6972 = vadd.f32 0.0, %v6971
  %v6973 = vpop.f32.mrb[0].mxu0
  %6974 = vmatprep.mubr.bf16.mxu0 0
  %6975 = vmatmul.mubr.bf16.gmra.mrb[0].mxu0 %v6898
  %v6976 = vpop.f32.mrb[0].mxu0
  %v6977 = vadd.f32 0.0, %v6976
  %v6978 = vpop.f32.mrb[0].mxu0
  %v6979 = vpop.f32.mrb[0].mxu0
  %v6980 = vadd.f32 0.0, %v6979
  %v6981 = vpop.f32.mrb[0].mxu0
  %6982 = vmatprep.mubr.bf16.mxu0 0
  %6983 = vmatmul.mubr.bf16.gmra.mrb[0].mxu0 %v6901
  %v6984 = vpop.f32.mrb[0].mxu0
  %v6985 = vadd.f32 0.0, %v6984
  %v6986 = vpop.f32.mrb[0].mxu0
  %v6987 = vpop.f32.mrb[0].mxu0
  %v6988 = vadd.f32 0.0, %v6987
  %v6989 = vpop.f32.mrb[0].mxu0
  %6990 = vmatprep.mubr.bf16.mxu0 0
  %6991 = vmatmul.mubr.bf16.gmra.mrb[0].mxu0 %v6904
  %v6992 = vpop.f32.mrb[0].mxu0
  %v6993 = vadd.f32 0.0, %v6992
  %v6994 = vpop.f32.mrb[0].mxu0
  %v6995 = vpop.f32.mrb[0].mxu0
  %v6996 = vadd.f32 0.0, %v6995
  %v6997 = vpop.f32.mrb[0].mxu0
  %6998 = vmatprep.mubr.bf16.mxu0 0
  %6999 = vmatmul.mubr.bf16.gmra.mrb[0].mxu0 %v6907
  %v7000 = vpop.f32.mrb[0].mxu0
  %v7001 = vadd.f32 0.0, %v7000
  %v7002 = vpop.f32.mrb[0].mxu0
  %v7003 = vpop.f32.mrb[0].mxu0
  %v7004 = vadd.f32 0.0, %v7003
  %v7005 = vpop.f32.mrb[0].mxu0
  %7006 = vmatprep.mubr.bf16.mxu0 0
  %7007 = vmatmul.mubr.bf16.gmra.mrb[0].mxu0 %v6910
  %v7008 = vpop.f32.mrb[0].mxu0
  %v7009 = vadd.f32 0.0, %v7008
  %v7010 = vpop.f32.mrb[0].mxu0
  %v7011 = vpop.f32.mrb[0].mxu0
  %v7012 = vadd.f32 0.0, %v7011
  %v7013 = vpop.f32.mrb[0].mxu0
  %7014 = vmatprep.mubr.bf16.mxu0 0
  %7015 = vmatmul.mubr.bf16.gmra.mrb[0].mxu0 %v6913
  %v7016 = vpop.f32.mrb[0].mxu0
  %v7017 = vadd.f32 0.0, %v7016
  %v7018 = vpop.f32.mrb[0].mxu0
  %v7019 = vpop.f32.mrb[0].mxu0
  %v7020 = vpop.f32.mrb[0].mxu0
  %7021 = vdwg.mxu0
  %s7022 = scalar_lea.vmem %s31, 32
  %v7023 = vld [vmem:[%s7022] sm:$0xf]
  %v7024 = vld [vmem:[%s7022 + $0x4] sm:$0xf]
  %v7025 = vld [vmem:[%s7022 + $0x8] sm:$0xf]
  %v7026 = vld [vmem:[%s7022 + $0xc] sm:$0xf]
  %v7027 = vld [vmem:[%s7022 + $0x10] sm:$0xf]
  %v7028 = vld [vmem:[%s7022 + $0x14] sm:$0xf]
  %v7029 = vld [vmem:[%s7022 + $0x18] sm:$0xf]
  %v7030 = vld [vmem:[%s7022 + $0x1c] sm:$0x7]
  %v7039 = vunpack.c.l.b16 %v7023
  %v7040 = vunpack.c.l.b16 %v7024
  %v7041 = vunpack.c.l.b16 %v7025
  %v7042 = vunpack.c.l.b16 %v7026
  %v7043 = vunpack.c.l.b16 %v7027
  %v7044 = vunpack.c.l.b16 %v7028
  %v7045 = vunpack.c.l.b16 %v7029
  %v7046 = vunpack.c.l.b16 %v7030
  %v7047 = vpack.c.b16 %v7040, %v7039
  %v7048 = vpack.c.b16 %v7042, %v7041
  %v7049 = vpack.c.b16 %v7044, %v7043
  %v7050 = vpack.c.b16 %v7046, %v7045
  %v7055 = vsel %vm4322, %v7050, 0
  %7057 = vmatprep.subr.bf16.mxu0 0
  %7058 = vmatpush1.bf16.msra.mxu0 %v7047
  %7059 = vmatprep.subr.bf16.mxu0 0
  %7060 = vmatpush1.bf16.msra.mxu0 %v7048
  %7061 = vmatprep.subr.bf16.mxu0 0
  %7062 = vmatpush1.bf16.msra.mxu0 %v7049
  %7063 = vmatprep.subr.bf16.mxu0 0
  %7064 = vmatpush1.bf16.msra.mxu0 %v7055
  %7065 = vmatprep.subr.bf16.mxu0 0
  %7066 = vmatpush1.bf16.msra.mxu0 0
  %7067 = vmatprep.subr.bf16.mxu0 0
  %7068 = vmatpush1.bf16.msra.mxu0 0
  %7069 = vmatprep.subr.bf16.mxu0 0
  %7070 = vmatpush1.bf16.msra.mxu0 0
  %7071 = vmatprep.subr.bf16.mxu0 0
  %7072 = vmatpush1.bf16.msra.mxu0 0
  %7073 = vmatprep.subr.bf16.mxu0 0
  %7074 = vmatpush1.bf16.msra.mxu0 0
  %7075 = vmatprep.subr.bf16.mxu0 0
  %7076 = vmatpush1.bf16.msra.mxu0 0
  %7077 = vmatprep.subr.bf16.mxu0 0
  %7078 = vmatpush1.bf16.msra.mxu0 0
  %7079 = vmatprep.subr.bf16.mxu0 0
  %7080 = vmatpush1.bf16.msra.mxu0 0
  %7081 = vmatprep.subr.bf16.mxu0 0
  %7082 = vmatpush1.bf16.msra.mxu0 0
  %7083 = vmatprep.subr.bf16.mxu0 0
  %7084 = vmatpush1.bf16.msra.mxu0 0
  %7085 = vmatprep.subr.bf16.mxu0 0
  %7086 = vmatpush1.bf16.msra.mxu0 0
  %7087 = vmatprep.subr.bf16.mxu0 0
  %7088 = vmatpush1.bf16.msra.mxu0 0
  %7089 = vmatprep.mubr.bf16.mxu0 0
  %7090 = vmatmul.mubr.bf16.gmra.mrb[0].mxu0 %v6889
  %v7091 = vpop.f32.mrb[0].mxu0
  %v7092 = vadd.f32 0.0, %v7091
  %v7093 = vpop.f32.mrb[0].mxu0
  %v7094 = vpop.f32.mrb[0].mxu0
  %v7095 = vadd.f32 0.0, %v7094
  %v7096 = vpop.f32.mrb[0].mxu0
  %7097 = vmatprep.mubr.bf16.mxu0 0
  %7098 = vmatmul.mubr.bf16.gmra.mrb[0].mxu0 %v6892
  %v7099 = vpop.f32.mrb[0].mxu0
  %v7100 = vadd.f32 0.0, %v7099
  %v7101 = vpop.f32.mrb[0].mxu0
  %v7102 = vpop.f32.mrb[0].mxu0
  %v7103 = vadd.f32 0.0, %v7102
  %v7104 = vpop.f32.mrb[0].mxu0
  %7105 = vmatprep.mubr.bf16.mxu0 0
  %7106 = vmatmul.mubr.bf16.gmra.mrb[0].mxu0 %v6895
  %v7107 = vpop.f32.mrb[0].mxu0
  %v7108 = vadd.f32 0.0, %v7107
  %v7109 = vpop.f32.mrb[0].mxu0
  %v7110 = vpop.f32.mrb[0].mxu0
  %v7111 = vadd.f32 0.0, %v7110
  %v7112 = vpop.f32.mrb[0].mxu0
  %7113 = vmatprep.mubr.bf16.mxu0 0
  %7114 = vmatmul.mubr.bf16.gmra.mrb[0].mxu0 %v6898
  %v7115 = vpop.f32.mrb[0].mxu0
  %v7116 = vadd.f32 0.0, %v7115
  %v7117 = vpop.f32.mrb[0].mxu0
  %v7118 = vpop.f32.mrb[0].mxu0
  %v7119 = vadd.f32 0.0, %v7118
  %v7120 = vpop.f32.mrb[0].mxu0
  %7121 = vmatprep.mubr.bf16.mxu0 0
  %7122 = vmatmul.mubr.bf16.gmra.mrb[0].mxu0 %v6901
  %v7123 = vpop.f32.mrb[0].mxu0
  %v7124 = vadd.f32 0.0, %v7123
  %v7125 = vpop.f32.mrb[0].mxu0
  %v7126 = vpop.f32.mrb[0].mxu0
  %v7127 = vadd.f32 0.0, %v7126
  %v7128 = vpop.f32.mrb[0].mxu0
  %7129 = vmatprep.mubr.bf16.mxu0 0
  %7130 = vmatmul.mubr.bf16.gmra.mrb[0].mxu0 %v6904
  %v7131 = vpop.f32.mrb[0].mxu0
  %v7132 = vadd.f32 0.0, %v7131
  %v7133 = vpop.f32.mrb[0].mxu0
  %v7134 = vpop.f32.mrb[0].mxu0
  %v7135 = vadd.f32 0.0, %v7134
  %v7136 = vpop.f32.mrb[0].mxu0
  %7137 = vmatprep.mubr.bf16.mxu0 0
  %7138 = vmatmul.mubr.bf16.gmra.mrb[0].mxu0 %v6907
  %v7139 = vpop.f32.mrb[0].mxu0
  %v7140 = vadd.f32 0.0, %v7139
  %v7141 = vpop.f32.mrb[0].mxu0
  %v7142 = vpop.f32.mrb[0].mxu0
  %v7143 = vadd.f32 0.0, %v7142
  %v7144 = vpop.f32.mrb[0].mxu0
  %7145 = vmatprep.mubr.bf16.mxu0 0
  %7146 = vmatmul.mubr.bf16.gmra.mrb[0].mxu0 %v6910
  %v7147 = vpop.f32.mrb[0].mxu0
  %v7148 = vadd.f32 0.0, %v7147
  %v7149 = vpop.f32.mrb[0].mxu0
  %v7150 = vpop.f32.mrb[0].mxu0
  %v7151 = vadd.f32 0.0, %v7150
  %v7152 = vpop.f32.mrb[0].mxu0
  %7153 = vmatprep.mubr.bf16.mxu0 0
  %7154 = vmatmul.mubr.bf16.gmra.mrb[0].mxu0 %v6913
  %v7155 = vpop.f32.mrb[0].mxu0
  %v7156 = vadd.f32 0.0, %v7155
  %v7157 = vpop.f32.mrb[0].mxu0
  %v7158 = vpop.f32.mrb[0].mxu0
  %v7159 = vpop.f32.mrb[0].mxu0
  %7160 = vdwg.mxu0
  %s7161 = scalar_lea.vmem %s31, 64
  %v7162 = vld [vmem:[%s7161] sm:$0xf]
  %v7163 = vld [vmem:[%s7161 + $0x4] sm:$0xf]
  %v7164 = vld [vmem:[%s7161 + $0x8] sm:$0xf]
  %v7165 = vld [vmem:[%s7161 + $0xc] sm:$0xf]
  %v7166 = vld [vmem:[%s7161 + $0x10] sm:$0xf]
  %v7167 = vld [vmem:[%s7161 + $0x14] sm:$0xf]
  %v7168 = vld [vmem:[%s7161 + $0x18] sm:$0xf]
  %v7169 = vld [vmem:[%s7161 + $0x1c] sm:$0x7]
  %v7178 = vunpack.c.l.b16 %v7162
  %v7179 = vunpack.c.l.b16 %v7163
  %v7180 = vunpack.c.l.b16 %v7164
  %v7181 = vunpack.c.l.b16 %v7165
  %v7182 = vunpack.c.l.b16 %v7166
  %v7183 = vunpack.c.l.b16 %v7167
  %v7184 = vunpack.c.l.b16 %v7168
  %v7185 = vunpack.c.l.b16 %v7169
  %v7186 = vpack.c.b16 %v7179, %v7178
  %v7187 = vpack.c.b16 %v7181, %v7180
  %v7188 = vpack.c.b16 %v7183, %v7182
  %v7189 = vpack.c.b16 %v7185, %v7184
  %v7194 = vsel %vm4322, %v7189, 0
  %7196 = vmatprep.subr.bf16.mxu0 0
  %7197 = vmatpush1.bf16.msra.mxu0 %v7186
  %7198 = vmatprep.subr.bf16.mxu0 0
  %7199 = vmatpush1.bf16.msra.mxu0 %v7187
  %7200 = vmatprep.subr.bf16.mxu0 0
  %7201 = vmatpush1.bf16.msra.mxu0 %v7188
  %7202 = vmatprep.subr.bf16.mxu0 0
  %7203 = vmatpush1.bf16.msra.mxu0 %v7194
  %7204 = vmatprep.subr.bf16.mxu0 0
  %7205 = vmatpush1.bf16.msra.mxu0 0
  %7206 = vmatprep.subr.bf16.mxu0 0
  %7207 = vmatpush1.bf16.msra.mxu0 0
  %7208 = vmatprep.subr.bf16.mxu0 0
  %7209 = vmatpush1.bf16.msra.mxu0 0
  %7210 = vmatprep.subr.bf16.mxu0 0
  %7211 = vmatpush1.bf16.msra.mxu0 0
  %7212 = vmatprep.subr.bf16.mxu0 0
  %7213 = vmatpush1.bf16.msra.mxu0 0
  %7214 = vmatprep.subr.bf16.mxu0 0
  %7215 = vmatpush1.bf16.msra.mxu0 0
  %7216 = vmatprep.subr.bf16.mxu0 0
  %7217 = vmatpush1.bf16.msra.mxu0 0
  %7218 = vmatprep.subr.bf16.mxu0 0
  %7219 = vmatpush1.bf16.msra.mxu0 0
  %7220 = vmatprep.subr.bf16.mxu0 0
  %7221 = vmatpush1.bf16.msra.mxu0 0
  %7222 = vmatprep.subr.bf16.mxu0 0
  %7223 = vmatpush1.bf16.msra.mxu0 0
  %7224 = vmatprep.subr.bf16.mxu0 0
  %7225 = vmatpush1.bf16.msra.mxu0 0
  %7226 = vmatprep.subr.bf16.mxu0 0
  %7227 = vmatpush1.bf16.msra.mxu0 0
  %7228 = vmatprep.mubr.bf16.mxu0 0
  %7229 = vmatmul.mubr.bf16.gmra.mrb[0].mxu0 %v6889
  %v7230 = vpop.f32.mrb[0].mxu0
  %v7231 = vadd.f32 0.0, %v7230
  %v7232 = vpop.f32.mrb[0].mxu0
  %v7233 = vpop.f32.mrb[0].mxu0
  %v7234 = vadd.f32 0.0, %v7233
  %v7235 = vpop.f32.mrb[0].mxu0
  %7236 = vmatprep.mubr.bf16.mxu0 0
  %7237 = vmatmul.mubr.bf16.gmra.mrb[0].mxu0 %v6892
  %v7238 = vpop.f32.mrb[0].mxu0
  %v7239 = vadd.f32 0.0, %v7238
  %v7240 = vpop.f32.mrb[0].mxu0
  %v7241 = vpop.f32.mrb[0].mxu0
  %v7242 = vadd.f32 0.0, %v7241
  %v7243 = vpop.f32.mrb[0].mxu0
  %7244 = vmatprep.mubr.bf16.mxu0 0
  %7245 = vmatmul.mubr.bf16.gmra.mrb[0].mxu0 %v6895
  %v7246 = vpop.f32.mrb[0].mxu0
  %v7247 = vadd.f32 0.0, %v7246
  %v7248 = vpop.f32.mrb[0].mxu0
  %v7249 = vpop.f32.mrb[0].mxu0
  %v7250 = vadd.f32 0.0, %v7249
  %v7251 = vpop.f32.mrb[0].mxu0
  %7252 = vmatprep.mubr.bf16.mxu0 0
  %7253 = vmatmul.mubr.bf16.gmra.mrb[0].mxu0 %v6898
  %v7254 = vpop.f32.mrb[0].mxu0
  %v7255 = vadd.f32 0.0, %v7254
  %v7256 = vpop.f32.mrb[0].mxu0
  %v7257 = vpop.f32.mrb[0].mxu0
  %v7258 = vadd.f32 0.0, %v7257
  %v7259 = vpop.f32.mrb[0].mxu0
  %7260 = vmatprep.mubr.bf16.mxu0 0
  %7261 = vmatmul.mubr.bf16.gmra.mrb[0].mxu0 %v6901
  %v7262 = vpop.f32.mrb[0].mxu0
  %v7263 = vadd.f32 0.0, %v7262
  %v7264 = vpop.f32.mrb[0].mxu0
  %v7265 = vpop.f32.mrb[0].mxu0
  %v7266 = vadd.f32 0.0, %v7265
  %v7267 = vpop.f32.mrb[0].mxu0
  %7268 = vmatprep.mubr.bf16.mxu0 0
  %7269 = vmatmul.mubr.bf16.gmra.mrb[0].mxu0 %v6904
  %v7270 = vpop.f32.mrb[0].mxu0
  %v7271 = vadd.f32 0.0, %v7270
  %v7272 = vpop.f32.mrb[0].mxu0
  %v7273 = vpop.f32.mrb[0].mxu0
  %v7274 = vadd.f32 0.0, %v7273
  %v7275 = vpop.f32.mrb[0].mxu0
  %7276 = vmatprep.mubr.bf16.mxu0 0
  %7277 = vmatmul.mubr.bf16.gmra.mrb[0].mxu0 %v6907
  %v7278 = vpop.f32.mrb[0].mxu0
  %v7279 = vadd.f32 0.0, %v7278
  %v7280 = vpop.f32.mrb[0].mxu0
  %v7281 = vpop.f32.mrb[0].mxu0
  %v7282 = vadd.f32 0.0, %v7281
  %v7283 = vpop.f32.mrb[0].mxu0
  %7284 = vmatprep.mubr.bf16.mxu0 0
  %7285 = vmatmul.mubr.bf16.gmra.mrb[0].mxu0 %v6910
  %v7286 = vpop.f32.mrb[0].mxu0
  %v7287 = vadd.f32 0.0, %v7286
  %v7288 = vpop.f32.mrb[0].mxu0
  %v7289 = vpop.f32.mrb[0].mxu0
  %v7290 = vadd.f32 0.0, %v7289
  %v7291 = vpop.f32.mrb[0].mxu0
  %7292 = vmatprep.mubr.bf16.mxu0 0
  %7293 = vmatmul.mubr.bf16.gmra.mrb[0].mxu0 %v6913
  %v7294 = vpop.f32.mrb[0].mxu0
  %v7295 = vadd.f32 0.0, %v7294
  %v7296 = vpop.f32.mrb[0].mxu0
  %v7297 = vpop.f32.mrb[0].mxu0
  %v7298 = vpop.f32.mrb[0].mxu0
  %7299 = vdwg.mxu0
  %v7300 = vld [vmem:[%s33] sm:$0xff]
  %v7301 = vld [vmem:[%s33 + $0x8] sm:$0xff]
  %v7302 = vld [vmem:[%s33 + $0x10] sm:$0xff]
  %v7303 = vld [vmem:[%s33 + $0x18] sm:$0xff]
  %v7304 = vld [vmem:[%s33 + $0x20] sm:$0xff]
  %v7305 = vld [vmem:[%s33 + $0x28] sm:$0xff]
  %v7306 = vld [vmem:[%s33 + $0x30] sm:$0xff]
  %v7307 = vld [vmem:[%s33 + $0x38] sm:$0xff]
  %v7308 = vld [vmem:[%s33 + $0x40] sm:$0xff]
  %v7309 = vld [vmem:[%s33 + $0x48] sm:$0xff]
  %v7310 = vld [vmem:[%s33 + $0x50] sm:$0xff]
  %v7311 = vld [vmem:[%s33 + $0x58] sm:$0xff]
  %v7312 = vld [vmem:[%s33 + $0x60] sm:$0xff]
  %v7313 = vld [vmem:[%s33 + $0x68] sm:$0xff]
  %v7314 = vld [vmem:[%s33 + $0x70] sm:$0xff]
  %v7315 = vld [vmem:[%s33 + $0x78] sm:$0xff]
  %v7316 = vld [vmem:[%s33 + $0x80] sm:$0xff]
  %v7317 = vld [vmem:[%s33 + $0x88] sm:$0xff]
  %v7318 = vld [vmem:[%s33 + $0x90] sm:$0xff]
  %v7319 = vld [vmem:[%s33 + $0x98] sm:$0xff]
  %v7320 = vld [vmem:[%s33 + $0xa0] sm:$0xff]
  %v7321 = vld [vmem:[%s33 + $0xa8] sm:$0xff]
  %v7322 = vld [vmem:[%s33 + $0xb0] sm:$0xff]
  %v7323 = vld [vmem:[%s33 + $0xb8] sm:$0xff]
  %v7324 = vld [vmem:[%s33 + $0xc0] sm:$0xff]
  %v7325 = vld [vmem:[%s33 + $0xc8] sm:$0xff]
  %v7326 = vpack.c.bf16 %v6956, %v6953
  %v7327 = vpack.c.bf16 %v6964, %v6961
  %v7328 = vpack.c.bf16 %v6972, %v6969
  %v7329 = vpack.c.bf16 %v6980, %v6977
  %v7330 = vpack.c.bf16 %v6988, %v6985
  %v7331 = vpack.c.bf16 %v6996, %v6993
  %v7332 = vpack.c.bf16 %v7004, %v7001
  %v7333 = vpack.c.bf16 %v7012, %v7009
  %v7334 = vpack.c.bf16 %v7092, %v7017
  %v7335 = vpack.c.bf16 %v7100, %v7095
  %v7336 = vpack.c.bf16 %v7108, %v7103
  %v7337 = vpack.c.bf16 %v7116, %v7111
  %v7338 = vpack.c.bf16 %v7124, %v7119
  %v7339 = vpack.c.bf16 %v7132, %v7127
  %v7340 = vpack.c.bf16 %v7140, %v7135
  %v7341 = vpack.c.bf16 %v7148, %v7143
  %v7342 = vpack.c.bf16 %v7156, %v7151
  %v7343 = vpack.c.bf16 %v7234, %v7231
  %v7344 = vpack.c.bf16 %v7242, %v7239
  %v7345 = vpack.c.bf16 %v7250, %v7247
  %v7346 = vpack.c.bf16 %v7258, %v7255
  %v7347 = vpack.c.bf16 %v7266, %v7263
  %v7348 = vpack.c.bf16 %v7274, %v7271
  %v7349 = vpack.c.bf16 %v7282, %v7279
  %v7350 = vpack.c.bf16 %v7290, %v7287
  %v7351 = vpack.c.bf16 %v7295, %v7295
  %v7352 = vld [vmem:[%s35] sm:$0xff]
  %v7353 = vld [vmem:[%s35 + $0x8] sm:$0xff]
  %v7354 = vld [vmem:[%s35 + $0x10] sm:$0xff]
  %v7355 = vld [vmem:[%s35 + $0x18] sm:$0xff]
  %v7356 = vld [vmem:[%s35 + $0x20] sm:$0xff]
  %v7357 = vld [vmem:[%s35 + $0x28] sm:$0xff]
  %v7358 = vld [vmem:[%s35 + $0x30] sm:$0xff]
  %v7359 = vld [vmem:[%s35 + $0x38] sm:$0xff]
  %v7360 = vld [vmem:[%s35 + $0x40] sm:$0xff]
  %v7361 = vld [vmem:[%s35 + $0x48] sm:$0xff]
  %v7362 = vld [vmem:[%s35 + $0x50] sm:$0xff]
  %v7363 = vld [vmem:[%s35 + $0x58] sm:$0xff]
  %v7364 = vld [vmem:[%s35 + $0x60] sm:$0xff]
  %7366 = vset.pattern.permute.xlu0 0
  %7367 = vperm.xlu0 %7366, %v7352
  %v7368 = vpop.permute.xlu0 %7367
  %7371 = vset.pattern.permute.xlu0 0
  %7372 = vperm.xlu0 %7371, %v7353
  %v7373 = vpop.permute.xlu0 %7372
  %7376 = vset.pattern.permute.xlu0 0
  %7377 = vperm.xlu0 %7376, %v7354
  %v7378 = vpop.permute.xlu0 %7377
  %7381 = vset.pattern.permute.xlu0 0
  %7382 = vperm.xlu0 %7381, %v7355
  %v7383 = vpop.permute.xlu0 %7382
  %7386 = vset.pattern.permute.xlu0 0
  %7387 = vperm.xlu0 %7386, %v7356
  %v7388 = vpop.permute.xlu0 %7387
  %7391 = vset.pattern.permute.xlu0 0
  %7392 = vperm.xlu0 %7391, %v7357
  %v7393 = vpop.permute.xlu0 %7392
  %7396 = vset.pattern.permute.xlu0 0
  %7397 = vperm.xlu0 %7396, %v7358
  %v7398 = vpop.permute.xlu0 %7397
  %7401 = vset.pattern.permute.xlu0 0
  %7402 = vperm.xlu0 %7401, %v7359
  %v7403 = vpop.permute.xlu0 %7402
  %7406 = vset.pattern.permute.xlu0 0
  %7407 = vperm.xlu0 %7406, %v7360
  %v7408 = vpop.permute.xlu0 %7407
  %7411 = vset.pattern.permute.xlu0 0
  %7412 = vperm.xlu0 %7411, %v7361
  %v7413 = vpop.permute.xlu0 %7412
  %7416 = vset.pattern.permute.xlu0 0
  %7417 = vperm.xlu0 %7416, %v7362
  %v7418 = vpop.permute.xlu0 %7417
  %7421 = vset.pattern.permute.xlu0 0
  %7422 = vperm.xlu0 %7421, %v7363
  %v7423 = vpop.permute.xlu0 %7422
  %7426 = vset.pattern.permute.xlu0 0
  %7427 = vperm.xlu0 %7426, %v7364
  %v7428 = vpop.permute.xlu0 %7427
  %v7456 = vunpack.c.l.b16 %v7300
  %v7457 = vunpack.c.h.b16 %v7300
  %v7458 = vunpack.c.l.b16 %v7301
  %v7459 = vunpack.c.h.b16 %v7301
  %v7460 = vunpack.c.l.b16 %v7302
  %v7461 = vunpack.c.h.b16 %v7302
  %v7462 = vunpack.c.l.b16 %v7303
  %v7463 = vunpack.c.h.b16 %v7303
  %v7464 = vunpack.c.l.b16 %v7304
  %v7465 = vunpack.c.h.b16 %v7304
  %v7466 = vunpack.c.l.b16 %v7305
  %v7467 = vunpack.c.h.b16 %v7305
  %v7468 = vunpack.c.l.b16 %v7306
  %v7469 = vunpack.c.h.b16 %v7306
  %v7470 = vunpack.c.l.b16 %v7307
  %v7471 = vunpack.c.h.b16 %v7307
  %v7472 = vunpack.c.l.b16 %v7308
  %v7473 = vunpack.c.h.b16 %v7308
  %v7474 = vunpack.c.l.b16 %v7309
  %v7475 = vunpack.c.h.b16 %v7309
  %v7476 = vunpack.c.l.b16 %v7310
  %v7477 = vunpack.c.h.b16 %v7310
  %v7478 = vunpack.c.l.b16 %v7311
  %v7479 = vunpack.c.h.b16 %v7311
  %v7480 = vunpack.c.l.b16 %v7312
  %v7481 = vunpack.c.h.b16 %v7312
  %v7482 = vunpack.c.l.b16 %v7313
  %v7483 = vunpack.c.h.b16 %v7313
  %v7484 = vunpack.c.l.b16 %v7314
  %v7485 = vunpack.c.h.b16 %v7314
  %v7486 = vunpack.c.l.b16 %v7315
  %v7487 = vunpack.c.h.b16 %v7315
  %v7488 = vunpack.c.l.b16 %v7316
  %v7489 = vunpack.c.h.b16 %v7316
  %v7490 = vunpack.c.l.b16 %v7317
  %v7491 = vunpack.c.h.b16 %v7317
  %v7492 = vunpack.c.l.b16 %v7318
  %v7493 = vunpack.c.h.b16 %v7318
  %v7494 = vunpack.c.l.b16 %v7319
  %v7495 = vunpack.c.h.b16 %v7319
  %v7496 = vunpack.c.l.b16 %v7320
  %v7497 = vunpack.c.h.b16 %v7320
  %v7498 = vunpack.c.l.b16 %v7321
  %v7499 = vunpack.c.h.b16 %v7321
  %v7500 = vunpack.c.l.b16 %v7322
  %v7501 = vunpack.c.h.b16 %v7322
  %v7502 = vunpack.c.l.b16 %v7323
  %v7503 = vunpack.c.h.b16 %v7323
  %v7504 = vunpack.c.l.b16 %v7324
  %v7505 = vunpack.c.h.b16 %v7324
  %v7506 = vunpack.c.l.b16 %v7325
  %v7507 = vunpack.c.h.b16 %v7325
  %v7508 = vpack.c.b16 %v7460, %v7456
  %v7509 = vpack.c.b16 %v7461, %v7457
  %v7510 = vpack.c.b16 %v7462, %v7458
  %v7511 = vpack.c.b16 %v7463, %v7459
  %v7512 = vpack.c.b16 %v7468, %v7464
  %v7513 = vpack.c.b16 %v7469, %v7465
  %v7514 = vpack.c.b16 %v7470, %v7466
  %v7515 = vpack.c.b16 %v7471, %v7467
  %v7516 = vpack.c.b16 %v7476, %v7472
  %v7517 = vpack.c.b16 %v7477, %v7473
  %v7518 = vpack.c.b16 %v7478, %v7474
  %v7519 = vpack.c.b16 %v7479, %v7475
  %v7520 = vpack.c.b16 %v7484, %v7480
  %v7521 = vpack.c.b16 %v7485, %v7481
  %v7522 = vpack.c.b16 %v7486, %v7482
  %v7523 = vpack.c.b16 %v7487, %v7483
  %v7524 = vpack.c.b16 %v7492, %v7488
  %v7525 = vpack.c.b16 %v7493, %v7489
  %v7526 = vpack.c.b16 %v7494, %v7490
  %v7527 = vpack.c.b16 %v7495, %v7491
  %v7528 = vpack.c.b16 %v7500, %v7496
  %v7529 = vpack.c.b16 %v7501, %v7497
  %v7530 = vpack.c.b16 %v7502, %v7498
  %v7531 = vpack.c.b16 %v7503, %v7499
  %v7532 = vpack.c.b16 %v7504, %v7504
  %v7533 = vpack.c.b16 %v7505, %v7505
  %v7534 = vpack.c.b16 %v7506, %v7506
  %v7535 = vpack.c.b16 %v7507, %v7507
  %vm7557 = vcmask 195584
  %v7559 = vsel %vm7557, %v7511, 0
  %v7562 = vsel %vm7557, %v7515, 0
  %v7565 = vsel %vm7557, %v7519, 0
  %v7568 = vsel %vm7557, %v7523, 0
  %v7571 = vsel %vm7557, %v7527, 0
  %v7574 = vsel %vm7557, %v7531, 0
  %v7577 = vsel %vm7557, %v7535, 0
  %v7580 = vsel %vm2004, %v7351, 0
  %7582 = vmatprep.subr.bf16.mxu0 0
  %7583 = vmatpush1.bf16.msra.mxu0 %v7326
  %7584 = vmatprep.subr.bf16.mxu0 0
  %7585 = vmatpush1.bf16.msra.mxu0 %v7327
  %7586 = vmatprep.subr.bf16.mxu0 0
  %7587 = vmatpush1.bf16.msra.mxu0 %v7328
  %7588 = vmatprep.subr.bf16.mxu0 0
  %7589 = vmatpush1.bf16.msra.mxu0 %v7329
  %7590 = vmatprep.subr.bf16.mxu0 0
  %7591 = vmatpush1.bf16.msra.mxu0 %v7330
  %7592 = vmatprep.subr.bf16.mxu0 0
  %7593 = vmatpush1.bf16.msra.mxu0 %v7331
  %7594 = vmatprep.subr.bf16.mxu0 0
  %7595 = vmatpush1.bf16.msra.mxu0 %v7332
  %7596 = vmatprep.subr.bf16.mxu0 0
  %7597 = vmatpush1.bf16.msra.mxu0 %v7333
  %7598 = vmatprep.subr.bf16.mxu0 0
  %7599 = vmatpush1.bf16.msra.mxu0 %v7334
  %7600 = vmatprep.subr.bf16.mxu0 0
  %7601 = vmatpush1.bf16.msra.mxu0 %v7335
  %7602 = vmatprep.subr.bf16.mxu0 0
  %7603 = vmatpush1.bf16.msra.mxu0 %v7336
  %7604 = vmatprep.subr.bf16.mxu0 0
  %7605 = vmatpush1.bf16.msra.mxu0 %v7337
  %7606 = vmatprep.subr.bf16.mxu0 0
  %7607 = vmatpush1.bf16.msra.mxu0 %v7338
  %7608 = vmatprep.subr.bf16.mxu0 0
  %7609 = vmatpush1.bf16.msra.mxu0 %v7339
  %7610 = vmatprep.subr.bf16.mxu0 0
  %7611 = vmatpush1.bf16.msra.mxu0 %v7340
  %7612 = vmatprep.subr.bf16.mxu0 0
  %7613 = vmatpush1.bf16.msra.mxu0 %v7341
  %7614 = vmatprep.mubr.bf16.mxu0 %v7509
  %7615 = vmatmul.mubr.bf16.gmra.mrb[0].mxu0 %v7508
  %v7616 = vpop.f32.mrb[0].mxu0
  %v7617 = vadd.f32 %v7368, %v7616
  %v7618 = vpop.f32.mrb[0].mxu0
  %v7619 = vpop.f32.mrb[0].mxu0
  %v7620 = vadd.f32 %v7373, %v7619
  %v7621 = vpop.f32.mrb[0].mxu0
  %7622 = vmatprep.mubr.bf16.mxu0 %v7513
  %7623 = vmatmul.mubr.bf16.gmra.mrb[0].mxu0 %v7512
  %v7624 = vpop.f32.mrb[0].mxu0
  %v7625 = vadd.f32 %v7378, %v7624
  %v7626 = vpop.f32.mrb[0].mxu0
  %v7627 = vpop.f32.mrb[0].mxu0
  %v7628 = vadd.f32 %v7383, %v7627
  %v7629 = vpop.f32.mrb[0].mxu0
  %7630 = vmatprep.mubr.bf16.mxu0 %v7517
  %7631 = vmatmul.mubr.bf16.gmra.mrb[0].mxu0 %v7516
  %v7632 = vpop.f32.mrb[0].mxu0
  %v7633 = vadd.f32 %v7388, %v7632
  %v7634 = vpop.f32.mrb[0].mxu0
  %v7635 = vpop.f32.mrb[0].mxu0
  %v7636 = vadd.f32 %v7393, %v7635
  %v7637 = vpop.f32.mrb[0].mxu0
  %7638 = vmatprep.mubr.bf16.mxu0 %v7521
  %7639 = vmatmul.mubr.bf16.gmra.mrb[0].mxu0 %v7520
  %v7640 = vpop.f32.mrb[0].mxu0
  %v7641 = vadd.f32 %v7398, %v7640
  %v7642 = vpop.f32.mrb[0].mxu0
  %v7643 = vpop.f32.mrb[0].mxu0
  %v7644 = vadd.f32 %v7403, %v7643
  %v7645 = vpop.f32.mrb[0].mxu0
  %7646 = vmatprep.mubr.bf16.mxu0 %v7525
  %7647 = vmatmul.mubr.bf16.gmra.mrb[0].mxu0 %v7524
  %v7648 = vpop.f32.mrb[0].mxu0
  %v7649 = vadd.f32 %v7408, %v7648
  %v7650 = vpop.f32.mrb[0].mxu0
  %v7651 = vpop.f32.mrb[0].mxu0
  %v7652 = vadd.f32 %v7413, %v7651
  %v7653 = vpop.f32.mrb[0].mxu0
  %7654 = vmatprep.mubr.bf16.mxu0 %v7529
  %7655 = vmatmul.mubr.bf16.gmra.mrb[0].mxu0 %v7528
  %v7656 = vpop.f32.mrb[0].mxu0
  %v7657 = vadd.f32 %v7418, %v7656
  %v7658 = vpop.f32.mrb[0].mxu0
  %v7659 = vpop.f32.mrb[0].mxu0
  %v7660 = vadd.f32 %v7423, %v7659
  %v7661 = vpop.f32.mrb[0].mxu0
  %7662 = vmatprep.mubr.bf16.mxu0 %v7533
  %7663 = vmatmul.mubr.bf16.gmra.mrb[0].mxu0 %v7532
  %v7664 = vpop.f32.mrb[0].mxu0
  %v7665 = vadd.f32 %v7428, %v7664
  %v7666 = vpop.f32.mrb[0].mxu0
  %v7667 = vpop.f32.mrb[0].mxu0
  %v7668 = vpop.f32.mrb[0].mxu0
  %7669 = vdwg.mxu0
  %7670 = vmatprep.subr.bf16.mxu0 0
  %7671 = vmatpush1.bf16.msra.mxu0 %v7342
  %7672 = vmatprep.subr.bf16.mxu0 0
  %7673 = vmatpush1.bf16.msra.mxu0 %v7343
  %7674 = vmatprep.subr.bf16.mxu0 0
  %7675 = vmatpush1.bf16.msra.mxu0 %v7344
  %7676 = vmatprep.subr.bf16.mxu0 0
  %7677 = vmatpush1.bf16.msra.mxu0 %v7345
  %7678 = vmatprep.subr.bf16.mxu0 0
  %7679 = vmatpush1.bf16.msra.mxu0 %v7346
  %7680 = vmatprep.subr.bf16.mxu0 0
  %7681 = vmatpush1.bf16.msra.mxu0 %v7347
  %7682 = vmatprep.subr.bf16.mxu0 0
  %7683 = vmatpush1.bf16.msra.mxu0 %v7348
  %7684 = vmatprep.subr.bf16.mxu0 0
  %7685 = vmatpush1.bf16.msra.mxu0 %v7349
  %7686 = vmatprep.subr.bf16.mxu0 0
  %7687 = vmatpush1.bf16.msra.mxu0 %v7350
  %7688 = vmatprep.subr.bf16.mxu0 0
  %7689 = vmatpush1.bf16.msra.mxu0 %v7580
  %7690 = vmatprep.subr.bf16.mxu0 0
  %7691 = vmatpush1.bf16.msra.mxu0 0
  %7692 = vmatprep.subr.bf16.mxu0 0
  %7693 = vmatpush1.bf16.msra.mxu0 0
  %7694 = vmatprep.subr.bf16.mxu0 0
  %7695 = vmatpush1.bf16.msra.mxu0 0
  %7696 = vmatprep.subr.bf16.mxu0 0
  %7697 = vmatpush1.bf16.msra.mxu0 0
  %7698 = vmatprep.subr.bf16.mxu0 0
  %7699 = vmatpush1.bf16.msra.mxu0 0
  %7700 = vmatprep.subr.bf16.mxu0 0
  %7701 = vmatpush1.bf16.msra.mxu0 0
  %7702 = vmatprep.mubr.bf16.mxu0 %v7559
  %7703 = vmatmul.mubr.bf16.gmra.mrb[0].mxu0 %v7510
  %v7704 = vpop.f32.mrb[0].mxu0
  %v7705 = vadd.f32 %v7617, %v7704
  %v7706 = vpop.f32.mrb[0].mxu0
  %v7707 = vpop.f32.mrb[0].mxu0
  %v7708 = vadd.f32 %v7620, %v7707
  %v7709 = vpop.f32.mrb[0].mxu0
  %7710 = vmatprep.mubr.bf16.mxu0 %v7562
  %7711 = vmatmul.mubr.bf16.gmra.mrb[0].mxu0 %v7514
  %v7712 = vpop.f32.mrb[0].mxu0
  %v7713 = vadd.f32 %v7625, %v7712
  %v7714 = vpop.f32.mrb[0].mxu0
  %v7715 = vpop.f32.mrb[0].mxu0
  %v7716 = vadd.f32 %v7628, %v7715
  %v7717 = vpop.f32.mrb[0].mxu0
  %7718 = vmatprep.mubr.bf16.mxu0 %v7565
  %7719 = vmatmul.mubr.bf16.gmra.mrb[0].mxu0 %v7518
  %v7720 = vpop.f32.mrb[0].mxu0
  %v7721 = vadd.f32 %v7633, %v7720
  %v7722 = vpop.f32.mrb[0].mxu0
  %v7723 = vpop.f32.mrb[0].mxu0
  %v7724 = vadd.f32 %v7636, %v7723
  %v7725 = vpop.f32.mrb[0].mxu0
  %7726 = vmatprep.mubr.bf16.mxu0 %v7568
  %7727 = vmatmul.mubr.bf16.gmra.mrb[0].mxu0 %v7522
  %v7728 = vpop.f32.mrb[0].mxu0
  %v7729 = vadd.f32 %v7641, %v7728
  %v7730 = vpop.f32.mrb[0].mxu0
  %v7731 = vpop.f32.mrb[0].mxu0
  %v7732 = vadd.f32 %v7644, %v7731
  %v7733 = vpop.f32.mrb[0].mxu0
  %7734 = vmatprep.mubr.bf16.mxu0 %v7571
  %7735 = vmatmul.mubr.bf16.gmra.mrb[0].mxu0 %v7526
  %v7736 = vpop.f32.mrb[0].mxu0
  %v7737 = vadd.f32 %v7649, %v7736
  %v7738 = vpop.f32.mrb[0].mxu0
  %v7739 = vpop.f32.mrb[0].mxu0
  %v7740 = vadd.f32 %v7652, %v7739
  %v7741 = vpop.f32.mrb[0].mxu0
  %7742 = vmatprep.mubr.bf16.mxu0 %v7574
  %7743 = vmatmul.mubr.bf16.gmra.mrb[0].mxu0 %v7530
  %v7744 = vpop.f32.mrb[0].mxu0
  %v7745 = vadd.f32 %v7657, %v7744
  %v7746 = vpop.f32.mrb[0].mxu0
  %v7747 = vpop.f32.mrb[0].mxu0
  %v7748 = vadd.f32 %v7660, %v7747
  %v7749 = vpop.f32.mrb[0].mxu0
  %7750 = vmatprep.mubr.bf16.mxu0 %v7577
  %7751 = vmatmul.mubr.bf16.gmra.mrb[0].mxu0 %v7534
  %v7752 = vpop.f32.mrb[0].mxu0
  %v7753 = vadd.f32 %v7665, %v7752
  %v7754 = vpop.f32.mrb[0].mxu0
  %v7755 = vpop.f32.mrb[0].mxu0
  %v7756 = vpop.f32.mrb[0].mxu0
  %7757 = vdwg.mxu0
  %v7758 = vmax.f32 %v7705, 0.0
  %v7759 = vmax.f32 %v7708, 0.0
  %v7760 = vmax.f32 %v7713, 0.0
  %v7761 = vmax.f32 %v7716, 0.0
  %v7762 = vmax.f32 %v7721, 0.0
  %v7763 = vmax.f32 %v7724, 0.0
  %v7764 = vmax.f32 %v7729, 0.0
  %v7765 = vmax.f32 %v7732, 0.0
  %v7766 = vmax.f32 %v7737, 0.0
  %v7767 = vmax.f32 %v7740, 0.0
  %v7768 = vmax.f32 %v7745, 0.0
  %v7769 = vmax.f32 %v7748, 0.0
  %v7770 = vmax.f32 %v7753, 0.0
  %v7771 = vmul.f32 %v7758, %v7758
  %v7772 = vmul.f32 %v7759, %v7759
  %v7773 = vmul.f32 %v7760, %v7760
  %v7774 = vmul.f32 %v7761, %v7761
  %v7775 = vmul.f32 %v7762, %v7762
  %v7776 = vmul.f32 %v7763, %v7763
  %v7777 = vmul.f32 %v7764, %v7764
  %v7778 = vmul.f32 %v7765, %v7765
  %v7779 = vmul.f32 %v7766, %v7766
  %v7780 = vmul.f32 %v7767, %v7767
  %v7781 = vmul.f32 %v7768, %v7768
  %v7782 = vmul.f32 %v7769, %v7769
  %v7783 = vmul.f32 %v7770, %v7770
  %vm7784 = vcmask 441344
  %v7785 = vsel %vm7784, %v7758, 0.0
  %7786 = vadd.xlane.f32.xlu0 %v7785
  %v7787 = vpop.xlane.xlu0 %7786
  %v7788 = vsel %vm7784, %v7759, 0.0
  %7789 = vadd.xlane.f32.xlu0 %v7788
  %v7790 = vpop.xlane.xlu0 %7789
  %v7791 = vsel %vm7784, %v7760, 0.0
  %7792 = vadd.xlane.f32.xlu0 %v7791
  %v7793 = vpop.xlane.xlu0 %7792
  %v7794 = vsel %vm7784, %v7761, 0.0
  %7795 = vadd.xlane.f32.xlu0 %v7794
  %v7796 = vpop.xlane.xlu0 %7795
  %v7797 = vsel %vm7784, %v7762, 0.0
  %7798 = vadd.xlane.f32.xlu0 %v7797
  %v7799 = vpop.xlane.xlu0 %7798
  %v7800 = vsel %vm7784, %v7763, 0.0
  %7801 = vadd.xlane.f32.xlu0 %v7800
  %v7802 = vpop.xlane.xlu0 %7801
  %v7803 = vsel %vm7784, %v7764, 0.0
  %7804 = vadd.xlane.f32.xlu0 %v7803
  %v7805 = vpop.xlane.xlu0 %7804
  %v7806 = vsel %vm7784, %v7765, 0.0
  %7807 = vadd.xlane.f32.xlu0 %v7806
  %v7808 = vpop.xlane.xlu0 %7807
  %v7809 = vsel %vm7784, %v7766, 0.0
  %7810 = vadd.xlane.f32.xlu0 %v7809
  %v7811 = vpop.xlane.xlu0 %7810
  %v7812 = vsel %vm7784, %v7767, 0.0
  %7813 = vadd.xlane.f32.xlu0 %v7812
  %v7814 = vpop.xlane.xlu0 %7813
  %v7815 = vsel %vm7784, %v7768, 0.0
  %7816 = vadd.xlane.f32.xlu0 %v7815
  %v7817 = vpop.xlane.xlu0 %7816
  %v7818 = vsel %vm7784, %v7769, 0.0
  %7819 = vadd.xlane.f32.xlu0 %v7818
  %v7820 = vpop.xlane.xlu0 %7819
  %v7821 = vsel %vm7784, %v7770, 0.0
  %7822 = vadd.xlane.f32.xlu0 %v7821
  %v7823 = vpop.xlane.xlu0 %7822
  %v7824 = vsel %vm7784, %v7771, 0.0
  %7825 = vadd.xlane.f32.xlu0 %v7824
  %v7826 = vpop.xlane.xlu0 %7825
  %v7827 = vsel %vm7784, %v7772, 0.0
  %7828 = vadd.xlane.f32.xlu0 %v7827
  %v7829 = vpop.xlane.xlu0 %7828
  %v7830 = vsel %vm7784, %v7773, 0.0
  %7831 = vadd.xlane.f32.xlu0 %v7830
  %v7832 = vpop.xlane.xlu0 %7831
  %v7833 = vsel %vm7784, %v7774, 0.0
  %7834 = vadd.xlane.f32.xlu0 %v7833
  %v7835 = vpop.xlane.xlu0 %7834
  %v7836 = vsel %vm7784, %v7775, 0.0
  %7837 = vadd.xlane.f32.xlu0 %v7836
  %v7838 = vpop.xlane.xlu0 %7837
  %v7839 = vsel %vm7784, %v7776, 0.0
  %7840 = vadd.xlane.f32.xlu0 %v7839
  %v7841 = vpop.xlane.xlu0 %7840
  %v7842 = vsel %vm7784, %v7777, 0.0
  %7843 = vadd.xlane.f32.xlu0 %v7842
  %v7844 = vpop.xlane.xlu0 %7843
  %v7845 = vsel %vm7784, %v7778, 0.0
  %7846 = vadd.xlane.f32.xlu0 %v7845
  %v7847 = vpop.xlane.xlu0 %7846
  %v7848 = vsel %vm7784, %v7779, 0.0
  %7849 = vadd.xlane.f32.xlu0 %v7848
  %v7850 = vpop.xlane.xlu0 %7849
  %v7851 = vsel %vm7784, %v7780, 0.0
  %7852 = vadd.xlane.f32.xlu0 %v7851
  %v7853 = vpop.xlane.xlu0 %7852
  %v7854 = vsel %vm7784, %v7781, 0.0
  %7855 = vadd.xlane.f32.xlu0 %v7854
  %v7856 = vpop.xlane.xlu0 %7855
  %v7857 = vsel %vm7784, %v7782, 0.0
  %7858 = vadd.xlane.f32.xlu0 %v7857
  %v7859 = vpop.xlane.xlu0 %7858
  %v7860 = vsel %vm7784, %v7783, 0.0
  %7861 = vadd.xlane.f32.xlu0 %v7860
  %v7862 = vpop.xlane.xlu0 %7861
  %v7863 = vld [vmem:[%s37] sm:$0xff]
  %v7864 = vld [vmem:[%s37 + $0x8] sm:$0xff]
  %v7865 = vld [vmem:[%s37 + $0x10] sm:$0xff]
  %v7866 = vld [vmem:[%s37 + $0x18] sm:$0xff]
  %vm7867 = vcmask 654336
  %v7869 = vsel %vm7867, %v7864, 0
  %v7872 = vsel %vm7867, %v7866, 0
  %7874 = vmatprep.subr.mxu0 0.0
  %7875 = vmatpush1.msra.mxu0 %v7787
  %7876 = vmatprep.subr.mxu0 0.0
  %7877 = vmatpush1.msra.mxu0 %v7790
  %7878 = vmatprep.subr.mxu0 0.0
  %7879 = vmatpush1.msra.mxu0 %v7793
  %7880 = vmatprep.subr.mxu0 0.0
  %7881 = vmatpush1.msra.mxu0 %v7796
  %7882 = vmatprep.subr.mxu0 0.0
  %7883 = vmatpush1.msra.mxu0 %v7799
  %7884 = vmatprep.subr.mxu0 0.0
  %7885 = vmatpush1.msra.mxu0 %v7802
  %7886 = vmatprep.subr.mxu0 0.0
  %7887 = vmatpush1.msra.mxu0 %v7805
  %7888 = vmatprep.subr.mxu0 0.0
  %7889 = vmatpush1.msra.mxu0 %v7808
  %7890 = vmatprep.subr.mxu0 0.0
  %7891 = vmatpush1.msra.mxu0 %v7811
  %7892 = vmatprep.subr.mxu0 0.0
  %7893 = vmatpush1.msra.mxu0 %v7814
  %7894 = vmatprep.subr.mxu0 0.0
  %7895 = vmatpush1.msra.mxu0 %v7817
  %7896 = vmatprep.subr.mxu0 0.0
  %7897 = vmatpush1.msra.mxu0 %v7820
  %7898 = vmatprep.subr.mxu0 0.0
  %7899 = vmatpush1.msra.mxu0 %v7823
  %7900 = vmatprep.subr.mxu0 0.0
  %7901 = vmatpush1.msra.mxu0 %v7826
  %7902 = vmatprep.subr.mxu0 0.0
  %7903 = vmatpush1.msra.mxu0 %v7829
  %7904 = vmatprep.subr.mxu0 0.0
  %7905 = vmatpush1.msra.mxu0 %v7832
  %7906 = vmatprep.subr.mxu0 0.0
  %7907 = vmatpush1.msra.mxu0 %v7835
  %7908 = vmatprep.subr.mxu0 0.0
  %7909 = vmatpush1.msra.mxu0 %v7838
  %7910 = vmatprep.subr.mxu0 0.0
  %7911 = vmatpush1.msra.mxu0 %v7841
  %7912 = vmatprep.subr.mxu0 0.0
  %7913 = vmatpush1.msra.mxu0 %v7844
  %7914 = vmatprep.subr.mxu0 0.0
  %7915 = vmatpush1.msra.mxu0 %v7847
  %7916 = vmatprep.subr.mxu0 0.0
  %7917 = vmatpush1.msra.mxu0 %v7850
  %7918 = vmatprep.subr.mxu0 0.0
  %7919 = vmatpush1.msra.mxu0 %v7853
  %7920 = vmatprep.subr.mxu0 0.0
  %7921 = vmatpush1.msra.mxu0 %v7856
  %7922 = vmatprep.subr.mxu0 0.0
  %7923 = vmatpush1.msra.mxu0 %v7859
  %7924 = vmatprep.subr.mxu0 0.0
  %7925 = vmatpush1.msra.mxu0 %v7862
  %7926 = vmatprep.subr.mxu0 0.0
  %7927 = vmatpush1.msra.mxu0 0.0
  %7928 = vmatprep.subr.mxu0 0.0
  %7929 = vmatpush1.msra.mxu0 0.0
  %7930 = vmatprep.subr.mxu0 0.0
  %7931 = vmatpush1.msra.mxu0 0.0
  %7932 = vmatprep.subr.mxu0 0.0
  %7933 = vmatpush1.msra.mxu0 0.0
  %7934 = vmatprep.subr.mxu0 0.0
  %7935 = vmatpush1.msra.mxu0 0.0
  %7936 = vmatprep.subr.mxu0 0.0
  %7937 = vmatpush1.msra.mxu0 0.0
  %7938 = vmatprep.mubr.f32.mxu0 %v7869
  %7939 = vmatmul.mubr.f32.gmra.mrb[0].mxu0 %v7863
  %v7940 = vpop.f32.mrb[0].mxu0
  %v7941 = vadd.f32 0.0, %v7940
  %v7942 = vpop.f32.mrb[0].mxu0
  %7943 = vmatprep.mubr.f32.mxu0 %v7872
  %7944 = vmatmul.mubr.f32.gmra.mrb[0].mxu0 %v7865
  %v7945 = vpop.f32.mrb[0].mxu0
  %v7946 = vadd.f32 0.0, %v7945
  %v7947 = vpop.f32.mrb[0].mxu0
  %7948 = vdwg.mxu0
  %v7949 = vmul.f32 %v7941, 0.0014245014
  %v7950 = vmul.f32 %v7946, 0.0014245014
  %v7951 = vmul.f32 %v7949, %v7949
  %v7952 = vsub.f32 %v7950, %v7951
  %v7953 = vmax.f32 %v7952, 0.0
  %v7954 = vld [vmem:[%s41] sm:$0xff]
  %v7955 = vadd.f32 %v7953, 1e-05
  %v7956 = vrsqrt.pop %v7955
  %v7957 = vmul.f32 %v7954, %v7956
  %v7958 = vld [vmem:[%s43] sm:$0xff]
  %v7959 = vmul.f32 %v7949, %v7957
  %v7960 = vsub.f32 %v7958, %v7959
  %v7961 = vld [vmem:[%s39] sm:$0xff]
  %v7962 = vld [vmem:[%s39 + $0x8] sm:$0xff]
  %v7963 = vld [vmem:[%s39 + $0x10] sm:$0xff]
  %v7964 = vld [vmem:[%s39 + $0x18] sm:$0xff]
  %v7965 = vld [vmem:[%s39 + $0x20] sm:$0xff]
  %v7966 = vld [vmem:[%s39 + $0x28] sm:$0xff]
  %v7967 = vld [vmem:[%s39 + $0x30] sm:$0xff]
  %v7968 = vld [vmem:[%s39 + $0x38] sm:$0xff]
  %v7969 = vld [vmem:[%s39 + $0x40] sm:$0xff]
  %v7970 = vld [vmem:[%s39 + $0x48] sm:$0xff]
  %v7971 = vld [vmem:[%s39 + $0x50] sm:$0xff]
  %v7972 = vld [vmem:[%s39 + $0x58] sm:$0xff]
  %v7973 = vld [vmem:[%s39 + $0x60] sm:$0xff]
  %v7974 = vld [vmem:[%s39 + $0x68] sm:$0xff]
  %v7975 = vld [vmem:[%s39 + $0x70] sm:$0xff]
  %v7976 = vld [vmem:[%s39 + $0x78] sm:$0xff]
  %v7977 = vld [vmem:[%s39 + $0x80] sm:$0xff]
  %v7978 = vld [vmem:[%s39 + $0x88] sm:$0xff]
  %v7979 = vld [vmem:[%s39 + $0x90] sm:$0xff]
  %v7980 = vld [vmem:[%s39 + $0x98] sm:$0xff]
  %v7981 = vld [vmem:[%s39 + $0xa0] sm:$0xff]
  %v7982 = vld [vmem:[%s39 + $0xa8] sm:$0xff]
  %v7983 = vld [vmem:[%s39 + $0xb0] sm:$0xff]
  %v7984 = vld [vmem:[%s39 + $0xb8] sm:$0xff]
  %v7985 = vld [vmem:[%s39 + $0xc0] sm:$0xff]
  %v7986 = vld [vmem:[%s39 + $0xc8] sm:$0xff]
  %v7988 = vsel %vm3141, %v7961, 0
  %v7991 = vsel %vm3141, %v7962, 0
  %v7994 = vsel %vm3141, %v7963, 0
  %v7997 = vsel %vm3141, %v7964, 0
  %v8000 = vsel %vm3141, %v7965, 0
  %v8003 = vsel %vm3141, %v7966, 0
  %v8006 = vsel %vm3141, %v7967, 0
  %v8009 = vsel %vm3141, %v7968, 0
  %v8012 = vsel %vm3141, %v7969, 0
  %v8015 = vsel %vm3141, %v7970, 0
  %v8018 = vsel %vm3141, %v7971, 0
  %v8021 = vsel %vm3141, %v7972, 0
  %v8024 = vsel %vm3141, %v7973, 0
  %v8027 = vsel %vm3141, %v7974, 0
  %v8030 = vsel %vm3141, %v7975, 0
  %v8033 = vsel %vm3141, %v7976, 0
  %v8036 = vsel %vm3141, %v7977, 0
  %v8039 = vsel %vm3141, %v7978, 0
  %v8042 = vsel %vm3141, %v7979, 0
  %v8045 = vsel %vm3141, %v7980, 0
  %v8048 = vsel %vm3141, %v7981, 0
  %v8051 = vsel %vm3141, %v7982, 0
  %v8054 = vsel %vm3141, %v7983, 0
  %v8057 = vsel %vm3141, %v7984, 0
  %v8060 = vsel %vm3141, %v7985, 0
  %v8063 = vsel %vm3141, %v7986, 0
  %8065 = vmatprep.subr.mxu0 0.0
  %8066 = vmatpush1.msra.mxu0 %v7957
  %8067 = vmatprep.subr.mxu0 0.0
  %8068 = vmatpush1.msra.mxu0 %v7960
  %8069 = vmatprep.subr.mxu0 0.0
  %8070 = vmatpush1.msra.mxu0 0.0
  %8071 = vmatprep.subr.mxu0 0.0
  %8072 = vmatpush1.msra.mxu0 0.0
  %8073 = vmatprep.subr.mxu0 0.0
  %8074 = vmatpush1.msra.mxu0 0.0
  %8075 = vmatprep.subr.mxu0 0.0
  %8076 = vmatpush1.msra.mxu0 0.0
  %8077 = vmatprep.subr.mxu0 0.0
  %8078 = vmatpush1.msra.mxu0 0.0
  %8079 = vmatprep.subr.mxu0 0.0
  %8080 = vmatpush1.msra.mxu0 0.0
  %8081 = vmatprep.subr.mxu0 0.0
  %8082 = vmatpush1.msra.mxu0 0.0
  %8083 = vmatprep.subr.mxu0 0.0
  %8084 = vmatpush1.msra.mxu0 0.0
  %8085 = vmatprep.subr.mxu0 0.0
  %8086 = vmatpush1.msra.mxu0 0.0
  %8087 = vmatprep.subr.mxu0 0.0
  %8088 = vmatpush1.msra.mxu0 0.0
  %8089 = vmatprep.subr.mxu0 0.0
  %8090 = vmatpush1.msra.mxu0 0.0
  %8091 = vmatprep.subr.mxu0 0.0
  %8092 = vmatpush1.msra.mxu0 0.0
  %8093 = vmatprep.subr.mxu0 0.0
  %8094 = vmatpush1.msra.mxu0 0.0
  %8095 = vmatprep.subr.mxu0 0.0
  %8096 = vmatpush1.msra.mxu0 0.0
  %8097 = vmatprep.subr.mxu0 0.0
  %8098 = vmatpush1.msra.mxu0 0.0
  %8099 = vmatprep.subr.mxu0 0.0
  %8100 = vmatpush1.msra.mxu0 0.0
  %8101 = vmatprep.subr.mxu0 0.0
  %8102 = vmatpush1.msra.mxu0 0.0
  %8103 = vmatprep.subr.mxu0 0.0
  %8104 = vmatpush1.msra.mxu0 0.0
  %8105 = vmatprep.subr.mxu0 0.0
  %8106 = vmatpush1.msra.mxu0 0.0
  %8107 = vmatprep.subr.mxu0 0.0
  %8108 = vmatpush1.msra.mxu0 0.0
  %8109 = vmatprep.subr.mxu0 0.0
  %8110 = vmatpush1.msra.mxu0 0.0
  %8111 = vmatprep.subr.mxu0 0.0
  %8112 = vmatpush1.msra.mxu0 0.0
  %8113 = vmatprep.subr.mxu0 0.0
  %8114 = vmatpush1.msra.mxu0 0.0
  %8115 = vmatprep.subr.mxu0 0.0
  %8116 = vmatpush1.msra.mxu0 0.0
  %8117 = vmatprep.subr.mxu0 0.0
  %8118 = vmatpush1.msra.mxu0 0.0
  %8119 = vmatprep.subr.mxu0 0.0
  %8120 = vmatpush1.msra.mxu0 0.0
  %8121 = vmatprep.subr.mxu0 0.0
  %8122 = vmatpush1.msra.mxu0 0.0
  %8123 = vmatprep.subr.mxu0 0.0
  %8124 = vmatpush1.msra.mxu0 0.0
  %8125 = vmatprep.subr.mxu0 0.0
  %8126 = vmatpush1.msra.mxu0 0.0
  %8127 = vmatprep.subr.mxu0 0.0
  %8128 = vmatpush1.msra.mxu0 0.0
  %8129 = vmatprep.mubr.f32.mxu0 0.0
  %8130 = vmatmul.mubr.f32.gmra.mrb[0].mxu0 %v7988
  %v8131 = vpop.f32.mrb[0].mxu0
  %v8132 = vadd.f32 0.0, %v8131
  %v8133 = vpop.f32.mrb[0].mxu0
  %8134 = vmatprep.mubr.f32.mxu0 0.0
  %8135 = vmatmul.mubr.f32.gmra.mrb[0].mxu0 %v7991
  %v8136 = vpop.f32.mrb[0].mxu0
  %v8137 = vadd.f32 0.0, %v8136
  %v8138 = vpop.f32.mrb[0].mxu0
  %8139 = vmatprep.mubr.f32.mxu0 0.0
  %8140 = vmatmul.mubr.f32.gmra.mrb[0].mxu0 %v7994
  %v8141 = vpop.f32.mrb[0].mxu0
  %v8142 = vadd.f32 0.0, %v8141
  %v8143 = vpop.f32.mrb[0].mxu0
  %8144 = vmatprep.mubr.f32.mxu0 0.0
  %8145 = vmatmul.mubr.f32.gmra.mrb[0].mxu0 %v7997
  %v8146 = vpop.f32.mrb[0].mxu0
  %v8147 = vadd.f32 0.0, %v8146
  %v8148 = vpop.f32.mrb[0].mxu0
  %8149 = vmatprep.mubr.f32.mxu0 0.0
  %8150 = vmatmul.mubr.f32.gmra.mrb[0].mxu0 %v8000
  %v8151 = vpop.f32.mrb[0].mxu0
  %v8152 = vadd.f32 0.0, %v8151
  %v8153 = vpop.f32.mrb[0].mxu0
  %8154 = vmatprep.mubr.f32.mxu0 0.0
  %8155 = vmatmul.mubr.f32.gmra.mrb[0].mxu0 %v8003
  %v8156 = vpop.f32.mrb[0].mxu0
  %v8157 = vadd.f32 0.0, %v8156
  %v8158 = vpop.f32.mrb[0].mxu0
  %8159 = vmatprep.mubr.f32.mxu0 0.0
  %8160 = vmatmul.mubr.f32.gmra.mrb[0].mxu0 %v8006
  %v8161 = vpop.f32.mrb[0].mxu0
  %v8162 = vadd.f32 0.0, %v8161
  %v8163 = vpop.f32.mrb[0].mxu0
  %8164 = vmatprep.mubr.f32.mxu0 0.0
  %8165 = vmatmul.mubr.f32.gmra.mrb[0].mxu0 %v8009
  %v8166 = vpop.f32.mrb[0].mxu0
  %v8167 = vadd.f32 0.0, %v8166
  %v8168 = vpop.f32.mrb[0].mxu0
  %8169 = vmatprep.mubr.f32.mxu0 0.0
  %8170 = vmatmul.mubr.f32.gmra.mrb[0].mxu0 %v8012
  %v8171 = vpop.f32.mrb[0].mxu0
  %v8172 = vadd.f32 0.0, %v8171
  %v8173 = vpop.f32.mrb[0].mxu0
  %8174 = vmatprep.mubr.f32.mxu0 0.0
  %8175 = vmatmul.mubr.f32.gmra.mrb[0].mxu0 %v8015
  %v8176 = vpop.f32.mrb[0].mxu0
  %v8177 = vadd.f32 0.0, %v8176
  %v8178 = vpop.f32.mrb[0].mxu0
  %8179 = vmatprep.mubr.f32.mxu0 0.0
  %8180 = vmatmul.mubr.f32.gmra.mrb[0].mxu0 %v8018
  %v8181 = vpop.f32.mrb[0].mxu0
  %v8182 = vadd.f32 0.0, %v8181
  %v8183 = vpop.f32.mrb[0].mxu0
  %8184 = vmatprep.mubr.f32.mxu0 0.0
  %8185 = vmatmul.mubr.f32.gmra.mrb[0].mxu0 %v8021
  %v8186 = vpop.f32.mrb[0].mxu0
  %v8187 = vadd.f32 0.0, %v8186
  %v8188 = vpop.f32.mrb[0].mxu0
  %8189 = vmatprep.mubr.f32.mxu0 0.0
  %8190 = vmatmul.mubr.f32.gmra.mrb[0].mxu0 %v8024
  %v8191 = vpop.f32.mrb[0].mxu0
  %v8192 = vadd.f32 0.0, %v8191
  %v8193 = vpop.f32.mrb[0].mxu0
  %8194 = vmatprep.mubr.f32.mxu0 0.0
  %8195 = vmatmul.mubr.f32.gmra.mrb[0].mxu0 %v8027
  %v8196 = vpop.f32.mrb[0].mxu0
  %v8197 = vadd.f32 0.0, %v8196
  %v8198 = vpop.f32.mrb[0].mxu0
  %8199 = vmatprep.mubr.f32.mxu0 0.0
  %8200 = vmatmul.mubr.f32.gmra.mrb[0].mxu0 %v8030
  %v8201 = vpop.f32.mrb[0].mxu0
  %v8202 = vadd.f32 0.0, %v8201
  %v8203 = vpop.f32.mrb[0].mxu0
  %8204 = vmatprep.mubr.f32.mxu0 0.0
  %8205 = vmatmul.mubr.f32.gmra.mrb[0].mxu0 %v8033
  %v8206 = vpop.f32.mrb[0].mxu0
  %v8207 = vadd.f32 0.0, %v8206
  %v8208 = vpop.f32.mrb[0].mxu0
  %8209 = vmatprep.mubr.f32.mxu0 0.0
  %8210 = vmatmul.mubr.f32.gmra.mrb[0].mxu0 %v8036
  %v8211 = vpop.f32.mrb[0].mxu0
  %v8212 = vadd.f32 0.0, %v8211
  %v8213 = vpop.f32.mrb[0].mxu0
  %8214 = vmatprep.mubr.f32.mxu0 0.0
  %8215 = vmatmul.mubr.f32.gmra.mrb[0].mxu0 %v8039
  %v8216 = vpop.f32.mrb[0].mxu0
  %v8217 = vadd.f32 0.0, %v8216
  %v8218 = vpop.f32.mrb[0].mxu0
  %8219 = vmatprep.mubr.f32.mxu0 0.0
  %8220 = vmatmul.mubr.f32.gmra.mrb[0].mxu0 %v8042
  %v8221 = vpop.f32.mrb[0].mxu0
  %v8222 = vadd.f32 0.0, %v8221
  %v8223 = vpop.f32.mrb[0].mxu0
  %8224 = vmatprep.mubr.f32.mxu0 0.0
  %8225 = vmatmul.mubr.f32.gmra.mrb[0].mxu0 %v8045
  %v8226 = vpop.f32.mrb[0].mxu0
  %v8227 = vadd.f32 0.0, %v8226
  %v8228 = vpop.f32.mrb[0].mxu0
  %8229 = vmatprep.mubr.f32.mxu0 0.0
  %8230 = vmatmul.mubr.f32.gmra.mrb[0].mxu0 %v8048
  %v8231 = vpop.f32.mrb[0].mxu0
  %v8232 = vadd.f32 0.0, %v8231
  %v8233 = vpop.f32.mrb[0].mxu0
  %8234 = vmatprep.mubr.f32.mxu0 0.0
  %8235 = vmatmul.mubr.f32.gmra.mrb[0].mxu0 %v8051
  %v8236 = vpop.f32.mrb[0].mxu0
  %v8237 = vadd.f32 0.0, %v8236
  %v8238 = vpop.f32.mrb[0].mxu0
  %8239 = vmatprep.mubr.f32.mxu0 0.0
  %8240 = vmatmul.mubr.f32.gmra.mrb[0].mxu0 %v8054
  %v8241 = vpop.f32.mrb[0].mxu0
  %v8242 = vadd.f32 0.0, %v8241
  %v8243 = vpop.f32.mrb[0].mxu0
  %8244 = vmatprep.mubr.f32.mxu0 0.0
  %8245 = vmatmul.mubr.f32.gmra.mrb[0].mxu0 %v8057
  %v8246 = vpop.f32.mrb[0].mxu0
  %v8247 = vadd.f32 0.0, %v8246
  %v8248 = vpop.f32.mrb[0].mxu0
  %8249 = vmatprep.mubr.f32.mxu0 0.0
  %8250 = vmatmul.mubr.f32.gmra.mrb[0].mxu0 %v8060
  %v8251 = vpop.f32.mrb[0].mxu0
  %v8252 = vadd.f32 0.0, %v8251
  %v8253 = vpop.f32.mrb[0].mxu0
  %8254 = vmatprep.mubr.f32.mxu0 0.0
  %8255 = vmatmul.mubr.f32.gmra.mrb[0].mxu0 %v8063
  %v8256 = vpop.f32.mrb[0].mxu0
  %v8257 = vadd.f32 0.0, %v8256
  %v8258 = vpop.f32.mrb[0].mxu0
  %8259 = vdwg.mxu0
  %8261 = vset.pattern.permute.xlu0 0
  %8262 = vperm.xlu0 %8261, %v8132
  %v8263 = vpop.permute.xlu0 %8262
  %8266 = vset.pattern.permute.xlu0 0
  %8267 = vperm.xlu0 %8266, %v8137
  %v8268 = vpop.permute.xlu0 %8267
  %8271 = vset.pattern.permute.xlu0 0
  %8272 = vperm.xlu0 %8271, %v8142
  %v8273 = vpop.permute.xlu0 %8272
  %8276 = vset.pattern.permute.xlu0 0
  %8277 = vperm.xlu0 %8276, %v8147
  %v8278 = vpop.permute.xlu0 %8277
  %8281 = vset.pattern.permute.xlu0 0
  %8282 = vperm.xlu0 %8281, %v8152
  %v8283 = vpop.permute.xlu0 %8282
  %8286 = vset.pattern.permute.xlu0 0
  %8287 = vperm.xlu0 %8286, %v8157
  %v8288 = vpop.permute.xlu0 %8287
  %8291 = vset.pattern.permute.xlu0 0
  %8292 = vperm.xlu0 %8291, %v8162
  %v8293 = vpop.permute.xlu0 %8292
  %8296 = vset.pattern.permute.xlu0 0
  %8297 = vperm.xlu0 %8296, %v8167
  %v8298 = vpop.permute.xlu0 %8297
  %8301 = vset.pattern.permute.xlu0 0
  %8302 = vperm.xlu0 %8301, %v8172
  %v8303 = vpop.permute.xlu0 %8302
  %8306 = vset.pattern.permute.xlu0 0
  %8307 = vperm.xlu0 %8306, %v8177
  %v8308 = vpop.permute.xlu0 %8307
  %8311 = vset.pattern.permute.xlu0 0
  %8312 = vperm.xlu0 %8311, %v8182
  %v8313 = vpop.permute.xlu0 %8312
  %8316 = vset.pattern.permute.xlu0 0
  %8317 = vperm.xlu0 %8316, %v8187
  %v8318 = vpop.permute.xlu0 %8317
  %8321 = vset.pattern.permute.xlu0 0
  %8322 = vperm.xlu0 %8321, %v8192
  %v8323 = vpop.permute.xlu0 %8322
  %v8325 = vmul.f32 %v7758, %v8263
  %v8326 = vmul.f32 %v7759, %v8268
  %v8327 = vmul.f32 %v7760, %v8273
  %v8328 = vmul.f32 %v7761, %v8278
  %v8329 = vmul.f32 %v7762, %v8283
  %v8330 = vmul.f32 %v7763, %v8288
  %v8331 = vmul.f32 %v7764, %v8293
  %v8332 = vmul.f32 %v7765, %v8298
  %v8333 = vmul.f32 %v7766, %v8303
  %v8334 = vmul.f32 %v7767, %v8308
  %v8335 = vmul.f32 %v7768, %v8313
  %v8336 = vmul.f32 %v7769, %v8318
  %v8337 = vmul.f32 %v7770, %v8323
  %8339 = vset.pattern.permute.xlu0 0
  %8340 = vperm.xlu0 %8339, %v8197
  %v8341 = vpop.permute.xlu0 %8340
  %8344 = vset.pattern.permute.xlu0 0
  %8345 = vperm.xlu0 %8344, %v8202
  %v8346 = vpop.permute.xlu0 %8345
  %8349 = vset.pattern.permute.xlu0 0
  %8350 = vperm.xlu0 %8349, %v8207
  %v8351 = vpop.permute.xlu0 %8350
  %8354 = vset.pattern.permute.xlu0 0
  %8355 = vperm.xlu0 %8354, %v8212
  %v8356 = vpop.permute.xlu0 %8355
  %8359 = vset.pattern.permute.xlu0 0
  %8360 = vperm.xlu0 %8359, %v8217
  %v8361 = vpop.permute.xlu0 %8360
  %8364 = vset.pattern.permute.xlu0 0
  %8365 = vperm.xlu0 %8364, %v8222
  %v8366 = vpop.permute.xlu0 %8365
  %8369 = vset.pattern.permute.xlu0 0
  %8370 = vperm.xlu0 %8369, %v8227
  %v8371 = vpop.permute.xlu0 %8370
  %8374 = vset.pattern.permute.xlu0 0
  %8375 = vperm.xlu0 %8374, %v8232
  %v8376 = vpop.permute.xlu0 %8375
  %8379 = vset.pattern.permute.xlu0 0
  %8380 = vperm.xlu0 %8379, %v8237
  %v8381 = vpop.permute.xlu0 %8380
  %8384 = vset.pattern.permute.xlu0 0
  %8385 = vperm.xlu0 %8384, %v8242
  %v8386 = vpop.permute.xlu0 %8385
  %8389 = vset.pattern.permute.xlu0 0
  %8390 = vperm.xlu0 %8389, %v8247
  %v8391 = vpop.permute.xlu0 %8390
  %8394 = vset.pattern.permute.xlu0 0
  %8395 = vperm.xlu0 %8394, %v8252
  %v8396 = vpop.permute.xlu0 %8395
  %8399 = vset.pattern.permute.xlu0 0
  %8400 = vperm.xlu0 %8399, %v8257
  %v8401 = vpop.permute.xlu0 %8400
  %v8403 = vadd.f32 %v8325, %v8341
  %v8404 = vadd.f32 %v8326, %v8346
  %v8405 = vadd.f32 %v8327, %v8351
  %v8406 = vadd.f32 %v8328, %v8356
  %v8407 = vadd.f32 %v8329, %v8361
  %v8408 = vadd.f32 %v8330, %v8366
  %v8409 = vadd.f32 %v8331, %v8371
  %v8410 = vadd.f32 %v8332, %v8376
  %v8411 = vadd.f32 %v8333, %v8381
  %v8412 = vadd.f32 %v8334, %v8386
  %v8413 = vadd.f32 %v8335, %v8391
  %v8414 = vadd.f32 %v8336, %v8396
  %v8415 = vadd.f32 %v8337, %v8401
  %v8416 = vpack.c.bf16 %v8404, %v8403
  %v8417 = vpack.c.bf16 %v8406, %v8405
  %v8418 = vpack.c.bf16 %v8408, %v8407
  %v8419 = vpack.c.bf16 %v8410, %v8409
  %v8420 = vpack.c.bf16 %v8412, %v8411
  %v8421 = vpack.c.bf16 %v8414, %v8413
  %v8422 = vpack.c.bf16 %v8415, %v8415
  %v8423 = vld [vmem:[%s45] sm:$0xf]
  %v8424 = vld [vmem:[%s45 + $0x4] sm:$0xf]
  %v8425 = vld [vmem:[%s45 + $0x8] sm:$0xf]
  %v8426 = vld [vmem:[%s45 + $0xc] sm:$0xf]
  %v8427 = vld [vmem:[%s45 + $0x10] sm:$0xf]
  %v8428 = vld [vmem:[%s45 + $0x14] sm:$0xf]
  %v8429 = vld [vmem:[%s45 + $0x18] sm:$0x7]
  %v8437 = vunpack.c.l.b16 %v8423
  %v8438 = vunpack.c.l.b16 %v8424
  %v8439 = vunpack.c.l.b16 %v8425
  %v8440 = vunpack.c.l.b16 %v8426
  %v8441 = vunpack.c.l.b16 %v8427
  %v8442 = vunpack.c.l.b16 %v8428
  %v8443 = vunpack.c.l.b16 %v8429
  %v8444 = vpack.c.b16 %v8438, %v8437
  %v8445 = vpack.c.b16 %v8440, %v8439
  %v8446 = vpack.c.b16 %v8442, %v8441
  %v8447 = vpack.c.b16 %v8443, %v8443
  %v8452 = vsel %vm7784, %v8416, 0
  %v8455 = vsel %vm7784, %v8417, 0
  %v8458 = vsel %vm7784, %v8418, 0
  %v8461 = vsel %vm7784, %v8419, 0
  %v8464 = vsel %vm7784, %v8420, 0
  %v8467 = vsel %vm7784, %v8421, 0
  %v8470 = vsel %vm7784, %v8422, 0
  %vm8472 = vcmask 1042432
  %v8474 = vsel %vm8472, %v8447, 0
  %8476 = vmatprep.subr.bf16.mxu0 0
  %8477 = vmatpush1.bf16.msra.mxu0 %v8444
  %8478 = vmatprep.subr.bf16.mxu0 0
  %8479 = vmatpush1.bf16.msra.mxu0 %v8445
  %8480 = vmatprep.subr.bf16.mxu0 0
  %8481 = vmatpush1.bf16.msra.mxu0 %v8446
  %8482 = vmatprep.subr.bf16.mxu0 0
  %8483 = vmatpush1.bf16.msra.mxu0 %v8474
  %8484 = vmatprep.subr.bf16.mxu0 0
  %8485 = vmatpush1.bf16.msra.mxu0 0
  %8486 = vmatprep.subr.bf16.mxu0 0
  %8487 = vmatpush1.bf16.msra.mxu0 0
  %8488 = vmatprep.subr.bf16.mxu0 0
  %8489 = vmatpush1.bf16.msra.mxu0 0
  %8490 = vmatprep.subr.bf16.mxu0 0
  %8491 = vmatpush1.bf16.msra.mxu0 0
  %8492 = vmatprep.subr.bf16.mxu0 0
  %8493 = vmatpush1.bf16.msra.mxu0 0
  %8494 = vmatprep.subr.bf16.mxu0 0
  %8495 = vmatpush1.bf16.msra.mxu0 0
  %8496 = vmatprep.subr.bf16.mxu0 0
  %8497 = vmatpush1.bf16.msra.mxu0 0
  %8498 = vmatprep.subr.bf16.mxu0 0
  %8499 = vmatpush1.bf16.msra.mxu0 0
  %8500 = vmatprep.subr.bf16.mxu0 0
  %8501 = vmatpush1.bf16.msra.mxu0 0
  %8502 = vmatprep.subr.bf16.mxu0 0
  %8503 = vmatpush1.bf16.msra.mxu0 0
  %8504 = vmatprep.subr.bf16.mxu0 0
  %8505 = vmatpush1.bf16.msra.mxu0 0
  %8506 = vmatprep.subr.bf16.mxu0 0
  %8507 = vmatpush1.bf16.msra.mxu0 0
  %8508 = vmatprep.mubr.bf16.mxu0 0
  %8509 = vmatmul.mubr.bf16.gmra.mrb[0].mxu0 %v8452
  %v8510 = vpop.f32.mrb[0].mxu0
  %v8511 = vadd.f32 0.0, %v8510
  %v8512 = vpop.f32.mrb[0].mxu0
  %v8513 = vpop.f32.mrb[0].mxu0
  %v8514 = vadd.f32 0.0, %v8513
  %v8515 = vpop.f32.mrb[0].mxu0
  %8516 = vmatprep.mubr.bf16.mxu0 0
  %8517 = vmatmul.mubr.bf16.gmra.mrb[0].mxu0 %v8455
  %v8518 = vpop.f32.mrb[0].mxu0
  %v8519 = vadd.f32 0.0, %v8518
  %v8520 = vpop.f32.mrb[0].mxu0
  %v8521 = vpop.f32.mrb[0].mxu0
  %v8522 = vadd.f32 0.0, %v8521
  %v8523 = vpop.f32.mrb[0].mxu0
  %8524 = vmatprep.mubr.bf16.mxu0 0
  %8525 = vmatmul.mubr.bf16.gmra.mrb[0].mxu0 %v8458
  %v8526 = vpop.f32.mrb[0].mxu0
  %v8527 = vadd.f32 0.0, %v8526
  %v8528 = vpop.f32.mrb[0].mxu0
  %v8529 = vpop.f32.mrb[0].mxu0
  %v8530 = vadd.f32 0.0, %v8529
  %v8531 = vpop.f32.mrb[0].mxu0
  %8532 = vmatprep.mubr.bf16.mxu0 0
  %8533 = vmatmul.mubr.bf16.gmra.mrb[0].mxu0 %v8461
  %v8534 = vpop.f32.mrb[0].mxu0
  %v8535 = vadd.f32 0.0, %v8534
  %v8536 = vpop.f32.mrb[0].mxu0
  %v8537 = vpop.f32.mrb[0].mxu0
  %v8538 = vadd.f32 0.0, %v8537
  %v8539 = vpop.f32.mrb[0].mxu0
  %8540 = vmatprep.mubr.bf16.mxu0 0
  %8541 = vmatmul.mubr.bf16.gmra.mrb[0].mxu0 %v8464
  %v8542 = vpop.f32.mrb[0].mxu0
  %v8543 = vadd.f32 0.0, %v8542
  %v8544 = vpop.f32.mrb[0].mxu0
  %v8545 = vpop.f32.mrb[0].mxu0
  %v8546 = vadd.f32 0.0, %v8545
  %v8547 = vpop.f32.mrb[0].mxu0
  %8548 = vmatprep.mubr.bf16.mxu0 0
  %8549 = vmatmul.mubr.bf16.gmra.mrb[0].mxu0 %v8467
  %v8550 = vpop.f32.mrb[0].mxu0
  %v8551 = vadd.f32 0.0, %v8550
  %v8552 = vpop.f32.mrb[0].mxu0
  %v8553 = vpop.f32.mrb[0].mxu0
  %v8554 = vadd.f32 0.0, %v8553
  %v8555 = vpop.f32.mrb[0].mxu0
  %8556 = vmatprep.mubr.bf16.mxu0 0
  %8557 = vmatmul.mubr.bf16.gmra.mrb[0].mxu0 %v8470
  %v8558 = vpop.f32.mrb[0].mxu0
  %v8559 = vadd.f32 0.0, %v8558
  %v8560 = vpop.f32.mrb[0].mxu0
  %v8561 = vpop.f32.mrb[0].mxu0
  %v8562 = vpop.f32.mrb[0].mxu0
  %8563 = vdwg.mxu0
  %s8564 = scalar_lea.vmem %s45, 28
  %v8565 = vld [vmem:[%s8564] sm:$0xf]
  %v8566 = vld [vmem:[%s8564 + $0x4] sm:$0xf]
  %v8567 = vld [vmem:[%s8564 + $0x8] sm:$0xf]
  %v8568 = vld [vmem:[%s8564 + $0xc] sm:$0xf]
  %v8569 = vld [vmem:[%s8564 + $0x10] sm:$0xf]
  %v8570 = vld [vmem:[%s8564 + $0x14] sm:$0xf]
  %v8571 = vld [vmem:[%s8564 + $0x18] sm:$0x7]
  %v8579 = vunpack.c.l.b16 %v8565
  %v8580 = vunpack.c.l.b16 %v8566
  %v8581 = vunpack.c.l.b16 %v8567
  %v8582 = vunpack.c.l.b16 %v8568
  %v8583 = vunpack.c.l.b16 %v8569
  %v8584 = vunpack.c.l.b16 %v8570
  %v8585 = vunpack.c.l.b16 %v8571
  %v8586 = vpack.c.b16 %v8580, %v8579
  %v8587 = vpack.c.b16 %v8582, %v8581
  %v8588 = vpack.c.b16 %v8584, %v8583
  %v8589 = vpack.c.b16 %v8585, %v8585
  %v8594 = vsel %vm8472, %v8589, 0
  %8596 = vmatprep.subr.bf16.mxu0 0
  %8597 = vmatpush1.bf16.msra.mxu0 %v8586
  %8598 = vmatprep.subr.bf16.mxu0 0
  %8599 = vmatpush1.bf16.msra.mxu0 %v8587
  %8600 = vmatprep.subr.bf16.mxu0 0
  %8601 = vmatpush1.bf16.msra.mxu0 %v8588
  %8602 = vmatprep.subr.bf16.mxu0 0
  %8603 = vmatpush1.bf16.msra.mxu0 %v8594
  %8604 = vmatprep.subr.bf16.mxu0 0
  %8605 = vmatpush1.bf16.msra.mxu0 0
  %8606 = vmatprep.subr.bf16.mxu0 0
  %8607 = vmatpush1.bf16.msra.mxu0 0
  %8608 = vmatprep.subr.bf16.mxu0 0
  %8609 = vmatpush1.bf16.msra.mxu0 0
  %8610 = vmatprep.subr.bf16.mxu0 0
  %8611 = vmatpush1.bf16.msra.mxu0 0
  %8612 = vmatprep.subr.bf16.mxu0 0
  %8613 = vmatpush1.bf16.msra.mxu0 0
  %8614 = vmatprep.subr.bf16.mxu0 0
  %8615 = vmatpush1.bf16.msra.mxu0 0
  %8616 = vmatprep.subr.bf16.mxu0 0
  %8617 = vmatpush1.bf16.msra.mxu0 0
  %8618 = vmatprep.subr.bf16.mxu0 0
  %8619 = vmatpush1.bf16.msra.mxu0 0
  %8620 = vmatprep.subr.bf16.mxu0 0
  %8621 = vmatpush1.bf16.msra.mxu0 0
  %8622 = vmatprep.subr.bf16.mxu0 0
  %8623 = vmatpush1.bf16.msra.mxu0 0
  %8624 = vmatprep.subr.bf16.mxu0 0
  %8625 = vmatpush1.bf16.msra.mxu0 0
  %8626 = vmatprep.subr.bf16.mxu0 0
  %8627 = vmatpush1.bf16.msra.mxu0 0
  %8628 = vmatprep.mubr.bf16.mxu0 0
  %8629 = vmatmul.mubr.bf16.gmra.mrb[0].mxu0 %v8452
  %v8630 = vpop.f32.mrb[0].mxu0
  %v8631 = vadd.f32 0.0, %v8630
  %v8632 = vpop.f32.mrb[0].mxu0
  %v8633 = vpop.f32.mrb[0].mxu0
  %v8634 = vadd.f32 0.0, %v8633
  %v8635 = vpop.f32.mrb[0].mxu0
  %8636 = vmatprep.mubr.bf16.mxu0 0
  %8637 = vmatmul.mubr.bf16.gmra.mrb[0].mxu0 %v8455
  %v8638 = vpop.f32.mrb[0].mxu0
  %v8639 = vadd.f32 0.0, %v8638
  %v8640 = vpop.f32.mrb[0].mxu0
  %v8641 = vpop.f32.mrb[0].mxu0
  %v8642 = vadd.f32 0.0, %v8641
  %v8643 = vpop.f32.mrb[0].mxu0
  %8644 = vmatprep.mubr.bf16.mxu0 0
  %8645 = vmatmul.mubr.bf16.gmra.mrb[0].mxu0 %v8458
  %v8646 = vpop.f32.mrb[0].mxu0
  %v8647 = vadd.f32 0.0, %v8646
  %v8648 = vpop.f32.mrb[0].mxu0
  %v8649 = vpop.f32.mrb[0].mxu0
  %v8650 = vadd.f32 0.0, %v8649
  %v8651 = vpop.f32.mrb[0].mxu0
  %8652 = vmatprep.mubr.bf16.mxu0 0
  %8653 = vmatmul.mubr.bf16.gmra.mrb[0].mxu0 %v8461
  %v8654 = vpop.f32.mrb[0].mxu0
  %v8655 = vadd.f32 0.0, %v8654
  %v8656 = vpop.f32.mrb[0].mxu0
  %v8657 = vpop.f32.mrb[0].mxu0
  %v8658 = vadd.f32 0.0, %v8657
  %v8659 = vpop.f32.mrb[0].mxu0
  %8660 = vmatprep.mubr.bf16.mxu0 0
  %8661 = vmatmul.mubr.bf16.gmra.mrb[0].mxu0 %v8464
  %v8662 = vpop.f32.mrb[0].mxu0
  %v8663 = vadd.f32 0.0, %v8662
  %v8664 = vpop.f32.mrb[0].mxu0
  %v8665 = vpop.f32.mrb[0].mxu0
  %v8666 = vadd.f32 0.0, %v8665
  %v8667 = vpop.f32.mrb[0].mxu0
  %8668 = vmatprep.mubr.bf16.mxu0 0
  %8669 = vmatmul.mubr.bf16.gmra.mrb[0].mxu0 %v8467
  %v8670 = vpop.f32.mrb[0].mxu0
  %v8671 = vadd.f32 0.0, %v8670
  %v8672 = vpop.f32.mrb[0].mxu0
  %v8673 = vpop.f32.mrb[0].mxu0
  %v8674 = vadd.f32 0.0, %v8673
  %v8675 = vpop.f32.mrb[0].mxu0
  %8676 = vmatprep.mubr.bf16.mxu0 0
  %8677 = vmatmul.mubr.bf16.gmra.mrb[0].mxu0 %v8470
  %v8678 = vpop.f32.mrb[0].mxu0
  %v8679 = vadd.f32 0.0, %v8678
  %v8680 = vpop.f32.mrb[0].mxu0
  %v8681 = vpop.f32.mrb[0].mxu0
  %v8682 = vpop.f32.mrb[0].mxu0
  %8683 = vdwg.mxu0
  %s8684 = scalar_lea.vmem %s45, 56
  %v8685 = vld [vmem:[%s8684] sm:$0xf]
  %v8686 = vld [vmem:[%s8684 + $0x4] sm:$0xf]
  %v8687 = vld [vmem:[%s8684 + $0x8] sm:$0xf]
  %v8688 = vld [vmem:[%s8684 + $0xc] sm:$0xf]
  %v8689 = vld [vmem:[%s8684 + $0x10] sm:$0xf]
  %v8690 = vld [vmem:[%s8684 + $0x14] sm:$0xf]
  %v8691 = vld [vmem:[%s8684 + $0x18] sm:$0x7]
  %v8699 = vunpack.c.l.b16 %v8685
  %v8700 = vunpack.c.l.b16 %v8686
  %v8701 = vunpack.c.l.b16 %v8687
  %v8702 = vunpack.c.l.b16 %v8688
  %v8703 = vunpack.c.l.b16 %v8689
  %v8704 = vunpack.c.l.b16 %v8690
  %v8705 = vunpack.c.l.b16 %v8691
  %v8706 = vpack.c.b16 %v8700, %v8699
  %v8707 = vpack.c.b16 %v8702, %v8701
  %v8708 = vpack.c.b16 %v8704, %v8703
  %v8709 = vpack.c.b16 %v8705, %v8705
  %v8714 = vsel %vm8472, %v8709, 0
  %8716 = vmatprep.subr.bf16.mxu0 0
  %8717 = vmatpush1.bf16.msra.mxu0 %v8706
  %8718 = vmatprep.subr.bf16.mxu0 0
  %8719 = vmatpush1.bf16.msra.mxu0 %v8707
  %8720 = vmatprep.subr.bf16.mxu0 0
  %8721 = vmatpush1.bf16.msra.mxu0 %v8708
  %8722 = vmatprep.subr.bf16.mxu0 0
  %8723 = vmatpush1.bf16.msra.mxu0 %v8714
  %8724 = vmatprep.subr.bf16.mxu0 0
  %8725 = vmatpush1.bf16.msra.mxu0 0
  %8726 = vmatprep.subr.bf16.mxu0 0
  %8727 = vmatpush1.bf16.msra.mxu0 0
  %8728 = vmatprep.subr.bf16.mxu0 0
  %8729 = vmatpush1.bf16.msra.mxu0 0
  %8730 = vmatprep.subr.bf16.mxu0 0
  %8731 = vmatpush1.bf16.msra.mxu0 0
  %8732 = vmatprep.subr.bf16.mxu0 0
  %8733 = vmatpush1.bf16.msra.mxu0 0
  %8734 = vmatprep.subr.bf16.mxu0 0
  %8735 = vmatpush1.bf16.msra.mxu0 0
  %8736 = vmatprep.subr.bf16.mxu0 0
  %8737 = vmatpush1.bf16.msra.mxu0 0
  %8738 = vmatprep.subr.bf16.mxu0 0
  %8739 = vmatpush1.bf16.msra.mxu0 0
  %8740 = vmatprep.subr.bf16.mxu0 0
  %8741 = vmatpush1.bf16.msra.mxu0 0
  %8742 = vmatprep.subr.bf16.mxu0 0
  %8743 = vmatpush1.bf16.msra.mxu0 0
  %8744 = vmatprep.subr.bf16.mxu0 0
  %8745 = vmatpush1.bf16.msra.mxu0 0
  %8746 = vmatprep.subr.bf16.mxu0 0
  %8747 = vmatpush1.bf16.msra.mxu0 0
  %8748 = vmatprep.mubr.bf16.mxu0 0
  %8749 = vmatmul.mubr.bf16.gmra.mrb[0].mxu0 %v8452
  %v8750 = vpop.f32.mrb[0].mxu0
  %v8751 = vadd.f32 0.0, %v8750
  %v8752 = vpop.f32.mrb[0].mxu0
  %v8753 = vpop.f32.mrb[0].mxu0
  %v8754 = vadd.f32 0.0, %v8753
  %v8755 = vpop.f32.mrb[0].mxu0
  %8756 = vmatprep.mubr.bf16.mxu0 0
  %8757 = vmatmul.mubr.bf16.gmra.mrb[0].mxu0 %v8455
  %v8758 = vpop.f32.mrb[0].mxu0
  %v8759 = vadd.f32 0.0, %v8758
  %v8760 = vpop.f32.mrb[0].mxu0
  %v8761 = vpop.f32.mrb[0].mxu0
  %v8762 = vadd.f32 0.0, %v8761
  %v8763 = vpop.f32.mrb[0].mxu0
  %8764 = vmatprep.mubr.bf16.mxu0 0
  %8765 = vmatmul.mubr.bf16.gmra.mrb[0].mxu0 %v8458
  %v8766 = vpop.f32.mrb[0].mxu0
  %v8767 = vadd.f32 0.0, %v8766
  %v8768 = vpop.f32.mrb[0].mxu0
  %v8769 = vpop.f32.mrb[0].mxu0
  %v8770 = vadd.f32 0.0, %v8769
  %v8771 = vpop.f32.mrb[0].mxu0
  %8772 = vmatprep.mubr.bf16.mxu0 0
  %8773 = vmatmul.mubr.bf16.gmra.mrb[0].mxu0 %v8461
  %v8774 = vpop.f32.mrb[0].mxu0
  %v8775 = vadd.f32 0.0, %v8774
  %v8776 = vpop.f32.mrb[0].mxu0
  %v8777 = vpop.f32.mrb[0].mxu0
  %v8778 = vadd.f32 0.0, %v8777
  %v8779 = vpop.f32.mrb[0].mxu0
  %8780 = vmatprep.mubr.bf16.mxu0 0
  %8781 = vmatmul.mubr.bf16.gmra.mrb[0].mxu0 %v8464
  %v8782 = vpop.f32.mrb[0].mxu0
  %v8783 = vadd.f32 0.0, %v8782
  %v8784 = vpop.f32.mrb[0].mxu0
  %v8785 = vpop.f32.mrb[0].mxu0
  %v8786 = vadd.f32 0.0, %v8785
  %v8787 = vpop.f32.mrb[0].mxu0
  %8788 = vmatprep.mubr.bf16.mxu0 0
  %8789 = vmatmul.mubr.bf16.gmra.mrb[0].mxu0 %v8467
  %v8790 = vpop.f32.mrb[0].mxu0
  %v8791 = vadd.f32 0.0, %v8790
  %v8792 = vpop.f32.mrb[0].mxu0
  %v8793 = vpop.f32.mrb[0].mxu0
  %v8794 = vadd.f32 0.0, %v8793
  %v8795 = vpop.f32.mrb[0].mxu0
  %8796 = vmatprep.mubr.bf16.mxu0 0
  %8797 = vmatmul.mubr.bf16.gmra.mrb[0].mxu0 %v8470
  %v8798 = vpop.f32.mrb[0].mxu0
  %v8799 = vadd.f32 0.0, %v8798
  %v8800 = vpop.f32.mrb[0].mxu0
  %v8801 = vpop.f32.mrb[0].mxu0
  %v8802 = vpop.f32.mrb[0].mxu0
  %8803 = vdwg.mxu0
  %v8804 = vld [vmem:[%s47] sm:$0xff]
  %v8805 = vld [vmem:[%s47 + $0x8] sm:$0xf]
  %v8806 = vld [vmem:[%s47 + $0xc] sm:$0xff]
  %v8807 = vld [vmem:[%s47 + $0x14] sm:$0xf]
  %v8808 = vld [vmem:[%s47 + $0x18] sm:$0xff]
  %v8809 = vld [vmem:[%s47 + $0x20] sm:$0xf]
  %v8810 = vld [vmem:[%s47 + $0x24] sm:$0xff]
  %v8811 = vld [vmem:[%s47 + $0x2c] sm:$0xf]
  %v8812 = vld [vmem:[%s47 + $0x30] sm:$0xff]
  %v8813 = vld [vmem:[%s47 + $0x38] sm:$0xf]
  %v8814 = vld [vmem:[%s47 + $0x3c] sm:$0xff]
  %v8815 = vld [vmem:[%s47 + $0x44] sm:$0xf]
  %v8816 = vld [vmem:[%s47 + $0x48] sm:$0xff]
  %v8817 = vld [vmem:[%s47 + $0x50] sm:$0xf]
  %v8818 = vpack.c.bf16 %v8514, %v8511
  %v8819 = vpack.c.bf16 %v8522, %v8519
  %v8820 = vpack.c.bf16 %v8530, %v8527
  %v8821 = vpack.c.bf16 %v8538, %v8535
  %v8822 = vpack.c.bf16 %v8546, %v8543
  %v8823 = vpack.c.bf16 %v8554, %v8551
  %v8824 = vpack.c.bf16 %v8631, %v8559
  %v8825 = vpack.c.bf16 %v8639, %v8634
  %v8826 = vpack.c.bf16 %v8647, %v8642
  %v8827 = vpack.c.bf16 %v8655, %v8650
  %v8828 = vpack.c.bf16 %v8663, %v8658
  %v8829 = vpack.c.bf16 %v8671, %v8666
  %v8830 = vpack.c.bf16 %v8679, %v8674
  %v8831 = vpack.c.bf16 %v8754, %v8751
  %v8832 = vpack.c.bf16 %v8762, %v8759
  %v8833 = vpack.c.bf16 %v8770, %v8767
  %v8834 = vpack.c.bf16 %v8778, %v8775
  %v8835 = vpack.c.bf16 %v8786, %v8783
  %v8836 = vpack.c.bf16 %v8794, %v8791
  %v8837 = vpack.c.bf16 %v8799, %v8799
  %v8838 = vld [vmem:[%s49] sm:$0xff]
  %v8839 = vld [vmem:[%s49 + $0x8] sm:$0xff]
  %v8840 = vld [vmem:[%s49 + $0x10] sm:$0xff]
  %v8841 = vld [vmem:[%s49 + $0x18] sm:$0xff]
  %v8842 = vld [vmem:[%s49 + $0x20] sm:$0xff]
  %v8843 = vld [vmem:[%s49 + $0x28] sm:$0xff]
  %v8844 = vld [vmem:[%s49 + $0x30] sm:$0xff]
  %8846 = vset.pattern.permute.xlu0 0
  %8847 = vperm.xlu0 %8846, %v8838
  %v8848 = vpop.permute.xlu0 %8847
  %8851 = vset.pattern.permute.xlu0 0
  %8852 = vperm.xlu0 %8851, %v8839
  %v8853 = vpop.permute.xlu0 %8852
  %8856 = vset.pattern.permute.xlu0 0
  %8857 = vperm.xlu0 %8856, %v8840
  %v8858 = vpop.permute.xlu0 %8857
  %8861 = vset.pattern.permute.xlu0 0
  %8862 = vperm.xlu0 %8861, %v8841
  %v8863 = vpop.permute.xlu0 %8862
  %8866 = vset.pattern.permute.xlu0 0
  %8867 = vperm.xlu0 %8866, %v8842
  %v8868 = vpop.permute.xlu0 %8867
  %8871 = vset.pattern.permute.xlu0 0
  %8872 = vperm.xlu0 %8871, %v8843
  %v8873 = vpop.permute.xlu0 %8872
  %8876 = vset.pattern.permute.xlu0 0
  %8877 = vperm.xlu0 %8876, %v8844
  %v8878 = vpop.permute.xlu0 %8877
  %v8894 = vunpack.c.l.b16 %v8804
  %v8895 = vunpack.c.h.b16 %v8804
  %v8896 = vunpack.c.l.b16 %v8805
  %v8897 = vunpack.c.l.b16 %v8806
  %v8898 = vunpack.c.h.b16 %v8806
  %v8899 = vunpack.c.l.b16 %v8807
  %v8900 = vunpack.c.l.b16 %v8808
  %v8901 = vunpack.c.h.b16 %v8808
  %v8902 = vunpack.c.l.b16 %v8809
  %v8903 = vunpack.c.l.b16 %v8810
  %v8904 = vunpack.c.h.b16 %v8810
  %v8905 = vunpack.c.l.b16 %v8811
  %v8906 = vunpack.c.l.b16 %v8812
  %v8907 = vunpack.c.h.b16 %v8812
  %v8908 = vunpack.c.l.b16 %v8813
  %v8909 = vunpack.c.l.b16 %v8814
  %v8910 = vunpack.c.h.b16 %v8814
  %v8911 = vunpack.c.l.b16 %v8815
  %v8912 = vunpack.c.l.b16 %v8816
  %v8913 = vunpack.c.h.b16 %v8816
  %v8914 = vunpack.c.l.b16 %v8817
  %v8915 = vpack.c.b16 %v8897, %v8894
  %v8916 = vpack.c.b16 %v8898, %v8895
  %v8917 = vpack.c.b16 %v8899, %v8896
  %v8918 = vpack.c.b16 %v8903, %v8900
  %v8919 = vpack.c.b16 %v8904, %v8901
  %v8920 = vpack.c.b16 %v8905, %v8902
  %v8921 = vpack.c.b16 %v8909, %v8906
  %v8922 = vpack.c.b16 %v8910, %v8907
  %v8923 = vpack.c.b16 %v8911, %v8908
  %v8924 = vpack.c.b16 %v8912, %v8912
  %v8925 = vpack.c.b16 %v8913, %v8913
  %v8926 = vpack.c.b16 %v8914, %v8914
  %vm8935 = vcmask 457728
  %v8937 = vsel %vm8935, %v8917, 0
  %v8940 = vsel %vm8935, %v8920, 0
  %v8943 = vsel %vm8935, %v8923, 0
  %v8946 = vsel %vm8935, %v8926, 0
  %v8949 = vsel %vm2004, %v8837, 0
  %8951 = vmatprep.subr.bf16.mxu0 0
  %8952 = vmatpush1.bf16.msra.mxu0 %v8818
  %8953 = vmatprep.subr.bf16.mxu0 0
  %8954 = vmatpush1.bf16.msra.mxu0 %v8819
  %8955 = vmatprep.subr.bf16.mxu0 0
  %8956 = vmatpush1.bf16.msra.mxu0 %v8820
  %8957 = vmatprep.subr.bf16.mxu0 0
  %8958 = vmatpush1.bf16.msra.mxu0 %v8821
  %8959 = vmatprep.subr.bf16.mxu0 0
  %8960 = vmatpush1.bf16.msra.mxu0 %v8822
  %8961 = vmatprep.subr.bf16.mxu0 0
  %8962 = vmatpush1.bf16.msra.mxu0 %v8823
  %8963 = vmatprep.subr.bf16.mxu0 0
  %8964 = vmatpush1.bf16.msra.mxu0 %v8824
  %8965 = vmatprep.subr.bf16.mxu0 0
  %8966 = vmatpush1.bf16.msra.mxu0 %v8825
  %8967 = vmatprep.subr.bf16.mxu0 0
  %8968 = vmatpush1.bf16.msra.mxu0 %v8826
  %8969 = vmatprep.subr.bf16.mxu0 0
  %8970 = vmatpush1.bf16.msra.mxu0 %v8827
  %8971 = vmatprep.subr.bf16.mxu0 0
  %8972 = vmatpush1.bf16.msra.mxu0 %v8828
  %8973 = vmatprep.subr.bf16.mxu0 0
  %8974 = vmatpush1.bf16.msra.mxu0 %v8829
  %8975 = vmatprep.subr.bf16.mxu0 0
  %8976 = vmatpush1.bf16.msra.mxu0 %v8830
  %8977 = vmatprep.subr.bf16.mxu0 0
  %8978 = vmatpush1.bf16.msra.mxu0 %v8831
  %8979 = vmatprep.subr.bf16.mxu0 0
  %8980 = vmatpush1.bf16.msra.mxu0 %v8832
  %8981 = vmatprep.subr.bf16.mxu0 0
  %8982 = vmatpush1.bf16.msra.mxu0 %v8833
  %8983 = vmatprep.mubr.bf16.mxu0 %v8916
  %8984 = vmatmul.mubr.bf16.gmra.mrb[0].mxu0 %v8915
  %v8985 = vpop.f32.mrb[0].mxu0
  %v8986 = vadd.f32 %v8848, %v8985
  %v8987 = vpop.f32.mrb[0].mxu0
  %v8988 = vpop.f32.mrb[0].mxu0
  %v8989 = vadd.f32 %v8853, %v8988
  %v8990 = vpop.f32.mrb[0].mxu0
  %8991 = vmatprep.mubr.bf16.mxu0 %v8919
  %8992 = vmatmul.mubr.bf16.gmra.mrb[0].mxu0 %v8918
  %v8993 = vpop.f32.mrb[0].mxu0
  %v8994 = vadd.f32 %v8858, %v8993
  %v8995 = vpop.f32.mrb[0].mxu0
  %v8996 = vpop.f32.mrb[0].mxu0
  %v8997 = vadd.f32 %v8863, %v8996
  %v8998 = vpop.f32.mrb[0].mxu0
  %8999 = vmatprep.mubr.bf16.mxu0 %v8922
  %9000 = vmatmul.mubr.bf16.gmra.mrb[0].mxu0 %v8921
  %v9001 = vpop.f32.mrb[0].mxu0
  %v9002 = vadd.f32 %v8868, %v9001
  %v9003 = vpop.f32.mrb[0].mxu0
  %v9004 = vpop.f32.mrb[0].mxu0
  %v9005 = vadd.f32 %v8873, %v9004
  %v9006 = vpop.f32.mrb[0].mxu0
  %9007 = vmatprep.mubr.bf16.mxu0 %v8925
  %9008 = vmatmul.mubr.bf16.gmra.mrb[0].mxu0 %v8924
  %v9009 = vpop.f32.mrb[0].mxu0
  %v9010 = vadd.f32 %v8878, %v9009
  %v9011 = vpop.f32.mrb[0].mxu0
  %v9012 = vpop.f32.mrb[0].mxu0
  %v9013 = vpop.f32.mrb[0].mxu0
  %9014 = vdwg.mxu0
  %9015 = vmatprep.subr.bf16.mxu0 0
  %9016 = vmatpush1.bf16.msra.mxu0 %v8834
  %9017 = vmatprep.subr.bf16.mxu0 0
  %9018 = vmatpush1.bf16.msra.mxu0 %v8835
  %9019 = vmatprep.subr.bf16.mxu0 0
  %9020 = vmatpush1.bf16.msra.mxu0 %v8836
  %9021 = vmatprep.subr.bf16.mxu0 0
  %9022 = vmatpush1.bf16.msra.mxu0 %v8949
  %9023 = vmatprep.subr.bf16.mxu0 0
  %9024 = vmatpush1.bf16.msra.mxu0 0
  %9025 = vmatprep.subr.bf16.mxu0 0
  %9026 = vmatpush1.bf16.msra.mxu0 0
  %9027 = vmatprep.subr.bf16.mxu0 0
  %9028 = vmatpush1.bf16.msra.mxu0 0
  %9029 = vmatprep.subr.bf16.mxu0 0
  %9030 = vmatpush1.bf16.msra.mxu0 0
  %9031 = vmatprep.subr.bf16.mxu0 0
  %9032 = vmatpush1.bf16.msra.mxu0 0
  %9033 = vmatprep.subr.bf16.mxu0 0
  %9034 = vmatpush1.bf16.msra.mxu0 0
  %9035 = vmatprep.subr.bf16.mxu0 0
  %9036 = vmatpush1.bf16.msra.mxu0 0
  %9037 = vmatprep.subr.bf16.mxu0 0
  %9038 = vmatpush1.bf16.msra.mxu0 0
  %9039 = vmatprep.subr.bf16.mxu0 0
  %9040 = vmatpush1.bf16.msra.mxu0 0
  %9041 = vmatprep.subr.bf16.mxu0 0
  %9042 = vmatpush1.bf16.msra.mxu0 0
  %9043 = vmatprep.subr.bf16.mxu0 0
  %9044 = vmatpush1.bf16.msra.mxu0 0
  %9045 = vmatprep.subr.bf16.mxu0 0
  %9046 = vmatpush1.bf16.msra.mxu0 0
  %9047 = vmatprep.mubr.bf16.mxu0 0
  %9048 = vmatmul.mubr.bf16.gmra.mrb[0].mxu0 %v8937
  %v9049 = vpop.f32.mrb[0].mxu0
  %v9050 = vadd.f32 %v8986, %v9049
  %v9051 = vpop.f32.mrb[0].mxu0
  %v9052 = vpop.f32.mrb[0].mxu0
  %v9053 = vadd.f32 %v8989, %v9052
  %v9054 = vpop.f32.mrb[0].mxu0
  %9055 = vmatprep.mubr.bf16.mxu0 0
  %9056 = vmatmul.mubr.bf16.gmra.mrb[0].mxu0 %v8940
  %v9057 = vpop.f32.mrb[0].mxu0
  %v9058 = vadd.f32 %v8994, %v9057
  %v9059 = vpop.f32.mrb[0].mxu0
  %v9060 = vpop.f32.mrb[0].mxu0
  %v9061 = vadd.f32 %v8997, %v9060
  %v9062 = vpop.f32.mrb[0].mxu0
  %9063 = vmatprep.mubr.bf16.mxu0 0
  %9064 = vmatmul.mubr.bf16.gmra.mrb[0].mxu0 %v8943
  %v9065 = vpop.f32.mrb[0].mxu0
  %v9066 = vadd.f32 %v9002, %v9065
  %v9067 = vpop.f32.mrb[0].mxu0
  %v9068 = vpop.f32.mrb[0].mxu0
  %v9069 = vadd.f32 %v9005, %v9068
  %v9070 = vpop.f32.mrb[0].mxu0
  %9071 = vmatprep.mubr.bf16.mxu0 0
  %9072 = vmatmul.mubr.bf16.gmra.mrb[0].mxu0 %v8946
  %v9073 = vpop.f32.mrb[0].mxu0
  %v9074 = vadd.f32 %v9010, %v9073
  %v9075 = vpop.f32.mrb[0].mxu0
  %v9076 = vpop.f32.mrb[0].mxu0
  %v9077 = vpop.f32.mrb[0].mxu0
  %9078 = vdwg.mxu0
  %v9079 = vmax.f32 %v9050, 0.0
  %v9080 = vmax.f32 %v9053, 0.0
  %v9081 = vmax.f32 %v9058, 0.0
  %v9082 = vmax.f32 %v9061, 0.0
  %v9083 = vmax.f32 %v9066, 0.0
  %v9084 = vmax.f32 %v9069, 0.0
  %v9085 = vmax.f32 %v9074, 0.0
  %v9086 = vmul.f32 %v9079, %v9079
  %v9087 = vmul.f32 %v9080, %v9080
  %v9088 = vmul.f32 %v9081, %v9081
  %v9089 = vmul.f32 %v9082, %v9082
  %v9090 = vmul.f32 %v9083, %v9083
  %v9091 = vmul.f32 %v9084, %v9084
  %v9092 = vmul.f32 %v9085, %v9085
  %vm9093 = vcmask 343040
  %v9094 = vsel %vm9093, %v9079, 0.0
  %9095 = vadd.xlane.f32.xlu0 %v9094
  %v9096 = vpop.xlane.xlu0 %9095
  %v9097 = vsel %vm9093, %v9080, 0.0
  %9098 = vadd.xlane.f32.xlu0 %v9097
  %v9099 = vpop.xlane.xlu0 %9098
  %v9100 = vsel %vm9093, %v9081, 0.0
  %9101 = vadd.xlane.f32.xlu0 %v9100
  %v9102 = vpop.xlane.xlu0 %9101
  %v9103 = vsel %vm9093, %v9082, 0.0
  %9104 = vadd.xlane.f32.xlu0 %v9103
  %v9105 = vpop.xlane.xlu0 %9104
  %v9106 = vsel %vm9093, %v9083, 0.0
  %9107 = vadd.xlane.f32.xlu0 %v9106
  %v9108 = vpop.xlane.xlu0 %9107
  %v9109 = vsel %vm9093, %v9084, 0.0
  %9110 = vadd.xlane.f32.xlu0 %v9109
  %v9111 = vpop.xlane.xlu0 %9110
  %v9112 = vsel %vm9093, %v9085, 0.0
  %9113 = vadd.xlane.f32.xlu0 %v9112
  %v9114 = vpop.xlane.xlu0 %9113
  %v9115 = vsel %vm9093, %v9086, 0.0
  %9116 = vadd.xlane.f32.xlu0 %v9115
  %v9117 = vpop.xlane.xlu0 %9116
  %v9118 = vsel %vm9093, %v9087, 0.0
  %9119 = vadd.xlane.f32.xlu0 %v9118
  %v9120 = vpop.xlane.xlu0 %9119
  %v9121 = vsel %vm9093, %v9088, 0.0
  %9122 = vadd.xlane.f32.xlu0 %v9121
  %v9123 = vpop.xlane.xlu0 %9122
  %v9124 = vsel %vm9093, %v9089, 0.0
  %9125 = vadd.xlane.f32.xlu0 %v9124
  %v9126 = vpop.xlane.xlu0 %9125
  %v9127 = vsel %vm9093, %v9090, 0.0
  %9128 = vadd.xlane.f32.xlu0 %v9127
  %v9129 = vpop.xlane.xlu0 %9128
  %v9130 = vsel %vm9093, %v9091, 0.0
  %9131 = vadd.xlane.f32.xlu0 %v9130
  %v9132 = vpop.xlane.xlu0 %9131
  %v9133 = vsel %vm9093, %v9092, 0.0
  %9134 = vadd.xlane.f32.xlu0 %v9133
  %v9135 = vpop.xlane.xlu0 %9134
  %v9136 = vld [vmem:[%s51] sm:$0xff]
  %v9137 = vld [vmem:[%s51 + $0x8] sm:$0xff]
  %vm9138 = vcmask 916480
  %v9140 = vsel %vm9138, %v9136, 0
  %v9143 = vsel %vm9138, %v9137, 0
  %9145 = vmatprep.subr.mxu0 0.0
  %9146 = vmatpush1.msra.mxu0 %v9096
  %9147 = vmatprep.subr.mxu0 0.0
  %9148 = vmatpush1.msra.mxu0 %v9099
  %9149 = vmatprep.subr.mxu0 0.0
  %9150 = vmatpush1.msra.mxu0 %v9102
  %9151 = vmatprep.subr.mxu0 0.0
  %9152 = vmatpush1.msra.mxu0 %v9105
  %9153 = vmatprep.subr.mxu0 0.0
  %9154 = vmatpush1.msra.mxu0 %v9108
  %9155 = vmatprep.subr.mxu0 0.0
  %9156 = vmatpush1.msra.mxu0 %v9111
  %9157 = vmatprep.subr.mxu0 0.0
  %9158 = vmatpush1.msra.mxu0 %v9114
  %9159 = vmatprep.subr.mxu0 0.0
  %9160 = vmatpush1.msra.mxu0 %v9117
  %9161 = vmatprep.subr.mxu0 0.0
  %9162 = vmatpush1.msra.mxu0 %v9120
  %9163 = vmatprep.subr.mxu0 0.0
  %9164 = vmatpush1.msra.mxu0 %v9123
  %9165 = vmatprep.subr.mxu0 0.0
  %9166 = vmatpush1.msra.mxu0 %v9126
  %9167 = vmatprep.subr.mxu0 0.0
  %9168 = vmatpush1.msra.mxu0 %v9129
  %9169 = vmatprep.subr.mxu0 0.0
  %9170 = vmatpush1.msra.mxu0 %v9132
  %9171 = vmatprep.subr.mxu0 0.0
  %9172 = vmatpush1.msra.mxu0 %v9135
  %9173 = vmatprep.subr.mxu0 0.0
  %9174 = vmatpush1.msra.mxu0 0.0
  %9175 = vmatprep.subr.mxu0 0.0
  %9176 = vmatpush1.msra.mxu0 0.0
  %9177 = vmatprep.subr.mxu0 0.0
  %9178 = vmatpush1.msra.mxu0 0.0
  %9179 = vmatprep.subr.mxu0 0.0
  %9180 = vmatpush1.msra.mxu0 0.0
  %9181 = vmatprep.subr.mxu0 0.0
  %9182 = vmatpush1.msra.mxu0 0.0
  %9183 = vmatprep.subr.mxu0 0.0
  %9184 = vmatpush1.msra.mxu0 0.0
  %9185 = vmatprep.subr.mxu0 0.0
  %9186 = vmatpush1.msra.mxu0 0.0
  %9187 = vmatprep.subr.mxu0 0.0
  %9188 = vmatpush1.msra.mxu0 0.0
  %9189 = vmatprep.subr.mxu0 0.0
  %9190 = vmatpush1.msra.mxu0 0.0
  %9191 = vmatprep.subr.mxu0 0.0
  %9192 = vmatpush1.msra.mxu0 0.0
  %9193 = vmatprep.subr.mxu0 0.0
  %9194 = vmatpush1.msra.mxu0 0.0
  %9195 = vmatprep.subr.mxu0 0.0
  %9196 = vmatpush1.msra.mxu0 0.0
  %9197 = vmatprep.subr.mxu0 0.0
  %9198 = vmatpush1.msra.mxu0 0.0
  %9199 = vmatprep.subr.mxu0 0.0
  %9200 = vmatpush1.msra.mxu0 0.0
  %9201 = vmatprep.subr.mxu0 0.0
  %9202 = vmatpush1.msra.mxu0 0.0
  %9203 = vmatprep.subr.mxu0 0.0
  %9204 = vmatpush1.msra.mxu0 0.0
  %9205 = vmatprep.subr.mxu0 0.0
  %9206 = vmatpush1.msra.mxu0 0.0
  %9207 = vmatprep.subr.mxu0 0.0
  %9208 = vmatpush1.msra.mxu0 0.0
  %9209 = vmatprep.mubr.f32.mxu0 0.0
  %9210 = vmatmul.mubr.f32.gmra.mrb[0].mxu0 %v9140
  %v9211 = vpop.f32.mrb[0].mxu0
  %v9212 = vadd.f32 0.0, %v9211
  %v9213 = vpop.f32.mrb[0].mxu0
  %9214 = vmatprep.mubr.f32.mxu0 0.0
  %9215 = vmatmul.mubr.f32.gmra.mrb[0].mxu0 %v9143
  %v9216 = vpop.f32.mrb[0].mxu0
  %v9217 = vadd.f32 0.0, %v9216
  %v9218 = vpop.f32.mrb[0].mxu0
  %9219 = vdwg.mxu0
  %v9220 = vmul.f32 %v9212, 0.0034013605
  %v9221 = vmul.f32 %v9217, 0.0034013605
  %v9222 = vmul.f32 %v9220, %v9220
  %v9223 = vsub.f32 %v9221, %v9222
  %v9224 = vmax.f32 %v9223, 0.0
  %v9225 = vld [vmem:[%s55] sm:$0xff]
  %v9226 = vadd.f32 %v9224, 1e-05
  %v9227 = vrsqrt.pop %v9226
  %v9228 = vmul.f32 %v9225, %v9227
  %v9229 = vld [vmem:[%s57] sm:$0xff]
  %v9230 = vmul.f32 %v9220, %v9228
  %v9231 = vsub.f32 %v9229, %v9230
  %v9232 = vld [vmem:[%s53] sm:$0xff]
  %v9233 = vld [vmem:[%s53 + $0x8] sm:$0xff]
  %v9234 = vld [vmem:[%s53 + $0x10] sm:$0xff]
  %v9235 = vld [vmem:[%s53 + $0x18] sm:$0xff]
  %v9236 = vld [vmem:[%s53 + $0x20] sm:$0xff]
  %v9237 = vld [vmem:[%s53 + $0x28] sm:$0xff]
  %v9238 = vld [vmem:[%s53 + $0x30] sm:$0xff]
  %v9239 = vld [vmem:[%s53 + $0x38] sm:$0xff]
  %v9240 = vld [vmem:[%s53 + $0x40] sm:$0xff]
  %v9241 = vld [vmem:[%s53 + $0x48] sm:$0xff]
  %v9242 = vld [vmem:[%s53 + $0x50] sm:$0xff]
  %v9243 = vld [vmem:[%s53 + $0x58] sm:$0xff]
  %v9244 = vld [vmem:[%s53 + $0x60] sm:$0xff]
  %v9245 = vld [vmem:[%s53 + $0x68] sm:$0xff]
  %v9247 = vsel %vm3141, %v9232, 0
  %v9250 = vsel %vm3141, %v9233, 0
  %v9253 = vsel %vm3141, %v9234, 0
  %v9256 = vsel %vm3141, %v9235, 0
  %v9259 = vsel %vm3141, %v9236, 0
  %v9262 = vsel %vm3141, %v9237, 0
  %v9265 = vsel %vm3141, %v9238, 0
  %v9268 = vsel %vm3141, %v9239, 0
  %v9271 = vsel %vm3141, %v9240, 0
  %v9274 = vsel %vm3141, %v9241, 0
  %v9277 = vsel %vm3141, %v9242, 0
  %v9280 = vsel %vm3141, %v9243, 0
  %v9283 = vsel %vm3141, %v9244, 0
  %v9286 = vsel %vm3141, %v9245, 0
  %9288 = vmatprep.subr.mxu0 0.0
  %9289 = vmatpush1.msra.mxu0 %v9228
  %9290 = vmatprep.subr.mxu0 0.0
  %9291 = vmatpush1.msra.mxu0 %v9231
  %9292 = vmatprep.subr.mxu0 0.0
  %9293 = vmatpush1.msra.mxu0 0.0
  %9294 = vmatprep.subr.mxu0 0.0
  %9295 = vmatpush1.msra.mxu0 0.0
  %9296 = vmatprep.subr.mxu0 0.0
  %9297 = vmatpush1.msra.mxu0 0.0
  %9298 = vmatprep.subr.mxu0 0.0
  %9299 = vmatpush1.msra.mxu0 0.0
  %9300 = vmatprep.subr.mxu0 0.0
  %9301 = vmatpush1.msra.mxu0 0.0
  %9302 = vmatprep.subr.mxu0 0.0
  %9303 = vmatpush1.msra.mxu0 0.0
  %9304 = vmatprep.subr.mxu0 0.0
  %9305 = vmatpush1.msra.mxu0 0.0
  %9306 = vmatprep.subr.mxu0 0.0
  %9307 = vmatpush1.msra.mxu0 0.0
  %9308 = vmatprep.subr.mxu0 0.0
  %9309 = vmatpush1.msra.mxu0 0.0
  %9310 = vmatprep.subr.mxu0 0.0
  %9311 = vmatpush1.msra.mxu0 0.0
  %9312 = vmatprep.subr.mxu0 0.0
  %9313 = vmatpush1.msra.mxu0 0.0
  %9314 = vmatprep.subr.mxu0 0.0
  %9315 = vmatpush1.msra.mxu0 0.0
  %9316 = vmatprep.subr.mxu0 0.0
  %9317 = vmatpush1.msra.mxu0 0.0
  %9318 = vmatprep.subr.mxu0 0.0
  %9319 = vmatpush1.msra.mxu0 0.0
  %9320 = vmatprep.subr.mxu0 0.0
  %9321 = vmatpush1.msra.mxu0 0.0
  %9322 = vmatprep.subr.mxu0 0.0
  %9323 = vmatpush1.msra.mxu0 0.0
  %9324 = vmatprep.subr.mxu0 0.0
  %9325 = vmatpush1.msra.mxu0 0.0
  %9326 = vmatprep.subr.mxu0 0.0
  %9327 = vmatpush1.msra.mxu0 0.0
  %9328 = vmatprep.subr.mxu0 0.0
  %9329 = vmatpush1.msra.mxu0 0.0
  %9330 = vmatprep.subr.mxu0 0.0
  %9331 = vmatpush1.msra.mxu0 0.0
  %9332 = vmatprep.subr.mxu0 0.0
  %9333 = vmatpush1.msra.mxu0 0.0
  %9334 = vmatprep.subr.mxu0 0.0
  %9335 = vmatpush1.msra.mxu0 0.0
  %9336 = vmatprep.subr.mxu0 0.0
  %9337 = vmatpush1.msra.mxu0 0.0
  %9338 = vmatprep.subr.mxu0 0.0
  %9339 = vmatpush1.msra.mxu0 0.0
  %9340 = vmatprep.subr.mxu0 0.0
  %9341 = vmatpush1.msra.mxu0 0.0
  %9342 = vmatprep.subr.mxu0 0.0
  %9343 = vmatpush1.msra.mxu0 0.0
  %9344 = vmatprep.subr.mxu0 0.0
  %9345 = vmatpush1.msra.mxu0 0.0
  %9346 = vmatprep.subr.mxu0 0.0
  %9347 = vmatpush1.msra.mxu0 0.0
  %9348 = vmatprep.subr.mxu0 0.0
  %9349 = vmatpush1.msra.mxu0 0.0
  %9350 = vmatprep.subr.mxu0 0.0
  %9351 = vmatpush1.msra.mxu0 0.0
  %9352 = vmatprep.mubr.f32.mxu0 0.0
  %9353 = vmatmul.mubr.f32.gmra.mrb[0].mxu0 %v9247
  %v9354 = vpop.f32.mrb[0].mxu0
  %v9355 = vadd.f32 0.0, %v9354
  %v9356 = vpop.f32.mrb[0].mxu0
  %9357 = vmatprep.mubr.f32.mxu0 0.0
  %9358 = vmatmul.mubr.f32.gmra.mrb[0].mxu0 %v9250
  %v9359 = vpop.f32.mrb[0].mxu0
  %v9360 = vadd.f32 0.0, %v9359
  %v9361 = vpop.f32.mrb[0].mxu0
  %9362 = vmatprep.mubr.f32.mxu0 0.0
  %9363 = vmatmul.mubr.f32.gmra.mrb[0].mxu0 %v9253
  %v9364 = vpop.f32.mrb[0].mxu0
  %v9365 = vadd.f32 0.0, %v9364
  %v9366 = vpop.f32.mrb[0].mxu0
  %9367 = vmatprep.mubr.f32.mxu0 0.0
  %9368 = vmatmul.mubr.f32.gmra.mrb[0].mxu0 %v9256
  %v9369 = vpop.f32.mrb[0].mxu0
  %v9370 = vadd.f32 0.0, %v9369
  %v9371 = vpop.f32.mrb[0].mxu0
  %9372 = vmatprep.mubr.f32.mxu0 0.0
  %9373 = vmatmul.mubr.f32.gmra.mrb[0].mxu0 %v9259
  %v9374 = vpop.f32.mrb[0].mxu0
  %v9375 = vadd.f32 0.0, %v9374
  %v9376 = vpop.f32.mrb[0].mxu0
  %9377 = vmatprep.mubr.f32.mxu0 0.0
  %9378 = vmatmul.mubr.f32.gmra.mrb[0].mxu0 %v9262
  %v9379 = vpop.f32.mrb[0].mxu0
  %v9380 = vadd.f32 0.0, %v9379
  %v9381 = vpop.f32.mrb[0].mxu0
  %9382 = vmatprep.mubr.f32.mxu0 0.0
  %9383 = vmatmul.mubr.f32.gmra.mrb[0].mxu0 %v9265
  %v9384 = vpop.f32.mrb[0].mxu0
  %v9385 = vadd.f32 0.0, %v9384
  %v9386 = vpop.f32.mrb[0].mxu0
  %9387 = vmatprep.mubr.f32.mxu0 0.0
  %9388 = vmatmul.mubr.f32.gmra.mrb[0].mxu0 %v9268
  %v9389 = vpop.f32.mrb[0].mxu0
  %v9390 = vadd.f32 0.0, %v9389
  %v9391 = vpop.f32.mrb[0].mxu0
  %9392 = vmatprep.mubr.f32.mxu0 0.0
  %9393 = vmatmul.mubr.f32.gmra.mrb[0].mxu0 %v9271
  %v9394 = vpop.f32.mrb[0].mxu0
  %v9395 = vadd.f32 0.0, %v9394
  %v9396 = vpop.f32.mrb[0].mxu0
  %9397 = vmatprep.mubr.f32.mxu0 0.0
  %9398 = vmatmul.mubr.f32.gmra.mrb[0].mxu0 %v9274
  %v9399 = vpop.f32.mrb[0].mxu0
  %v9400 = vadd.f32 0.0, %v9399
  %v9401 = vpop.f32.mrb[0].mxu0
  %9402 = vmatprep.mubr.f32.mxu0 0.0
  %9403 = vmatmul.mubr.f32.gmra.mrb[0].mxu0 %v9277
  %v9404 = vpop.f32.mrb[0].mxu0
  %v9405 = vadd.f32 0.0, %v9404
  %v9406 = vpop.f32.mrb[0].mxu0
  %9407 = vmatprep.mubr.f32.mxu0 0.0
  %9408 = vmatmul.mubr.f32.gmra.mrb[0].mxu0 %v9280
  %v9409 = vpop.f32.mrb[0].mxu0
  %v9410 = vadd.f32 0.0, %v9409
  %v9411 = vpop.f32.mrb[0].mxu0
  %9412 = vmatprep.mubr.f32.mxu0 0.0
  %9413 = vmatmul.mubr.f32.gmra.mrb[0].mxu0 %v9283
  %v9414 = vpop.f32.mrb[0].mxu0
  %v9415 = vadd.f32 0.0, %v9414
  %v9416 = vpop.f32.mrb[0].mxu0
  %9417 = vmatprep.mubr.f32.mxu0 0.0
  %9418 = vmatmul.mubr.f32.gmra.mrb[0].mxu0 %v9286
  %v9419 = vpop.f32.mrb[0].mxu0
  %v9420 = vadd.f32 0.0, %v9419
  %v9421 = vpop.f32.mrb[0].mxu0
  %9422 = vdwg.mxu0
  %9424 = vset.pattern.permute.xlu0 0
  %9425 = vperm.xlu0 %9424, %v9355
  %v9426 = vpop.permute.xlu0 %9425
  %9429 = vset.pattern.permute.xlu0 0
  %9430 = vperm.xlu0 %9429, %v9360
  %v9431 = vpop.permute.xlu0 %9430
  %9434 = vset.pattern.permute.xlu0 0
  %9435 = vperm.xlu0 %9434, %v9365
  %v9436 = vpop.permute.xlu0 %9435
  %9439 = vset.pattern.permute.xlu0 0
  %9440 = vperm.xlu0 %9439, %v9370
  %v9441 = vpop.permute.xlu0 %9440
  %9444 = vset.pattern.permute.xlu0 0
  %9445 = vperm.xlu0 %9444, %v9375
  %v9446 = vpop.permute.xlu0 %9445
  %9449 = vset.pattern.permute.xlu0 0
  %9450 = vperm.xlu0 %9449, %v9380
  %v9451 = vpop.permute.xlu0 %9450
  %9454 = vset.pattern.permute.xlu0 0
  %9455 = vperm.xlu0 %9454, %v9385
  %v9456 = vpop.permute.xlu0 %9455
  %v9458 = vmul.f32 %v9079, %v9426
  %v9459 = vmul.f32 %v9080, %v9431
  %v9460 = vmul.f32 %v9081, %v9436
  %v9461 = vmul.f32 %v9082, %v9441
  %v9462 = vmul.f32 %v9083, %v9446
  %v9463 = vmul.f32 %v9084, %v9451
  %v9464 = vmul.f32 %v9085, %v9456
  %9466 = vset.pattern.permute.xlu0 0
  %9467 = vperm.xlu0 %9466, %v9390
  %v9468 = vpop.permute.xlu0 %9467
  %9471 = vset.pattern.permute.xlu0 0
  %9472 = vperm.xlu0 %9471, %v9395
  %v9473 = vpop.permute.xlu0 %9472
  %9476 = vset.pattern.permute.xlu0 0
  %9477 = vperm.xlu0 %9476, %v9400
  %v9478 = vpop.permute.xlu0 %9477
  %9481 = vset.pattern.permute.xlu0 0
  %9482 = vperm.xlu0 %9481, %v9405
  %v9483 = vpop.permute.xlu0 %9482
  %9486 = vset.pattern.permute.xlu0 0
  %9487 = vperm.xlu0 %9486, %v9410
  %v9488 = vpop.permute.xlu0 %9487
  %9491 = vset.pattern.permute.xlu0 0
  %9492 = vperm.xlu0 %9491, %v9415
  %v9493 = vpop.permute.xlu0 %9492
  %9496 = vset.pattern.permute.xlu0 0
  %9497 = vperm.xlu0 %9496, %v9420
  %v9498 = vpop.permute.xlu0 %9497
  %v9500 = vadd.f32 %v9458, %v9468
  %v9501 = vadd.f32 %v9459, %v9473
  %v9502 = vadd.f32 %v9460, %v9478
  %v9503 = vadd.f32 %v9461, %v9483
  %v9504 = vadd.f32 %v9462, %v9488
  %v9505 = vadd.f32 %v9463, %v9493
  %v9506 = vadd.f32 %v9464, %v9498
  %v9507 = vpack.c.bf16 %v9501, %v9500
  %v9508 = vpack.c.bf16 %v9503, %v9502
  %v9509 = vpack.c.bf16 %v9505, %v9504
  %v9510 = vpack.c.bf16 %v9506, %v9506
  %v9511 = vld [vmem:[%s59] sm:$0xf]
  %v9512 = vld [vmem:[%s59 + $0x4] sm:$0xf]
  %v9513 = vld [vmem:[%s59 + $0x8] sm:$0xf]
  %v9514 = vld [vmem:[%s59 + $0xc] sm:$0xf]
  %v9515 = vld [vmem:[%s59 + $0x10] sm:$0xf]
  %v9516 = vld [vmem:[%s59 + $0x14] sm:$0x1]
  %v9523 = vunpack.c.l.b16 %v9511
  %v9524 = vunpack.c.l.b16 %v9512
  %v9525 = vunpack.c.l.b16 %v9513
  %v9526 = vunpack.c.l.b16 %v9514
  %v9527 = vunpack.c.l.b16 %v9515
  %v9528 = vunpack.c.l.b16 %v9516
  %v9529 = vpack.c.b16 %v9524, %v9523
  %v9530 = vpack.c.b16 %v9526, %v9525
  %v9531 = vpack.c.b16 %v9528, %v9527
  %v9535 = vsel %vm9093, %v9507, 0
  %v9538 = vsel %vm9093, %v9508, 0
  %v9541 = vsel %vm9093, %v9509, 0
  %v9544 = vsel %vm9093, %v9510, 0
  %vm9546 = vcmask 1044480
  %v9548 = vsel %vm9546, %v9531, 0
  %9550 = vmatprep.subr.bf16.mxu0 0
  %9551 = vmatpush1.bf16.msra.mxu0 %v9529
  %9552 = vmatprep.subr.bf16.mxu0 0
  %9553 = vmatpush1.bf16.msra.mxu0 %v9530
  %9554 = vmatprep.subr.bf16.mxu0 0
  %9555 = vmatpush1.bf16.msra.mxu0 %v9548
  %9556 = vmatprep.subr.bf16.mxu0 0
  %9557 = vmatpush1.bf16.msra.mxu0 0
  %9558 = vmatprep.subr.bf16.mxu0 0
  %9559 = vmatpush1.bf16.msra.mxu0 0
  %9560 = vmatprep.subr.bf16.mxu0 0
  %9561 = vmatpush1.bf16.msra.mxu0 0
  %9562 = vmatprep.subr.bf16.mxu0 0
  %9563 = vmatpush1.bf16.msra.mxu0 0
  %9564 = vmatprep.subr.bf16.mxu0 0
  %9565 = vmatpush1.bf16.msra.mxu0 0
  %9566 = vmatprep.subr.bf16.mxu0 0
  %9567 = vmatpush1.bf16.msra.mxu0 0
  %9568 = vmatprep.subr.bf16.mxu0 0
  %9569 = vmatpush1.bf16.msra.mxu0 0
  %9570 = vmatprep.subr.bf16.mxu0 0
  %9571 = vmatpush1.bf16.msra.mxu0 0
  %9572 = vmatprep.subr.bf16.mxu0 0
  %9573 = vmatpush1.bf16.msra.mxu0 0
  %9574 = vmatprep.subr.bf16.mxu0 0
  %9575 = vmatpush1.bf16.msra.mxu0 0
  %9576 = vmatprep.subr.bf16.mxu0 0
  %9577 = vmatpush1.bf16.msra.mxu0 0
  %9578 = vmatprep.subr.bf16.mxu0 0
  %9579 = vmatpush1.bf16.msra.mxu0 0
  %9580 = vmatprep.subr.bf16.mxu0 0
  %9581 = vmatpush1.bf16.msra.mxu0 0
  %9582 = vmatprep.mubr.bf16.mxu0 0
  %9583 = vmatmul.mubr.bf16.gmra.mrb[0].mxu0 %v9535
  %v9584 = vpop.f32.mrb[0].mxu0
  %v9585 = vadd.f32 0.0, %v9584
  %v9586 = vpop.f32.mrb[0].mxu0
  %v9587 = vpop.f32.mrb[0].mxu0
  %v9588 = vadd.f32 0.0, %v9587
  %v9589 = vpop.f32.mrb[0].mxu0
  %9590 = vmatprep.mubr.bf16.mxu0 0
  %9591 = vmatmul.mubr.bf16.gmra.mrb[0].mxu0 %v9538
  %v9592 = vpop.f32.mrb[0].mxu0
  %v9593 = vadd.f32 0.0, %v9592
  %v9594 = vpop.f32.mrb[0].mxu0
  %v9595 = vpop.f32.mrb[0].mxu0
  %v9596 = vadd.f32 0.0, %v9595
  %v9597 = vpop.f32.mrb[0].mxu0
  %9598 = vmatprep.mubr.bf16.mxu0 0
  %9599 = vmatmul.mubr.bf16.gmra.mrb[0].mxu0 %v9541
  %v9600 = vpop.f32.mrb[0].mxu0
  %v9601 = vadd.f32 0.0, %v9600
  %v9602 = vpop.f32.mrb[0].mxu0
  %v9603 = vpop.f32.mrb[0].mxu0
  %v9604 = vadd.f32 0.0, %v9603
  %v9605 = vpop.f32.mrb[0].mxu0
  %9606 = vmatprep.mubr.bf16.mxu0 0
  %9607 = vmatmul.mubr.bf16.gmra.mrb[0].mxu0 %v9544
  %v9608 = vpop.f32.mrb[0].mxu0
  %v9609 = vadd.f32 0.0, %v9608
  %v9610 = vpop.f32.mrb[0].mxu0
  %v9611 = vpop.f32.mrb[0].mxu0
  %v9612 = vpop.f32.mrb[0].mxu0
  %9613 = vdwg.mxu0
  %s9614 = scalar_lea.vmem %s59, 24
  %v9615 = vld [vmem:[%s9614] sm:$0xf]
  %v9616 = vld [vmem:[%s9614 + $0x4] sm:$0xf]
  %v9617 = vld [vmem:[%s9614 + $0x8] sm:$0xf]
  %v9618 = vld [vmem:[%s9614 + $0xc] sm:$0xf]
  %v9619 = vld [vmem:[%s9614 + $0x10] sm:$0xf]
  %v9620 = vld [vmem:[%s9614 + $0x14] sm:$0x1]
  %v9627 = vunpack.c.l.b16 %v9615
  %v9628 = vunpack.c.l.b16 %v9616
  %v9629 = vunpack.c.l.b16 %v9617
  %v9630 = vunpack.c.l.b16 %v9618
  %v9631 = vunpack.c.l.b16 %v9619
  %v9632 = vunpack.c.l.b16 %v9620
  %v9633 = vpack.c.b16 %v9628, %v9627
  %v9634 = vpack.c.b16 %v9630, %v9629
  %v9635 = vpack.c.b16 %v9632, %v9631
  %v9639 = vsel %vm9546, %v9635, 0
  %9641 = vmatprep.subr.bf16.mxu0 0
  %9642 = vmatpush1.bf16.msra.mxu0 %v9633
  %9643 = vmatprep.subr.bf16.mxu0 0
  %9644 = vmatpush1.bf16.msra.mxu0 %v9634
  %9645 = vmatprep.subr.bf16.mxu0 0
  %9646 = vmatpush1.bf16.msra.mxu0 %v9639
  %9647 = vmatprep.subr.bf16.mxu0 0
  %9648 = vmatpush1.bf16.msra.mxu0 0
  %9649 = vmatprep.subr.bf16.mxu0 0
  %9650 = vmatpush1.bf16.msra.mxu0 0
  %9651 = vmatprep.subr.bf16.mxu0 0
  %9652 = vmatpush1.bf16.msra.mxu0 0
  %9653 = vmatprep.subr.bf16.mxu0 0
  %9654 = vmatpush1.bf16.msra.mxu0 0
  %9655 = vmatprep.subr.bf16.mxu0 0
  %9656 = vmatpush1.bf16.msra.mxu0 0
  %9657 = vmatprep.subr.bf16.mxu0 0
  %9658 = vmatpush1.bf16.msra.mxu0 0
  %9659 = vmatprep.subr.bf16.mxu0 0
  %9660 = vmatpush1.bf16.msra.mxu0 0
  %9661 = vmatprep.subr.bf16.mxu0 0
  %9662 = vmatpush1.bf16.msra.mxu0 0
  %9663 = vmatprep.subr.bf16.mxu0 0
  %9664 = vmatpush1.bf16.msra.mxu0 0
  %9665 = vmatprep.subr.bf16.mxu0 0
  %9666 = vmatpush1.bf16.msra.mxu0 0
  %9667 = vmatprep.subr.bf16.mxu0 0
  %9668 = vmatpush1.bf16.msra.mxu0 0
  %9669 = vmatprep.subr.bf16.mxu0 0
  %9670 = vmatpush1.bf16.msra.mxu0 0
  %9671 = vmatprep.subr.bf16.mxu0 0
  %9672 = vmatpush1.bf16.msra.mxu0 0
  %9673 = vmatprep.mubr.bf16.mxu0 0
  %9674 = vmatmul.mubr.bf16.gmra.mrb[0].mxu0 %v9535
  %v9675 = vpop.f32.mrb[0].mxu0
  %v9676 = vadd.f32 0.0, %v9675
  %v9677 = vpop.f32.mrb[0].mxu0
  %v9678 = vpop.f32.mrb[0].mxu0
  %v9679 = vadd.f32 0.0, %v9678
  %v9680 = vpop.f32.mrb[0].mxu0
  %9681 = vmatprep.mubr.bf16.mxu0 0
  %9682 = vmatmul.mubr.bf16.gmra.mrb[0].mxu0 %v9538
  %v9683 = vpop.f32.mrb[0].mxu0
  %v9684 = vadd.f32 0.0, %v9683
  %v9685 = vpop.f32.mrb[0].mxu0
  %v9686 = vpop.f32.mrb[0].mxu0
  %v9687 = vadd.f32 0.0, %v9686
  %v9688 = vpop.f32.mrb[0].mxu0
  %9689 = vmatprep.mubr.bf16.mxu0 0
  %9690 = vmatmul.mubr.bf16.gmra.mrb[0].mxu0 %v9541
  %v9691 = vpop.f32.mrb[0].mxu0
  %v9692 = vadd.f32 0.0, %v9691
  %v9693 = vpop.f32.mrb[0].mxu0
  %v9694 = vpop.f32.mrb[0].mxu0
  %v9695 = vadd.f32 0.0, %v9694
  %v9696 = vpop.f32.mrb[0].mxu0
  %9697 = vmatprep.mubr.bf16.mxu0 0
  %9698 = vmatmul.mubr.bf16.gmra.mrb[0].mxu0 %v9544
  %v9699 = vpop.f32.mrb[0].mxu0
  %v9700 = vadd.f32 0.0, %v9699
  %v9701 = vpop.f32.mrb[0].mxu0
  %v9702 = vpop.f32.mrb[0].mxu0
  %v9703 = vpop.f32.mrb[0].mxu0
  %9704 = vdwg.mxu0
  %s9705 = scalar_lea.vmem %s59, 48
  %v9706 = vld [vmem:[%s9705] sm:$0xf]
  %v9707 = vld [vmem:[%s9705 + $0x4] sm:$0xf]
  %v9708 = vld [vmem:[%s9705 + $0x8] sm:$0xf]
  %v9709 = vld [vmem:[%s9705 + $0xc] sm:$0xf]
  %v9710 = vld [vmem:[%s9705 + $0x10] sm:$0xf]
  %v9711 = vld [vmem:[%s9705 + $0x14] sm:$0x1]
  %v9718 = vunpack.c.l.b16 %v9706
  %v9719 = vunpack.c.l.b16 %v9707
  %v9720 = vunpack.c.l.b16 %v9708
  %v9721 = vunpack.c.l.b16 %v9709
  %v9722 = vunpack.c.l.b16 %v9710
  %v9723 = vunpack.c.l.b16 %v9711
  %v9724 = vpack.c.b16 %v9719, %v9718
  %v9725 = vpack.c.b16 %v9721, %v9720
  %v9726 = vpack.c.b16 %v9723, %v9722
  %v9730 = vsel %vm9546, %v9726, 0
  %9732 = vmatprep.subr.bf16.mxu0 0
  %9733 = vmatpush1.bf16.msra.mxu0 %v9724
  %9734 = vmatprep.subr.bf16.mxu0 0
  %9735 = vmatpush1.bf16.msra.mxu0 %v9725
  %9736 = vmatprep.subr.bf16.mxu0 0
  %9737 = vmatpush1.bf16.msra.mxu0 %v9730
  %9738 = vmatprep.subr.bf16.mxu0 0
  %9739 = vmatpush1.bf16.msra.mxu0 0
  %9740 = vmatprep.subr.bf16.mxu0 0
  %9741 = vmatpush1.bf16.msra.mxu0 0
  %9742 = vmatprep.subr.bf16.mxu0 0
  %9743 = vmatpush1.bf16.msra.mxu0 0
  %9744 = vmatprep.subr.bf16.mxu0 0
  %9745 = vmatpush1.bf16.msra.mxu0 0
  %9746 = vmatprep.subr.bf16.mxu0 0
  %9747 = vmatpush1.bf16.msra.mxu0 0
  %9748 = vmatprep.subr.bf16.mxu0 0
  %9749 = vmatpush1.bf16.msra.mxu0 0
  %9750 = vmatprep.subr.bf16.mxu0 0
  %9751 = vmatpush1.bf16.msra.mxu0 0
  %9752 = vmatprep.subr.bf16.mxu0 0
  %9753 = vmatpush1.bf16.msra.mxu0 0
  %9754 = vmatprep.subr.bf16.mxu0 0
  %9755 = vmatpush1.bf16.msra.mxu0 0
  %9756 = vmatprep.subr.bf16.mxu0 0
  %9757 = vmatpush1.bf16.msra.mxu0 0
  %9758 = vmatprep.subr.bf16.mxu0 0
  %9759 = vmatpush1.bf16.msra.mxu0 0
  %9760 = vmatprep.subr.bf16.mxu0 0
  %9761 = vmatpush1.bf16.msra.mxu0 0
  %9762 = vmatprep.subr.bf16.mxu0 0
  %9763 = vmatpush1.bf16.msra.mxu0 0
  %9764 = vmatprep.mubr.bf16.mxu0 0
  %9765 = vmatmul.mubr.bf16.gmra.mrb[0].mxu0 %v9535
  %v9766 = vpop.f32.mrb[0].mxu0
  %v9767 = vadd.f32 0.0, %v9766
  %v9768 = vpop.f32.mrb[0].mxu0
  %v9769 = vpop.f32.mrb[0].mxu0
  %v9770 = vadd.f32 0.0, %v9769
  %v9771 = vpop.f32.mrb[0].mxu0
  %9772 = vmatprep.mubr.bf16.mxu0 0
  %9773 = vmatmul.mubr.bf16.gmra.mrb[0].mxu0 %v9538
  %v9774 = vpop.f32.mrb[0].mxu0
  %v9775 = vadd.f32 0.0, %v9774
  %v9776 = vpop.f32.mrb[0].mxu0
  %v9777 = vpop.f32.mrb[0].mxu0
  %v9778 = vadd.f32 0.0, %v9777
  %v9779 = vpop.f32.mrb[0].mxu0
  %9780 = vmatprep.mubr.bf16.mxu0 0
  %9781 = vmatmul.mubr.bf16.gmra.mrb[0].mxu0 %v9541
  %v9782 = vpop.f32.mrb[0].mxu0
  %v9783 = vadd.f32 0.0, %v9782
  %v9784 = vpop.f32.mrb[0].mxu0
  %v9785 = vpop.f32.mrb[0].mxu0
  %v9786 = vadd.f32 0.0, %v9785
  %v9787 = vpop.f32.mrb[0].mxu0
  %9788 = vmatprep.mubr.bf16.mxu0 0
  %9789 = vmatmul.mubr.bf16.gmra.mrb[0].mxu0 %v9544
  %v9790 = vpop.f32.mrb[0].mxu0
  %v9791 = vadd.f32 0.0, %v9790
  %v9792 = vpop.f32.mrb[0].mxu0
  %v9793 = vpop.f32.mrb[0].mxu0
  %v9794 = vpop.f32.mrb[0].mxu0
  %9795 = vdwg.mxu0
  %v9796 = vld [vmem:[%s61] sm:$0xff]
  %v9797 = vld [vmem:[%s61 + $0x8] sm:$0xff]
  %v9798 = vld [vmem:[%s61 + $0x10] sm:$0xff]
  %v9799 = vpack.c.bf16 %v9588, %v9585
  %v9800 = vpack.c.bf16 %v9596, %v9593
  %v9801 = vpack.c.bf16 %v9604, %v9601
  %v9802 = vpack.c.bf16 %v9676, %v9609
  %v9803 = vpack.c.bf16 %v9684, %v9679
  %v9804 = vpack.c.bf16 %v9692, %v9687
  %v9805 = vpack.c.bf16 %v9700, %v9695
  %v9806 = vpack.c.bf16 %v9770, %v9767
  %v9807 = vpack.c.bf16 %v9778, %v9775
  %v9808 = vpack.c.bf16 %v9786, %v9783
  %v9809 = vpack.c.bf16 %v9791, %v9791
  %v9810 = vld [vmem:[%s63] sm:$0xff]
  %v9811 = vld [vmem:[%s63 + $0x8] sm:$0xff]
  %v9812 = vld [vmem:[%s63 + $0x10] sm:$0xff]
  %9814 = vset.pattern.permute.xlu0 0
  %9815 = vperm.xlu0 %9814, %v9810
  %v9816 = vpop.permute.xlu0 %9815
  %9819 = vset.pattern.permute.xlu0 0
  %9820 = vperm.xlu0 %9819, %v9811
  %v9821 = vpop.permute.xlu0 %9820
  %9824 = vset.pattern.permute.xlu0 0
  %9825 = vperm.xlu0 %9824, %v9812
  %v9826 = vpop.permute.xlu0 %9825
  %v9831 = vunpack.c.l.b16 %v9796
  %v9832 = vunpack.c.h.b16 %v9796
  %v9833 = vunpack.c.l.b16 %v9797
  %v9834 = vunpack.c.h.b16 %v9797
  %v9835 = vunpack.c.l.b16 %v9798
  %v9836 = vunpack.c.h.b16 %v9798
  %v9837 = vpack.c.b16 %v9833, %v9831
  %v9838 = vpack.c.b16 %v9834, %v9832
  %v9839 = vpack.c.b16 %v9835, %v9835
  %v9840 = vpack.c.b16 %v9836, %v9836
  %vm9843 = vcmask 326656
  %v9845 = vsel %vm9843, %v9838, 0
  %v9848 = vsel %vm9843, %v9840, 0
  %v9851 = vsel %vm2004, %v9809, 0
  %9853 = vmatprep.subr.bf16.mxu0 0
  %9854 = vmatpush1.bf16.msra.mxu0 %v9799
  %9855 = vmatprep.subr.bf16.mxu0 0
  %9856 = vmatpush1.bf16.msra.mxu0 %v9800
  %9857 = vmatprep.subr.bf16.mxu0 0
  %9858 = vmatpush1.bf16.msra.mxu0 %v9801
  %9859 = vmatprep.subr.bf16.mxu0 0
  %9860 = vmatpush1.bf16.msra.mxu0 %v9802
  %9861 = vmatprep.subr.bf16.mxu0 0
  %9862 = vmatpush1.bf16.msra.mxu0 %v9803
  %9863 = vmatprep.subr.bf16.mxu0 0
  %9864 = vmatpush1.bf16.msra.mxu0 %v9804
  %9865 = vmatprep.subr.bf16.mxu0 0
  %9866 = vmatpush1.bf16.msra.mxu0 %v9805
  %9867 = vmatprep.subr.bf16.mxu0 0
  %9868 = vmatpush1.bf16.msra.mxu0 %v9806
  %9869 = vmatprep.subr.bf16.mxu0 0
  %9870 = vmatpush1.bf16.msra.mxu0 %v9807
  %9871 = vmatprep.subr.bf16.mxu0 0
  %9872 = vmatpush1.bf16.msra.mxu0 %v9808
  %9873 = vmatprep.subr.bf16.mxu0 0
  %9874 = vmatpush1.bf16.msra.mxu0 %v9851
  %9875 = vmatprep.subr.bf16.mxu0 0
  %9876 = vmatpush1.bf16.msra.mxu0 0
  %9877 = vmatprep.subr.bf16.mxu0 0
  %9878 = vmatpush1.bf16.msra.mxu0 0
  %9879 = vmatprep.subr.bf16.mxu0 0
  %9880 = vmatpush1.bf16.msra.mxu0 0
  %9881 = vmatprep.subr.bf16.mxu0 0
  %9882 = vmatpush1.bf16.msra.mxu0 0
  %9883 = vmatprep.subr.bf16.mxu0 0
  %9884 = vmatpush1.bf16.msra.mxu0 0
  %9885 = vmatprep.mubr.bf16.mxu0 %v9845
  %9886 = vmatmul.mubr.bf16.gmra.mrb[0].mxu0 %v9837
  %v9887 = vpop.f32.mrb[0].mxu0
  %v9888 = vadd.f32 %v9816, %v9887
  %v9889 = vpop.f32.mrb[0].mxu0
  %v9890 = vpop.f32.mrb[0].mxu0
  %v9891 = vadd.f32 %v9821, %v9890
  %v9892 = vpop.f32.mrb[0].mxu0
  %9893 = vmatprep.mubr.bf16.mxu0 %v9848
  %9894 = vmatmul.mubr.bf16.gmra.mrb[0].mxu0 %v9839
  %v9895 = vpop.f32.mrb[0].mxu0
  %v9896 = vadd.f32 %v9826, %v9895
  %v9897 = vpop.f32.mrb[0].mxu0
  %v9898 = vpop.f32.mrb[0].mxu0
  %v9899 = vpop.f32.mrb[0].mxu0
  %9900 = vdwg.mxu0
  %v9901 = vmax.f32 %v9888, 0.0
  %v9902 = vmax.f32 %v9891, 0.0
  %v9903 = vmax.f32 %v9896, 0.0
  %v9904 = vmul.f32 %v9901, %v9901
  %v9905 = vmul.f32 %v9902, %v9902
  %v9906 = vmul.f32 %v9903, %v9903
  %vm9907 = vcmask 277504
  %v9908 = vsel %vm9907, %v9901, 0.0
  %9909 = vadd.xlane.f32.xlu0 %v9908
  %v9910 = vpop.xlane.xlu0 %9909
  %v9911 = vsel %vm9907, %v9902, 0.0
  %9912 = vadd.xlane.f32.xlu0 %v9911
  %v9913 = vpop.xlane.xlu0 %9912
  %v9914 = vsel %vm9907, %v9903, 0.0
  %9915 = vadd.xlane.f32.xlu0 %v9914
  %v9916 = vpop.xlane.xlu0 %9915
  %v9917 = vsel %vm9907, %v9904, 0.0
  %9918 = vadd.xlane.f32.xlu0 %v9917
  %v9919 = vpop.xlane.xlu0 %9918
  %v9920 = vsel %vm9907, %v9905, 0.0
  %9921 = vadd.xlane.f32.xlu0 %v9920
  %v9922 = vpop.xlane.xlu0 %9921
  %v9923 = vsel %vm9907, %v9906, 0.0
  %9924 = vadd.xlane.f32.xlu0 %v9923
  %v9925 = vpop.xlane.xlu0 %9924
  %v9926 = vld [vmem:[%s65] sm:$0xff]
  %v9927 = vld [vmem:[%s65 + $0x8] sm:$0xff]
  %v9929 = vsel %vm2827, %v9926, 0
  %v9932 = vsel %vm2827, %v9927, 0
  %9934 = vmatprep.subr.mxu0 0.0
  %9935 = vmatpush1.msra.mxu0 %v9910
  %9936 = vmatprep.subr.mxu0 0.0
  %9937 = vmatpush1.msra.mxu0 %v9913
  %9938 = vmatprep.subr.mxu0 0.0
  %9939 = vmatpush1.msra.mxu0 %v9916
  %9940 = vmatprep.subr.mxu0 0.0
  %9941 = vmatpush1.msra.mxu0 %v9919
  %9942 = vmatprep.subr.mxu0 0.0
  %9943 = vmatpush1.msra.mxu0 %v9922
  %9944 = vmatprep.subr.mxu0 0.0
  %9945 = vmatpush1.msra.mxu0 %v9925
  %9946 = vmatprep.subr.mxu0 0.0
  %9947 = vmatpush1.msra.mxu0 0.0
  %9948 = vmatprep.subr.mxu0 0.0
  %9949 = vmatpush1.msra.mxu0 0.0
  %9950 = vmatprep.subr.mxu0 0.0
  %9951 = vmatpush1.msra.mxu0 0.0
  %9952 = vmatprep.subr.mxu0 0.0
  %9953 = vmatpush1.msra.mxu0 0.0
  %9954 = vmatprep.subr.mxu0 0.0
  %9955 = vmatpush1.msra.mxu0 0.0
  %9956 = vmatprep.subr.mxu0 0.0
  %9957 = vmatpush1.msra.mxu0 0.0
  %9958 = vmatprep.subr.mxu0 0.0
  %9959 = vmatpush1.msra.mxu0 0.0
  %9960 = vmatprep.subr.mxu0 0.0
  %9961 = vmatpush1.msra.mxu0 0.0
  %9962 = vmatprep.subr.mxu0 0.0
  %9963 = vmatpush1.msra.mxu0 0.0
  %9964 = vmatprep.subr.mxu0 0.0
  %9965 = vmatpush1.msra.mxu0 0.0
  %9966 = vmatprep.subr.mxu0 0.0
  %9967 = vmatpush1.msra.mxu0 0.0
  %9968 = vmatprep.subr.mxu0 0.0
  %9969 = vmatpush1.msra.mxu0 0.0
  %9970 = vmatprep.subr.mxu0 0.0
  %9971 = vmatpush1.msra.mxu0 0.0
  %9972 = vmatprep.subr.mxu0 0.0
  %9973 = vmatpush1.msra.mxu0 0.0
  %9974 = vmatprep.subr.mxu0 0.0
  %9975 = vmatpush1.msra.mxu0 0.0
  %9976 = vmatprep.subr.mxu0 0.0
  %9977 = vmatpush1.msra.mxu0 0.0
  %9978 = vmatprep.subr.mxu0 0.0
  %9979 = vmatpush1.msra.mxu0 0.0
  %9980 = vmatprep.subr.mxu0 0.0
  %9981 = vmatpush1.msra.mxu0 0.0
  %9982 = vmatprep.subr.mxu0 0.0
  %9983 = vmatpush1.msra.mxu0 0.0
  %9984 = vmatprep.subr.mxu0 0.0
  %9985 = vmatpush1.msra.mxu0 0.0
  %9986 = vmatprep.subr.mxu0 0.0
  %9987 = vmatpush1.msra.mxu0 0.0
  %9988 = vmatprep.subr.mxu0 0.0
  %9989 = vmatpush1.msra.mxu0 0.0
  %9990 = vmatprep.subr.mxu0 0.0
  %9991 = vmatpush1.msra.mxu0 0.0
  %9992 = vmatprep.subr.mxu0 0.0
  %9993 = vmatpush1.msra.mxu0 0.0
  %9994 = vmatprep.subr.mxu0 0.0
  %9995 = vmatpush1.msra.mxu0 0.0
  %9996 = vmatprep.subr.mxu0 0.0
  %9997 = vmatpush1.msra.mxu0 0.0
  %9998 = vmatprep.mubr.f32.mxu0 0.0
  %9999 = vmatmul.mubr.f32.gmra.mrb[0].mxu0 %v9929
  %v10000 = vpop.f32.mrb[0].mxu0
  %v10001 = vadd.f32 0.0, %v10000
  %v10002 = vpop.f32.mrb[0].mxu0
  %10003 = vmatprep.mubr.f32.mxu0 0.0
  %10004 = vmatmul.mubr.f32.gmra.mrb[0].mxu0 %v9932
  %v10005 = vpop.f32.mrb[0].mxu0
  %v10006 = vadd.f32 0.0, %v10005
  %v10007 = vpop.f32.mrb[0].mxu0
  %10008 = vdwg.mxu0
  %v10009 = vmul.f32 %v10001, 0.009803922
  %v10010 = vmul.f32 %v10006, 0.009803922
  %v10011 = vmul.f32 %v10009, %v10009
  %v10012 = vsub.f32 %v10010, %v10011
  %v10013 = vmax.f32 %v10012, 0.0
  %v10014 = vld [vmem:[%s69] sm:$0xff]
  %v10015 = vadd.f32 %v10013, 1e-05
  %v10016 = vrsqrt.pop %v10015
  %v10017 = vmul.f32 %v10014, %v10016
  %v10018 = vld [vmem:[%s71] sm:$0xff]
  %v10019 = vmul.f32 %v10009, %v10017
  %v10020 = vsub.f32 %v10018, %v10019
  %v10021 = vld [vmem:[%s67] sm:$0xff]
  %v10022 = vld [vmem:[%s67 + $0x8] sm:$0xff]
  %v10023 = vld [vmem:[%s67 + $0x10] sm:$0xff]
  %v10024 = vld [vmem:[%s67 + $0x18] sm:$0xff]
  %v10025 = vld [vmem:[%s67 + $0x20] sm:$0xff]
  %v10026 = vld [vmem:[%s67 + $0x28] sm:$0xff]
  %v10028 = vsel %vm3141, %v10021, 0
  %v10031 = vsel %vm3141, %v10022, 0
  %v10034 = vsel %vm3141, %v10023, 0
  %v10037 = vsel %vm3141, %v10024, 0
  %v10040 = vsel %vm3141, %v10025, 0
  %v10043 = vsel %vm3141, %v10026, 0
  %10045 = vmatprep.subr.mxu0 0.0
  %10046 = vmatpush1.msra.mxu0 %v10017
  %10047 = vmatprep.subr.mxu0 0.0
  %10048 = vmatpush1.msra.mxu0 %v10020
  %10049 = vmatprep.subr.mxu0 0.0
  %10050 = vmatpush1.msra.mxu0 0.0
  %10051 = vmatprep.subr.mxu0 0.0
  %10052 = vmatpush1.msra.mxu0 0.0
  %10053 = vmatprep.subr.mxu0 0.0
  %10054 = vmatpush1.msra.mxu0 0.0
  %10055 = vmatprep.subr.mxu0 0.0
  %10056 = vmatpush1.msra.mxu0 0.0
  %10057 = vmatprep.subr.mxu0 0.0
  %10058 = vmatpush1.msra.mxu0 0.0
  %10059 = vmatprep.subr.mxu0 0.0
  %10060 = vmatpush1.msra.mxu0 0.0
  %10061 = vmatprep.subr.mxu0 0.0
  %10062 = vmatpush1.msra.mxu0 0.0
  %10063 = vmatprep.subr.mxu0 0.0
  %10064 = vmatpush1.msra.mxu0 0.0
  %10065 = vmatprep.subr.mxu0 0.0
  %10066 = vmatpush1.msra.mxu0 0.0
  %10067 = vmatprep.subr.mxu0 0.0
  %10068 = vmatpush1.msra.mxu0 0.0
  %10069 = vmatprep.subr.mxu0 0.0
  %10070 = vmatpush1.msra.mxu0 0.0
  %10071 = vmatprep.subr.mxu0 0.0
  %10072 = vmatpush1.msra.mxu0 0.0
  %10073 = vmatprep.subr.mxu0 0.0
  %10074 = vmatpush1.msra.mxu0 0.0
  %10075 = vmatprep.subr.mxu0 0.0
  %10076 = vmatpush1.msra.mxu0 0.0
  %10077 = vmatprep.subr.mxu0 0.0
  %10078 = vmatpush1.msra.mxu0 0.0
  %10079 = vmatprep.subr.mxu0 0.0
  %10080 = vmatpush1.msra.mxu0 0.0
  %10081 = vmatprep.subr.mxu0 0.0
  %10082 = vmatpush1.msra.mxu0 0.0
  %10083 = vmatprep.subr.mxu0 0.0
  %10084 = vmatpush1.msra.mxu0 0.0
  %10085 = vmatprep.subr.mxu0 0.0
  %10086 = vmatpush1.msra.mxu0 0.0
  %10087 = vmatprep.subr.mxu0 0.0
  %10088 = vmatpush1.msra.mxu0 0.0
  %10089 = vmatprep.subr.mxu0 0.0
  %10090 = vmatpush1.msra.mxu0 0.0
  %10091 = vmatprep.subr.mxu0 0.0
  %10092 = vmatpush1.msra.mxu0 0.0
  %10093 = vmatprep.subr.mxu0 0.0
  %10094 = vmatpush1.msra.mxu0 0.0
  %10095 = vmatprep.subr.mxu0 0.0
  %10096 = vmatpush1.msra.mxu0 0.0
  %10097 = vmatprep.subr.mxu0 0.0
  %10098 = vmatpush1.msra.mxu0 0.0
  %10099 = vmatprep.subr.mxu0 0.0
  %10100 = vmatpush1.msra.mxu0 0.0
  %10101 = vmatprep.subr.mxu0 0.0
  %10102 = vmatpush1.msra.mxu0 0.0
  %10103 = vmatprep.subr.mxu0 0.0
  %10104 = vmatpush1.msra.mxu0 0.0
  %10105 = vmatprep.subr.mxu0 0.0
  %10106 = vmatpush1.msra.mxu0 0.0
  %10107 = vmatprep.subr.mxu0 0.0
  %10108 = vmatpush1.msra.mxu0 0.0
  %10109 = vmatprep.mubr.f32.mxu0 0.0
  %10110 = vmatmul.mubr.f32.gmra.mrb[0].mxu0 %v10028
  %v10111 = vpop.f32.mrb[0].mxu0
  %v10112 = vadd.f32 0.0, %v10111
  %v10113 = vpop.f32.mrb[0].mxu0
  %10114 = vmatprep.mubr.f32.mxu0 0.0
  %10115 = vmatmul.mubr.f32.gmra.mrb[0].mxu0 %v10031
  %v10116 = vpop.f32.mrb[0].mxu0
  %v10117 = vadd.f32 0.0, %v10116
  %v10118 = vpop.f32.mrb[0].mxu0
  %10119 = vmatprep.mubr.f32.mxu0 0.0
  %10120 = vmatmul.mubr.f32.gmra.mrb[0].mxu0 %v10034
  %v10121 = vpop.f32.mrb[0].mxu0
  %v10122 = vadd.f32 0.0, %v10121
  %v10123 = vpop.f32.mrb[0].mxu0
  %10124 = vmatprep.mubr.f32.mxu0 0.0
  %10125 = vmatmul.mubr.f32.gmra.mrb[0].mxu0 %v10037
  %v10126 = vpop.f32.mrb[0].mxu0
  %v10127 = vadd.f32 0.0, %v10126
  %v10128 = vpop.f32.mrb[0].mxu0
  %10129 = vmatprep.mubr.f32.mxu0 0.0
  %10130 = vmatmul.mubr.f32.gmra.mrb[0].mxu0 %v10040
  %v10131 = vpop.f32.mrb[0].mxu0
  %v10132 = vadd.f32 0.0, %v10131
  %v10133 = vpop.f32.mrb[0].mxu0
  %10134 = vmatprep.mubr.f32.mxu0 0.0
  %10135 = vmatmul.mubr.f32.gmra.mrb[0].mxu0 %v10043
  %v10136 = vpop.f32.mrb[0].mxu0
  %v10137 = vadd.f32 0.0, %v10136
  %v10138 = vpop.f32.mrb[0].mxu0
  %10139 = vdwg.mxu0
  %10141 = vset.pattern.permute.xlu0 0
  %10142 = vperm.xlu0 %10141, %v10112
  %v10143 = vpop.permute.xlu0 %10142
  %10146 = vset.pattern.permute.xlu0 0
  %10147 = vperm.xlu0 %10146, %v10117
  %v10148 = vpop.permute.xlu0 %10147
  %10151 = vset.pattern.permute.xlu0 0
  %10152 = vperm.xlu0 %10151, %v10122
  %v10153 = vpop.permute.xlu0 %10152
  %v10155 = vmul.f32 %v9901, %v10143
  %v10156 = vmul.f32 %v9902, %v10148
  %v10157 = vmul.f32 %v9903, %v10153
  %10159 = vset.pattern.permute.xlu0 0
  %10160 = vperm.xlu0 %10159, %v10127
  %v10161 = vpop.permute.xlu0 %10160
  %10164 = vset.pattern.permute.xlu0 0
  %10165 = vperm.xlu0 %10164, %v10132
  %v10166 = vpop.permute.xlu0 %10165
  %10169 = vset.pattern.permute.xlu0 0
  %10170 = vperm.xlu0 %10169, %v10137
  %v10171 = vpop.permute.xlu0 %10170
  %v10173 = vadd.f32 %v10155, %v10161
  %v10174 = vadd.f32 %v10156, %v10166
  %v10175 = vadd.f32 %v10157, %v10171
  %v10176 = vpack.c.bf16 %v10174, %v10173
  %v10177 = vpack.c.bf16 %v10175, %v10175
  %v10178 = vld [vmem:[%s73] sm:$0xf]
  %v10179 = vld [vmem:[%s73 + $0x4] sm:$0xf]
  %v10180 = vld [vmem:[%s73 + $0x8] sm:$0xf]
  %v10181 = vld [vmem:[%s73 + $0xc] sm:$0xf]
  %v10182 = vld [vmem:[%s73 + $0x10] sm:$0xf]
  %v10183 = vld [vmem:[%s73 + $0x14] sm:$0xf]
  %v10184 = vld [vmem:[%s73 + $0x18] sm:$0xf]
  %v10185 = vld [vmem:[%s73 + $0x1c] sm:$0xf]
  %v10186 = vld [vmem:[%s73 + $0x20] sm:$0xf]
  %v10187 = vld [vmem:[%s73 + $0x24] sm:$0xf]
  %v10188 = vld [vmem:[%s73 + $0x28] sm:$0xf]
  %v10189 = vld [vmem:[%s73 + $0x2c] sm:$0xf]
  %v10190 = vld [vmem:[%s73 + $0x30] sm:$0xf]
  %v10191 = vld [vmem:[%s73 + $0x34] sm:$0xf]
  %v10192 = vld [vmem:[%s73 + $0x38] sm:$0xf]
  %v10193 = vld [vmem:[%s73 + $0x3c] sm:$0xf]
  %v10194 = vld [vmem:[%s73 + $0x40] sm:$0xf]
  %v10195 = vld [vmem:[%s73 + $0x44] sm:$0xf]
  %v10196 = vld [vmem:[%s73 + $0x48] sm:$0xf]
  %v10197 = vld [vmem:[%s73 + $0x4c] sm:$0xf]
  %v10198 = vld [vmem:[%s73 + $0x50] sm:$0xf]
  %v10199 = vld [vmem:[%s73 + $0x54] sm:$0xf]
  %v10200 = vld [vmem:[%s73 + $0x58] sm:$0xf]
  %v10201 = vld [vmem:[%s73 + $0x5c] sm:$0xf]
  %v10202 = vld [vmem:[%s73 + $0x60] sm:$0xf]
  %v10203 = vld [vmem:[%s73 + $0x64] sm:$0xf]
  %v10204 = vld [vmem:[%s73 + $0x68] sm:$0xf]
  %v10205 = vld [vmem:[%s73 + $0x6c] sm:$0xf]
  %v10206 = vld [vmem:[%s73 + $0x70] sm:$0xf]
  %v10207 = vld [vmem:[%s73 + $0x74] sm:$0xf]
  %v10208 = vld [vmem:[%s73 + $0x78] sm:$0xf]
  %v10209 = vld [vmem:[%s73 + $0x7c] sm:$0xf]
  %v10210 = vld [vmem:[%s73 + $0x80] sm:$0xf]
  %v10211 = vld [vmem:[%s73 + $0x84] sm:$0xf]
  %v10212 = vld [vmem:[%s73 + $0x88] sm:$0xf]
  %v10213 = vld [vmem:[%s73 + $0x8c] sm:$0xf]
  %v10214 = vld [vmem:[%s73 + $0x90] sm:$0xf]
  %v10215 = vld [vmem:[%s73 + $0x94] sm:$0xf]
  %v10216 = vld [vmem:[%s73 + $0x98] sm:$0xf]
  %v10217 = vld [vmem:[%s73 + $0x9c] sm:$0xf]
  %v10218 = vld [vmem:[%s73 + $0xa0] sm:$0xf]
  %v10219 = vld [vmem:[%s73 + $0xa4] sm:$0xf]
  %v10220 = vld [vmem:[%s73 + $0xa8] sm:$0xf]
  %v10221 = vld [vmem:[%s73 + $0xac] sm:$0xf]
  %v10222 = vld [vmem:[%s73 + $0xb0] sm:$0xf]
  %v10223 = vld [vmem:[%s73 + $0xb4] sm:$0xf]
  %v10224 = vld [vmem:[%s73 + $0xb8] sm:$0xf]
  %v10225 = vld [vmem:[%s73 + $0xbc] sm:$0xf]
  %v10226 = vld [vmem:[%s73 + $0xc0] sm:$0xf]
  %v10227 = vld [vmem:[%s73 + $0xc4] sm:$0xf]
  %v10228 = vld [vmem:[%s73 + $0xc8] sm:$0xf]
  %v10280 = vunpack.c.l.b16 %v10178
  %v10281 = vunpack.c.l.b16 %v10179
  %v10282 = vunpack.c.l.b16 %v10180
  %v10283 = vunpack.c.l.b16 %v10181
  %v10284 = vunpack.c.l.b16 %v10182
  %v10285 = vunpack.c.l.b16 %v10183
  %v10286 = vunpack.c.l.b16 %v10184
  %v10287 = vunpack.c.l.b16 %v10185
  %v10288 = vunpack.c.l.b16 %v10186
  %v10289 = vunpack.c.l.b16 %v10187
  %v10290 = vunpack.c.l.b16 %v10188
  %v10291 = vunpack.c.l.b16 %v10189
  %v10292 = vunpack.c.l.b16 %v10190
  %v10293 = vunpack.c.l.b16 %v10191
  %v10294 = vunpack.c.l.b16 %v10192
  %v10295 = vunpack.c.l.b16 %v10193
  %v10296 = vunpack.c.l.b16 %v10194
  %v10297 = vunpack.c.l.b16 %v10195
  %v10298 = vunpack.c.l.b16 %v10196
  %v10299 = vunpack.c.l.b16 %v10197
  %v10300 = vunpack.c.l.b16 %v10198
  %v10301 = vunpack.c.l.b16 %v10199
  %v10302 = vunpack.c.l.b16 %v10200
  %v10303 = vunpack.c.l.b16 %v10201
  %v10304 = vunpack.c.l.b16 %v10202
  %v10305 = vunpack.c.l.b16 %v10203
  %v10306 = vunpack.c.l.b16 %v10204
  %v10307 = vunpack.c.l.b16 %v10205
  %v10308 = vunpack.c.l.b16 %v10206
  %v10309 = vunpack.c.l.b16 %v10207
  %v10310 = vunpack.c.l.b16 %v10208
  %v10311 = vunpack.c.l.b16 %v10209
  %v10312 = vunpack.c.l.b16 %v10210
  %v10313 = vunpack.c.l.b16 %v10211
  %v10314 = vunpack.c.l.b16 %v10212
  %v10315 = vunpack.c.l.b16 %v10213
  %v10316 = vunpack.c.l.b16 %v10214
  %v10317 = vunpack.c.l.b16 %v10215
  %v10318 = vunpack.c.l.b16 %v10216
  %v10319 = vunpack.c.l.b16 %v10217
  %v10320 = vunpack.c.l.b16 %v10218
  %v10321 = vunpack.c.l.b16 %v10219
  %v10322 = vunpack.c.l.b16 %v10220
  %v10323 = vunpack.c.l.b16 %v10221
  %v10324 = vunpack.c.l.b16 %v10222
  %v10325 = vunpack.c.l.b16 %v10223
  %v10326 = vunpack.c.l.b16 %v10224
  %v10327 = vunpack.c.l.b16 %v10225
  %v10328 = vunpack.c.l.b16 %v10226
  %v10329 = vunpack.c.l.b16 %v10227
  %v10330 = vunpack.c.l.b16 %v10228
  %v10331 = vpack.c.b16 %v10281, %v10280
  %v10332 = vpack.c.b16 %v10283, %v10282
  %v10333 = vpack.c.b16 %v10285, %v10284
  %v10334 = vpack.c.b16 %v10287, %v10286
  %v10335 = vpack.c.b16 %v10289, %v10288
  %v10336 = vpack.c.b16 %v10291, %v10290
  %v10337 = vpack.c.b16 %v10293, %v10292
  %v10338 = vpack.c.b16 %v10295, %v10294
  %v10339 = vpack.c.b16 %v10297, %v10296
  %v10340 = vpack.c.b16 %v10299, %v10298
  %v10341 = vpack.c.b16 %v10301, %v10300
  %v10342 = vpack.c.b16 %v10303, %v10302
  %v10343 = vpack.c.b16 %v10305, %v10304
  %v10344 = vpack.c.b16 %v10307, %v10306
  %v10345 = vpack.c.b16 %v10309, %v10308
  %v10346 = vpack.c.b16 %v10311, %v10310
  %v10347 = vpack.c.b16 %v10313, %v10312
  %v10348 = vpack.c.b16 %v10315, %v10314
  %v10349 = vpack.c.b16 %v10317, %v10316
  %v10350 = vpack.c.b16 %v10319, %v10318
  %v10351 = vpack.c.b16 %v10321, %v10320
  %v10352 = vpack.c.b16 %v10323, %v10322
  %v10353 = vpack.c.b16 %v10325, %v10324
  %v10354 = vpack.c.b16 %v10327, %v10326
  %v10355 = vpack.c.b16 %v10329, %v10328
  %v10356 = vpack.c.b16 %v10330, %v10330
  %v10358 = vsel %vm7557, %v10331, 0
  %v10361 = vsel %vm7557, %v10332, 0
  %v10364 = vsel %vm7557, %v10333, 0
  %v10367 = vsel %vm7557, %v10334, 0
  %v10370 = vsel %vm7557, %v10335, 0
  %v10373 = vsel %vm7557, %v10336, 0
  %v10376 = vsel %vm7557, %v10337, 0
  %v10379 = vsel %vm7557, %v10338, 0
  %v10382 = vsel %vm7557, %v10339, 0
  %v10385 = vsel %vm7557, %v10340, 0
  %v10388 = vsel %vm7557, %v10341, 0
  %v10391 = vsel %vm7557, %v10342, 0
  %v10394 = vsel %vm7557, %v10343, 0
  %v10397 = vsel %vm7557, %v10344, 0
  %v10400 = vsel %vm7557, %v10345, 0
  %v10403 = vsel %vm7557, %v10346, 0
  %v10406 = vsel %vm7557, %v10347, 0
  %v10409 = vsel %vm7557, %v10348, 0
  %v10412 = vsel %vm7557, %v10349, 0
  %v10415 = vsel %vm7557, %v10350, 0
  %v10418 = vsel %vm7557, %v10351, 0
  %v10421 = vsel %vm7557, %v10352, 0
  %v10424 = vsel %vm7557, %v10353, 0
  %v10427 = vsel %vm7557, %v10354, 0
  %v10430 = vsel %vm7557, %v10355, 0
  %v10433 = vsel %vm7557, %v10356, 0
  %v10436 = vsel %vm2004, %v10177, 0
  %10438 = vmatprep.subr.bf16.mxu0 0
  %10439 = vmatpush1.bf16.msra.mxu0 %v10176
  %10440 = vmatprep.subr.bf16.mxu0 0
  %10441 = vmatpush1.bf16.msra.mxu0 %v10436
  %10442 = vmatprep.subr.bf16.mxu0 0
  %10443 = vmatpush1.bf16.msra.mxu0 0
  %10444 = vmatprep.subr.bf16.mxu0 0
  %10445 = vmatpush1.bf16.msra.mxu0 0
  %10446 = vmatprep.subr.bf16.mxu0 0
  %10447 = vmatpush1.bf16.msra.mxu0 0
  %10448 = vmatprep.subr.bf16.mxu0 0
  %10449 = vmatpush1.bf16.msra.mxu0 0
  %10450 = vmatprep.subr.bf16.mxu0 0
  %10451 = vmatpush1.bf16.msra.mxu0 0
  %10452 = vmatprep.subr.bf16.mxu0 0
  %10453 = vmatpush1.bf16.msra.mxu0 0
  %10454 = vmatprep.subr.bf16.mxu0 0
  %10455 = vmatpush1.bf16.msra.mxu0 0
  %10456 = vmatprep.subr.bf16.mxu0 0
  %10457 = vmatpush1.bf16.msra.mxu0 0
  %10458 = vmatprep.subr.bf16.mxu0 0
  %10459 = vmatpush1.bf16.msra.mxu0 0
  %10460 = vmatprep.subr.bf16.mxu0 0
  %10461 = vmatpush1.bf16.msra.mxu0 0
  %10462 = vmatprep.subr.bf16.mxu0 0
  %10463 = vmatpush1.bf16.msra.mxu0 0
  %10464 = vmatprep.subr.bf16.mxu0 0
  %10465 = vmatpush1.bf16.msra.mxu0 0
  %10466 = vmatprep.subr.bf16.mxu0 0
  %10467 = vmatpush1.bf16.msra.mxu0 0
  %10468 = vmatprep.subr.bf16.mxu0 0
  %10469 = vmatpush1.bf16.msra.mxu0 0
  %10470 = vmatprep.mubr.bf16.mxu0 0
  %10471 = vmatmul.mubr.bf16.gmra.mrb[0].mxu0 %v10358
  %v10472 = vpop.f32.mrb[0].mxu0
  %v10473 = vadd.f32 0.0, %v10472
  %v10474 = vpop.f32.mrb[0].mxu0
  %v10475 = vpop.f32.mrb[0].mxu0
  %v10476 = vadd.f32 0.0, %v10475
  %v10477 = vpop.f32.mrb[0].mxu0
  %10478 = vmatprep.mubr.bf16.mxu0 0
  %10479 = vmatmul.mubr.bf16.gmra.mrb[0].mxu0 %v10361
  %v10480 = vpop.f32.mrb[0].mxu0
  %v10481 = vadd.f32 0.0, %v10480
  %v10482 = vpop.f32.mrb[0].mxu0
  %v10483 = vpop.f32.mrb[0].mxu0
  %v10484 = vadd.f32 0.0, %v10483
  %v10485 = vpop.f32.mrb[0].mxu0
  %10486 = vmatprep.mubr.bf16.mxu0 0
  %10487 = vmatmul.mubr.bf16.gmra.mrb[0].mxu0 %v10364
  %v10488 = vpop.f32.mrb[0].mxu0
  %v10489 = vadd.f32 0.0, %v10488
  %v10490 = vpop.f32.mrb[0].mxu0
  %v10491 = vpop.f32.mrb[0].mxu0
  %v10492 = vadd.f32 0.0, %v10491
  %v10493 = vpop.f32.mrb[0].mxu0
  %10494 = vmatprep.mubr.bf16.mxu0 0
  %10495 = vmatmul.mubr.bf16.gmra.mrb[0].mxu0 %v10367
  %v10496 = vpop.f32.mrb[0].mxu0
  %v10497 = vadd.f32 0.0, %v10496
  %v10498 = vpop.f32.mrb[0].mxu0
  %v10499 = vpop.f32.mrb[0].mxu0
  %v10500 = vadd.f32 0.0, %v10499
  %v10501 = vpop.f32.mrb[0].mxu0
  %10502 = vmatprep.mubr.bf16.mxu0 0
  %10503 = vmatmul.mubr.bf16.gmra.mrb[0].mxu0 %v10370
  %v10504 = vpop.f32.mrb[0].mxu0
  %v10505 = vadd.f32 0.0, %v10504
  %v10506 = vpop.f32.mrb[0].mxu0
  %v10507 = vpop.f32.mrb[0].mxu0
  %v10508 = vadd.f32 0.0, %v10507
  %v10509 = vpop.f32.mrb[0].mxu0
  %10510 = vmatprep.mubr.bf16.mxu0 0
  %10511 = vmatmul.mubr.bf16.gmra.mrb[0].mxu0 %v10373
  %v10512 = vpop.f32.mrb[0].mxu0
  %v10513 = vadd.f32 0.0, %v10512
  %v10514 = vpop.f32.mrb[0].mxu0
  %v10515 = vpop.f32.mrb[0].mxu0
  %v10516 = vadd.f32 0.0, %v10515
  %v10517 = vpop.f32.mrb[0].mxu0
  %10518 = vmatprep.mubr.bf16.mxu0 0
  %10519 = vmatmul.mubr.bf16.gmra.mrb[0].mxu0 %v10376
  %v10520 = vpop.f32.mrb[0].mxu0
  %v10521 = vadd.f32 0.0, %v10520
  %v10522 = vpop.f32.mrb[0].mxu0
  %v10523 = vpop.f32.mrb[0].mxu0
  %v10524 = vadd.f32 0.0, %v10523
  %v10525 = vpop.f32.mrb[0].mxu0
  %10526 = vmatprep.mubr.bf16.mxu0 0
  %10527 = vmatmul.mubr.bf16.gmra.mrb[0].mxu0 %v10379
  %v10528 = vpop.f32.mrb[0].mxu0
  %v10529 = vadd.f32 0.0, %v10528
  %v10530 = vpop.f32.mrb[0].mxu0
  %v10531 = vpop.f32.mrb[0].mxu0
  %v10532 = vadd.f32 0.0, %v10531
  %v10533 = vpop.f32.mrb[0].mxu0
  %10534 = vmatprep.mubr.bf16.mxu0 0
  %10535 = vmatmul.mubr.bf16.gmra.mrb[0].mxu0 %v10382
  %v10536 = vpop.f32.mrb[0].mxu0
  %v10537 = vadd.f32 0.0, %v10536
  %v10538 = vpop.f32.mrb[0].mxu0
  %v10539 = vpop.f32.mrb[0].mxu0
  %v10540 = vadd.f32 0.0, %v10539
  %v10541 = vpop.f32.mrb[0].mxu0
  %10542 = vmatprep.mubr.bf16.mxu0 0
  %10543 = vmatmul.mubr.bf16.gmra.mrb[0].mxu0 %v10385
  %v10544 = vpop.f32.mrb[0].mxu0
  %v10545 = vadd.f32 0.0, %v10544
  %v10546 = vpop.f32.mrb[0].mxu0
  %v10547 = vpop.f32.mrb[0].mxu0
  %v10548 = vadd.f32 0.0, %v10547
  %v10549 = vpop.f32.mrb[0].mxu0
  %10550 = vmatprep.mubr.bf16.mxu0 0
  %10551 = vmatmul.mubr.bf16.gmra.mrb[0].mxu0 %v10388
  %v10552 = vpop.f32.mrb[0].mxu0
  %v10553 = vadd.f32 0.0, %v10552
  %v10554 = vpop.f32.mrb[0].mxu0
  %v10555 = vpop.f32.mrb[0].mxu0
  %v10556 = vadd.f32 0.0, %v10555
  %v10557 = vpop.f32.mrb[0].mxu0
  %10558 = vmatprep.mubr.bf16.mxu0 0
  %10559 = vmatmul.mubr.bf16.gmra.mrb[0].mxu0 %v10391
  %v10560 = vpop.f32.mrb[0].mxu0
  %v10561 = vadd.f32 0.0, %v10560
  %v10562 = vpop.f32.mrb[0].mxu0
  %v10563 = vpop.f32.mrb[0].mxu0
  %v10564 = vadd.f32 0.0, %v10563
  %v10565 = vpop.f32.mrb[0].mxu0
  %10566 = vmatprep.mubr.bf16.mxu0 0
  %10567 = vmatmul.mubr.bf16.gmra.mrb[0].mxu0 %v10394
  %v10568 = vpop.f32.mrb[0].mxu0
  %v10569 = vadd.f32 0.0, %v10568
  %v10570 = vpop.f32.mrb[0].mxu0
  %v10571 = vpop.f32.mrb[0].mxu0
  %v10572 = vadd.f32 0.0, %v10571
  %v10573 = vpop.f32.mrb[0].mxu0
  %10574 = vmatprep.mubr.bf16.mxu0 0
  %10575 = vmatmul.mubr.bf16.gmra.mrb[0].mxu0 %v10397
  %v10576 = vpop.f32.mrb[0].mxu0
  %v10577 = vadd.f32 0.0, %v10576
  %v10578 = vpop.f32.mrb[0].mxu0
  %v10579 = vpop.f32.mrb[0].mxu0
  %v10580 = vadd.f32 0.0, %v10579
  %v10581 = vpop.f32.mrb[0].mxu0
  %10582 = vmatprep.mubr.bf16.mxu0 0
  %10583 = vmatmul.mubr.bf16.gmra.mrb[0].mxu0 %v10400
  %v10584 = vpop.f32.mrb[0].mxu0
  %v10585 = vadd.f32 0.0, %v10584
  %v10586 = vpop.f32.mrb[0].mxu0
  %v10587 = vpop.f32.mrb[0].mxu0
  %v10588 = vadd.f32 0.0, %v10587
  %v10589 = vpop.f32.mrb[0].mxu0
  %10590 = vmatprep.mubr.bf16.mxu0 0
  %10591 = vmatmul.mubr.bf16.gmra.mrb[0].mxu0 %v10403
  %v10592 = vpop.f32.mrb[0].mxu0
  %v10593 = vadd.f32 0.0, %v10592
  %v10594 = vpop.f32.mrb[0].mxu0
  %v10595 = vpop.f32.mrb[0].mxu0
  %v10596 = vadd.f32 0.0, %v10595
  %v10597 = vpop.f32.mrb[0].mxu0
  %10598 = vmatprep.mubr.bf16.mxu0 0
  %10599 = vmatmul.mubr.bf16.gmra.mrb[0].mxu0 %v10406
  %v10600 = vpop.f32.mrb[0].mxu0
  %v10601 = vadd.f32 0.0, %v10600
  %v10602 = vpop.f32.mrb[0].mxu0
  %v10603 = vpop.f32.mrb[0].mxu0
  %v10604 = vadd.f32 0.0, %v10603
  %v10605 = vpop.f32.mrb[0].mxu0
  %10606 = vmatprep.mubr.bf16.mxu0 0
  %10607 = vmatmul.mubr.bf16.gmra.mrb[0].mxu0 %v10409
  %v10608 = vpop.f32.mrb[0].mxu0
  %v10609 = vadd.f32 0.0, %v10608
  %v10610 = vpop.f32.mrb[0].mxu0
  %v10611 = vpop.f32.mrb[0].mxu0
  %v10612 = vadd.f32 0.0, %v10611
  %v10613 = vpop.f32.mrb[0].mxu0
  %10614 = vmatprep.mubr.bf16.mxu0 0
  %10615 = vmatmul.mubr.bf16.gmra.mrb[0].mxu0 %v10412
  %v10616 = vpop.f32.mrb[0].mxu0
  %v10617 = vadd.f32 0.0, %v10616
  %v10618 = vpop.f32.mrb[0].mxu0
  %v10619 = vpop.f32.mrb[0].mxu0
  %v10620 = vadd.f32 0.0, %v10619
  %v10621 = vpop.f32.mrb[0].mxu0
  %10622 = vmatprep.mubr.bf16.mxu0 0
  %10623 = vmatmul.mubr.bf16.gmra.mrb[0].mxu0 %v10415
  %v10624 = vpop.f32.mrb[0].mxu0
  %v10625 = vadd.f32 0.0, %v10624
  %v10626 = vpop.f32.mrb[0].mxu0
  %v10627 = vpop.f32.mrb[0].mxu0
  %v10628 = vadd.f32 0.0, %v10627
  %v10629 = vpop.f32.mrb[0].mxu0
  %10630 = vmatprep.mubr.bf16.mxu0 0
  %10631 = vmatmul.mubr.bf16.gmra.mrb[0].mxu0 %v10418
  %v10632 = vpop.f32.mrb[0].mxu0
  %v10633 = vadd.f32 0.0, %v10632
  %v10634 = vpop.f32.mrb[0].mxu0
  %v10635 = vpop.f32.mrb[0].mxu0
  %v10636 = vadd.f32 0.0, %v10635
  %v10637 = vpop.f32.mrb[0].mxu0
  %10638 = vmatprep.mubr.bf16.mxu0 0
  %10639 = vmatmul.mubr.bf16.gmra.mrb[0].mxu0 %v10421
  %v10640 = vpop.f32.mrb[0].mxu0
  %v10641 = vadd.f32 0.0, %v10640
  %v10642 = vpop.f32.mrb[0].mxu0
  %v10643 = vpop.f32.mrb[0].mxu0
  %v10644 = vadd.f32 0.0, %v10643
  %v10645 = vpop.f32.mrb[0].mxu0
  %10646 = vmatprep.mubr.bf16.mxu0 0
  %10647 = vmatmul.mubr.bf16.gmra.mrb[0].mxu0 %v10424
  %v10648 = vpop.f32.mrb[0].mxu0
  %v10649 = vadd.f32 0.0, %v10648
  %v10650 = vpop.f32.mrb[0].mxu0
  %v10651 = vpop.f32.mrb[0].mxu0
  %v10652 = vadd.f32 0.0, %v10651
  %v10653 = vpop.f32.mrb[0].mxu0
  %10654 = vmatprep.mubr.bf16.mxu0 0
  %10655 = vmatmul.mubr.bf16.gmra.mrb[0].mxu0 %v10427
  %v10656 = vpop.f32.mrb[0].mxu0
  %v10657 = vadd.f32 0.0, %v10656
  %v10658 = vpop.f32.mrb[0].mxu0
  %v10659 = vpop.f32.mrb[0].mxu0
  %v10660 = vadd.f32 0.0, %v10659
  %v10661 = vpop.f32.mrb[0].mxu0
  %10662 = vmatprep.mubr.bf16.mxu0 0
  %10663 = vmatmul.mubr.bf16.gmra.mrb[0].mxu0 %v10430
  %v10664 = vpop.f32.mrb[0].mxu0
  %v10665 = vadd.f32 0.0, %v10664
  %v10666 = vpop.f32.mrb[0].mxu0
  %v10667 = vpop.f32.mrb[0].mxu0
  %v10668 = vadd.f32 0.0, %v10667
  %v10669 = vpop.f32.mrb[0].mxu0
  %10670 = vmatprep.mubr.bf16.mxu0 0
  %10671 = vmatmul.mubr.bf16.gmra.mrb[0].mxu0 %v10433
  %v10672 = vpop.f32.mrb[0].mxu0
  %v10673 = vadd.f32 0.0, %v10672
  %v10674 = vpop.f32.mrb[0].mxu0
  %v10675 = vpop.f32.mrb[0].mxu0
  %v10676 = vpop.f32.mrb[0].mxu0
  %10677 = vdwg.mxu0
  %v10678 = vld [vmem:[%s75] sm:$0xff]
  %v10679 = vld [vmem:[%s75 + $0x8] sm:$0xff]
  %v10680 = vld [vmem:[%s75 + $0x10] sm:$0xff]
  %v10681 = vld [vmem:[%s75 + $0x18] sm:$0xff]
  %v10682 = vld [vmem:[%s75 + $0x20] sm:$0xff]
  %v10683 = vld [vmem:[%s75 + $0x28] sm:$0xff]
  %v10684 = vld [vmem:[%s75 + $0x30] sm:$0xff]
  %v10685 = vld [vmem:[%s75 + $0x38] sm:$0xff]
  %v10686 = vld [vmem:[%s75 + $0x40] sm:$0xff]
  %v10687 = vld [vmem:[%s75 + $0x48] sm:$0xff]
  %v10688 = vld [vmem:[%s75 + $0x50] sm:$0xff]
  %v10689 = vld [vmem:[%s75 + $0x58] sm:$0xff]
  %v10690 = vld [vmem:[%s75 + $0x60] sm:$0xff]
  %v10691 = vld [vmem:[%s75 + $0x68] sm:$0xff]
  %v10692 = vld [vmem:[%s75 + $0x70] sm:$0xff]
  %v10693 = vld [vmem:[%s75 + $0x78] sm:$0xff]
  %v10694 = vld [vmem:[%s75 + $0x80] sm:$0xff]
  %v10695 = vld [vmem:[%s75 + $0x88] sm:$0xff]
  %v10696 = vld [vmem:[%s75 + $0x90] sm:$0xff]
  %v10697 = vld [vmem:[%s75 + $0x98] sm:$0xff]
  %v10698 = vld [vmem:[%s75 + $0xa0] sm:$0xff]
  %v10699 = vld [vmem:[%s75 + $0xa8] sm:$0xff]
  %v10700 = vld [vmem:[%s75 + $0xb0] sm:$0xff]
  %v10701 = vld [vmem:[%s75 + $0xb8] sm:$0xff]
  %v10702 = vld [vmem:[%s75 + $0xc0] sm:$0xff]
  %v10703 = vld [vmem:[%s75 + $0xc8] sm:$0xff]
  %v10704 = vld [vmem:[%s75 + $0xd0] sm:$0xff]
  %v10705 = vld [vmem:[%s75 + $0xd8] sm:$0xff]
  %v10706 = vld [vmem:[%s75 + $0xe0] sm:$0xff]
  %v10707 = vld [vmem:[%s75 + $0xe8] sm:$0xff]
  %v10708 = vld [vmem:[%s75 + $0xf0] sm:$0xff]
  %v10709 = vld [vmem:[%s75 + $0xf8] sm:$0xff]
  %v10710 = vld [vmem:[%s75 + $0x100] sm:$0xff]
  %v10711 = vld [vmem:[%s75 + $0x108] sm:$0xff]
  %v10712 = vld [vmem:[%s75 + $0x110] sm:$0xff]
  %v10713 = vld [vmem:[%s75 + $0x118] sm:$0xff]
  %v10714 = vld [vmem:[%s75 + $0x120] sm:$0xff]
  %v10715 = vld [vmem:[%s75 + $0x128] sm:$0xff]
  %v10716 = vld [vmem:[%s75 + $0x130] sm:$0xff]
  %v10717 = vld [vmem:[%s75 + $0x138] sm:$0xff]
  %v10718 = vld [vmem:[%s75 + $0x140] sm:$0xff]
  %v10719 = vld [vmem:[%s75 + $0x148] sm:$0xff]
  %v10720 = vld [vmem:[%s75 + $0x150] sm:$0xff]
  %v10721 = vld [vmem:[%s75 + $0x158] sm:$0xff]
  %v10722 = vld [vmem:[%s75 + $0x160] sm:$0xff]
  %v10723 = vld [vmem:[%s75 + $0x168] sm:$0xff]
  %v10724 = vld [vmem:[%s75 + $0x170] sm:$0xff]
  %v10725 = vld [vmem:[%s75 + $0x178] sm:$0xff]
  %v10726 = vld [vmem:[%s75 + $0x180] sm:$0xff]
  %v10727 = vld [vmem:[%s75 + $0x188] sm:$0xff]
  %v10728 = vld [vmem:[%s75 + $0x190] sm:$0xff]
  %v10729 = vmul.f32 %v10473, %v10678
  %v10730 = vmul.f32 %v10476, %v10679
  %v10731 = vmul.f32 %v10481, %v10680
  %v10732 = vmul.f32 %v10484, %v10681
  %v10733 = vmul.f32 %v10489, %v10682
  %v10734 = vmul.f32 %v10492, %v10683
  %v10735 = vmul.f32 %v10497, %v10684
  %v10736 = vmul.f32 %v10500, %v10685
  %v10737 = vmul.f32 %v10505, %v10686
  %v10738 = vmul.f32 %v10508, %v10687
  %v10739 = vmul.f32 %v10513, %v10688
  %v10740 = vmul.f32 %v10516, %v10689
  %v10741 = vmul.f32 %v10521, %v10690
  %v10742 = vmul.f32 %v10524, %v10691
  %v10743 = vmul.f32 %v10529, %v10692
  %v10744 = vmul.f32 %v10532, %v10693
  %v10745 = vmul.f32 %v10537, %v10694
  %v10746 = vmul.f32 %v10540, %v10695
  %v10747 = vmul.f32 %v10545, %v10696
  %v10748 = vmul.f32 %v10548, %v10697
  %v10749 = vmul.f32 %v10553, %v10698
  %v10750 = vmul.f32 %v10556, %v10699
  %v10751 = vmul.f32 %v10561, %v10700
  %v10752 = vmul.f32 %v10564, %v10701
  %v10753 = vmul.f32 %v10569, %v10702
  %v10754 = vmul.f32 %v10572, %v10703
  %v10755 = vmul.f32 %v10577, %v10704
  %v10756 = vmul.f32 %v10580, %v10705
  %v10757 = vmul.f32 %v10585, %v10706
  %v10758 = vmul.f32 %v10588, %v10707
  %v10759 = vmul.f32 %v10593, %v10708
  %v10760 = vmul.f32 %v10596, %v10709
  %v10761 = vmul.f32 %v10601, %v10710
  %v10762 = vmul.f32 %v10604, %v10711
  %v10763 = vmul.f32 %v10609, %v10712
  %v10764 = vmul.f32 %v10612, %v10713
  %v10765 = vmul.f32 %v10617, %v10714
  %v10766 = vmul.f32 %v10620, %v10715
  %v10767 = vmul.f32 %v10625, %v10716
  %v10768 = vmul.f32 %v10628, %v10717
  %v10769 = vmul.f32 %v10633, %v10718
  %v10770 = vmul.f32 %v10636, %v10719
  %v10771 = vmul.f32 %v10641, %v10720
  %v10772 = vmul.f32 %v10644, %v10721
  %v10773 = vmul.f32 %v10649, %v10722
  %v10774 = vmul.f32 %v10652, %v10723
  %v10775 = vmul.f32 %v10657, %v10724
  %v10776 = vmul.f32 %v10660, %v10725
  %v10777 = vmul.f32 %v10665, %v10726
  %v10778 = vmul.f32 %v10668, %v10727
  %v10779 = vmul.f32 %v10673, %v10728
  %v10780 = vld [vmem:[%s77] sm:$0xff]
  %v10781 = vld [vmem:[%s77 + $0x8] sm:$0xff]
  %v10782 = vld [vmem:[%s77 + $0x10] sm:$0xff]
  %v10783 = vld [vmem:[%s77 + $0x18] sm:$0xff]
  %v10784 = vld [vmem:[%s77 + $0x20] sm:$0x3]
  %v10786 = vsel %vm9907, %v10729, 0
  %v10789 = vsel %vm9907, %v10730, 0
  %v10792 = vsel %vm9907, %v10731, 0
  %v10795 = vsel %vm9907, %v10732, 0
  %v10798 = vsel %vm9907, %v10733, 0
  %v10801 = vsel %vm9907, %v10734, 0
  %v10804 = vsel %vm9907, %v10735, 0
  %v10807 = vsel %vm9907, %v10736, 0
  %v10810 = vsel %vm9907, %v10737, 0
  %v10813 = vsel %vm9907, %v10738, 0
  %v10816 = vsel %vm9907, %v10739, 0
  %v10819 = vsel %vm9907, %v10740, 0
  %v10822 = vsel %vm9907, %v10741, 0
  %v10825 = vsel %vm9907, %v10742, 0
  %v10828 = vsel %vm9907, %v10743, 0
  %v10831 = vsel %vm9907, %v10744, 0
  %v10834 = vsel %vm9907, %v10745, 0
  %v10837 = vsel %vm9907, %v10746, 0
  %v10840 = vsel %vm9907, %v10747, 0
  %v10843 = vsel %vm9907, %v10748, 0
  %v10846 = vsel %vm9907, %v10749, 0
  %v10849 = vsel %vm9907, %v10750, 0
  %v10852 = vsel %vm9907, %v10751, 0
  %v10855 = vsel %vm9907, %v10752, 0
  %v10858 = vsel %vm9907, %v10753, 0
  %v10861 = vsel %vm9907, %v10754, 0
  %v10864 = vsel %vm9907, %v10755, 0
  %v10867 = vsel %vm9907, %v10756, 0
  %v10870 = vsel %vm9907, %v10757, 0
  %v10873 = vsel %vm9907, %v10758, 0
  %v10876 = vsel %vm9907, %v10759, 0
  %v10879 = vsel %vm9907, %v10760, 0
  %v10882 = vsel %vm9907, %v10761, 0
  %v10885 = vsel %vm9907, %v10762, 0
  %v10888 = vsel %vm9907, %v10763, 0
  %v10891 = vsel %vm9907, %v10764, 0
  %v10894 = vsel %vm9907, %v10765, 0
  %v10897 = vsel %vm9907, %v10766, 0
  %v10900 = vsel %vm9907, %v10767, 0
  %v10903 = vsel %vm9907, %v10768, 0
  %v10906 = vsel %vm9907, %v10769, 0
  %v10909 = vsel %vm9907, %v10770, 0
  %v10912 = vsel %vm9907, %v10771, 0
  %v10915 = vsel %vm9907, %v10772, 0
  %v10918 = vsel %vm9907, %v10773, 0
  %v10921 = vsel %vm9907, %v10774, 0
  %v10924 = vsel %vm9907, %v10775, 0
  %v10927 = vsel %vm9907, %v10776, 0
  %v10930 = vsel %vm9907, %v10777, 0
  %v10933 = vsel %vm9907, %v10778, 0
  %v10936 = vsel %vm9907, %v10779, 0
  %vm10938 = vcmask 1041408
  %v10940 = vsel %vm10938, %v10784, 0
  %10942 = vmatprep.subr.mxu0 0.0
  %10943 = vmatpush1.msra.mxu0 %v10780
  %10944 = vmatprep.subr.mxu0 0.0
  %10945 = vmatpush1.msra.mxu0 %v10781
  %10946 = vmatprep.subr.mxu0 0.0
  %10947 = vmatpush1.msra.mxu0 %v10782
  %10948 = vmatprep.subr.mxu0 0.0
  %10949 = vmatpush1.msra.mxu0 %v10783
  %10950 = vmatprep.subr.mxu0 0.0
  %10951 = vmatpush1.msra.mxu0 %v10940
  %10952 = vmatprep.subr.mxu0 0.0
  %10953 = vmatpush1.msra.mxu0 0.0
  %10954 = vmatprep.subr.mxu0 0.0
  %10955 = vmatpush1.msra.mxu0 0.0
  %10956 = vmatprep.subr.mxu0 0.0
  %10957 = vmatpush1.msra.mxu0 0.0
  %10958 = vmatprep.subr.mxu0 0.0
  %10959 = vmatpush1.msra.mxu0 0.0
  %10960 = vmatprep.subr.mxu0 0.0
  %10961 = vmatpush1.msra.mxu0 0.0
  %10962 = vmatprep.subr.mxu0 0.0
  %10963 = vmatpush1.msra.mxu0 0.0
  %10964 = vmatprep.subr.mxu0 0.0
  %10965 = vmatpush1.msra.mxu0 0.0
  %10966 = vmatprep.subr.mxu0 0.0
  %10967 = vmatpush1.msra.mxu0 0.0
  %10968 = vmatprep.subr.mxu0 0.0
  %10969 = vmatpush1.msra.mxu0 0.0
  %10970 = vmatprep.subr.mxu0 0.0
  %10971 = vmatpush1.msra.mxu0 0.0
  %10972 = vmatprep.subr.mxu0 0.0
  %10973 = vmatpush1.msra.mxu0 0.0
  %10974 = vmatprep.subr.mxu0 0.0
  %10975 = vmatpush1.msra.mxu0 0.0
  %10976 = vmatprep.subr.mxu0 0.0
  %10977 = vmatpush1.msra.mxu0 0.0
  %10978 = vmatprep.subr.mxu0 0.0
  %10979 = vmatpush1.msra.mxu0 0.0
  %10980 = vmatprep.subr.mxu0 0.0
  %10981 = vmatpush1.msra.mxu0 0.0
  %10982 = vmatprep.subr.mxu0 0.0
  %10983 = vmatpush1.msra.mxu0 0.0
  %10984 = vmatprep.subr.mxu0 0.0
  %10985 = vmatpush1.msra.mxu0 0.0
  %10986 = vmatprep.subr.mxu0 0.0
  %10987 = vmatpush1.msra.mxu0 0.0
  %10988 = vmatprep.subr.mxu0 0.0
  %10989 = vmatpush1.msra.mxu0 0.0
  %10990 = vmatprep.subr.mxu0 0.0
  %10991 = vmatpush1.msra.mxu0 0.0
  %10992 = vmatprep.subr.mxu0 0.0
  %10993 = vmatpush1.msra.mxu0 0.0
  %10994 = vmatprep.subr.mxu0 0.0
  %10995 = vmatpush1.msra.mxu0 0.0
  %10996 = vmatprep.subr.mxu0 0.0
  %10997 = vmatpush1.msra.mxu0 0.0
  %10998 = vmatprep.subr.mxu0 0.0
  %10999 = vmatpush1.msra.mxu0 0.0
  %11000 = vmatprep.subr.mxu0 0.0
  %11001 = vmatpush1.msra.mxu0 0.0
  %11002 = vmatprep.subr.mxu0 0.0
  %11003 = vmatpush1.msra.mxu0 0.0
  %11004 = vmatprep.subr.mxu0 0.0
  %11005 = vmatpush1.msra.mxu0 0.0
  %11006 = vmatprep.mubr.f32.mxu0 0.0
  %11007 = vmatmul.mubr.f32.gmra.mrb[0].mxu0 %v10786
  %v11008 = vpop.f32.mrb[0].mxu0
  %v11009 = vadd.f32 0.0, %v11008
  %v11010 = vpop.f32.mrb[0].mxu0
  %11011 = vmatprep.mubr.f32.mxu0 0.0
  %11012 = vmatmul.mubr.f32.gmra.mrb[0].mxu0 %v10789
  %v11013 = vpop.f32.mrb[0].mxu0
  %v11014 = vadd.f32 0.0, %v11013
  %v11015 = vpop.f32.mrb[0].mxu0
  %11016 = vmatprep.mubr.f32.mxu0 0.0
  %11017 = vmatmul.mubr.f32.gmra.mrb[0].mxu0 %v10792
  %v11018 = vpop.f32.mrb[0].mxu0
  %v11019 = vadd.f32 0.0, %v11018
  %v11020 = vpop.f32.mrb[0].mxu0
  %11021 = vmatprep.mubr.f32.mxu0 0.0
  %11022 = vmatmul.mubr.f32.gmra.mrb[0].mxu0 %v10795
  %v11023 = vpop.f32.mrb[0].mxu0
  %v11024 = vadd.f32 0.0, %v11023
  %v11025 = vpop.f32.mrb[0].mxu0
  %11026 = vmatprep.mubr.f32.mxu0 0.0
  %11027 = vmatmul.mubr.f32.gmra.mrb[0].mxu0 %v10798
  %v11028 = vpop.f32.mrb[0].mxu0
  %v11029 = vadd.f32 0.0, %v11028
  %v11030 = vpop.f32.mrb[0].mxu0
  %11031 = vmatprep.mubr.f32.mxu0 0.0
  %11032 = vmatmul.mubr.f32.gmra.mrb[0].mxu0 %v10801
  %v11033 = vpop.f32.mrb[0].mxu0
  %v11034 = vadd.f32 0.0, %v11033
  %v11035 = vpop.f32.mrb[0].mxu0
  %11036 = vmatprep.mubr.f32.mxu0 0.0
  %11037 = vmatmul.mubr.f32.gmra.mrb[0].mxu0 %v10804
  %v11038 = vpop.f32.mrb[0].mxu0
  %v11039 = vadd.f32 0.0, %v11038
  %v11040 = vpop.f32.mrb[0].mxu0
  %11041 = vmatprep.mubr.f32.mxu0 0.0
  %11042 = vmatmul.mubr.f32.gmra.mrb[0].mxu0 %v10807
  %v11043 = vpop.f32.mrb[0].mxu0
  %v11044 = vadd.f32 0.0, %v11043
  %v11045 = vpop.f32.mrb[0].mxu0
  %11046 = vmatprep.mubr.f32.mxu0 0.0
  %11047 = vmatmul.mubr.f32.gmra.mrb[0].mxu0 %v10810
  %v11048 = vpop.f32.mrb[0].mxu0
  %v11049 = vadd.f32 0.0, %v11048
  %v11050 = vpop.f32.mrb[0].mxu0
  %11051 = vmatprep.mubr.f32.mxu0 0.0
  %11052 = vmatmul.mubr.f32.gmra.mrb[0].mxu0 %v10813
  %v11053 = vpop.f32.mrb[0].mxu0
  %v11054 = vadd.f32 0.0, %v11053
  %v11055 = vpop.f32.mrb[0].mxu0
  %11056 = vmatprep.mubr.f32.mxu0 0.0
  %11057 = vmatmul.mubr.f32.gmra.mrb[0].mxu0 %v10816
  %v11058 = vpop.f32.mrb[0].mxu0
  %v11059 = vadd.f32 0.0, %v11058
  %v11060 = vpop.f32.mrb[0].mxu0
  %11061 = vmatprep.mubr.f32.mxu0 0.0
  %11062 = vmatmul.mubr.f32.gmra.mrb[0].mxu0 %v10819
  %v11063 = vpop.f32.mrb[0].mxu0
  %v11064 = vadd.f32 0.0, %v11063
  %v11065 = vpop.f32.mrb[0].mxu0
  %11066 = vmatprep.mubr.f32.mxu0 0.0
  %11067 = vmatmul.mubr.f32.gmra.mrb[0].mxu0 %v10822
  %v11068 = vpop.f32.mrb[0].mxu0
  %v11069 = vadd.f32 0.0, %v11068
  %v11070 = vpop.f32.mrb[0].mxu0
  %11071 = vmatprep.mubr.f32.mxu0 0.0
  %11072 = vmatmul.mubr.f32.gmra.mrb[0].mxu0 %v10825
  %v11073 = vpop.f32.mrb[0].mxu0
  %v11074 = vadd.f32 0.0, %v11073
  %v11075 = vpop.f32.mrb[0].mxu0
  %11076 = vmatprep.mubr.f32.mxu0 0.0
  %11077 = vmatmul.mubr.f32.gmra.mrb[0].mxu0 %v10828
  %v11078 = vpop.f32.mrb[0].mxu0
  %v11079 = vadd.f32 0.0, %v11078
  %v11080 = vpop.f32.mrb[0].mxu0
  %11081 = vmatprep.mubr.f32.mxu0 0.0
  %11082 = vmatmul.mubr.f32.gmra.mrb[0].mxu0 %v10831
  %v11083 = vpop.f32.mrb[0].mxu0
  %v11084 = vadd.f32 0.0, %v11083
  %v11085 = vpop.f32.mrb[0].mxu0
  %11086 = vmatprep.mubr.f32.mxu0 0.0
  %11087 = vmatmul.mubr.f32.gmra.mrb[0].mxu0 %v10834
  %v11088 = vpop.f32.mrb[0].mxu0
  %v11089 = vadd.f32 0.0, %v11088
  %v11090 = vpop.f32.mrb[0].mxu0
  %11091 = vmatprep.mubr.f32.mxu0 0.0
  %11092 = vmatmul.mubr.f32.gmra.mrb[0].mxu0 %v10837
  %v11093 = vpop.f32.mrb[0].mxu0
  %v11094 = vadd.f32 0.0, %v11093
  %v11095 = vpop.f32.mrb[0].mxu0
  %11096 = vmatprep.mubr.f32.mxu0 0.0
  %11097 = vmatmul.mubr.f32.gmra.mrb[0].mxu0 %v10840
  %v11098 = vpop.f32.mrb[0].mxu0
  %v11099 = vadd.f32 0.0, %v11098
  %v11100 = vpop.f32.mrb[0].mxu0
  %11101 = vmatprep.mubr.f32.mxu0 0.0
  %11102 = vmatmul.mubr.f32.gmra.mrb[0].mxu0 %v10843
  %v11103 = vpop.f32.mrb[0].mxu0
  %v11104 = vadd.f32 0.0, %v11103
  %v11105 = vpop.f32.mrb[0].mxu0
  %11106 = vmatprep.mubr.f32.mxu0 0.0
  %11107 = vmatmul.mubr.f32.gmra.mrb[0].mxu0 %v10846
  %v11108 = vpop.f32.mrb[0].mxu0
  %v11109 = vadd.f32 0.0, %v11108
  %v11110 = vpop.f32.mrb[0].mxu0
  %11111 = vmatprep.mubr.f32.mxu0 0.0
  %11112 = vmatmul.mubr.f32.gmra.mrb[0].mxu0 %v10849
  %v11113 = vpop.f32.mrb[0].mxu0
  %v11114 = vadd.f32 0.0, %v11113
  %v11115 = vpop.f32.mrb[0].mxu0
  %11116 = vmatprep.mubr.f32.mxu0 0.0
  %11117 = vmatmul.mubr.f32.gmra.mrb[0].mxu0 %v10852
  %v11118 = vpop.f32.mrb[0].mxu0
  %v11119 = vadd.f32 0.0, %v11118
  %v11120 = vpop.f32.mrb[0].mxu0
  %11121 = vmatprep.mubr.f32.mxu0 0.0
  %11122 = vmatmul.mubr.f32.gmra.mrb[0].mxu0 %v10855
  %v11123 = vpop.f32.mrb[0].mxu0
  %v11124 = vadd.f32 0.0, %v11123
  %v11125 = vpop.f32.mrb[0].mxu0
  %11126 = vmatprep.mubr.f32.mxu0 0.0
  %11127 = vmatmul.mubr.f32.gmra.mrb[0].mxu0 %v10858
  %v11128 = vpop.f32.mrb[0].mxu0
  %v11129 = vadd.f32 0.0, %v11128
  %v11130 = vpop.f32.mrb[0].mxu0
  %11131 = vmatprep.mubr.f32.mxu0 0.0
  %11132 = vmatmul.mubr.f32.gmra.mrb[0].mxu0 %v10861
  %v11133 = vpop.f32.mrb[0].mxu0
  %v11134 = vadd.f32 0.0, %v11133
  %v11135 = vpop.f32.mrb[0].mxu0
  %11136 = vmatprep.mubr.f32.mxu0 0.0
  %11137 = vmatmul.mubr.f32.gmra.mrb[0].mxu0 %v10864
  %v11138 = vpop.f32.mrb[0].mxu0
  %v11139 = vadd.f32 0.0, %v11138
  %v11140 = vpop.f32.mrb[0].mxu0
  %11141 = vmatprep.mubr.f32.mxu0 0.0
  %11142 = vmatmul.mubr.f32.gmra.mrb[0].mxu0 %v10867
  %v11143 = vpop.f32.mrb[0].mxu0
  %v11144 = vadd.f32 0.0, %v11143
  %v11145 = vpop.f32.mrb[0].mxu0
  %11146 = vmatprep.mubr.f32.mxu0 0.0
  %11147 = vmatmul.mubr.f32.gmra.mrb[0].mxu0 %v10870
  %v11148 = vpop.f32.mrb[0].mxu0
  %v11149 = vadd.f32 0.0, %v11148
  %v11150 = vpop.f32.mrb[0].mxu0
  %11151 = vmatprep.mubr.f32.mxu0 0.0
  %11152 = vmatmul.mubr.f32.gmra.mrb[0].mxu0 %v10873
  %v11153 = vpop.f32.mrb[0].mxu0
  %v11154 = vadd.f32 0.0, %v11153
  %v11155 = vpop.f32.mrb[0].mxu0
  %11156 = vmatprep.mubr.f32.mxu0 0.0
  %11157 = vmatmul.mubr.f32.gmra.mrb[0].mxu0 %v10876
  %v11158 = vpop.f32.mrb[0].mxu0
  %v11159 = vadd.f32 0.0, %v11158
  %v11160 = vpop.f32.mrb[0].mxu0
  %11161 = vmatprep.mubr.f32.mxu0 0.0
  %11162 = vmatmul.mubr.f32.gmra.mrb[0].mxu0 %v10879
  %v11163 = vpop.f32.mrb[0].mxu0
  %v11164 = vadd.f32 0.0, %v11163
  %v11165 = vpop.f32.mrb[0].mxu0
  %11166 = vmatprep.mubr.f32.mxu0 0.0
  %11167 = vmatmul.mubr.f32.gmra.mrb[0].mxu0 %v10882
  %v11168 = vpop.f32.mrb[0].mxu0
  %v11169 = vadd.f32 0.0, %v11168
  %v11170 = vpop.f32.mrb[0].mxu0
  %11171 = vmatprep.mubr.f32.mxu0 0.0
  %11172 = vmatmul.mubr.f32.gmra.mrb[0].mxu0 %v10885
  %v11173 = vpop.f32.mrb[0].mxu0
  %v11174 = vadd.f32 0.0, %v11173
  %v11175 = vpop.f32.mrb[0].mxu0
  %11176 = vmatprep.mubr.f32.mxu0 0.0
  %11177 = vmatmul.mubr.f32.gmra.mrb[0].mxu0 %v10888
  %v11178 = vpop.f32.mrb[0].mxu0
  %v11179 = vadd.f32 0.0, %v11178
  %v11180 = vpop.f32.mrb[0].mxu0
  %11181 = vmatprep.mubr.f32.mxu0 0.0
  %11182 = vmatmul.mubr.f32.gmra.mrb[0].mxu0 %v10891
  %v11183 = vpop.f32.mrb[0].mxu0
  %v11184 = vadd.f32 0.0, %v11183
  %v11185 = vpop.f32.mrb[0].mxu0
  %11186 = vmatprep.mubr.f32.mxu0 0.0
  %11187 = vmatmul.mubr.f32.gmra.mrb[0].mxu0 %v10894
  %v11188 = vpop.f32.mrb[0].mxu0
  %v11189 = vadd.f32 0.0, %v11188
  %v11190 = vpop.f32.mrb[0].mxu0
  %11191 = vmatprep.mubr.f32.mxu0 0.0
  %11192 = vmatmul.mubr.f32.gmra.mrb[0].mxu0 %v10897
  %v11193 = vpop.f32.mrb[0].mxu0
  %v11194 = vadd.f32 0.0, %v11193
  %v11195 = vpop.f32.mrb[0].mxu0
  %11196 = vmatprep.mubr.f32.mxu0 0.0
  %11197 = vmatmul.mubr.f32.gmra.mrb[0].mxu0 %v10900
  %v11198 = vpop.f32.mrb[0].mxu0
  %v11199 = vadd.f32 0.0, %v11198
  %v11200 = vpop.f32.mrb[0].mxu0
  %11201 = vmatprep.mubr.f32.mxu0 0.0
  %11202 = vmatmul.mubr.f32.gmra.mrb[0].mxu0 %v10903
  %v11203 = vpop.f32.mrb[0].mxu0
  %v11204 = vadd.f32 0.0, %v11203
  %v11205 = vpop.f32.mrb[0].mxu0
  %11206 = vmatprep.mubr.f32.mxu0 0.0
  %11207 = vmatmul.mubr.f32.gmra.mrb[0].mxu0 %v10906
  %v11208 = vpop.f32.mrb[0].mxu0
  %v11209 = vadd.f32 0.0, %v11208
  %v11210 = vpop.f32.mrb[0].mxu0
  %11211 = vmatprep.mubr.f32.mxu0 0.0
  %11212 = vmatmul.mubr.f32.gmra.mrb[0].mxu0 %v10909
  %v11213 = vpop.f32.mrb[0].mxu0
  %v11214 = vadd.f32 0.0, %v11213
  %v11215 = vpop.f32.mrb[0].mxu0
  %11216 = vmatprep.mubr.f32.mxu0 0.0
  %11217 = vmatmul.mubr.f32.gmra.mrb[0].mxu0 %v10912
  %v11218 = vpop.f32.mrb[0].mxu0
  %v11219 = vadd.f32 0.0, %v11218
  %v11220 = vpop.f32.mrb[0].mxu0
  %11221 = vmatprep.mubr.f32.mxu0 0.0
  %11222 = vmatmul.mubr.f32.gmra.mrb[0].mxu0 %v10915
  %v11223 = vpop.f32.mrb[0].mxu0
  %v11224 = vadd.f32 0.0, %v11223
  %v11225 = vpop.f32.mrb[0].mxu0
  %11226 = vmatprep.mubr.f32.mxu0 0.0
  %11227 = vmatmul.mubr.f32.gmra.mrb[0].mxu0 %v10918
  %v11228 = vpop.f32.mrb[0].mxu0
  %v11229 = vadd.f32 0.0, %v11228
  %v11230 = vpop.f32.mrb[0].mxu0
  %11231 = vmatprep.mubr.f32.mxu0 0.0
  %11232 = vmatmul.mubr.f32.gmra.mrb[0].mxu0 %v10921
  %v11233 = vpop.f32.mrb[0].mxu0
  %v11234 = vadd.f32 0.0, %v11233
  %v11235 = vpop.f32.mrb[0].mxu0
  %11236 = vmatprep.mubr.f32.mxu0 0.0
  %11237 = vmatmul.mubr.f32.gmra.mrb[0].mxu0 %v10924
  %v11238 = vpop.f32.mrb[0].mxu0
  %v11239 = vadd.f32 0.0, %v11238
  %v11240 = vpop.f32.mrb[0].mxu0
  %11241 = vmatprep.mubr.f32.mxu0 0.0
  %11242 = vmatmul.mubr.f32.gmra.mrb[0].mxu0 %v10927
  %v11243 = vpop.f32.mrb[0].mxu0
  %v11244 = vadd.f32 0.0, %v11243
  %v11245 = vpop.f32.mrb[0].mxu0
  %11246 = vmatprep.mubr.f32.mxu0 0.0
  %11247 = vmatmul.mubr.f32.gmra.mrb[0].mxu0 %v10930
  %v11248 = vpop.f32.mrb[0].mxu0
  %v11249 = vadd.f32 0.0, %v11248
  %v11250 = vpop.f32.mrb[0].mxu0
  %11251 = vmatprep.mubr.f32.mxu0 0.0
  %11252 = vmatmul.mubr.f32.gmra.mrb[0].mxu0 %v10933
  %v11253 = vpop.f32.mrb[0].mxu0
  %v11254 = vadd.f32 0.0, %v11253
  %v11255 = vpop.f32.mrb[0].mxu0
  %11256 = vmatprep.mubr.f32.mxu0 0.0
  %11257 = vmatmul.mubr.f32.gmra.mrb[0].mxu0 %v10936
  %v11258 = vpop.f32.mrb[0].mxu0
  %v11259 = vadd.f32 0.0, %v11258
  %v11260 = vpop.f32.mrb[0].mxu0
  %11261 = vdwg.mxu0
  %v11262 = vld [vmem:[%s79] sm:$0xff]
  %v11263 = vld [vmem:[%s79 + $0x8] sm:$0xff]
  %v11264 = vld [vmem:[%s79 + $0x10] sm:$0xff]
  %v11265 = vld [vmem:[%s79 + $0x18] sm:$0xff]
  %v11266 = vld [vmem:[%s79 + $0x20] sm:$0xff]
  %v11267 = vld [vmem:[%s79 + $0x28] sm:$0xff]
  %v11268 = vld [vmem:[%s79 + $0x30] sm:$0xff]
  %v11269 = vld [vmem:[%s79 + $0x38] sm:$0xff]
  %v11270 = vld [vmem:[%s79 + $0x40] sm:$0xff]
  %v11271 = vld [vmem:[%s79 + $0x48] sm:$0xff]
  %v11272 = vld [vmem:[%s79 + $0x50] sm:$0xff]
  %v11273 = vld [vmem:[%s79 + $0x58] sm:$0xff]
  %v11274 = vld [vmem:[%s79 + $0x60] sm:$0xff]
  %v11275 = vld [vmem:[%s79 + $0x68] sm:$0xff]
  %v11276 = vld [vmem:[%s79 + $0x70] sm:$0xff]
  %v11277 = vld [vmem:[%s79 + $0x78] sm:$0xff]
  %v11278 = vpack.c.bf16 %v11014, %v11009
  %v11279 = vpack.c.bf16 %v11024, %v11019
  %v11280 = vpack.c.bf16 %v11034, %v11029
  %v11281 = vpack.c.bf16 %v11044, %v11039
  %v11282 = vpack.c.bf16 %v11054, %v11049
  %v11283 = vpack.c.bf16 %v11064, %v11059
  %v11284 = vpack.c.bf16 %v11074, %v11069
  %v11285 = vpack.c.bf16 %v11084, %v11079
  %v11286 = vpack.c.bf16 %v11094, %v11089
  %v11287 = vpack.c.bf16 %v11104, %v11099
  %v11288 = vpack.c.bf16 %v11114, %v11109
  %v11289 = vpack.c.bf16 %v11124, %v11119
  %v11290 = vpack.c.bf16 %v11134, %v11129
  %v11291 = vpack.c.bf16 %v11144, %v11139
  %v11292 = vpack.c.bf16 %v11154, %v11149
  %v11293 = vpack.c.bf16 %v11164, %v11159
  %v11294 = vpack.c.bf16 %v11174, %v11169
  %v11295 = vpack.c.bf16 %v11184, %v11179
  %v11296 = vpack.c.bf16 %v11194, %v11189
  %v11297 = vpack.c.bf16 %v11204, %v11199
  %v11298 = vpack.c.bf16 %v11214, %v11209
  %v11299 = vpack.c.bf16 %v11224, %v11219
  %v11300 = vpack.c.bf16 %v11234, %v11229
  %v11301 = vpack.c.bf16 %v11244, %v11239
  %v11302 = vpack.c.bf16 %v11254, %v11249
  %v11303 = vpack.c.bf16 %v11259, %v11259
  %v11304 = vld [vmem:[%s81] sm:$0xff]
  %v11305 = vld [vmem:[%s81 + $0x8] sm:$0xff]
  %v11306 = vld [vmem:[%s81 + $0x10] sm:$0xff]
  %v11307 = vld [vmem:[%s81 + $0x18] sm:$0xff]
  %v11308 = vld [vmem:[%s81 + $0x20] sm:$0xff]
  %v11309 = vld [vmem:[%s81 + $0x28] sm:$0xff]
  %v11310 = vld [vmem:[%s81 + $0x30] sm:$0xff]
  %v11311 = vld [vmem:[%s81 + $0x38] sm:$0xff]
  %11313 = vset.pattern.permute.xlu0 0
  %11314 = vperm.xlu0 %11313, %v11304
  %v11315 = vpop.permute.xlu0 %11314
  %11318 = vset.pattern.permute.xlu0 0
  %11319 = vperm.xlu0 %11318, %v11305
  %v11320 = vpop.permute.xlu0 %11319
  %11323 = vset.pattern.permute.xlu0 0
  %11324 = vperm.xlu0 %11323, %v11306
  %v11325 = vpop.permute.xlu0 %11324
  %11328 = vset.pattern.permute.xlu0 0
  %11329 = vperm.xlu0 %11328, %v11307
  %v11330 = vpop.permute.xlu0 %11329
  %11333 = vset.pattern.permute.xlu0 0
  %11334 = vperm.xlu0 %11333, %v11308
  %v11335 = vpop.permute.xlu0 %11334
  %11338 = vset.pattern.permute.xlu0 0
  %11339 = vperm.xlu0 %11338, %v11309
  %v11340 = vpop.permute.xlu0 %11339
  %11343 = vset.pattern.permute.xlu0 0
  %11344 = vperm.xlu0 %11343, %v11310
  %v11345 = vpop.permute.xlu0 %11344
  %11348 = vset.pattern.permute.xlu0 0
  %11349 = vperm.xlu0 %11348, %v11311
  %v11350 = vpop.permute.xlu0 %11349
  %v11368 = vunpack.c.l.b16 %v11262
  %v11369 = vunpack.c.h.b16 %v11262
  %v11370 = vunpack.c.l.b16 %v11263
  %v11371 = vunpack.c.h.b16 %v11263
  %v11372 = vunpack.c.l.b16 %v11264
  %v11373 = vunpack.c.h.b16 %v11264
  %v11374 = vunpack.c.l.b16 %v11265
  %v11375 = vunpack.c.h.b16 %v11265
  %v11376 = vunpack.c.l.b16 %v11266
  %v11377 = vunpack.c.h.b16 %v11266
  %v11378 = vunpack.c.l.b16 %v11267
  %v11379 = vunpack.c.h.b16 %v11267
  %v11380 = vunpack.c.l.b16 %v11268
  %v11381 = vunpack.c.h.b16 %v11268
  %v11382 = vunpack.c.l.b16 %v11269
  %v11383 = vunpack.c.h.b16 %v11269
  %v11384 = vunpack.c.l.b16 %v11270
  %v11385 = vunpack.c.h.b16 %v11270
  %v11386 = vunpack.c.l.b16 %v11271
  %v11387 = vunpack.c.h.b16 %v11271
  %v11388 = vunpack.c.l.b16 %v11272
  %v11389 = vunpack.c.h.b16 %v11272
  %v11390 = vunpack.c.l.b16 %v11273
  %v11391 = vunpack.c.h.b16 %v11273
  %v11392 = vunpack.c.l.b16 %v11274
  %v11393 = vunpack.c.h.b16 %v11274
  %v11394 = vunpack.c.l.b16 %v11275
  %v11395 = vunpack.c.h.b16 %v11275
  %v11396 = vunpack.c.l.b16 %v11276
  %v11397 = vunpack.c.h.b16 %v11276
  %v11398 = vunpack.c.l.b16 %v11277
  %v11399 = vunpack.c.h.b16 %v11277
  %v11400 = vpack.c.b16 %v11372, %v11368
  %v11401 = vpack.c.b16 %v11373, %v11369
  %v11402 = vpack.c.b16 %v11374, %v11370
  %v11403 = vpack.c.b16 %v11375, %v11371
  %v11404 = vpack.c.b16 %v11380, %v11376
  %v11405 = vpack.c.b16 %v11381, %v11377
  %v11406 = vpack.c.b16 %v11382, %v11378
  %v11407 = vpack.c.b16 %v11383, %v11379
  %v11408 = vpack.c.b16 %v11388, %v11384
  %v11409 = vpack.c.b16 %v11389, %v11385
  %v11410 = vpack.c.b16 %v11390, %v11386
  %v11411 = vpack.c.b16 %v11391, %v11387
  %v11412 = vpack.c.b16 %v11396, %v11392
  %v11413 = vpack.c.b16 %v11397, %v11393
  %v11414 = vpack.c.b16 %v11398, %v11394
  %v11415 = vpack.c.b16 %v11399, %v11395
  %v11429 = vsel %vm7557, %v11403, 0
  %v11432 = vsel %vm7557, %v11407, 0
  %v11435 = vsel %vm7557, %v11411, 0
  %v11438 = vsel %vm7557, %v11415, 0
  %v11441 = vsel %vm2004, %v11303, 0
  %11443 = vmatprep.subr.bf16.mxu0 0
  %11444 = vmatpush1.bf16.msra.mxu0 %v11278
  %11445 = vmatprep.subr.bf16.mxu0 0
  %11446 = vmatpush1.bf16.msra.mxu0 %v11279
  %11447 = vmatprep.subr.bf16.mxu0 0
  %11448 = vmatpush1.bf16.msra.mxu0 %v11280
  %11449 = vmatprep.subr.bf16.mxu0 0
  %11450 = vmatpush1.bf16.msra.mxu0 %v11281
  %11451 = vmatprep.subr.bf16.mxu0 0
  %11452 = vmatpush1.bf16.msra.mxu0 %v11282
  %11453 = vmatprep.subr.bf16.mxu0 0
  %11454 = vmatpush1.bf16.msra.mxu0 %v11283
  %11455 = vmatprep.subr.bf16.mxu0 0
  %11456 = vmatpush1.bf16.msra.mxu0 %v11284
  %11457 = vmatprep.subr.bf16.mxu0 0
  %11458 = vmatpush1.bf16.msra.mxu0 %v11285
  %11459 = vmatprep.subr.bf16.mxu0 0
  %11460 = vmatpush1.bf16.msra.mxu0 %v11286
  %11461 = vmatprep.subr.bf16.mxu0 0
  %11462 = vmatpush1.bf16.msra.mxu0 %v11287
  %11463 = vmatprep.subr.bf16.mxu0 0
  %11464 = vmatpush1.bf16.msra.mxu0 %v11288
  %11465 = vmatprep.subr.bf16.mxu0 0
  %11466 = vmatpush1.bf16.msra.mxu0 %v11289
  %11467 = vmatprep.subr.bf16.mxu0 0
  %11468 = vmatpush1.bf16.msra.mxu0 %v11290
  %11469 = vmatprep.subr.bf16.mxu0 0
  %11470 = vmatpush1.bf16.msra.mxu0 %v11291
  %11471 = vmatprep.subr.bf16.mxu0 0
  %11472 = vmatpush1.bf16.msra.mxu0 %v11292
  %11473 = vmatprep.subr.bf16.mxu0 0
  %11474 = vmatpush1.bf16.msra.mxu0 %v11293
  %11475 = vmatprep.mubr.bf16.mxu0 %v11401
  %11476 = vmatmul.mubr.bf16.gmra.mrb[0].mxu0 %v11400
  %v11477 = vpop.f32.mrb[0].mxu0
  %v11478 = vadd.f32 %v11315, %v11477
  %v11479 = vpop.f32.mrb[0].mxu0
  %v11480 = vpop.f32.mrb[0].mxu0
  %v11481 = vadd.f32 %v11320, %v11480
  %v11482 = vpop.f32.mrb[0].mxu0
  %11483 = vmatprep.mubr.bf16.mxu0 %v11405
  %11484 = vmatmul.mubr.bf16.gmra.mrb[0].mxu0 %v11404
  %v11485 = vpop.f32.mrb[0].mxu0
  %v11486 = vadd.f32 %v11325, %v11485
  %v11487 = vpop.f32.mrb[0].mxu0
  %v11488 = vpop.f32.mrb[0].mxu0
  %v11489 = vadd.f32 %v11330, %v11488
  %v11490 = vpop.f32.mrb[0].mxu0
  %11491 = vmatprep.mubr.bf16.mxu0 %v11409
  %11492 = vmatmul.mubr.bf16.gmra.mrb[0].mxu0 %v11408
  %v11493 = vpop.f32.mrb[0].mxu0
  %v11494 = vadd.f32 %v11335, %v11493
  %v11495 = vpop.f32.mrb[0].mxu0
  %v11496 = vpop.f32.mrb[0].mxu0
  %v11497 = vadd.f32 %v11340, %v11496
  %v11498 = vpop.f32.mrb[0].mxu0
  %11499 = vmatprep.mubr.bf16.mxu0 %v11413
  %11500 = vmatmul.mubr.bf16.gmra.mrb[0].mxu0 %v11412
  %v11501 = vpop.f32.mrb[0].mxu0
  %v11502 = vadd.f32 %v11345, %v11501
  %v11503 = vpop.f32.mrb[0].mxu0
  %v11504 = vpop.f32.mrb[0].mxu0
  %v11505 = vadd.f32 %v11350, %v11504
  %v11506 = vpop.f32.mrb[0].mxu0
  %11507 = vdwg.mxu0
  %11508 = vmatprep.subr.bf16.mxu0 0
  %11509 = vmatpush1.bf16.msra.mxu0 %v11294
  %11510 = vmatprep.subr.bf16.mxu0 0
  %11511 = vmatpush1.bf16.msra.mxu0 %v11295
  %11512 = vmatprep.subr.bf16.mxu0 0
  %11513 = vmatpush1.bf16.msra.mxu0 %v11296
  %11514 = vmatprep.subr.bf16.mxu0 0
  %11515 = vmatpush1.bf16.msra.mxu0 %v11297
  %11516 = vmatprep.subr.bf16.mxu0 0
  %11517 = vmatpush1.bf16.msra.mxu0 %v11298
  %11518 = vmatprep.subr.bf16.mxu0 0
  %11519 = vmatpush1.bf16.msra.mxu0 %v11299
  %11520 = vmatprep.subr.bf16.mxu0 0
  %11521 = vmatpush1.bf16.msra.mxu0 %v11300
  %11522 = vmatprep.subr.bf16.mxu0 0
  %11523 = vmatpush1.bf16.msra.mxu0 %v11301
  %11524 = vmatprep.subr.bf16.mxu0 0
  %11525 = vmatpush1.bf16.msra.mxu0 %v11302
  %11526 = vmatprep.subr.bf16.mxu0 0
  %11527 = vmatpush1.bf16.msra.mxu0 %v11441
  %11528 = vmatprep.subr.bf16.mxu0 0
  %11529 = vmatpush1.bf16.msra.mxu0 0
  %11530 = vmatprep.subr.bf16.mxu0 0
  %11531 = vmatpush1.bf16.msra.mxu0 0
  %11532 = vmatprep.subr.bf16.mxu0 0
  %11533 = vmatpush1.bf16.msra.mxu0 0
  %11534 = vmatprep.subr.bf16.mxu0 0
  %11535 = vmatpush1.bf16.msra.mxu0 0
  %11536 = vmatprep.subr.bf16.mxu0 0
  %11537 = vmatpush1.bf16.msra.mxu0 0
  %11538 = vmatprep.subr.bf16.mxu0 0
  %11539 = vmatpush1.bf16.msra.mxu0 0
  %11540 = vmatprep.mubr.bf16.mxu0 %v11429
  %11541 = vmatmul.mubr.bf16.gmra.mrb[0].mxu0 %v11402
  %v11542 = vpop.f32.mrb[0].mxu0
  %v11543 = vadd.f32 %v11478, %v11542
  %v11544 = vpop.f32.mrb[0].mxu0
  %v11545 = vpop.f32.mrb[0].mxu0
  %v11546 = vadd.f32 %v11481, %v11545
  %v11547 = vpop.f32.mrb[0].mxu0
  %11548 = vmatprep.mubr.bf16.mxu0 %v11432
  %11549 = vmatmul.mubr.bf16.gmra.mrb[0].mxu0 %v11406
  %v11550 = vpop.f32.mrb[0].mxu0
  %v11551 = vadd.f32 %v11486, %v11550
  %v11552 = vpop.f32.mrb[0].mxu0
  %v11553 = vpop.f32.mrb[0].mxu0
  %v11554 = vadd.f32 %v11489, %v11553
  %v11555 = vpop.f32.mrb[0].mxu0
  %11556 = vmatprep.mubr.bf16.mxu0 %v11435
  %11557 = vmatmul.mubr.bf16.gmra.mrb[0].mxu0 %v11410
  %v11558 = vpop.f32.mrb[0].mxu0
  %v11559 = vadd.f32 %v11494, %v11558
  %v11560 = vpop.f32.mrb[0].mxu0
  %v11561 = vpop.f32.mrb[0].mxu0
  %v11562 = vadd.f32 %v11497, %v11561
  %v11563 = vpop.f32.mrb[0].mxu0
  %11564 = vmatprep.mubr.bf16.mxu0 %v11438
  %11565 = vmatmul.mubr.bf16.gmra.mrb[0].mxu0 %v11414
  %v11566 = vpop.f32.mrb[0].mxu0
  %v11567 = vadd.f32 %v11502, %v11566
  %v11568 = vpop.f32.mrb[0].mxu0
  %v11569 = vpop.f32.mrb[0].mxu0
  %v11570 = vadd.f32 %v11505, %v11569
  %v11571 = vpop.f32.mrb[0].mxu0
  %11572 = vdwg.mxu0
  %v11573 = vmax.f32 %v11543, 0.0
  %v11574 = vmax.f32 %v11546, 0.0
  %v11575 = vmax.f32 %v11551, 0.0
  %v11576 = vmax.f32 %v11554, 0.0
  %v11577 = vmax.f32 %v11559, 0.0
  %v11578 = vmax.f32 %v11562, 0.0
  %v11579 = vmax.f32 %v11567, 0.0
  %v11580 = vmax.f32 %v11570, 0.0
  %v11581 = vld [vmem:[%s83] sm:$0xf]
  %v11582 = vld [vmem:[%s83 + $0x4] sm:$0xf]
  %v11583 = vld [vmem:[%s83 + $0x8] sm:$0xf]
  %v11584 = vld [vmem:[%s83 + $0xc] sm:$0xf]
  %v11585 = vld [vmem:[%s83 + $0x10] sm:$0xf]
  %v11586 = vld [vmem:[%s83 + $0x14] sm:$0xf]
  %v11587 = vld [vmem:[%s83 + $0x18] sm:$0xf]
  %v11588 = vld [vmem:[%s83 + $0x1c] sm:$0x7]
  %v11589 = vpack.c.bf16 %v11574, %v11573
  %v11590 = vpack.c.bf16 %v11576, %v11575
  %v11591 = vpack.c.bf16 %v11578, %v11577
  %v11592 = vpack.c.bf16 %v11580, %v11579
  %v11593 = vld [vmem:[%s85] sm:$0xff]
  %v11594 = vld [vmem:[%s85 + $0x8] sm:$0xff]
  %v11595 = vld [vmem:[%s85 + $0x10] sm:$0xff]
  %v11596 = vld [vmem:[%s85 + $0x18] sm:$0xff]
  %v11597 = vld [vmem:[%s85 + $0x20] sm:$0xff]
  %v11598 = vld [vmem:[%s85 + $0x28] sm:$0xff]
  %v11599 = vld [vmem:[%s85 + $0x30] sm:$0xff]
  %v11600 = vld [vmem:[%s85 + $0x38] sm:$0x3f]
  %11602 = vset.pattern.permute.xlu0 0
  %11603 = vperm.xlu0 %11602, %v11593
  %v11604 = vpop.permute.xlu0 %11603
  %11607 = vset.pattern.permute.xlu0 0
  %11608 = vperm.xlu0 %11607, %v11594
  %v11609 = vpop.permute.xlu0 %11608
  %11612 = vset.pattern.permute.xlu0 0
  %11613 = vperm.xlu0 %11612, %v11595
  %v11614 = vpop.permute.xlu0 %11613
  %11617 = vset.pattern.permute.xlu0 0
  %11618 = vperm.xlu0 %11617, %v11596
  %v11619 = vpop.permute.xlu0 %11618
  %11622 = vset.pattern.permute.xlu0 0
  %11623 = vperm.xlu0 %11622, %v11597
  %v11624 = vpop.permute.xlu0 %11623
  %11627 = vset.pattern.permute.xlu0 0
  %11628 = vperm.xlu0 %11627, %v11598
  %v11629 = vpop.permute.xlu0 %11628
  %11632 = vset.pattern.permute.xlu0 0
  %11633 = vperm.xlu0 %11632, %v11599
  %v11634 = vpop.permute.xlu0 %11633
  %11637 = vset.pattern.permute.xlu0 0
  %11638 = vperm.xlu0 %11637, %v11600
  %v11639 = vpop.permute.xlu0 %11638
  %v11649 = vunpack.c.l.b16 %v11581
  %v11650 = vunpack.c.l.b16 %v11582
  %v11651 = vunpack.c.l.b16 %v11583
  %v11652 = vunpack.c.l.b16 %v11584
  %v11653 = vunpack.c.l.b16 %v11585
  %v11654 = vunpack.c.l.b16 %v11586
  %v11655 = vunpack.c.l.b16 %v11587
  %v11656 = vunpack.c.l.b16 %v11588
  %v11657 = vpack.c.b16 %v11650, %v11649
  %v11658 = vpack.c.b16 %v11652, %v11651
  %v11659 = vpack.c.b16 %v11654, %v11653
  %v11660 = vpack.c.b16 %v11656, %v11655
  %vm11661 = vcmask 523264
  %v11663 = vsel %vm11661, %v11657, 0
  %v11666 = vsel %vm11661, %v11658, 0
  %v11669 = vsel %vm11661, %v11659, 0
  %v11672 = vsel %vm11661, %v11660, 0
  %11674 = vmatprep.subr.bf16.mxu0 0
  %11675 = vmatpush1.bf16.msra.mxu0 %v11589
  %11676 = vmatprep.subr.bf16.mxu0 0
  %11677 = vmatpush1.bf16.msra.mxu0 %v11590
  %11678 = vmatprep.subr.bf16.mxu0 0
  %11679 = vmatpush1.bf16.msra.mxu0 %v11591
  %11680 = vmatprep.subr.bf16.mxu0 0
  %11681 = vmatpush1.bf16.msra.mxu0 %v11592
  %11682 = vmatprep.subr.bf16.mxu0 0
  %11683 = vmatpush1.bf16.msra.mxu0 0
  %11684 = vmatprep.subr.bf16.mxu0 0
  %11685 = vmatpush1.bf16.msra.mxu0 0
  %11686 = vmatprep.subr.bf16.mxu0 0
  %11687 = vmatpush1.bf16.msra.mxu0 0
  %11688 = vmatprep.subr.bf16.mxu0 0
  %11689 = vmatpush1.bf16.msra.mxu0 0
  %11690 = vmatprep.subr.bf16.mxu0 0
  %11691 = vmatpush1.bf16.msra.mxu0 0
  %11692 = vmatprep.subr.bf16.mxu0 0
  %11693 = vmatpush1.bf16.msra.mxu0 0
  %11694 = vmatprep.subr.bf16.mxu0 0
  %11695 = vmatpush1.bf16.msra.mxu0 0
  %11696 = vmatprep.subr.bf16.mxu0 0
  %11697 = vmatpush1.bf16.msra.mxu0 0
  %11698 = vmatprep.subr.bf16.mxu0 0
  %11699 = vmatpush1.bf16.msra.mxu0 0
  %11700 = vmatprep.subr.bf16.mxu0 0
  %11701 = vmatpush1.bf16.msra.mxu0 0
  %11702 = vmatprep.subr.bf16.mxu0 0
  %11703 = vmatpush1.bf16.msra.mxu0 0
  %11704 = vmatprep.subr.bf16.mxu0 0
  %11705 = vmatpush1.bf16.msra.mxu0 0
  %11706 = vmatprep.mubr.bf16.mxu0 0
  %11707 = vmatmul.mubr.bf16.gmra.mrb[0].mxu0 %v11663
  %v11708 = vpop.f32.mrb[0].mxu0
  %v11709 = vadd.f32 %v11604, %v11708
  %v11710 = vpop.f32.mrb[0].mxu0
  %v11711 = vpop.f32.mrb[0].mxu0
  %v11712 = vadd.f32 %v11609, %v11711
  %v11713 = vpop.f32.mrb[0].mxu0
  %11714 = vmatprep.mubr.bf16.mxu0 0
  %11715 = vmatmul.mubr.bf16.gmra.mrb[0].mxu0 %v11666
  %v11716 = vpop.f32.mrb[0].mxu0
  %v11717 = vadd.f32 %v11614, %v11716
  %v11718 = vpop.f32.mrb[0].mxu0
  %v11719 = vpop.f32.mrb[0].mxu0
  %v11720 = vadd.f32 %v11619, %v11719
  %v11721 = vpop.f32.mrb[0].mxu0
  %11722 = vmatprep.mubr.bf16.mxu0 0
  %11723 = vmatmul.mubr.bf16.gmra.mrb[0].mxu0 %v11669
  %v11724 = vpop.f32.mrb[0].mxu0
  %v11725 = vadd.f32 %v11624, %v11724
  %v11726 = vpop.f32.mrb[0].mxu0
  %v11727 = vpop.f32.mrb[0].mxu0
  %v11728 = vadd.f32 %v11629, %v11727
  %v11729 = vpop.f32.mrb[0].mxu0
  %11730 = vmatprep.mubr.bf16.mxu0 0
  %11731 = vmatmul.mubr.bf16.gmra.mrb[0].mxu0 %v11672
  %v11732 = vpop.f32.mrb[0].mxu0
  %v11733 = vadd.f32 %v11634, %v11732
  %v11734 = vpop.f32.mrb[0].mxu0
  %v11735 = vpop.f32.mrb[0].mxu0
  %v11736 = vadd.f32 %v11639, %v11735
  %v11737 = vpop.f32.mrb[0].mxu0
  %11738 = vdwg.mxu0
  %vm11739 = vcmask 15360
  %11740 = vst.msk [vmem:[%s87] sm:$0xff] %vm11739, %v11709
  %11741 = vst.msk [vmem:[%s87 + $0x8] sm:$0xff] %vm11739, %v11712
  %11742 = vst.msk [vmem:[%s87 + $0x10] sm:$0xff] %vm11739, %v11717
  %11743 = vst.msk [vmem:[%s87 + $0x18] sm:$0xff] %vm11739, %v11720
  %11744 = vst.msk [vmem:[%s87 + $0x20] sm:$0xff] %vm11739, %v11725
  %11745 = vst.msk [vmem:[%s87 + $0x28] sm:$0xff] %vm11739, %v11728
  %11746 = vst.msk [vmem:[%s87 + $0x30] sm:$0xff] %vm11739, %v11733
  %vm11747 = vcmask 13312
  %11748 = vst.msk [vmem:[%s87 + $0x38] sm:$0x3f] %vm11747, %v11736
  // Predicated region
  $region174: #{_forward.1} parent=0 // pred_check
    _
  $region175: #{_forward.1} parent=0 // pred_check_branch
    %11750 = sbr.rel (0) target = $region177
  $region176: #{_forward.1} parent=0 // pred_region
    _
  $region177: #{_forward.1} parent=0 // pred_fallthru
    _
  // Predicated region
  $region178: #{_forward.1} parent=0 // pred_check
    _
  $region179: #{_forward.1} parent=0 // pred_check_branch
    %11752 = sbr.rel (0) target = $region181
  $region180: #{_forward.1} parent=0 // pred_region
    _
  $region181: #{_forward.1} parent=0 // pred_fallthru
    _

</llo_original>
